<compile_context>
chip_gen: v7x
topology: tpu7x:2x2x1
jax: 0.10.0
libtpu: 0.0.40
codegen_flags: <defaults>
</compile_context>

<pallas_src>
import math

import numpy as np
import jax
import jax.numpy as jnp
from jax.experimental import pallas as pl
from jax.experimental.pallas import tpu as pltpu

# ------------------------- model config (small, consistent with the module) -------------------------
INPUT_CHANNELS = 4
PATCH_SIZE = (2, 2)
EMBED_DIM = 32
DEPTHS = (2, 2)
NUM_HEADS = (2, 4)
WINDOW_SIZE = (4, 4)
MLP_RATIO = 4.0
LN_EPS = 1e-5
NEG_INF = -1e9  # cross-window / cross-head mask; exp(NEG_INF - max) underflows to exactly 0


# --------------------------------- in-kernel math helpers ---------------------------------
def _ln_rows(y, g, b, eps):
    mu = jnp.mean(y, axis=-1, keepdims=True)
    var = jnp.mean(jnp.square(y - mu), axis=-1, keepdims=True)
    return (y - mu) * jax.lax.rsqrt(var + eps) * g + b


def _erf(x):
    # Abramowitz & Stegun 7.1.26, max abs err ~1.5e-7 (essentially f32-exact).
    # TODO(synk): PyTorch GELU(approximate='none') uses exact erf; this is the Mosaic-safe equivalent.
    p = 0.3275911
    a1, a2, a3, a4, a5 = 0.254829592, -0.284496736, 1.421413741, -1.453152027, 1.061405429
    s = jnp.where(x < 0.0, -1.0, 1.0)
    ax = jnp.abs(x)
    t = 1.0 / (1.0 + p * ax)
    poly = ((((a5 * t + a4) * t + a3) * t + a2) * t + a1) * t
    return s * (1.0 - poly * jnp.exp(-ax * ax))


def _gelu(x):
    return 0.5 * x * (1.0 + _erf(x * 0.7071067811865476))


# --------------------------------------- fused Pallas kernel ---------------------------------------
def _swin_block_body(x, refs, nh):
    """One Swin-V2 block on a raster-ordered (T, C) token slab (all in registers/VMEM)."""
    qkv_w, proj_w, w1, w2, vec8_ref, b1_ref, bias_ref, qscale_ref = refs
    t, c = x.shape
    hd = c // nh
    v8 = vec8_ref[...]                                           # rows: bq,bv,proj_b,n1g,n1b,b2,n2g,n2b

    xb = x.astype(jnp.bfloat16)
    q = jnp.dot(xb, qkv_w[0], preferred_element_type=jnp.float32) + v8[0:1, :]
    k = jnp.dot(xb, qkv_w[1], preferred_element_type=jnp.float32)   # Swin-V2 zeroes the k bias
    v = jnp.dot(xb, qkv_w[2], preferred_element_type=jnp.float32) + v8[1:2, :]

    # Head-stacked block-diagonal cosine attention: one lane-dense S + one softmax + one P@V.
    qs = jnp.concatenate([q[:, h * hd:(h + 1) * hd] for h in range(nh)], axis=0)   # (nh*T, hd)
    ks = jnp.concatenate([k[:, h * hd:(h + 1) * hd] for h in range(nh)], axis=0)
    vs = jnp.concatenate([v[:, h * hd:(h + 1) * hd] for h in range(nh)], axis=0)

    # F.normalize(., dim=-1, eps=1e-12); clamped per-head logit scale folded into q rows.
    qn = qs * jax.lax.rsqrt(jnp.maximum(jnp.sum(qs * qs, -1, keepdims=True), 1e-24)) * qscale_ref[...]
    kn = ks * jax.lax.rsqrt(jnp.maximum(jnp.sum(ks * ks, -1, keepdims=True), 1e-24))

    # bias_ref already contains: relative-position bias + shift mask (-100) + cross-window /
    # cross-head NEG_INF, precomputed in raster order, so no roll / window reshape is needed.
    s = jax.lax.dot_general(qn, kn, (((1,), (1,)), ((), ())),
                            preferred_element_type=jnp.float32) + bias_ref[...]
    s = s - jnp.max(s, axis=-1, keepdims=True)
    p = jnp.exp(s)
    p = p / jnp.sum(p, axis=-1, keepdims=True)                   # exact divide (review note)
    o = jnp.dot(p, vs, preferred_element_type=jnp.float32)       # (nh*T, hd)

    # Output projection accumulated per head straight into (T, C) - no lane re-concat, no scratch.
    a = v8[2:3, :]
    for h in range(nh):
        a = a + jnp.dot(o[h * t:(h + 1) * t, :].astype(jnp.bfloat16),
                        proj_w[h * hd:(h + 1) * hd, :],
                        preferred_element_type=jnp.float32)

    # Swin-V2 post-norm residuals: x = x + norm1(attn(x)); x = x + norm2(mlp(x))
    x = x + _ln_rows(a, v8[3:4, :], v8[4:5, :], LN_EPS)
    hmid = _gelu(jnp.dot(x.astype(jnp.bfloat16), w1[...],
                         preferred_element_type=jnp.float32) + b1_ref[...])
    m = jnp.dot(hmid.astype(jnp.bfloat16), w2[...],
                preferred_element_type=jnp.float32) + v8[5:6, :]
    return x + _ln_rows(m, v8[6:7, :], v8[7:8, :], LN_EPS)


def _swin_forward_kernel(*refs):
    """Whole forward for ONE image per grid step: patch embed -> stages (+ merging) -> features."""
    it = iter(refs)
    obs_ref = next(it)
    pe_w_ref = next(it)
    pe_vec_ref = next(it)
    stage_blocks = []
    merge_refs = []
    for si, depth in enumerate(DEPTHS):
        stage_blocks.append([tuple(next(it) for _ in range(8)) for _ in range(depth)])
        if si < len(DEPTHS) - 1:
            merge_refs.append(tuple(next(it) for _ in range(3)))
    feat_refs = [next(it) for _ in range(len(DEPTHS))]

    # ---- patch embedding: Conv2d(k=stride=patch) == per-patch flatten + matmul, then LayerNorm ----
    pe_vec = pe_vec_ref[...]
    y = jnp.dot(obs_ref[...].astype(jnp.bfloat16), pe_w_ref[...],
                preferred_element_type=jnp.float32) + pe_vec[0:1, :]
    x = _ln_rows(y, pe_vec[1:2, :], pe_vec[2:3, :], LN_EPS)      # (T, E), raster token order

    for si, depth in enumerate(DEPTHS):
        nh = NUM_HEADS[si]
        for li in range(depth):
            x = _swin_block_body(x, stage_blocks[si][li], nh)
        feat_refs[si][...] = x                                    # stage output (feature map)

        if si < len(DEPTHS) - 1:
            # PatchMergingV2: 2x2 decimation via a constant 0/1 selection matmul, then
            # lane-perfect (.., 4C=128) concat, reduction Linear(4C->2C, no bias) and LayerNorm(2C).
            sel_ref, red_w_ref, mg_vec_ref = merge_refs[si]
            t_out = sel_ref.shape[0] // 4
            z = jnp.dot(sel_ref[...], x, preferred_element_type=jnp.float32)      # [x0;x1;x2;x3]
            xc = jnp.concatenate([z[p * t_out:(p + 1) * t_out, :] for p in range(4)], axis=1)
            mg_vec = mg_vec_ref[...]
            y = jnp.dot(xc.astype(jnp.bfloat16), red_w_ref[...],
                        preferred_element_type=jnp.float32)
            x = _ln_rows(y, mg_vec[0:1, :], mg_vec[1:2, :], LN_EPS)


# -------------------------------------------- wrapper --------------------------------------------
def swin_feature_extractor(obs, params):
    """Mirrors SwinFeatureExtractor.forward: returns [stage-1 output, stage-2 output] (NHWC)."""
    b, h, w, cin = obs.shape
    ph, pw = PATCH_SIZE
    h1, w1 = h // ph, w // pw
    n_tok = h1 * w1
    patch_feat = ph * pw * cin

    # One tiny per-patch flattening of the 4 KB input; everything downstream stays in VMEM.
    obs_p = obs.reshape(b, h1, ph, w1, pw, cin).transpose(0, 1, 3, 2, 4, 5)
    obs_p = obs_p.reshape(b * n_tok, patch_feat)

    args = [obs_p]
    in_specs = [pl.BlockSpec((n_tok, patch_feat), lambda i: (i, 0))]

    def add(a):
        args.append(a)
        in_specs.append(pl.BlockSpec(a.shape, lambda i, nd=a.ndim: (0,) * nd))

    add(params["patch_embed"]["w"])
    add(params["patch_embed"]["vec"])
    for si in range(len(DEPTHS)):
        for bp in params["stages"][si]:
            for name in ("qkv_w", "proj_w", "mlp_w1", "mlp_w2", "vec8", "mlp_b1",
                         "attn_bias", "qscale"):
                add(bp[name])
        if si < len(DEPTHS) - 1:
            mg = params["merges"][si]
            for name in ("sel", "red_w", "vec2"):
                add(mg[name])

    out_shapes, out_specs, shapes_nhwc = [], [], []
    toks, dim, hh, ww = n_tok, EMBED_DIM, h1, w1
    for si in range(len(DEPTHS)):
        out_shapes.append(jax.ShapeDtypeStruct((b * toks, dim), jnp.float32))
        out_specs.append(pl.BlockSpec((toks, dim), lambda i: (i, 0)))
        shapes_nhwc.append((b, hh, ww, dim))
        if si < len(DEPTHS) - 1:
            toks //= 4
            dim *= 2
            hh //= 2
            ww //= 2

    outs = pl.pallas_call(
        _swin_forward_kernel,
        grid=(b,),                                   # one image per step -> scales with batch (v7x)
        in_specs=in_specs,
        out_specs=tuple(out_specs),
        out_shape=tuple(out_shapes),
        compiler_params=pltpu.CompilerParams(dimension_semantics=("parallel",)),
    )(*args)
    return [o.reshape(s) for o, s in zip(outs, shapes_nhwc)]


# ------------------------------- prepare-time constants (hoisted) -------------------------------
def _relative_position_index(window_size):
    wh, ww = window_size
    coords = np.stack(np.meshgrid(np.arange(wh), np.arange(ww), indexing="ij"))
    coords_flat = coords.reshape(2, -1)
    rel = (coords_flat[:, :, None] - coords_flat[:, None, :]).transpose(1, 2, 0).astype(np.int64)
    rel[..., 0] += wh - 1
    rel[..., 1] += ww - 1
    rel[..., 0] *= 2 * ww - 1
    return rel.sum(-1).reshape(-1)


def _relative_coords_table(window_size):
    wh, ww = window_size
    ch = np.arange(-(wh - 1), wh, dtype=np.float32)
    cw = np.arange(-(ww - 1), ww, dtype=np.float32)
    table = np.stack(np.meshgrid(ch, cw, indexing="ij"), axis=-1)
    table[..., 0] /= (wh - 1)
    table[..., 1] /= (ww - 1)
    table *= 8.0
    table = np.sign(table) * np.log2(np.abs(table) + 1.0) / 3.0
    return table.reshape(-1, 2)


def _relative_position_bias(ap, window_size, num_heads):
    # cpb_mlp is a tiny parameter-only MLP; evaluated ONCE at prepare time (outside the forward).
    table = jnp.asarray(_relative_coords_table(window_size))
    hmid = jnp.maximum(table @ ap["cpb_w1"] + ap["cpb_b1"], 0.0)
    bias_table = hmid @ ap["cpb_w2"]                               # (T, num_heads)
    idx = _relative_position_index(window_size)
    n = window_size[0] * window_size[1]
    bias = bias_table[idx].reshape(n, n, num_heads).transpose(2, 0, 1)
    return (16.0 * jax.nn.sigmoid(bias)).astype(jnp.float32)       # (num_heads, N, N)


def _build_attn_bias(rel_bias, hs, ws, window, shift, neg=NEG_INF):
    """Combined additive attention tensor in raster token order: relative-position bias +
    torchvision shift mask (-100) for same-window pairs, NEG_INF for cross-window / cross-head."""
    wh, ww = window
    sh, sw = shift
    if wh >= hs:
        sh = 0
    if ww >= ws:
        sw = 0
    # TODO(synk): torchvision pads H/W up to a window multiple; not needed for the config used here.
    assert hs % wh == 0 and ws % ww == 0
    t = hs * ws
    nh = rel_bias.shape[0]
    hh = np.repeat(np.arange(hs), ws)                 # original raster coords of every token
    wc = np.tile(np.arange(ws), hs)
    si_ = (hh - sh) % hs                              # coords after torch.roll(-shift)
    sj_ = (wc - sw) % ws
    win_id = (si_ // wh) * (ws // ww) + (sj_ // ww)
    pos = (si_ % wh) * ww + (sj_ % ww)                # position inside the window
    lab = np.zeros((hs, ws), np.int64)
    if sh > 0 or sw > 0:                              # torchvision region labels for the shift mask
        cnt = 0
        for h0, h1_ in ((0, hs - wh), (hs - wh, hs - sh), (hs - sh, hs)):
            for w0, w1_ in ((0, ws - ww), (ws - ww, ws - sw), (ws - sw, ws)):
                lab[h0:h1_, w0:w1_] = cnt
                cnt += 1
    label = lab[si_, sj_]
    same_win = win_id[:, None] == win_id[None, :]
    shift_term = np.where(label[:, None] != label[None, :], -100.0, 0.0).astype(np.float32)
    pos_i = np.broadcast_to(pos[:, None], (t, t))
    pos_j = np.broadcast_to(pos[None, :], (t, t))
    full = jnp.full((nh * t, nh * t), neg, jnp.float32)
    for h in range(nh):
        blk = jnp.where(same_win, rel_bias[h][pos_i, pos_j] + shift_term, neg)
        full = full.at[h * t:(h + 1) * t, h * t:(h + 1) * t].set(blk)
    return full


def _merge_select_matrix(hs, ws):
    """0/1 matrix stacking the x0/x1/x2/x3 2x2-decimated token sets of PatchMergingV2 vertically."""
    h2, w2 = hs // 2, ws // 2
    t_out = h2 * w2
    sel = np.zeros((4 * t_out, hs * ws), np.float32)
    offs = [(0, 0), (1, 0), (0, 1), (1, 1)]           # torchvision x0, x1, x2, x3 order
    for p, (dh, dw) in enumerate(offs):
        for i in range(h2):
            for j in range(w2):
                sel[p * t_out + i * w2 + j, (2 * i + dh) * ws + (2 * j + dw)] = 1.0
    return sel


# ------------------------------------- parameter init / prepare -------------------------------------
def init_params(key):
    kit = iter(jax.random.split(key, 512))

    def tn(shape, std=0.02):  # trunc_normal_(std=0.02), biases -> zeros (per module __init__)
        return std * jax.random.truncated_normal(next(kit), -2.0, 2.0, shape, jnp.float32)

    ph, pw = PATCH_SIZE
    params = {
        "patch_embed": {
            # conv weight stored pre-flattened as (kh*kw*Cin, E) matching NHWC patch flattening
            "conv_w": 0.05 * jax.random.normal(next(kit), (ph * pw * INPUT_CHANNELS, EMBED_DIM),
                                               jnp.float32),
            "conv_b": jnp.zeros((EMBED_DIM,), jnp.float32),
            "norm_g": jnp.ones((EMBED_DIM,), jnp.float32),
            "norm_b": jnp.zeros((EMBED_DIM,), jnp.float32),
        },
        "stages": [],
        "merges": [],
    }
    for i_stage, depth in enumerate(DEPTHS):
        dim = EMBED_DIM * (2 ** i_stage)
        nh = NUM_HEADS[i_stage]
        hidden = int(dim * MLP_RATIO)
        blocks = []
        for _ in range(depth):
            blocks.append({
                "attn": {
                    "qkv_w": tn((dim, 3 * dim)),
                    "qkv_b": jnp.zeros((3 * dim,), jnp.float32),
                    "proj_w": tn((dim, dim)),
                    "proj_b": jnp.zeros((dim,), jnp.float32),
                    "logit_scale": jnp.full((nh, 1, 1), math.log(10.0), jnp.float32),
                    "cpb_w1": tn((2, 512)),
                    "cpb_b1": jnp.zeros((512,), jnp.float32),
                    "cpb_w2": tn((512, nh)),
                },
                "norm1_g": jnp.ones((dim,), jnp.float32),
                "norm1_b": jnp.zeros((dim,), jnp.float32),
                "norm2_g": jnp.ones((dim,), jnp.float32),
                "norm2_b": jnp.zeros((dim,), jnp.float32),
                "mlp_w1": tn((dim, hidden)),
                "mlp_b1": jnp.zeros((hidden,), jnp.float32),
                "mlp_w2": tn((hidden, dim)),
                "mlp_b2": jnp.zeros((dim,), jnp.float32),
            })
        params["stages"].append(blocks)
        if i_stage < len(DEPTHS) - 1:
            params["merges"].append({
                "red_w": tn((4 * dim, 2 * dim)),          # Linear(4C, 2C, bias=False)
                "norm_g": jnp.ones((2 * dim,), jnp.float32),
                "norm_b": jnp.zeros((2 * dim,), jnp.float32),
            })
    return params


def prepare_params(raw, image_hw=(16, 16)):
    """One-time hoisting: bf16 matmul weights (q/k/v split), packed bias/norm rows, precomputed
    combined attention bias (rel-bias + shift mask + window/head block mask), folded logit scale,
    and the patch-merging selection matrix.  Must be called with the image size used at runtime."""
    def w16(a):
        return a.astype(jnp.bfloat16)

    def row(a):
        return a.reshape(1, -1).astype(jnp.float32)

    ph, pw = PATCH_SIZE
    hs, ws = image_hw[0] // ph, image_hw[1] // pw

    pe = raw["patch_embed"]
    prepared = {
        "patch_embed": {
            "w": w16(pe["conv_w"]),
            "vec": jnp.stack([pe["conv_b"], pe["norm_g"], pe["norm_b"]], 0).astype(jnp.float32),
        },
        "stages": [],
        "merges": [],
    }
    for si, depth in enumerate(DEPTHS):
        nh = NUM_HEADS[si]
        dim = EMBED_DIM * (2 ** si)
        t = hs * ws
        blocks = []
        for li in range(depth):
            bp = raw["stages"][si][li]
            ap = bp["attn"]
            shift = [0 if li % 2 == 0 else wsz // 2 for wsz in WINDOW_SIZE]
            rel_bias = _relative_position_bias(ap, WINDOW_SIZE, nh)          # (nh, wt, wt)
            scale = jnp.exp(jnp.minimum(ap["logit_scale"].reshape(nh), math.log(100.0)))
            qw = ap["qkv_w"]
            blocks.append({
                "qkv_w": jnp.stack([qw[:, :dim], qw[:, dim:2 * dim], qw[:, 2 * dim:]], 0
                                   ).astype(jnp.bfloat16),
                "proj_w": w16(ap["proj_w"]),
                "mlp_w1": w16(bp["mlp_w1"]),
                "mlp_w2": w16(bp["mlp_w2"]),
                # rows: bq, bv (Swin-V2 drops the k bias), proj_b, n1g, n1b, mlp_b2, n2g, n2b
                "vec8": jnp.stack([ap["qkv_b"][:dim], ap["qkv_b"][2 * dim:], ap["proj_b"],
                                   bp["norm1_g"], bp["norm1_b"], bp["mlp_b2"],
                                   bp["norm2_g"], bp["norm2_b"]], 0).astype(jnp.float32),
                "mlp_b1": row(bp["mlp_b1"]),
                "attn_bias": _build_attn_bias(rel_bias, hs, ws, WINDOW_SIZE, shift),
                "qscale": jnp.repeat(scale, t).reshape(nh * t, 1).astype(jnp.float32),
            })
        prepared["stages"].append(blocks)
        if si < len(DEPTHS) - 1:
            mp = raw["merges"][si]
            prepared["merges"].append({
                "sel": jnp.asarray(_merge_select_matrix(hs, ws), jnp.float32),
                "red_w": w16(mp["red_w"]),
                "vec2": jnp.stack([mp["norm_g"], mp["norm_b"]], 0).astype(jnp.float32),
            })
            hs //= 2
            ws //= 2
    return prepared


if __name__ == "__main__":
    key = jax.random.PRNGKey(0)
    k_obs, k_params = jax.random.split(key)
    obs = jax.random.normal(k_obs, (2, 16, 16, INPUT_CHANNELS), jnp.float32)
    params = prepare_params(init_params(k_params), image_hw=(16, 16))

    feats = jax.jit(swin_feature_extractor)(obs, params)
    feats = jax.block_until_ready(feats)

    assert feats[0].shape == (2, 8, 8, EMBED_DIM)
    assert feats[1].shape == (2, 4, 4, 2 * EMBED_DIM)
    assert all(bool(jnp.isfinite(f).all()) for f in feats)
    print("KERNEL_OK")
</pallas_src>

<mosaic_0001>
module attributes {stable_mosaic.version = 11 : i64} {
  func.func @_swin_forward_kernel(%arg0: i32, %arg1: memref<64x16xf32, #tpu.memory_space<vmem>>, %arg2: memref<16x32xbf16, #tpu.memory_space<vmem>>, %arg3: memref<3x32xf32, #tpu.memory_space<vmem>>, %arg4: memref<3x32x32xbf16, #tpu.memory_space<vmem>>, %arg5: memref<32x32xbf16, #tpu.memory_space<vmem>>, %arg6: memref<32x128xbf16, #tpu.memory_space<vmem>>, %arg7: memref<128x32xbf16, #tpu.memory_space<vmem>>, %arg8: memref<8x32xf32, #tpu.memory_space<vmem>>, %arg9: memref<1x128xf32, #tpu.memory_space<vmem>>, %arg10: memref<128x128xf32, #tpu.memory_space<vmem>>, %arg11: memref<128x1xf32, #tpu.memory_space<vmem>>, %arg12: memref<3x32x32xbf16, #tpu.memory_space<vmem>>, %arg13: memref<32x32xbf16, #tpu.memory_space<vmem>>, %arg14: memref<32x128xbf16, #tpu.memory_space<vmem>>, %arg15: memref<128x32xbf16, #tpu.memory_space<vmem>>, %arg16: memref<8x32xf32, #tpu.memory_space<vmem>>, %arg17: memref<1x128xf32, #tpu.memory_space<vmem>>, %arg18: memref<128x128xf32, #tpu.memory_space<vmem>>, %arg19: memref<128x1xf32, #tpu.memory_space<vmem>>, %arg20: memref<64x64xf32, #tpu.memory_space<vmem>>, %arg21: memref<128x64xbf16, #tpu.memory_space<vmem>>, %arg22: memref<2x64xf32, #tpu.memory_space<vmem>>, %arg23: memref<3x64x64xbf16, #tpu.memory_space<vmem>>, %arg24: memref<64x64xbf16, #tpu.memory_space<vmem>>, %arg25: memref<64x256xbf16, #tpu.memory_space<vmem>>, %arg26: memref<256x64xbf16, #tpu.memory_space<vmem>>, %arg27: memref<8x64xf32, #tpu.memory_space<vmem>>, %arg28: memref<1x256xf32, #tpu.memory_space<vmem>>, %arg29: memref<64x64xf32, #tpu.memory_space<vmem>>, %arg30: memref<64x1xf32, #tpu.memory_space<vmem>>, %arg31: memref<3x64x64xbf16, #tpu.memory_space<vmem>>, %arg32: memref<64x64xbf16, #tpu.memory_space<vmem>>, %arg33: memref<64x256xbf16, #tpu.memory_space<vmem>>, %arg34: memref<256x64xbf16, #tpu.memory_space<vmem>>, %arg35: memref<8x64xf32, #tpu.memory_space<vmem>>, %arg36: memref<1x256xf32, #tpu.memory_space<vmem>>, %arg37: memref<64x64xf32, #tpu.memory_space<vmem>>, %arg38: memref<64x1xf32, #tpu.memory_space<vmem>>, %arg39: memref<64x32xf32, #tpu.memory_space<vmem>>, %arg40: memref<16x64xf32, #tpu.memory_space<vmem>>) attributes {dimension_semantics = [#tpu.dimension_semantics<parallel>], iteration_bounds = array<i64: 2>, scalar_prefetch = 0 : i64, scratch_operands = 0 : i64, tpu.core_type = #tpu.core_type<tc>, window_params = [{transform_indices = @transform_0, window_bounds = array<i64: 64, 16>}, {pipeline_mode = #tpu.pipeline_mode<synchronous>, transform_indices = @transform_1, window_bounds = array<i64: 16, 32>}, {pipeline_mode = #tpu.pipeline_mode<synchronous>, transform_indices = @transform_2, window_bounds = array<i64: 3, 32>}, {pipeline_mode = #tpu.pipeline_mode<synchronous>, transform_indices = @transform_3, window_bounds = array<i64: 3, 32, 32>}, {pipeline_mode = #tpu.pipeline_mode<synchronous>, transform_indices = @transform_4, window_bounds = array<i64: 32, 32>}, {pipeline_mode = #tpu.pipeline_mode<synchronous>, transform_indices = @transform_5, window_bounds = array<i64: 32, 128>}, {pipeline_mode = #tpu.pipeline_mode<synchronous>, transform_indices = @transform_6, window_bounds = array<i64: 128, 32>}, {pipeline_mode = #tpu.pipeline_mode<synchronous>, transform_indices = @transform_7, window_bounds = array<i64: 8, 32>}, {pipeline_mode = #tpu.pipeline_mode<synchronous>, transform_indices = @transform_8, window_bounds = array<i64: 1, 128>}, {pipeline_mode = #tpu.pipeline_mode<synchronous>, transform_indices = @transform_9, window_bounds = array<i64: 128, 128>}, {pipeline_mode = #tpu.pipeline_mode<synchronous>, transform_indices = @transform_10, window_bounds = array<i64: 128, 1>}, {pipeline_mode = #tpu.pipeline_mode<synchronous>, transform_indices = @transform_11, window_bounds = array<i64: 3, 32, 32>}, {pipeline_mode = #tpu.pipeline_mode<synchronous>, transform_indices = @transform_12, window_bounds = array<i64: 32, 32>}, {pipeline_mode = #tpu.pipeline_mode<synchronous>, transform_indices = @transform_13, window_bounds = array<i64: 32, 128>}, {pipeline_mode = #tpu.pipeline_mode<synchronous>, transform_indices = @transform_14, window_bounds = array<i64: 128, 32>}, {pipeline_mode = #tpu.pipeline_mode<synchronous>, transform_indices = @transform_15, window_bounds = array<i64: 8, 32>}, {pipeline_mode = #tpu.pipeline_mode<synchronous>, transform_indices = @transform_16, window_bounds = array<i64: 1, 128>}, {pipeline_mode = #tpu.pipeline_mode<synchronous>, transform_indices = @transform_17, window_bounds = array<i64: 128, 128>}, {pipeline_mode = #tpu.pipeline_mode<synchronous>, transform_indices = @transform_18, window_bounds = array<i64: 128, 1>}, {pipeline_mode = #tpu.pipeline_mode<synchronous>, transform_indices = @transform_19, window_bounds = array<i64: 64, 64>}, {pipeline_mode = #tpu.pipeline_mode<synchronous>, transform_indices = @transform_20, window_bounds = array<i64: 128, 64>}, {pipeline_mode = #tpu.pipeline_mode<synchronous>, transform_indices = @transform_21, window_bounds = array<i64: 2, 64>}, {pipeline_mode = #tpu.pipeline_mode<synchronous>, transform_indices = @transform_22, window_bounds = array<i64: 3, 64, 64>}, {pipeline_mode = #tpu.pipeline_mode<synchronous>, transform_indices = @transform_23, window_bounds = array<i64: 64, 64>}, {pipeline_mode = #tpu.pipeline_mode<synchronous>, transform_indices = @transform_24, window_bounds = array<i64: 64, 256>}, {pipeline_mode = #tpu.pipeline_mode<synchronous>, transform_indices = @transform_25, window_bounds = array<i64: 256, 64>}, {pipeline_mode = #tpu.pipeline_mode<synchronous>, transform_indices = @transform_26, window_bounds = array<i64: 8, 64>}, {pipeline_mode = #tpu.pipeline_mode<synchronous>, transform_indices = @transform_27, window_bounds = array<i64: 1, 256>}, {pipeline_mode = #tpu.pipeline_mode<synchronous>, transform_indices = @transform_28, window_bounds = array<i64: 64, 64>}, {pipeline_mode = #tpu.pipeline_mode<synchronous>, transform_indices = @transform_29, window_bounds = array<i64: 64, 1>}, {pipeline_mode = #tpu.pipeline_mode<synchronous>, transform_indices = @transform_30, window_bounds = array<i64: 3, 64, 64>}, {pipeline_mode = #tpu.pipeline_mode<synchronous>, transform_indices = @transform_31, window_bounds = array<i64: 64, 64>}, {pipeline_mode = #tpu.pipeline_mode<synchronous>, transform_indices = @transform_32, window_bounds = array<i64: 64, 256>}, {pipeline_mode = #tpu.pipeline_mode<synchronous>, transform_indices = @transform_33, window_bounds = array<i64: 256, 64>}, {pipeline_mode = #tpu.pipeline_mode<synchronous>, transform_indices = @transform_34, window_bounds = array<i64: 8, 64>}, {pipeline_mode = #tpu.pipeline_mode<synchronous>, transform_indices = @transform_35, window_bounds = array<i64: 1, 256>}, {pipeline_mode = #tpu.pipeline_mode<synchronous>, transform_indices = @transform_36, window_bounds = array<i64: 64, 64>}, {pipeline_mode = #tpu.pipeline_mode<synchronous>, transform_indices = @transform_37, window_bounds = array<i64: 64, 1>}, {transform_indices = @transform_38, window_bounds = array<i64: 64, 32>}, {transform_indices = @transform_39, window_bounds = array<i64: 16, 64>}]} {
    %c0 = arith.constant 0 : index
    %c0_0 = arith.constant 0 : index
    %0 = vector.load %arg3[%c0, %c0_0] : memref<3x32xf32, #tpu.memory_space<vmem>>, vector<3x32xf32>
    %c0_1 = arith.constant 0 : index
    %c0_2 = arith.constant 0 : index
    %1 = vector.load %arg1[%c0_1, %c0_2] : memref<64x16xf32, #tpu.memory_space<vmem>>, vector<64x16xf32>
    %2 = arith.truncf %1 : vector<64x16xf32> to vector<64x16xbf16>
    %c0_3 = arith.constant 0 : index
    %c0_4 = arith.constant 0 : index
    %3 = vector.load %arg2[%c0_3, %c0_4] : memref<16x32xbf16, #tpu.memory_space<vmem>>, vector<16x32xbf16>
    %cst = arith.constant dense<0.000000e+00> : vector<64x32xf32>
    %4 = tpu.matmul %2, %3, %cst {dimension_numbers = #tpu.dot_dimension_numbers<[1], [0], [0], [1], [0, 0, 1, 1], [], []>} : vector<64x16xbf16>, vector<16x32xbf16>, vector<64x32xf32> -> vector<64x32xf32>
    %5 = vector.extract_strided_slice %0 {offsets = [0, 0], sizes = [1, 32], strides = [1, 1]} : vector<3x32xf32> to vector<1x32xf32>
    %6 = vector.broadcast %5 : vector<1x32xf32> to vector<64x32xf32>
    %7 = arith.addf %4, %6 : vector<64x32xf32>
    %8 = vector.extract_strided_slice %0 {offsets = [1, 0], sizes = [1, 32], strides = [1, 1]} : vector<3x32xf32> to vector<1x32xf32>
    %9 = vector.extract_strided_slice %0 {offsets = [2, 0], sizes = [1, 32], strides = [1, 1]} : vector<3x32xf32> to vector<1x32xf32>
    %cst_5 = arith.constant dense<0.000000e+00> : vector<64xf32>
    %10 = vector.multi_reduction <add>, %7, %cst_5 [1] : vector<64x32xf32> to vector<64xf32>
    %11 = vector.shape_cast %10 : vector<64xf32> to vector<64x1xf32>
    %cst_6 = arith.constant 3.200000e+01 : f32
    %12 = vector.broadcast %cst_6 : f32 to vector<64x1xf32>
    %13 = arith.divf %11, %12 : vector<64x1xf32>
    %14 = vector.broadcast %13 : vector<64x1xf32> to vector<64x32xf32>
    %15 = arith.subf %7, %14 : vector<64x32xf32>
    %16 = arith.mulf %15, %15 : vector<64x32xf32>
    %cst_7 = arith.constant dense<0.000000e+00> : vector<64xf32>
    %17 = vector.multi_reduction <add>, %16, %cst_7 [1] : vector<64x32xf32> to vector<64xf32>
    %18 = vector.shape_cast %17 : vector<64xf32> to vector<64x1xf32>
    %cst_8 = arith.constant 3.200000e+01 : f32
    %19 = vector.broadcast %cst_8 : f32 to vector<64x1xf32>
    %20 = arith.divf %18, %19 : vector<64x1xf32>
    %21 = vector.broadcast %13 : vector<64x1xf32> to vector<64x32xf32>
    %22 = arith.subf %7, %21 : vector<64x32xf32>
    %cst_9 = arith.constant 9.99999974E-6 : f32
    %23 = vector.broadcast %cst_9 : f32 to vector<64x1xf32>
    %24 = arith.addf %20, %23 : vector<64x1xf32>
    %25 = math.rsqrt %24 : vector<64x1xf32>
    %26 = vector.broadcast %25 : vector<64x1xf32> to vector<64x32xf32>
    %27 = arith.mulf %22, %26 : vector<64x32xf32>
    %28 = vector.broadcast %8 : vector<1x32xf32> to vector<64x32xf32>
    %29 = arith.mulf %27, %28 : vector<64x32xf32>
    %30 = vector.broadcast %9 : vector<1x32xf32> to vector<64x32xf32>
    %31 = arith.addf %29, %30 : vector<64x32xf32>
    %c0_10 = arith.constant 0 : index
    %c0_11 = arith.constant 0 : index
    %32 = vector.load %arg8[%c0_10, %c0_11] : memref<8x32xf32, #tpu.memory_space<vmem>>, vector<8x32xf32>
    %33 = arith.truncf %31 : vector<64x32xf32> to vector<64x32xbf16>
    %c0_12 = arith.constant 0 : index
    %c0_13 = arith.constant 0 : index
    %c0_14 = arith.constant 0 : index
    %34 = vector.load %arg4[%c0_12, %c0_13, %c0_14] : memref<3x32x32xbf16, #tpu.memory_space<vmem>>, vector<1x32x32xbf16>
    %35 = vector.shape_cast %34 : vector<1x32x32xbf16> to vector<32x32xbf16>
    %cst_15 = arith.constant dense<0.000000e+00> : vector<64x32xf32>
    %36 = tpu.matmul %33, %35, %cst_15 {dimension_numbers = #tpu.dot_dimension_numbers<[1], [0], [0], [1], [0, 0, 1, 1], [], []>} : vector<64x32xbf16>, vector<32x32xbf16>, vector<64x32xf32> -> vector<64x32xf32>
    %37 = vector.extract_strided_slice %32 {offsets = [0, 0], sizes = [1, 32], strides = [1, 1]} : vector<8x32xf32> to vector<1x32xf32>
    %38 = vector.broadcast %37 : vector<1x32xf32> to vector<64x32xf32>
    %39 = arith.addf %36, %38 : vector<64x32xf32>
    %c1 = arith.constant 1 : index
    %c0_16 = arith.constant 0 : index
    %c0_17 = arith.constant 0 : index
    %40 = vector.load %arg4[%c1, %c0_16, %c0_17] : memref<3x32x32xbf16, #tpu.memory_space<vmem>>, vector<1x32x32xbf16>
    %41 = vector.shape_cast %40 : vector<1x32x32xbf16> to vector<32x32xbf16>
    %cst_18 = arith.constant dense<0.000000e+00> : vector<64x32xf32>
    %42 = tpu.matmul %33, %41, %cst_18 {dimension_numbers = #tpu.dot_dimension_numbers<[1], [0], [0], [1], [0, 0, 1, 1], [], []>} : vector<64x32xbf16>, vector<32x32xbf16>, vector<64x32xf32> -> vector<64x32xf32>
    %c2 = arith.constant 2 : index
    %c0_19 = arith.constant 0 : index
    %c0_20 = arith.constant 0 : index
    %43 = vector.load %arg4[%c2, %c0_19, %c0_20] : memref<3x32x32xbf16, #tpu.memory_space<vmem>>, vector<1x32x32xbf16>
    %44 = vector.shape_cast %43 : vector<1x32x32xbf16> to vector<32x32xbf16>
    %cst_21 = arith.constant dense<0.000000e+00> : vector<64x32xf32>
    %45 = tpu.matmul %33, %44, %cst_21 {dimension_numbers = #tpu.dot_dimension_numbers<[1], [0], [0], [1], [0, 0, 1, 1], [], []>} : vector<64x32xbf16>, vector<32x32xbf16>, vector<64x32xf32> -> vector<64x32xf32>
    %46 = vector.extract_strided_slice %32 {offsets = [1, 0], sizes = [1, 32], strides = [1, 1]} : vector<8x32xf32> to vector<1x32xf32>
    %47 = vector.broadcast %46 : vector<1x32xf32> to vector<64x32xf32>
    %48 = arith.addf %45, %47 : vector<64x32xf32>
    %49 = vector.extract_strided_slice %39 {offsets = [0, 0], sizes = [64, 16], strides = [1, 1]} : vector<64x32xf32> to vector<64x16xf32>
    %50 = vector.extract_strided_slice %39 {offsets = [0, 16], sizes = [64, 16], strides = [1, 1]} : vector<64x32xf32> to vector<64x16xf32>
    %51 = tpu.concatenate %49, %50 in 0 : vector<64x16xf32>, vector<64x16xf32> -> vector<128x16xf32>
    %52 = vector.extract_strided_slice %42 {offsets = [0, 0], sizes = [64, 16], strides = [1, 1]} : vector<64x32xf32> to vector<64x16xf32>
    %53 = vector.extract_strided_slice %42 {offsets = [0, 16], sizes = [64, 16], strides = [1, 1]} : vector<64x32xf32> to vector<64x16xf32>
    %54 = tpu.concatenate %52, %53 in 0 : vector<64x16xf32>, vector<64x16xf32> -> vector<128x16xf32>
    %55 = vector.extract_strided_slice %48 {offsets = [0, 0], sizes = [64, 16], strides = [1, 1]} : vector<64x32xf32> to vector<64x16xf32>
    %56 = vector.extract_strided_slice %48 {offsets = [0, 16], sizes = [64, 16], strides = [1, 1]} : vector<64x32xf32> to vector<64x16xf32>
    %57 = tpu.concatenate %55, %56 in 0 : vector<64x16xf32>, vector<64x16xf32> -> vector<128x16xf32>
    %58 = arith.mulf %51, %51 : vector<128x16xf32>
    %cst_22 = arith.constant dense<0.000000e+00> : vector<128xf32>
    %59 = vector.multi_reduction <add>, %58, %cst_22 [1] : vector<128x16xf32> to vector<128xf32>
    %60 = vector.shape_cast %59 : vector<128xf32> to vector<128x1xf32>
    %cst_23 = arith.constant 1.000000e-24 : f32
    %61 = vector.broadcast %cst_23 : f32 to vector<128x1xf32>
    %62 = arith.maximumf %60, %61 : vector<128x1xf32>
    %63 = math.rsqrt %62 : vector<128x1xf32>
    %64 = vector.broadcast %63 : vector<128x1xf32> to vector<128x16xf32>
    %65 = arith.mulf %51, %64 : vector<128x16xf32>
    %c0_24 = arith.constant 0 : index
    %c0_25 = arith.constant 0 : index
    %66 = vector.load %arg11[%c0_24, %c0_25] : memref<128x1xf32, #tpu.memory_space<vmem>>, vector<128x1xf32>
    %67 = vector.broadcast %66 : vector<128x1xf32> to vector<128x16xf32>
    %68 = arith.mulf %65, %67 : vector<128x16xf32>
    %69 = arith.mulf %54, %54 : vector<128x16xf32>
    %cst_26 = arith.constant dense<0.000000e+00> : vector<128xf32>
    %70 = vector.multi_reduction <add>, %69, %cst_26 [1] : vector<128x16xf32> to vector<128xf32>
    %71 = vector.shape_cast %70 : vector<128xf32> to vector<128x1xf32>
    %cst_27 = arith.constant 1.000000e-24 : f32
    %72 = vector.broadcast %cst_27 : f32 to vector<128x1xf32>
    %73 = arith.maximumf %71, %72 : vector<128x1xf32>
    %74 = math.rsqrt %73 : vector<128x1xf32>
    %75 = vector.broadcast %74 : vector<128x1xf32> to vector<128x16xf32>
    %76 = arith.mulf %54, %75 : vector<128x16xf32>
    %cst_28 = arith.constant dense<0.000000e+00> : vector<128x128xf32>
    %77 = tpu.matmul %68, %76, %cst_28 {dimension_numbers = #tpu.dot_dimension_numbers<[1], [1], [0], [0], [0, 0, 1, 0], [], []>} : vector<128x16xf32>, vector<128x16xf32>, vector<128x128xf32> -> vector<128x128xf32>
    %c0_29 = arith.constant 0 : index
    %c0_30 = arith.constant 0 : index
    %78 = vector.load %arg10[%c0_29, %c0_30] : memref<128x128xf32, #tpu.memory_space<vmem>>, vector<128x128xf32>
    %79 = arith.addf %77, %78 : vector<128x128xf32>
    %cst_31 = arith.constant dense<0xFF800000> : vector<128xf32>
    %80 = vector.multi_reduction <maximumf>, %79, %cst_31 [1] : vector<128x128xf32> to vector<128xf32>
    %81 = vector.shape_cast %80 : vector<128xf32> to vector<128x1xf32>
    %82 = vector.broadcast %81 : vector<128x1xf32> to vector<128x128xf32>
    %83 = arith.subf %79, %82 : vector<128x128xf32>
    %84 = math.exp %83 : vector<128x128xf32>
    %cst_32 = arith.constant dense<0.000000e+00> : vector<128xf32>
    %85 = vector.multi_reduction <add>, %84, %cst_32 [1] : vector<128x128xf32> to vector<128xf32>
    %86 = vector.shape_cast %85 : vector<128xf32> to vector<128x1xf32>
    %87 = vector.broadcast %86 : vector<128x1xf32> to vector<128x128xf32>
    %88 = arith.divf %84, %87 : vector<128x128xf32>
    %cst_33 = arith.constant dense<0.000000e+00> : vector<128x16xf32>
    %89 = tpu.matmul %88, %57, %cst_33 {dimension_numbers = #tpu.dot_dimension_numbers<[1], [0], [0], [1], [0, 0, 1, 1], [], []>} : vector<128x128xf32>, vector<128x16xf32>, vector<128x16xf32> -> vector<128x16xf32>
    %90 = vector.extract_strided_slice %32 {offsets = [2, 0], sizes = [1, 32], strides = [1, 1]} : vector<8x32xf32> to vector<1x32xf32>
    %91 = vector.extract_strided_slice %89 {offsets = [0, 0], sizes = [64, 16], strides = [1, 1]} : vector<128x16xf32> to vector<64x16xf32>
    %92 = arith.truncf %91 : vector<64x16xf32> to vector<64x16xbf16>
    %c0_34 = arith.constant 0 : index
    %c0_35 = arith.constant 0 : index
    %93 = vector.load %arg5[%c0_34, %c0_35] : memref<32x32xbf16, #tpu.memory_space<vmem>>, vector<16x32xbf16>
    %cst_36 = arith.constant dense<0.000000e+00> : vector<64x32xf32>
    %94 = tpu.matmul %92, %93, %cst_36 {dimension_numbers = #tpu.dot_dimension_numbers<[1], [0], [0], [1], [0, 0, 1, 1], [], []>} : vector<64x16xbf16>, vector<16x32xbf16>, vector<64x32xf32> -> vector<64x32xf32>
    %95 = vector.broadcast %90 : vector<1x32xf32> to vector<64x32xf32>
    %96 = arith.addf %95, %94 : vector<64x32xf32>
    %97 = vector.extract_strided_slice %89 {offsets = [64, 0], sizes = [64, 16], strides = [1, 1]} : vector<128x16xf32> to vector<64x16xf32>
    %98 = arith.truncf %97 : vector<64x16xf32> to vector<64x16xbf16>
    %c16 = arith.constant 16 : index
    %c0_37 = arith.constant 0 : index
    %99 = vector.load %arg5[%c16, %c0_37] : memref<32x32xbf16, #tpu.memory_space<vmem>>, vector<16x32xbf16>
    %cst_38 = arith.constant dense<0.000000e+00> : vector<64x32xf32>
    %100 = tpu.matmul %98, %99, %cst_38 {dimension_numbers = #tpu.dot_dimension_numbers<[1], [0], [0], [1], [0, 0, 1, 1], [], []>} : vector<64x16xbf16>, vector<16x32xbf16>, vector<64x32xf32> -> vector<64x32xf32>
    %101 = arith.addf %96, %100 : vector<64x32xf32>
    %102 = vector.extract_strided_slice %32 {offsets = [3, 0], sizes = [1, 32], strides = [1, 1]} : vector<8x32xf32> to vector<1x32xf32>
    %103 = vector.extract_strided_slice %32 {offsets = [4, 0], sizes = [1, 32], strides = [1, 1]} : vector<8x32xf32> to vector<1x32xf32>
    %cst_39 = arith.constant dense<0.000000e+00> : vector<64xf32>
    %104 = vector.multi_reduction <add>, %101, %cst_39 [1] : vector<64x32xf32> to vector<64xf32>
    %105 = vector.shape_cast %104 : vector<64xf32> to vector<64x1xf32>
    %cst_40 = arith.constant 3.200000e+01 : f32
    %106 = vector.broadcast %cst_40 : f32 to vector<64x1xf32>
    %107 = arith.divf %105, %106 : vector<64x1xf32>
    %108 = vector.broadcast %107 : vector<64x1xf32> to vector<64x32xf32>
    %109 = arith.subf %101, %108 : vector<64x32xf32>
    %110 = arith.mulf %109, %109 : vector<64x32xf32>
    %cst_41 = arith.constant dense<0.000000e+00> : vector<64xf32>
    %111 = vector.multi_reduction <add>, %110, %cst_41 [1] : vector<64x32xf32> to vector<64xf32>
    %112 = vector.shape_cast %111 : vector<64xf32> to vector<64x1xf32>
    %cst_42 = arith.constant 3.200000e+01 : f32
    %113 = vector.broadcast %cst_42 : f32 to vector<64x1xf32>
    %114 = arith.divf %112, %113 : vector<64x1xf32>
    %115 = vector.broadcast %107 : vector<64x1xf32> to vector<64x32xf32>
    %116 = arith.subf %101, %115 : vector<64x32xf32>
    %cst_43 = arith.constant 9.99999974E-6 : f32
    %117 = vector.broadcast %cst_43 : f32 to vector<64x1xf32>
    %118 = arith.addf %114, %117 : vector<64x1xf32>
    %119 = math.rsqrt %118 : vector<64x1xf32>
    %120 = vector.broadcast %119 : vector<64x1xf32> to vector<64x32xf32>
    %121 = arith.mulf %116, %120 : vector<64x32xf32>
    %122 = vector.broadcast %102 : vector<1x32xf32> to vector<64x32xf32>
    %123 = arith.mulf %121, %122 : vector<64x32xf32>
    %124 = vector.broadcast %103 : vector<1x32xf32> to vector<64x32xf32>
    %125 = arith.addf %123, %124 : vector<64x32xf32>
    %126 = arith.addf %31, %125 : vector<64x32xf32>
    %127 = arith.truncf %126 : vector<64x32xf32> to vector<64x32xbf16>
    %c0_44 = arith.constant 0 : index
    %c0_45 = arith.constant 0 : index
    %128 = vector.load %arg6[%c0_44, %c0_45] : memref<32x128xbf16, #tpu.memory_space<vmem>>, vector<32x128xbf16>
    %cst_46 = arith.constant dense<0.000000e+00> : vector<64x128xf32>
    %129 = tpu.matmul %127, %128, %cst_46 {dimension_numbers = #tpu.dot_dimension_numbers<[1], [0], [0], [1], [0, 0, 1, 1], [], []>} : vector<64x32xbf16>, vector<32x128xbf16>, vector<64x128xf32> -> vector<64x128xf32>
    %c0_47 = arith.constant 0 : index
    %c0_48 = arith.constant 0 : index
    %130 = vector.load %arg9[%c0_47, %c0_48] : memref<1x128xf32, #tpu.memory_space<vmem>>, vector<1x128xf32>
    %131 = vector.broadcast %130 : vector<1x128xf32> to vector<64x128xf32>
    %132 = arith.addf %129, %131 : vector<64x128xf32>
    %cst_49 = arith.constant 5.000000e-01 : f32
    %133 = vector.broadcast %cst_49 : f32 to vector<64x128xf32>
    %134 = arith.mulf %133, %132 : vector<64x128xf32>
    %cst_50 = arith.constant 0.707106769 : f32
    %135 = vector.broadcast %cst_50 : f32 to vector<64x128xf32>
    %136 = arith.mulf %132, %135 : vector<64x128xf32>
    %cst_51 = arith.constant 0.000000e+00 : f32
    %137 = vector.broadcast %cst_51 : f32 to vector<64x128xf32>
    %138 = arith.cmpf olt, %136, %137 : vector<64x128xf32>
    %cst_52 = arith.constant -1.000000e+00 : f32
    %cst_53 = arith.constant 1.000000e+00 : f32
    %139 = vector.broadcast %cst_52 : f32 to vector<64x128xf32>
    %140 = vector.broadcast %cst_53 : f32 to vector<64x128xf32>
    %141 = arith.select %138, %139, %140 : vector<64x128xi1>, vector<64x128xf32>
    %142 = math.absf %136 : vector<64x128xf32>
    %cst_54 = arith.constant 0.327591091 : f32
    %143 = vector.broadcast %cst_54 : f32 to vector<64x128xf32>
    %144 = arith.mulf %143, %142 : vector<64x128xf32>
    %cst_55 = arith.constant 1.000000e+00 : f32
    %145 = vector.broadcast %cst_55 : f32 to vector<64x128xf32>
    %146 = arith.addf %145, %144 : vector<64x128xf32>
    %cst_56 = arith.constant 1.000000e+00 : f32
    %147 = vector.broadcast %cst_56 : f32 to vector<64x128xf32>
    %148 = arith.divf %147, %146 : vector<64x128xf32>
    %cst_57 = arith.constant 1.06140542 : f32
    %149 = vector.broadcast %cst_57 : f32 to vector<64x128xf32>
    %150 = arith.mulf %149, %148 : vector<64x128xf32>
    %cst_58 = arith.constant -1.45315206 : f32
    %151 = vector.broadcast %cst_58 : f32 to vector<64x128xf32>
    %152 = arith.addf %150, %151 : vector<64x128xf32>
    %153 = arith.mulf %152, %148 : vector<64x128xf32>
    %cst_59 = arith.constant 1.42141378 : f32
    %154 = vector.broadcast %cst_59 : f32 to vector<64x128xf32>
    %155 = arith.addf %153, %154 : vector<64x128xf32>
    %156 = arith.mulf %155, %148 : vector<64x128xf32>
    %cst_60 = arith.constant -0.284496725 : f32
    %157 = vector.broadcast %cst_60 : f32 to vector<64x128xf32>
    %158 = arith.addf %156, %157 : vector<64x128xf32>
    %159 = arith.mulf %158, %148 : vector<64x128xf32>
    %cst_61 = arith.constant 0.254829586 : f32
    %160 = vector.broadcast %cst_61 : f32 to vector<64x128xf32>
    %161 = arith.addf %159, %160 : vector<64x128xf32>
    %162 = arith.mulf %161, %148 : vector<64x128xf32>
    %cst_62 = arith.constant 0.000000e+00 : f32
    %163 = vector.broadcast %cst_62 : f32 to vector<64x128xf32>
    %164 = arith.subf %163, %142 : vector<64x128xf32>
    %165 = arith.mulf %164, %142 : vector<64x128xf32>
    %166 = math.exp %165 : vector<64x128xf32>
    %167 = arith.mulf %162, %166 : vector<64x128xf32>
    %cst_63 = arith.constant 1.000000e+00 : f32
    %168 = vector.broadcast %cst_63 : f32 to vector<64x128xf32>
    %169 = arith.subf %168, %167 : vector<64x128xf32>
    %170 = arith.mulf %141, %169 : vector<64x128xf32>
    %cst_64 = arith.constant 1.000000e+00 : f32
    %171 = vector.broadcast %cst_64 : f32 to vector<64x128xf32>
    %172 = arith.addf %171, %170 : vector<64x128xf32>
    %173 = arith.mulf %134, %172 : vector<64x128xf32>
    %174 = arith.truncf %173 : vector<64x128xf32> to vector<64x128xbf16>
    %c0_65 = arith.constant 0 : index
    %c0_66 = arith.constant 0 : index
    %175 = vector.load %arg7[%c0_65, %c0_66] : memref<128x32xbf16, #tpu.memory_space<vmem>>, vector<128x32xbf16>
    %cst_67 = arith.constant dense<0.000000e+00> : vector<64x32xf32>
    %176 = tpu.matmul %174, %175, %cst_67 {dimension_numbers = #tpu.dot_dimension_numbers<[1], [0], [0], [1], [0, 0, 1, 1], [], []>} : vector<64x128xbf16>, vector<128x32xbf16>, vector<64x32xf32> -> vector<64x32xf32>
    %177 = vector.extract_strided_slice %32 {offsets = [5, 0], sizes = [1, 32], strides = [1, 1]} : vector<8x32xf32> to vector<1x32xf32>
    %178 = vector.broadcast %177 : vector<1x32xf32> to vector<64x32xf32>
    %179 = arith.addf %176, %178 : vector<64x32xf32>
    %180 = vector.extract_strided_slice %32 {offsets = [6, 0], sizes = [1, 32], strides = [1, 1]} : vector<8x32xf32> to vector<1x32xf32>
    %181 = vector.extract_strided_slice %32 {offsets = [7, 0], sizes = [1, 32], strides = [1, 1]} : vector<8x32xf32> to vector<1x32xf32>
    %cst_68 = arith.constant dense<0.000000e+00> : vector<64xf32>
    %182 = vector.multi_reduction <add>, %179, %cst_68 [1] : vector<64x32xf32> to vector<64xf32>
    %183 = vector.shape_cast %182 : vector<64xf32> to vector<64x1xf32>
    %cst_69 = arith.constant 3.200000e+01 : f32
    %184 = vector.broadcast %cst_69 : f32 to vector<64x1xf32>
    %185 = arith.divf %183, %184 : vector<64x1xf32>
    %186 = vector.broadcast %185 : vector<64x1xf32> to vector<64x32xf32>
    %187 = arith.subf %179, %186 : vector<64x32xf32>
    %188 = arith.mulf %187, %187 : vector<64x32xf32>
    %cst_70 = arith.constant dense<0.000000e+00> : vector<64xf32>
    %189 = vector.multi_reduction <add>, %188, %cst_70 [1] : vector<64x32xf32> to vector<64xf32>
    %190 = vector.shape_cast %189 : vector<64xf32> to vector<64x1xf32>
    %cst_71 = arith.constant 3.200000e+01 : f32
    %191 = vector.broadcast %cst_71 : f32 to vector<64x1xf32>
    %192 = arith.divf %190, %191 : vector<64x1xf32>
    %193 = vector.broadcast %185 : vector<64x1xf32> to vector<64x32xf32>
    %194 = arith.subf %179, %193 : vector<64x32xf32>
    %cst_72 = arith.constant 9.99999974E-6 : f32
    %195 = vector.broadcast %cst_72 : f32 to vector<64x1xf32>
    %196 = arith.addf %192, %195 : vector<64x1xf32>
    %197 = math.rsqrt %196 : vector<64x1xf32>
    %198 = vector.broadcast %197 : vector<64x1xf32> to vector<64x32xf32>
    %199 = arith.mulf %194, %198 : vector<64x32xf32>
    %200 = vector.broadcast %180 : vector<1x32xf32> to vector<64x32xf32>
    %201 = arith.mulf %199, %200 : vector<64x32xf32>
    %202 = vector.broadcast %181 : vector<1x32xf32> to vector<64x32xf32>
    %203 = arith.addf %201, %202 : vector<64x32xf32>
    %204 = arith.addf %126, %203 : vector<64x32xf32>
    %c0_73 = arith.constant 0 : index
    %c0_74 = arith.constant 0 : index
    %205 = vector.load %arg16[%c0_73, %c0_74] : memref<8x32xf32, #tpu.memory_space<vmem>>, vector<8x32xf32>
    %206 = arith.truncf %204 : vector<64x32xf32> to vector<64x32xbf16>
    %c0_75 = arith.constant 0 : index
    %c0_76 = arith.constant 0 : index
    %c0_77 = arith.constant 0 : index
    %207 = vector.load %arg12[%c0_75, %c0_76, %c0_77] : memref<3x32x32xbf16, #tpu.memory_space<vmem>>, vector<1x32x32xbf16>
    %208 = vector.shape_cast %207 : vector<1x32x32xbf16> to vector<32x32xbf16>
    %cst_78 = arith.constant dense<0.000000e+00> : vector<64x32xf32>
    %209 = tpu.matmul %206, %208, %cst_78 {dimension_numbers = #tpu.dot_dimension_numbers<[1], [0], [0], [1], [0, 0, 1, 1], [], []>} : vector<64x32xbf16>, vector<32x32xbf16>, vector<64x32xf32> -> vector<64x32xf32>
    %210 = vector.extract_strided_slice %205 {offsets = [0, 0], sizes = [1, 32], strides = [1, 1]} : vector<8x32xf32> to vector<1x32xf32>
    %211 = vector.broadcast %210 : vector<1x32xf32> to vector<64x32xf32>
    %212 = arith.addf %209, %211 : vector<64x32xf32>
    %c1_79 = arith.constant 1 : index
    %c0_80 = arith.constant 0 : index
    %c0_81 = arith.constant 0 : index
    %213 = vector.load %arg12[%c1_79, %c0_80, %c0_81] : memref<3x32x32xbf16, #tpu.memory_space<vmem>>, vector<1x32x32xbf16>
    %214 = vector.shape_cast %213 : vector<1x32x32xbf16> to vector<32x32xbf16>
    %cst_82 = arith.constant dense<0.000000e+00> : vector<64x32xf32>
    %215 = tpu.matmul %206, %214, %cst_82 {dimension_numbers = #tpu.dot_dimension_numbers<[1], [0], [0], [1], [0, 0, 1, 1], [], []>} : vector<64x32xbf16>, vector<32x32xbf16>, vector<64x32xf32> -> vector<64x32xf32>
    %c2_83 = arith.constant 2 : index
    %c0_84 = arith.constant 0 : index
    %c0_85 = arith.constant 0 : index
    %216 = vector.load %arg12[%c2_83, %c0_84, %c0_85] : memref<3x32x32xbf16, #tpu.memory_space<vmem>>, vector<1x32x32xbf16>
    %217 = vector.shape_cast %216 : vector<1x32x32xbf16> to vector<32x32xbf16>
    %cst_86 = arith.constant dense<0.000000e+00> : vector<64x32xf32>
    %218 = tpu.matmul %206, %217, %cst_86 {dimension_numbers = #tpu.dot_dimension_numbers<[1], [0], [0], [1], [0, 0, 1, 1], [], []>} : vector<64x32xbf16>, vector<32x32xbf16>, vector<64x32xf32> -> vector<64x32xf32>
    %219 = vector.extract_strided_slice %205 {offsets = [1, 0], sizes = [1, 32], strides = [1, 1]} : vector<8x32xf32> to vector<1x32xf32>
    %220 = vector.broadcast %219 : vector<1x32xf32> to vector<64x32xf32>
    %221 = arith.addf %218, %220 : vector<64x32xf32>
    %222 = vector.extract_strided_slice %212 {offsets = [0, 0], sizes = [64, 16], strides = [1, 1]} : vector<64x32xf32> to vector<64x16xf32>
    %223 = vector.extract_strided_slice %212 {offsets = [0, 16], sizes = [64, 16], strides = [1, 1]} : vector<64x32xf32> to vector<64x16xf32>
    %224 = tpu.concatenate %222, %223 in 0 : vector<64x16xf32>, vector<64x16xf32> -> vector<128x16xf32>
    %225 = vector.extract_strided_slice %215 {offsets = [0, 0], sizes = [64, 16], strides = [1, 1]} : vector<64x32xf32> to vector<64x16xf32>
    %226 = vector.extract_strided_slice %215 {offsets = [0, 16], sizes = [64, 16], strides = [1, 1]} : vector<64x32xf32> to vector<64x16xf32>
    %227 = tpu.concatenate %225, %226 in 0 : vector<64x16xf32>, vector<64x16xf32> -> vector<128x16xf32>
    %228 = vector.extract_strided_slice %221 {offsets = [0, 0], sizes = [64, 16], strides = [1, 1]} : vector<64x32xf32> to vector<64x16xf32>
    %229 = vector.extract_strided_slice %221 {offsets = [0, 16], sizes = [64, 16], strides = [1, 1]} : vector<64x32xf32> to vector<64x16xf32>
    %230 = tpu.concatenate %228, %229 in 0 : vector<64x16xf32>, vector<64x16xf32> -> vector<128x16xf32>
    %231 = arith.mulf %224, %224 : vector<128x16xf32>
    %cst_87 = arith.constant dense<0.000000e+00> : vector<128xf32>
    %232 = vector.multi_reduction <add>, %231, %cst_87 [1] : vector<128x16xf32> to vector<128xf32>
    %233 = vector.shape_cast %232 : vector<128xf32> to vector<128x1xf32>
    %cst_88 = arith.constant 1.000000e-24 : f32
    %234 = vector.broadcast %cst_88 : f32 to vector<128x1xf32>
    %235 = arith.maximumf %233, %234 : vector<128x1xf32>
    %236 = math.rsqrt %235 : vector<128x1xf32>
    %237 = vector.broadcast %236 : vector<128x1xf32> to vector<128x16xf32>
    %238 = arith.mulf %224, %237 : vector<128x16xf32>
    %c0_89 = arith.constant 0 : index
    %c0_90 = arith.constant 0 : index
    %239 = vector.load %arg19[%c0_89, %c0_90] : memref<128x1xf32, #tpu.memory_space<vmem>>, vector<128x1xf32>
    %240 = vector.broadcast %239 : vector<128x1xf32> to vector<128x16xf32>
    %241 = arith.mulf %238, %240 : vector<128x16xf32>
    %242 = arith.mulf %227, %227 : vector<128x16xf32>
    %cst_91 = arith.constant dense<0.000000e+00> : vector<128xf32>
    %243 = vector.multi_reduction <add>, %242, %cst_91 [1] : vector<128x16xf32> to vector<128xf32>
    %244 = vector.shape_cast %243 : vector<128xf32> to vector<128x1xf32>
    %cst_92 = arith.constant 1.000000e-24 : f32
    %245 = vector.broadcast %cst_92 : f32 to vector<128x1xf32>
    %246 = arith.maximumf %244, %245 : vector<128x1xf32>
    %247 = math.rsqrt %246 : vector<128x1xf32>
    %248 = vector.broadcast %247 : vector<128x1xf32> to vector<128x16xf32>
    %249 = arith.mulf %227, %248 : vector<128x16xf32>
    %cst_93 = arith.constant dense<0.000000e+00> : vector<128x128xf32>
    %250 = tpu.matmul %241, %249, %cst_93 {dimension_numbers = #tpu.dot_dimension_numbers<[1], [1], [0], [0], [0, 0, 1, 0], [], []>} : vector<128x16xf32>, vector<128x16xf32>, vector<128x128xf32> -> vector<128x128xf32>
    %c0_94 = arith.constant 0 : index
    %c0_95 = arith.constant 0 : index
    %251 = vector.load %arg18[%c0_94, %c0_95] : memref<128x128xf32, #tpu.memory_space<vmem>>, vector<128x128xf32>
    %252 = arith.addf %250, %251 : vector<128x128xf32>
    %cst_96 = arith.constant dense<0xFF800000> : vector<128xf32>
    %253 = vector.multi_reduction <maximumf>, %252, %cst_96 [1] : vector<128x128xf32> to vector<128xf32>
    %254 = vector.shape_cast %253 : vector<128xf32> to vector<128x1xf32>
    %255 = vector.broadcast %254 : vector<128x1xf32> to vector<128x128xf32>
    %256 = arith.subf %252, %255 : vector<128x128xf32>
    %257 = math.exp %256 : vector<128x128xf32>
    %cst_97 = arith.constant dense<0.000000e+00> : vector<128xf32>
    %258 = vector.multi_reduction <add>, %257, %cst_97 [1] : vector<128x128xf32> to vector<128xf32>
    %259 = vector.shape_cast %258 : vector<128xf32> to vector<128x1xf32>
    %260 = vector.broadcast %259 : vector<128x1xf32> to vector<128x128xf32>
    %261 = arith.divf %257, %260 : vector<128x128xf32>
    %cst_98 = arith.constant dense<0.000000e+00> : vector<128x16xf32>
    %262 = tpu.matmul %261, %230, %cst_98 {dimension_numbers = #tpu.dot_dimension_numbers<[1], [0], [0], [1], [0, 0, 1, 1], [], []>} : vector<128x128xf32>, vector<128x16xf32>, vector<128x16xf32> -> vector<128x16xf32>
    %263 = vector.extract_strided_slice %205 {offsets = [2, 0], sizes = [1, 32], strides = [1, 1]} : vector<8x32xf32> to vector<1x32xf32>
    %264 = vector.extract_strided_slice %262 {offsets = [0, 0], sizes = [64, 16], strides = [1, 1]} : vector<128x16xf32> to vector<64x16xf32>
    %265 = arith.truncf %264 : vector<64x16xf32> to vector<64x16xbf16>
    %c0_99 = arith.constant 0 : index
    %c0_100 = arith.constant 0 : index
    %266 = vector.load %arg13[%c0_99, %c0_100] : memref<32x32xbf16, #tpu.memory_space<vmem>>, vector<16x32xbf16>
    %cst_101 = arith.constant dense<0.000000e+00> : vector<64x32xf32>
    %267 = tpu.matmul %265, %266, %cst_101 {dimension_numbers = #tpu.dot_dimension_numbers<[1], [0], [0], [1], [0, 0, 1, 1], [], []>} : vector<64x16xbf16>, vector<16x32xbf16>, vector<64x32xf32> -> vector<64x32xf32>
    %268 = vector.broadcast %263 : vector<1x32xf32> to vector<64x32xf32>
    %269 = arith.addf %268, %267 : vector<64x32xf32>
    %270 = vector.extract_strided_slice %262 {offsets = [64, 0], sizes = [64, 16], strides = [1, 1]} : vector<128x16xf32> to vector<64x16xf32>
    %271 = arith.truncf %270 : vector<64x16xf32> to vector<64x16xbf16>
    %c16_102 = arith.constant 16 : index
    %c0_103 = arith.constant 0 : index
    %272 = vector.load %arg13[%c16_102, %c0_103] : memref<32x32xbf16, #tpu.memory_space<vmem>>, vector<16x32xbf16>
    %cst_104 = arith.constant dense<0.000000e+00> : vector<64x32xf32>
    %273 = tpu.matmul %271, %272, %cst_104 {dimension_numbers = #tpu.dot_dimension_numbers<[1], [0], [0], [1], [0, 0, 1, 1], [], []>} : vector<64x16xbf16>, vector<16x32xbf16>, vector<64x32xf32> -> vector<64x32xf32>
    %274 = arith.addf %269, %273 : vector<64x32xf32>
    %275 = vector.extract_strided_slice %205 {offsets = [3, 0], sizes = [1, 32], strides = [1, 1]} : vector<8x32xf32> to vector<1x32xf32>
    %276 = vector.extract_strided_slice %205 {offsets = [4, 0], sizes = [1, 32], strides = [1, 1]} : vector<8x32xf32> to vector<1x32xf32>
    %cst_105 = arith.constant dense<0.000000e+00> : vector<64xf32>
    %277 = vector.multi_reduction <add>, %274, %cst_105 [1] : vector<64x32xf32> to vector<64xf32>
    %278 = vector.shape_cast %277 : vector<64xf32> to vector<64x1xf32>
    %cst_106 = arith.constant 3.200000e+01 : f32
    %279 = vector.broadcast %cst_106 : f32 to vector<64x1xf32>
    %280 = arith.divf %278, %279 : vector<64x1xf32>
    %281 = vector.broadcast %280 : vector<64x1xf32> to vector<64x32xf32>
    %282 = arith.subf %274, %281 : vector<64x32xf32>
    %283 = arith.mulf %282, %282 : vector<64x32xf32>
    %cst_107 = arith.constant dense<0.000000e+00> : vector<64xf32>
    %284 = vector.multi_reduction <add>, %283, %cst_107 [1] : vector<64x32xf32> to vector<64xf32>
    %285 = vector.shape_cast %284 : vector<64xf32> to vector<64x1xf32>
    %cst_108 = arith.constant 3.200000e+01 : f32
    %286 = vector.broadcast %cst_108 : f32 to vector<64x1xf32>
    %287 = arith.divf %285, %286 : vector<64x1xf32>
    %288 = vector.broadcast %280 : vector<64x1xf32> to vector<64x32xf32>
    %289 = arith.subf %274, %288 : vector<64x32xf32>
    %cst_109 = arith.constant 9.99999974E-6 : f32
    %290 = vector.broadcast %cst_109 : f32 to vector<64x1xf32>
    %291 = arith.addf %287, %290 : vector<64x1xf32>
    %292 = math.rsqrt %291 : vector<64x1xf32>
    %293 = vector.broadcast %292 : vector<64x1xf32> to vector<64x32xf32>
    %294 = arith.mulf %289, %293 : vector<64x32xf32>
    %295 = vector.broadcast %275 : vector<1x32xf32> to vector<64x32xf32>
    %296 = arith.mulf %294, %295 : vector<64x32xf32>
    %297 = vector.broadcast %276 : vector<1x32xf32> to vector<64x32xf32>
    %298 = arith.addf %296, %297 : vector<64x32xf32>
    %299 = arith.addf %204, %298 : vector<64x32xf32>
    %300 = arith.truncf %299 : vector<64x32xf32> to vector<64x32xbf16>
    %c0_110 = arith.constant 0 : index
    %c0_111 = arith.constant 0 : index
    %301 = vector.load %arg14[%c0_110, %c0_111] : memref<32x128xbf16, #tpu.memory_space<vmem>>, vector<32x128xbf16>
    %cst_112 = arith.constant dense<0.000000e+00> : vector<64x128xf32>
    %302 = tpu.matmul %300, %301, %cst_112 {dimension_numbers = #tpu.dot_dimension_numbers<[1], [0], [0], [1], [0, 0, 1, 1], [], []>} : vector<64x32xbf16>, vector<32x128xbf16>, vector<64x128xf32> -> vector<64x128xf32>
    %c0_113 = arith.constant 0 : index
    %c0_114 = arith.constant 0 : index
    %303 = vector.load %arg17[%c0_113, %c0_114] : memref<1x128xf32, #tpu.memory_space<vmem>>, vector<1x128xf32>
    %304 = vector.broadcast %303 : vector<1x128xf32> to vector<64x128xf32>
    %305 = arith.addf %302, %304 : vector<64x128xf32>
    %cst_115 = arith.constant 5.000000e-01 : f32
    %306 = vector.broadcast %cst_115 : f32 to vector<64x128xf32>
    %307 = arith.mulf %306, %305 : vector<64x128xf32>
    %cst_116 = arith.constant 0.707106769 : f32
    %308 = vector.broadcast %cst_116 : f32 to vector<64x128xf32>
    %309 = arith.mulf %305, %308 : vector<64x128xf32>
    %cst_117 = arith.constant 0.000000e+00 : f32
    %310 = vector.broadcast %cst_117 : f32 to vector<64x128xf32>
    %311 = arith.cmpf olt, %309, %310 : vector<64x128xf32>
    %cst_118 = arith.constant -1.000000e+00 : f32
    %cst_119 = arith.constant 1.000000e+00 : f32
    %312 = vector.broadcast %cst_118 : f32 to vector<64x128xf32>
    %313 = vector.broadcast %cst_119 : f32 to vector<64x128xf32>
    %314 = arith.select %311, %312, %313 : vector<64x128xi1>, vector<64x128xf32>
    %315 = math.absf %309 : vector<64x128xf32>
    %cst_120 = arith.constant 0.327591091 : f32
    %316 = vector.broadcast %cst_120 : f32 to vector<64x128xf32>
    %317 = arith.mulf %316, %315 : vector<64x128xf32>
    %cst_121 = arith.constant 1.000000e+00 : f32
    %318 = vector.broadcast %cst_121 : f32 to vector<64x128xf32>
    %319 = arith.addf %318, %317 : vector<64x128xf32>
    %cst_122 = arith.constant 1.000000e+00 : f32
    %320 = vector.broadcast %cst_122 : f32 to vector<64x128xf32>
    %321 = arith.divf %320, %319 : vector<64x128xf32>
    %cst_123 = arith.constant 1.06140542 : f32
    %322 = vector.broadcast %cst_123 : f32 to vector<64x128xf32>
    %323 = arith.mulf %322, %321 : vector<64x128xf32>
    %cst_124 = arith.constant -1.45315206 : f32
    %324 = vector.broadcast %cst_124 : f32 to vector<64x128xf32>
    %325 = arith.addf %323, %324 : vector<64x128xf32>
    %326 = arith.mulf %325, %321 : vector<64x128xf32>
    %cst_125 = arith.constant 1.42141378 : f32
    %327 = vector.broadcast %cst_125 : f32 to vector<64x128xf32>
    %328 = arith.addf %326, %327 : vector<64x128xf32>
    %329 = arith.mulf %328, %321 : vector<64x128xf32>
    %cst_126 = arith.constant -0.284496725 : f32
    %330 = vector.broadcast %cst_126 : f32 to vector<64x128xf32>
    %331 = arith.addf %329, %330 : vector<64x128xf32>
    %332 = arith.mulf %331, %321 : vector<64x128xf32>
    %cst_127 = arith.constant 0.254829586 : f32
    %333 = vector.broadcast %cst_127 : f32 to vector<64x128xf32>
    %334 = arith.addf %332, %333 : vector<64x128xf32>
    %335 = arith.mulf %334, %321 : vector<64x128xf32>
    %cst_128 = arith.constant 0.000000e+00 : f32
    %336 = vector.broadcast %cst_128 : f32 to vector<64x128xf32>
    %337 = arith.subf %336, %315 : vector<64x128xf32>
    %338 = arith.mulf %337, %315 : vector<64x128xf32>
    %339 = math.exp %338 : vector<64x128xf32>
    %340 = arith.mulf %335, %339 : vector<64x128xf32>
    %cst_129 = arith.constant 1.000000e+00 : f32
    %341 = vector.broadcast %cst_129 : f32 to vector<64x128xf32>
    %342 = arith.subf %341, %340 : vector<64x128xf32>
    %343 = arith.mulf %314, %342 : vector<64x128xf32>
    %cst_130 = arith.constant 1.000000e+00 : f32
    %344 = vector.broadcast %cst_130 : f32 to vector<64x128xf32>
    %345 = arith.addf %344, %343 : vector<64x128xf32>
    %346 = arith.mulf %307, %345 : vector<64x128xf32>
    %347 = arith.truncf %346 : vector<64x128xf32> to vector<64x128xbf16>
    %c0_131 = arith.constant 0 : index
    %c0_132 = arith.constant 0 : index
    %348 = vector.load %arg15[%c0_131, %c0_132] : memref<128x32xbf16, #tpu.memory_space<vmem>>, vector<128x32xbf16>
    %cst_133 = arith.constant dense<0.000000e+00> : vector<64x32xf32>
    %349 = tpu.matmul %347, %348, %cst_133 {dimension_numbers = #tpu.dot_dimension_numbers<[1], [0], [0], [1], [0, 0, 1, 1], [], []>} : vector<64x128xbf16>, vector<128x32xbf16>, vector<64x32xf32> -> vector<64x32xf32>
    %350 = vector.extract_strided_slice %205 {offsets = [5, 0], sizes = [1, 32], strides = [1, 1]} : vector<8x32xf32> to vector<1x32xf32>
    %351 = vector.broadcast %350 : vector<1x32xf32> to vector<64x32xf32>
    %352 = arith.addf %349, %351 : vector<64x32xf32>
    %353 = vector.extract_strided_slice %205 {offsets = [6, 0], sizes = [1, 32], strides = [1, 1]} : vector<8x32xf32> to vector<1x32xf32>
    %354 = vector.extract_strided_slice %205 {offsets = [7, 0], sizes = [1, 32], strides = [1, 1]} : vector<8x32xf32> to vector<1x32xf32>
    %cst_134 = arith.constant dense<0.000000e+00> : vector<64xf32>
    %355 = vector.multi_reduction <add>, %352, %cst_134 [1] : vector<64x32xf32> to vector<64xf32>
    %356 = vector.shape_cast %355 : vector<64xf32> to vector<64x1xf32>
    %cst_135 = arith.constant 3.200000e+01 : f32
    %357 = vector.broadcast %cst_135 : f32 to vector<64x1xf32>
    %358 = arith.divf %356, %357 : vector<64x1xf32>
    %359 = vector.broadcast %358 : vector<64x1xf32> to vector<64x32xf32>
    %360 = arith.subf %352, %359 : vector<64x32xf32>
    %361 = arith.mulf %360, %360 : vector<64x32xf32>
    %cst_136 = arith.constant dense<0.000000e+00> : vector<64xf32>
    %362 = vector.multi_reduction <add>, %361, %cst_136 [1] : vector<64x32xf32> to vector<64xf32>
    %363 = vector.shape_cast %362 : vector<64xf32> to vector<64x1xf32>
    %cst_137 = arith.constant 3.200000e+01 : f32
    %364 = vector.broadcast %cst_137 : f32 to vector<64x1xf32>
    %365 = arith.divf %363, %364 : vector<64x1xf32>
    %366 = vector.broadcast %358 : vector<64x1xf32> to vector<64x32xf32>
    %367 = arith.subf %352, %366 : vector<64x32xf32>
    %cst_138 = arith.constant 9.99999974E-6 : f32
    %368 = vector.broadcast %cst_138 : f32 to vector<64x1xf32>
    %369 = arith.addf %365, %368 : vector<64x1xf32>
    %370 = math.rsqrt %369 : vector<64x1xf32>
    %371 = vector.broadcast %370 : vector<64x1xf32> to vector<64x32xf32>
    %372 = arith.mulf %367, %371 : vector<64x32xf32>
    %373 = vector.broadcast %353 : vector<1x32xf32> to vector<64x32xf32>
    %374 = arith.mulf %372, %373 : vector<64x32xf32>
    %375 = vector.broadcast %354 : vector<1x32xf32> to vector<64x32xf32>
    %376 = arith.addf %374, %375 : vector<64x32xf32>
    %377 = arith.addf %299, %376 : vector<64x32xf32>
    %c0_139 = arith.constant 0 : index
    %c0_140 = arith.constant 0 : index
    %378 = vector.load %arg39[%c0_139, %c0_140] : memref<64x32xf32, #tpu.memory_space<vmem>>, vector<64x32xf32>
    tpu.vector_store %arg39[%c0_139, %c0_140], %377 {strides = array<i32>} : memref<64x32xf32, #tpu.memory_space<vmem>>, vector<64x32xf32>,
    %c0_141 = arith.constant 0 : index
    %c0_142 = arith.constant 0 : index
    %379 = vector.load %arg20[%c0_141, %c0_142] : memref<64x64xf32, #tpu.memory_space<vmem>>, vector<64x64xf32>
    %cst_143 = arith.constant dense<0.000000e+00> : vector<64x32xf32>
    %380 = tpu.matmul %379, %377, %cst_143 {dimension_numbers = #tpu.dot_dimension_numbers<[1], [0], [0], [1], [0, 0, 1, 1], [], []>} : vector<64x64xf32>, vector<64x32xf32>, vector<64x32xf32> -> vector<64x32xf32>
    %381 = vector.extract_strided_slice %380 {offsets = [0, 0], sizes = [16, 32], strides = [1, 1]} : vector<64x32xf32> to vector<16x32xf32>
    %382 = vector.extract_strided_slice %380 {offsets = [16, 0], sizes = [16, 32], strides = [1, 1]} : vector<64x32xf32> to vector<16x32xf32>
    %383 = vector.extract_strided_slice %380 {offsets = [32, 0], sizes = [16, 32], strides = [1, 1]} : vector<64x32xf32> to vector<16x32xf32>
    %384 = vector.extract_strided_slice %380 {offsets = [48, 0], sizes = [16, 32], strides = [1, 1]} : vector<64x32xf32> to vector<16x32xf32>
    %385 = tpu.concatenate %381, %382, %383, %384 in 1 : vector<16x32xf32>, vector<16x32xf32>, vector<16x32xf32>, vector<16x32xf32> -> vector<16x128xf32>
    %c0_144 = arith.constant 0 : index
    %c0_145 = arith.constant 0 : index
    %386 = vector.load %arg22[%c0_144, %c0_145] : memref<2x64xf32, #tpu.memory_space<vmem>>, vector<2x64xf32>
    %387 = arith.truncf %385 : vector<16x128xf32> to vector<16x128xbf16>
    %c0_146 = arith.constant 0 : index
    %c0_147 = arith.constant 0 : index
    %388 = vector.load %arg21[%c0_146, %c0_147] : memref<128x64xbf16, #tpu.memory_space<vmem>>, vector<128x64xbf16>
    %cst_148 = arith.constant dense<0.000000e+00> : vector<16x64xf32>
    %389 = tpu.matmul %387, %388, %cst_148 {dimension_numbers = #tpu.dot_dimension_numbers<[1], [0], [0], [1], [0, 0, 1, 1], [], []>} : vector<16x128xbf16>, vector<128x64xbf16>, vector<16x64xf32> -> vector<16x64xf32>
    %390 = vector.extract_strided_slice %386 {offsets = [0, 0], sizes = [1, 64], strides = [1, 1]} : vector<2x64xf32> to vector<1x64xf32>
    %391 = vector.extract_strided_slice %386 {offsets = [1, 0], sizes = [1, 64], strides = [1, 1]} : vector<2x64xf32> to vector<1x64xf32>
    %cst_149 = arith.constant dense<0.000000e+00> : vector<16xf32>
    %392 = vector.multi_reduction <add>, %389, %cst_149 [1] : vector<16x64xf32> to vector<16xf32>
    %393 = vector.shape_cast %392 : vector<16xf32> to vector<16x1xf32>
    %cst_150 = arith.constant 6.400000e+01 : f32
    %394 = vector.broadcast %cst_150 : f32 to vector<16x1xf32>
    %395 = arith.divf %393, %394 : vector<16x1xf32>
    %396 = vector.broadcast %395 : vector<16x1xf32> to vector<16x64xf32>
    %397 = arith.subf %389, %396 : vector<16x64xf32>
    %398 = arith.mulf %397, %397 : vector<16x64xf32>
    %cst_151 = arith.constant dense<0.000000e+00> : vector<16xf32>
    %399 = vector.multi_reduction <add>, %398, %cst_151 [1] : vector<16x64xf32> to vector<16xf32>
    %400 = vector.shape_cast %399 : vector<16xf32> to vector<16x1xf32>
    %cst_152 = arith.constant 6.400000e+01 : f32
    %401 = vector.broadcast %cst_152 : f32 to vector<16x1xf32>
    %402 = arith.divf %400, %401 : vector<16x1xf32>
    %403 = vector.broadcast %395 : vector<16x1xf32> to vector<16x64xf32>
    %404 = arith.subf %389, %403 : vector<16x64xf32>
    %cst_153 = arith.constant 9.99999974E-6 : f32
    %405 = vector.broadcast %cst_153 : f32 to vector<16x1xf32>
    %406 = arith.addf %402, %405 : vector<16x1xf32>
    %407 = math.rsqrt %406 : vector<16x1xf32>
    %408 = vector.broadcast %407 : vector<16x1xf32> to vector<16x64xf32>
    %409 = arith.mulf %404, %408 : vector<16x64xf32>
    %410 = vector.broadcast %390 : vector<1x64xf32> to vector<16x64xf32>
    %411 = arith.mulf %409, %410 : vector<16x64xf32>
    %412 = vector.broadcast %391 : vector<1x64xf32> to vector<16x64xf32>
    %413 = arith.addf %411, %412 : vector<16x64xf32>
    %c0_154 = arith.constant 0 : index
    %c0_155 = arith.constant 0 : index
    %414 = vector.load %arg27[%c0_154, %c0_155] : memref<8x64xf32, #tpu.memory_space<vmem>>, vector<8x64xf32>
    %415 = arith.truncf %413 : vector<16x64xf32> to vector<16x64xbf16>
    %c0_156 = arith.constant 0 : index
    %c0_157 = arith.constant 0 : index
    %c0_158 = arith.constant 0 : index
    %416 = vector.load %arg23[%c0_156, %c0_157, %c0_158] : memref<3x64x64xbf16, #tpu.memory_space<vmem>>, vector<1x64x64xbf16>
    %417 = vector.shape_cast %416 : vector<1x64x64xbf16> to vector<64x64xbf16>
    %cst_159 = arith.constant dense<0.000000e+00> : vector<16x64xf32>
    %418 = tpu.matmul %415, %417, %cst_159 {dimension_numbers = #tpu.dot_dimension_numbers<[1], [0], [0], [1], [0, 0, 1, 1], [], []>} : vector<16x64xbf16>, vector<64x64xbf16>, vector<16x64xf32> -> vector<16x64xf32>
    %419 = vector.extract_strided_slice %414 {offsets = [0, 0], sizes = [1, 64], strides = [1, 1]} : vector<8x64xf32> to vector<1x64xf32>
    %420 = vector.broadcast %419 : vector<1x64xf32> to vector<16x64xf32>
    %421 = arith.addf %418, %420 : vector<16x64xf32>
    %c1_160 = arith.constant 1 : index
    %c0_161 = arith.constant 0 : index
    %c0_162 = arith.constant 0 : index
    %422 = vector.load %arg23[%c1_160, %c0_161, %c0_162] : memref<3x64x64xbf16, #tpu.memory_space<vmem>>, vector<1x64x64xbf16>
    %423 = vector.shape_cast %422 : vector<1x64x64xbf16> to vector<64x64xbf16>
    %cst_163 = arith.constant dense<0.000000e+00> : vector<16x64xf32>
    %424 = tpu.matmul %415, %423, %cst_163 {dimension_numbers = #tpu.dot_dimension_numbers<[1], [0], [0], [1], [0, 0, 1, 1], [], []>} : vector<16x64xbf16>, vector<64x64xbf16>, vector<16x64xf32> -> vector<16x64xf32>
    %c2_164 = arith.constant 2 : index
    %c0_165 = arith.constant 0 : index
    %c0_166 = arith.constant 0 : index
    %425 = vector.load %arg23[%c2_164, %c0_165, %c0_166] : memref<3x64x64xbf16, #tpu.memory_space<vmem>>, vector<1x64x64xbf16>
    %426 = vector.shape_cast %425 : vector<1x64x64xbf16> to vector<64x64xbf16>
    %cst_167 = arith.constant dense<0.000000e+00> : vector<16x64xf32>
    %427 = tpu.matmul %415, %426, %cst_167 {dimension_numbers = #tpu.dot_dimension_numbers<[1], [0], [0], [1], [0, 0, 1, 1], [], []>} : vector<16x64xbf16>, vector<64x64xbf16>, vector<16x64xf32> -> vector<16x64xf32>
    %428 = vector.extract_strided_slice %414 {offsets = [1, 0], sizes = [1, 64], strides = [1, 1]} : vector<8x64xf32> to vector<1x64xf32>
    %429 = vector.broadcast %428 : vector<1x64xf32> to vector<16x64xf32>
    %430 = arith.addf %427, %429 : vector<16x64xf32>
    %431 = vector.extract_strided_slice %421 {offsets = [0, 0], sizes = [16, 16], strides = [1, 1]} : vector<16x64xf32> to vector<16x16xf32>
    %432 = vector.extract_strided_slice %421 {offsets = [0, 16], sizes = [16, 16], strides = [1, 1]} : vector<16x64xf32> to vector<16x16xf32>
    %433 = vector.extract_strided_slice %421 {offsets = [0, 32], sizes = [16, 16], strides = [1, 1]} : vector<16x64xf32> to vector<16x16xf32>
    %434 = vector.extract_strided_slice %421 {offsets = [0, 48], sizes = [16, 16], strides = [1, 1]} : vector<16x64xf32> to vector<16x16xf32>
    %435 = tpu.concatenate %431, %432, %433, %434 in 0 : vector<16x16xf32>, vector<16x16xf32>, vector<16x16xf32>, vector<16x16xf32> -> vector<64x16xf32>
    %436 = vector.extract_strided_slice %424 {offsets = [0, 0], sizes = [16, 16], strides = [1, 1]} : vector<16x64xf32> to vector<16x16xf32>
    %437 = vector.extract_strided_slice %424 {offsets = [0, 16], sizes = [16, 16], strides = [1, 1]} : vector<16x64xf32> to vector<16x16xf32>
    %438 = vector.extract_strided_slice %424 {offsets = [0, 32], sizes = [16, 16], strides = [1, 1]} : vector<16x64xf32> to vector<16x16xf32>
    %439 = vector.extract_strided_slice %424 {offsets = [0, 48], sizes = [16, 16], strides = [1, 1]} : vector<16x64xf32> to vector<16x16xf32>
    %440 = tpu.concatenate %436, %437, %438, %439 in 0 : vector<16x16xf32>, vector<16x16xf32>, vector<16x16xf32>, vector<16x16xf32> -> vector<64x16xf32>
    %441 = vector.extract_strided_slice %430 {offsets = [0, 0], sizes = [16, 16], strides = [1, 1]} : vector<16x64xf32> to vector<16x16xf32>
    %442 = vector.extract_strided_slice %430 {offsets = [0, 16], sizes = [16, 16], strides = [1, 1]} : vector<16x64xf32> to vector<16x16xf32>
    %443 = vector.extract_strided_slice %430 {offsets = [0, 32], sizes = [16, 16], strides = [1, 1]} : vector<16x64xf32> to vector<16x16xf32>
    %444 = vector.extract_strided_slice %430 {offsets = [0, 48], sizes = [16, 16], strides = [1, 1]} : vector<16x64xf32> to vector<16x16xf32>
    %445 = tpu.concatenate %441, %442, %443, %444 in 0 : vector<16x16xf32>, vector<16x16xf32>, vector<16x16xf32>, vector<16x16xf32> -> vector<64x16xf32>
    %446 = arith.mulf %435, %435 : vector<64x16xf32>
    %cst_168 = arith.constant dense<0.000000e+00> : vector<64xf32>
    %447 = vector.multi_reduction <add>, %446, %cst_168 [1] : vector<64x16xf32> to vector<64xf32>
    %448 = vector.shape_cast %447 : vector<64xf32> to vector<64x1xf32>
    %cst_169 = arith.constant 1.000000e-24 : f32
    %449 = vector.broadcast %cst_169 : f32 to vector<64x1xf32>
    %450 = arith.maximumf %448, %449 : vector<64x1xf32>
    %451 = math.rsqrt %450 : vector<64x1xf32>
    %452 = vector.broadcast %451 : vector<64x1xf32> to vector<64x16xf32>
    %453 = arith.mulf %435, %452 : vector<64x16xf32>
    %c0_170 = arith.constant 0 : index
    %c0_171 = arith.constant 0 : index
    %454 = vector.load %arg30[%c0_170, %c0_171] : memref<64x1xf32, #tpu.memory_space<vmem>>, vector<64x1xf32>
    %455 = vector.broadcast %454 : vector<64x1xf32> to vector<64x16xf32>
    %456 = arith.mulf %453, %455 : vector<64x16xf32>
    %457 = arith.mulf %440, %440 : vector<64x16xf32>
    %cst_172 = arith.constant dense<0.000000e+00> : vector<64xf32>
    %458 = vector.multi_reduction <add>, %457, %cst_172 [1] : vector<64x16xf32> to vector<64xf32>
    %459 = vector.shape_cast %458 : vector<64xf32> to vector<64x1xf32>
    %cst_173 = arith.constant 1.000000e-24 : f32
    %460 = vector.broadcast %cst_173 : f32 to vector<64x1xf32>
    %461 = arith.maximumf %459, %460 : vector<64x1xf32>
    %462 = math.rsqrt %461 : vector<64x1xf32>
    %463 = vector.broadcast %462 : vector<64x1xf32> to vector<64x16xf32>
    %464 = arith.mulf %440, %463 : vector<64x16xf32>
    %cst_174 = arith.constant dense<0.000000e+00> : vector<64x64xf32>
    %465 = tpu.matmul %456, %464, %cst_174 {dimension_numbers = #tpu.dot_dimension_numbers<[1], [1], [0], [0], [0, 0, 1, 0], [], []>} : vector<64x16xf32>, vector<64x16xf32>, vector<64x64xf32> -> vector<64x64xf32>
    %c0_175 = arith.constant 0 : index
    %c0_176 = arith.constant 0 : index
    %466 = vector.load %arg29[%c0_175, %c0_176] : memref<64x64xf32, #tpu.memory_space<vmem>>, vector<64x64xf32>
    %467 = arith.addf %465, %466 : vector<64x64xf32>
    %cst_177 = arith.constant dense<0xFF800000> : vector<64xf32>
    %468 = vector.multi_reduction <maximumf>, %467, %cst_177 [1] : vector<64x64xf32> to vector<64xf32>
    %469 = vector.shape_cast %468 : vector<64xf32> to vector<64x1xf32>
    %470 = vector.broadcast %469 : vector<64x1xf32> to vector<64x64xf32>
    %471 = arith.subf %467, %470 : vector<64x64xf32>
    %472 = math.exp %471 : vector<64x64xf32>
    %cst_178 = arith.constant dense<0.000000e+00> : vector<64xf32>
    %473 = vector.multi_reduction <add>, %472, %cst_178 [1] : vector<64x64xf32> to vector<64xf32>
    %474 = vector.shape_cast %473 : vector<64xf32> to vector<64x1xf32>
    %475 = vector.broadcast %474 : vector<64x1xf32> to vector<64x64xf32>
    %476 = arith.divf %472, %475 : vector<64x64xf32>
    %cst_179 = arith.constant dense<0.000000e+00> : vector<64x16xf32>
    %477 = tpu.matmul %476, %445, %cst_179 {dimension_numbers = #tpu.dot_dimension_numbers<[1], [0], [0], [1], [0, 0, 1, 1], [], []>} : vector<64x64xf32>, vector<64x16xf32>, vector<64x16xf32> -> vector<64x16xf32>
    %478 = vector.extract_strided_slice %414 {offsets = [2, 0], sizes = [1, 64], strides = [1, 1]} : vector<8x64xf32> to vector<1x64xf32>
    %479 = vector.extract_strided_slice %477 {offsets = [0, 0], sizes = [16, 16], strides = [1, 1]} : vector<64x16xf32> to vector<16x16xf32>
    %480 = arith.truncf %479 : vector<16x16xf32> to vector<16x16xbf16>
    %c0_180 = arith.constant 0 : index
    %c0_181 = arith.constant 0 : index
    %481 = vector.load %arg24[%c0_180, %c0_181] : memref<64x64xbf16, #tpu.memory_space<vmem>>, vector<16x64xbf16>
    %cst_182 = arith.constant dense<0.000000e+00> : vector<16x64xf32>
    %482 = tpu.matmul %480, %481, %cst_182 {dimension_numbers = #tpu.dot_dimension_numbers<[1], [0], [0], [1], [0, 0, 1, 1], [], []>} : vector<16x16xbf16>, vector<16x64xbf16>, vector<16x64xf32> -> vector<16x64xf32>
    %483 = vector.broadcast %478 : vector<1x64xf32> to vector<16x64xf32>
    %484 = arith.addf %483, %482 : vector<16x64xf32>
    %485 = vector.extract_strided_slice %477 {offsets = [16, 0], sizes = [16, 16], strides = [1, 1]} : vector<64x16xf32> to vector<16x16xf32>
    %486 = arith.truncf %485 : vector<16x16xf32> to vector<16x16xbf16>
    %c16_183 = arith.constant 16 : index
    %c0_184 = arith.constant 0 : index
    %487 = vector.load %arg24[%c16_183, %c0_184] : memref<64x64xbf16, #tpu.memory_space<vmem>>, vector<16x64xbf16>
    %cst_185 = arith.constant dense<0.000000e+00> : vector<16x64xf32>
    %488 = tpu.matmul %486, %487, %cst_185 {dimension_numbers = #tpu.dot_dimension_numbers<[1], [0], [0], [1], [0, 0, 1, 1], [], []>} : vector<16x16xbf16>, vector<16x64xbf16>, vector<16x64xf32> -> vector<16x64xf32>
    %489 = arith.addf %484, %488 : vector<16x64xf32>
    %490 = vector.extract_strided_slice %477 {offsets = [32, 0], sizes = [16, 16], strides = [1, 1]} : vector<64x16xf32> to vector<16x16xf32>
    %491 = arith.truncf %490 : vector<16x16xf32> to vector<16x16xbf16>
    %c32 = arith.constant 32 : index
    %c0_186 = arith.constant 0 : index
    %492 = vector.load %arg24[%c32, %c0_186] : memref<64x64xbf16, #tpu.memory_space<vmem>>, vector<16x64xbf16>
    %cst_187 = arith.constant dense<0.000000e+00> : vector<16x64xf32>
    %493 = tpu.matmul %491, %492, %cst_187 {dimension_numbers = #tpu.dot_dimension_numbers<[1], [0], [0], [1], [0, 0, 1, 1], [], []>} : vector<16x16xbf16>, vector<16x64xbf16>, vector<16x64xf32> -> vector<16x64xf32>
    %494 = arith.addf %489, %493 : vector<16x64xf32>
    %495 = vector.extract_strided_slice %477 {offsets = [48, 0], sizes = [16, 16], strides = [1, 1]} : vector<64x16xf32> to vector<16x16xf32>
    %496 = arith.truncf %495 : vector<16x16xf32> to vector<16x16xbf16>
    %c48 = arith.constant 48 : index
    %c0_188 = arith.constant 0 : index
    %497 = vector.load %arg24[%c48, %c0_188] : memref<64x64xbf16, #tpu.memory_space<vmem>>, vector<16x64xbf16>
    %cst_189 = arith.constant dense<0.000000e+00> : vector<16x64xf32>
    %498 = tpu.matmul %496, %497, %cst_189 {dimension_numbers = #tpu.dot_dimension_numbers<[1], [0], [0], [1], [0, 0, 1, 1], [], []>} : vector<16x16xbf16>, vector<16x64xbf16>, vector<16x64xf32> -> vector<16x64xf32>
    %499 = arith.addf %494, %498 : vector<16x64xf32>
    %500 = vector.extract_strided_slice %414 {offsets = [3, 0], sizes = [1, 64], strides = [1, 1]} : vector<8x64xf32> to vector<1x64xf32>
    %501 = vector.extract_strided_slice %414 {offsets = [4, 0], sizes = [1, 64], strides = [1, 1]} : vector<8x64xf32> to vector<1x64xf32>
    %cst_190 = arith.constant dense<0.000000e+00> : vector<16xf32>
    %502 = vector.multi_reduction <add>, %499, %cst_190 [1] : vector<16x64xf32> to vector<16xf32>
    %503 = vector.shape_cast %502 : vector<16xf32> to vector<16x1xf32>
    %cst_191 = arith.constant 6.400000e+01 : f32
    %504 = vector.broadcast %cst_191 : f32 to vector<16x1xf32>
    %505 = arith.divf %503, %504 : vector<16x1xf32>
    %506 = vector.broadcast %505 : vector<16x1xf32> to vector<16x64xf32>
    %507 = arith.subf %499, %506 : vector<16x64xf32>
    %508 = arith.mulf %507, %507 : vector<16x64xf32>
    %cst_192 = arith.constant dense<0.000000e+00> : vector<16xf32>
    %509 = vector.multi_reduction <add>, %508, %cst_192 [1] : vector<16x64xf32> to vector<16xf32>
    %510 = vector.shape_cast %509 : vector<16xf32> to vector<16x1xf32>
    %cst_193 = arith.constant 6.400000e+01 : f32
    %511 = vector.broadcast %cst_193 : f32 to vector<16x1xf32>
    %512 = arith.divf %510, %511 : vector<16x1xf32>
    %513 = vector.broadcast %505 : vector<16x1xf32> to vector<16x64xf32>
    %514 = arith.subf %499, %513 : vector<16x64xf32>
    %cst_194 = arith.constant 9.99999974E-6 : f32
    %515 = vector.broadcast %cst_194 : f32 to vector<16x1xf32>
    %516 = arith.addf %512, %515 : vector<16x1xf32>
    %517 = math.rsqrt %516 : vector<16x1xf32>
    %518 = vector.broadcast %517 : vector<16x1xf32> to vector<16x64xf32>
    %519 = arith.mulf %514, %518 : vector<16x64xf32>
    %520 = vector.broadcast %500 : vector<1x64xf32> to vector<16x64xf32>
    %521 = arith.mulf %519, %520 : vector<16x64xf32>
    %522 = vector.broadcast %501 : vector<1x64xf32> to vector<16x64xf32>
    %523 = arith.addf %521, %522 : vector<16x64xf32>
    %524 = arith.addf %413, %523 : vector<16x64xf32>
    %525 = arith.truncf %524 : vector<16x64xf32> to vector<16x64xbf16>
    %c0_195 = arith.constant 0 : index
    %c0_196 = arith.constant 0 : index
    %526 = vector.load %arg25[%c0_195, %c0_196] : memref<64x256xbf16, #tpu.memory_space<vmem>>, vector<64x256xbf16>
    %cst_197 = arith.constant dense<0.000000e+00> : vector<16x256xf32>
    %527 = tpu.matmul %525, %526, %cst_197 {dimension_numbers = #tpu.dot_dimension_numbers<[1], [0], [0], [1], [0, 0, 1, 1], [], []>} : vector<16x64xbf16>, vector<64x256xbf16>, vector<16x256xf32> -> vector<16x256xf32>
    %c0_198 = arith.constant 0 : index
    %c0_199 = arith.constant 0 : index
    %528 = vector.load %arg28[%c0_198, %c0_199] : memref<1x256xf32, #tpu.memory_space<vmem>>, vector<1x256xf32>
    %529 = vector.broadcast %528 : vector<1x256xf32> to vector<16x256xf32>
    %530 = arith.addf %527, %529 : vector<16x256xf32>
    %cst_200 = arith.constant 5.000000e-01 : f32
    %531 = vector.broadcast %cst_200 : f32 to vector<16x256xf32>
    %532 = arith.mulf %531, %530 : vector<16x256xf32>
    %cst_201 = arith.constant 0.707106769 : f32
    %533 = vector.broadcast %cst_201 : f32 to vector<16x256xf32>
    %534 = arith.mulf %530, %533 : vector<16x256xf32>
    %cst_202 = arith.constant 0.000000e+00 : f32
    %535 = vector.broadcast %cst_202 : f32 to vector<16x256xf32>
    %536 = arith.cmpf olt, %534, %535 : vector<16x256xf32>
    %cst_203 = arith.constant -1.000000e+00 : f32
    %cst_204 = arith.constant 1.000000e+00 : f32
    %537 = vector.broadcast %cst_203 : f32 to vector<16x256xf32>
    %538 = vector.broadcast %cst_204 : f32 to vector<16x256xf32>
    %539 = arith.select %536, %537, %538 : vector<16x256xi1>, vector<16x256xf32>
    %540 = math.absf %534 : vector<16x256xf32>
    %cst_205 = arith.constant 0.327591091 : f32
    %541 = vector.broadcast %cst_205 : f32 to vector<16x256xf32>
    %542 = arith.mulf %541, %540 : vector<16x256xf32>
    %cst_206 = arith.constant 1.000000e+00 : f32
    %543 = vector.broadcast %cst_206 : f32 to vector<16x256xf32>
    %544 = arith.addf %543, %542 : vector<16x256xf32>
    %cst_207 = arith.constant 1.000000e+00 : f32
    %545 = vector.broadcast %cst_207 : f32 to vector<16x256xf32>
    %546 = arith.divf %545, %544 : vector<16x256xf32>
    %cst_208 = arith.constant 1.06140542 : f32
    %547 = vector.broadcast %cst_208 : f32 to vector<16x256xf32>
    %548 = arith.mulf %547, %546 : vector<16x256xf32>
    %cst_209 = arith.constant -1.45315206 : f32
    %549 = vector.broadcast %cst_209 : f32 to vector<16x256xf32>
    %550 = arith.addf %548, %549 : vector<16x256xf32>
    %551 = arith.mulf %550, %546 : vector<16x256xf32>
    %cst_210 = arith.constant 1.42141378 : f32
    %552 = vector.broadcast %cst_210 : f32 to vector<16x256xf32>
    %553 = arith.addf %551, %552 : vector<16x256xf32>
    %554 = arith.mulf %553, %546 : vector<16x256xf32>
    %cst_211 = arith.constant -0.284496725 : f32
    %555 = vector.broadcast %cst_211 : f32 to vector<16x256xf32>
    %556 = arith.addf %554, %555 : vector<16x256xf32>
    %557 = arith.mulf %556, %546 : vector<16x256xf32>
    %cst_212 = arith.constant 0.254829586 : f32
    %558 = vector.broadcast %cst_212 : f32 to vector<16x256xf32>
    %559 = arith.addf %557, %558 : vector<16x256xf32>
    %560 = arith.mulf %559, %546 : vector<16x256xf32>
    %cst_213 = arith.constant 0.000000e+00 : f32
    %561 = vector.broadcast %cst_213 : f32 to vector<16x256xf32>
    %562 = arith.subf %561, %540 : vector<16x256xf32>
    %563 = arith.mulf %562, %540 : vector<16x256xf32>
    %564 = math.exp %563 : vector<16x256xf32>
    %565 = arith.mulf %560, %564 : vector<16x256xf32>
    %cst_214 = arith.constant 1.000000e+00 : f32
    %566 = vector.broadcast %cst_214 : f32 to vector<16x256xf32>
    %567 = arith.subf %566, %565 : vector<16x256xf32>
    %568 = arith.mulf %539, %567 : vector<16x256xf32>
    %cst_215 = arith.constant 1.000000e+00 : f32
    %569 = vector.broadcast %cst_215 : f32 to vector<16x256xf32>
    %570 = arith.addf %569, %568 : vector<16x256xf32>
    %571 = arith.mulf %532, %570 : vector<16x256xf32>
    %572 = arith.truncf %571 : vector<16x256xf32> to vector<16x256xbf16>
    %c0_216 = arith.constant 0 : index
    %c0_217 = arith.constant 0 : index
    %573 = vector.load %arg26[%c0_216, %c0_217] : memref<256x64xbf16, #tpu.memory_space<vmem>>, vector<256x64xbf16>
    %cst_218 = arith.constant dense<0.000000e+00> : vector<16x64xf32>
    %574 = tpu.matmul %572, %573, %cst_218 {dimension_numbers = #tpu.dot_dimension_numbers<[1], [0], [0], [1], [0, 0, 1, 1], [], []>} : vector<16x256xbf16>, vector<256x64xbf16>, vector<16x64xf32> -> vector<16x64xf32>
    %575 = vector.extract_strided_slice %414 {offsets = [5, 0], sizes = [1, 64], strides = [1, 1]} : vector<8x64xf32> to vector<1x64xf32>
    %576 = vector.broadcast %575 : vector<1x64xf32> to vector<16x64xf32>
    %577 = arith.addf %574, %576 : vector<16x64xf32>
    %578 = vector.extract_strided_slice %414 {offsets = [6, 0], sizes = [1, 64], strides = [1, 1]} : vector<8x64xf32> to vector<1x64xf32>
    %579 = vector.extract_strided_slice %414 {offsets = [7, 0], sizes = [1, 64], strides = [1, 1]} : vector<8x64xf32> to vector<1x64xf32>
    %cst_219 = arith.constant dense<0.000000e+00> : vector<16xf32>
    %580 = vector.multi_reduction <add>, %577, %cst_219 [1] : vector<16x64xf32> to vector<16xf32>
    %581 = vector.shape_cast %580 : vector<16xf32> to vector<16x1xf32>
    %cst_220 = arith.constant 6.400000e+01 : f32
    %582 = vector.broadcast %cst_220 : f32 to vector<16x1xf32>
    %583 = arith.divf %581, %582 : vector<16x1xf32>
    %584 = vector.broadcast %583 : vector<16x1xf32> to vector<16x64xf32>
    %585 = arith.subf %577, %584 : vector<16x64xf32>
    %586 = arith.mulf %585, %585 : vector<16x64xf32>
    %cst_221 = arith.constant dense<0.000000e+00> : vector<16xf32>
    %587 = vector.multi_reduction <add>, %586, %cst_221 [1] : vector<16x64xf32> to vector<16xf32>
    %588 = vector.shape_cast %587 : vector<16xf32> to vector<16x1xf32>
    %cst_222 = arith.constant 6.400000e+01 : f32
    %589 = vector.broadcast %cst_222 : f32 to vector<16x1xf32>
    %590 = arith.divf %588, %589 : vector<16x1xf32>
    %591 = vector.broadcast %583 : vector<16x1xf32> to vector<16x64xf32>
    %592 = arith.subf %577, %591 : vector<16x64xf32>
    %cst_223 = arith.constant 9.99999974E-6 : f32
    %593 = vector.broadcast %cst_223 : f32 to vector<16x1xf32>
    %594 = arith.addf %590, %593 : vector<16x1xf32>
    %595 = math.rsqrt %594 : vector<16x1xf32>
    %596 = vector.broadcast %595 : vector<16x1xf32> to vector<16x64xf32>
    %597 = arith.mulf %592, %596 : vector<16x64xf32>
    %598 = vector.broadcast %578 : vector<1x64xf32> to vector<16x64xf32>
    %599 = arith.mulf %597, %598 : vector<16x64xf32>
    %600 = vector.broadcast %579 : vector<1x64xf32> to vector<16x64xf32>
    %601 = arith.addf %599, %600 : vector<16x64xf32>
    %602 = arith.addf %524, %601 : vector<16x64xf32>
    %c0_224 = arith.constant 0 : index
    %c0_225 = arith.constant 0 : index
    %603 = vector.load %arg35[%c0_224, %c0_225] : memref<8x64xf32, #tpu.memory_space<vmem>>, vector<8x64xf32>
    %604 = arith.truncf %602 : vector<16x64xf32> to vector<16x64xbf16>
    %c0_226 = arith.constant 0 : index
    %c0_227 = arith.constant 0 : index
    %c0_228 = arith.constant 0 : index
    %605 = vector.load %arg31[%c0_226, %c0_227, %c0_228] : memref<3x64x64xbf16, #tpu.memory_space<vmem>>, vector<1x64x64xbf16>
    %606 = vector.shape_cast %605 : vector<1x64x64xbf16> to vector<64x64xbf16>
    %cst_229 = arith.constant dense<0.000000e+00> : vector<16x64xf32>
    %607 = tpu.matmul %604, %606, %cst_229 {dimension_numbers = #tpu.dot_dimension_numbers<[1], [0], [0], [1], [0, 0, 1, 1], [], []>} : vector<16x64xbf16>, vector<64x64xbf16>, vector<16x64xf32> -> vector<16x64xf32>
    %608 = vector.extract_strided_slice %603 {offsets = [0, 0], sizes = [1, 64], strides = [1, 1]} : vector<8x64xf32> to vector<1x64xf32>
    %609 = vector.broadcast %608 : vector<1x64xf32> to vector<16x64xf32>
    %610 = arith.addf %607, %609 : vector<16x64xf32>
    %c1_230 = arith.constant 1 : index
    %c0_231 = arith.constant 0 : index
    %c0_232 = arith.constant 0 : index
    %611 = vector.load %arg31[%c1_230, %c0_231, %c0_232] : memref<3x64x64xbf16, #tpu.memory_space<vmem>>, vector<1x64x64xbf16>
    %612 = vector.shape_cast %611 : vector<1x64x64xbf16> to vector<64x64xbf16>
    %cst_233 = arith.constant dense<0.000000e+00> : vector<16x64xf32>
    %613 = tpu.matmul %604, %612, %cst_233 {dimension_numbers = #tpu.dot_dimension_numbers<[1], [0], [0], [1], [0, 0, 1, 1], [], []>} : vector<16x64xbf16>, vector<64x64xbf16>, vector<16x64xf32> -> vector<16x64xf32>
    %c2_234 = arith.constant 2 : index
    %c0_235 = arith.constant 0 : index
    %c0_236 = arith.constant 0 : index
    %614 = vector.load %arg31[%c2_234, %c0_235, %c0_236] : memref<3x64x64xbf16, #tpu.memory_space<vmem>>, vector<1x64x64xbf16>
    %615 = vector.shape_cast %614 : vector<1x64x64xbf16> to vector<64x64xbf16>
    %cst_237 = arith.constant dense<0.000000e+00> : vector<16x64xf32>
    %616 = tpu.matmul %604, %615, %cst_237 {dimension_numbers = #tpu.dot_dimension_numbers<[1], [0], [0], [1], [0, 0, 1, 1], [], []>} : vector<16x64xbf16>, vector<64x64xbf16>, vector<16x64xf32> -> vector<16x64xf32>
    %617 = vector.extract_strided_slice %603 {offsets = [1, 0], sizes = [1, 64], strides = [1, 1]} : vector<8x64xf32> to vector<1x64xf32>
    %618 = vector.broadcast %617 : vector<1x64xf32> to vector<16x64xf32>
    %619 = arith.addf %616, %618 : vector<16x64xf32>
    %620 = vector.extract_strided_slice %610 {offsets = [0, 0], sizes = [16, 16], strides = [1, 1]} : vector<16x64xf32> to vector<16x16xf32>
    %621 = vector.extract_strided_slice %610 {offsets = [0, 16], sizes = [16, 16], strides = [1, 1]} : vector<16x64xf32> to vector<16x16xf32>
    %622 = vector.extract_strided_slice %610 {offsets = [0, 32], sizes = [16, 16], strides = [1, 1]} : vector<16x64xf32> to vector<16x16xf32>
    %623 = vector.extract_strided_slice %610 {offsets = [0, 48], sizes = [16, 16], strides = [1, 1]} : vector<16x64xf32> to vector<16x16xf32>
    %624 = tpu.concatenate %620, %621, %622, %623 in 0 : vector<16x16xf32>, vector<16x16xf32>, vector<16x16xf32>, vector<16x16xf32> -> vector<64x16xf32>
    %625 = vector.extract_strided_slice %613 {offsets = [0, 0], sizes = [16, 16], strides = [1, 1]} : vector<16x64xf32> to vector<16x16xf32>
    %626 = vector.extract_strided_slice %613 {offsets = [0, 16], sizes = [16, 16], strides = [1, 1]} : vector<16x64xf32> to vector<16x16xf32>
    %627 = vector.extract_strided_slice %613 {offsets = [0, 32], sizes = [16, 16], strides = [1, 1]} : vector<16x64xf32> to vector<16x16xf32>
    %628 = vector.extract_strided_slice %613 {offsets = [0, 48], sizes = [16, 16], strides = [1, 1]} : vector<16x64xf32> to vector<16x16xf32>
    %629 = tpu.concatenate %625, %626, %627, %628 in 0 : vector<16x16xf32>, vector<16x16xf32>, vector<16x16xf32>, vector<16x16xf32> -> vector<64x16xf32>
    %630 = vector.extract_strided_slice %619 {offsets = [0, 0], sizes = [16, 16], strides = [1, 1]} : vector<16x64xf32> to vector<16x16xf32>
    %631 = vector.extract_strided_slice %619 {offsets = [0, 16], sizes = [16, 16], strides = [1, 1]} : vector<16x64xf32> to vector<16x16xf32>
    %632 = vector.extract_strided_slice %619 {offsets = [0, 32], sizes = [16, 16], strides = [1, 1]} : vector<16x64xf32> to vector<16x16xf32>
    %633 = vector.extract_strided_slice %619 {offsets = [0, 48], sizes = [16, 16], strides = [1, 1]} : vector<16x64xf32> to vector<16x16xf32>
    %634 = tpu.concatenate %630, %631, %632, %633 in 0 : vector<16x16xf32>, vector<16x16xf32>, vector<16x16xf32>, vector<16x16xf32> -> vector<64x16xf32>
    %635 = arith.mulf %624, %624 : vector<64x16xf32>
    %cst_238 = arith.constant dense<0.000000e+00> : vector<64xf32>
    %636 = vector.multi_reduction <add>, %635, %cst_238 [1] : vector<64x16xf32> to vector<64xf32>
    %637 = vector.shape_cast %636 : vector<64xf32> to vector<64x1xf32>
    %cst_239 = arith.constant 1.000000e-24 : f32
    %638 = vector.broadcast %cst_239 : f32 to vector<64x1xf32>
    %639 = arith.maximumf %637, %638 : vector<64x1xf32>
    %640 = math.rsqrt %639 : vector<64x1xf32>
    %641 = vector.broadcast %640 : vector<64x1xf32> to vector<64x16xf32>
    %642 = arith.mulf %624, %641 : vector<64x16xf32>
    %c0_240 = arith.constant 0 : index
    %c0_241 = arith.constant 0 : index
    %643 = vector.load %arg38[%c0_240, %c0_241] : memref<64x1xf32, #tpu.memory_space<vmem>>, vector<64x1xf32>
    %644 = vector.broadcast %643 : vector<64x1xf32> to vector<64x16xf32>
    %645 = arith.mulf %642, %644 : vector<64x16xf32>
    %646 = arith.mulf %629, %629 : vector<64x16xf32>
    %cst_242 = arith.constant dense<0.000000e+00> : vector<64xf32>
    %647 = vector.multi_reduction <add>, %646, %cst_242 [1] : vector<64x16xf32> to vector<64xf32>
    %648 = vector.shape_cast %647 : vector<64xf32> to vector<64x1xf32>
    %cst_243 = arith.constant 1.000000e-24 : f32
    %649 = vector.broadcast %cst_243 : f32 to vector<64x1xf32>
    %650 = arith.maximumf %648, %649 : vector<64x1xf32>
    %651 = math.rsqrt %650 : vector<64x1xf32>
    %652 = vector.broadcast %651 : vector<64x1xf32> to vector<64x16xf32>
    %653 = arith.mulf %629, %652 : vector<64x16xf32>
    %cst_244 = arith.constant dense<0.000000e+00> : vector<64x64xf32>
    %654 = tpu.matmul %645, %653, %cst_244 {dimension_numbers = #tpu.dot_dimension_numbers<[1], [1], [0], [0], [0, 0, 1, 0], [], []>} : vector<64x16xf32>, vector<64x16xf32>, vector<64x64xf32> -> vector<64x64xf32>
    %c0_245 = arith.constant 0 : index
    %c0_246 = arith.constant 0 : index
    %655 = vector.load %arg37[%c0_245, %c0_246] : memref<64x64xf32, #tpu.memory_space<vmem>>, vector<64x64xf32>
    %656 = arith.addf %654, %655 : vector<64x64xf32>
    %cst_247 = arith.constant dense<0xFF800000> : vector<64xf32>
    %657 = vector.multi_reduction <maximumf>, %656, %cst_247 [1] : vector<64x64xf32> to vector<64xf32>
    %658 = vector.shape_cast %657 : vector<64xf32> to vector<64x1xf32>
    %659 = vector.broadcast %658 : vector<64x1xf32> to vector<64x64xf32>
    %660 = arith.subf %656, %659 : vector<64x64xf32>
    %661 = math.exp %660 : vector<64x64xf32>
    %cst_248 = arith.constant dense<0.000000e+00> : vector<64xf32>
    %662 = vector.multi_reduction <add>, %661, %cst_248 [1] : vector<64x64xf32> to vector<64xf32>
    %663 = vector.shape_cast %662 : vector<64xf32> to vector<64x1xf32>
    %664 = vector.broadcast %663 : vector<64x1xf32> to vector<64x64xf32>
    %665 = arith.divf %661, %664 : vector<64x64xf32>
    %cst_249 = arith.constant dense<0.000000e+00> : vector<64x16xf32>
    %666 = tpu.matmul %665, %634, %cst_249 {dimension_numbers = #tpu.dot_dimension_numbers<[1], [0], [0], [1], [0, 0, 1, 1], [], []>} : vector<64x64xf32>, vector<64x16xf32>, vector<64x16xf32> -> vector<64x16xf32>
    %667 = vector.extract_strided_slice %603 {offsets = [2, 0], sizes = [1, 64], strides = [1, 1]} : vector<8x64xf32> to vector<1x64xf32>
    %668 = vector.extract_strided_slice %666 {offsets = [0, 0], sizes = [16, 16], strides = [1, 1]} : vector<64x16xf32> to vector<16x16xf32>
    %669 = arith.truncf %668 : vector<16x16xf32> to vector<16x16xbf16>
    %c0_250 = arith.constant 0 : index
    %c0_251 = arith.constant 0 : index
    %670 = vector.load %arg32[%c0_250, %c0_251] : memref<64x64xbf16, #tpu.memory_space<vmem>>, vector<16x64xbf16>
    %cst_252 = arith.constant dense<0.000000e+00> : vector<16x64xf32>
    %671 = tpu.matmul %669, %670, %cst_252 {dimension_numbers = #tpu.dot_dimension_numbers<[1], [0], [0], [1], [0, 0, 1, 1], [], []>} : vector<16x16xbf16>, vector<16x64xbf16>, vector<16x64xf32> -> vector<16x64xf32>
    %672 = vector.broadcast %667 : vector<1x64xf32> to vector<16x64xf32>
    %673 = arith.addf %672, %671 : vector<16x64xf32>
    %674 = vector.extract_strided_slice %666 {offsets = [16, 0], sizes = [16, 16], strides = [1, 1]} : vector<64x16xf32> to vector<16x16xf32>
    %675 = arith.truncf %674 : vector<16x16xf32> to vector<16x16xbf16>
    %c16_253 = arith.constant 16 : index
    %c0_254 = arith.constant 0 : index
    %676 = vector.load %arg32[%c16_253, %c0_254] : memref<64x64xbf16, #tpu.memory_space<vmem>>, vector<16x64xbf16>
    %cst_255 = arith.constant dense<0.000000e+00> : vector<16x64xf32>
    %677 = tpu.matmul %675, %676, %cst_255 {dimension_numbers = #tpu.dot_dimension_numbers<[1], [0], [0], [1], [0, 0, 1, 1], [], []>} : vector<16x16xbf16>, vector<16x64xbf16>, vector<16x64xf32> -> vector<16x64xf32>
    %678 = arith.addf %673, %677 : vector<16x64xf32>
    %679 = vector.extract_strided_slice %666 {offsets = [32, 0], sizes = [16, 16], strides = [1, 1]} : vector<64x16xf32> to vector<16x16xf32>
    %680 = arith.truncf %679 : vector<16x16xf32> to vector<16x16xbf16>
    %c32_256 = arith.constant 32 : index
    %c0_257 = arith.constant 0 : index
    %681 = vector.load %arg32[%c32_256, %c0_257] : memref<64x64xbf16, #tpu.memory_space<vmem>>, vector<16x64xbf16>
    %cst_258 = arith.constant dense<0.000000e+00> : vector<16x64xf32>
    %682 = tpu.matmul %680, %681, %cst_258 {dimension_numbers = #tpu.dot_dimension_numbers<[1], [0], [0], [1], [0, 0, 1, 1], [], []>} : vector<16x16xbf16>, vector<16x64xbf16>, vector<16x64xf32> -> vector<16x64xf32>
    %683 = arith.addf %678, %682 : vector<16x64xf32>
    %684 = vector.extract_strided_slice %666 {offsets = [48, 0], sizes = [16, 16], strides = [1, 1]} : vector<64x16xf32> to vector<16x16xf32>
    %685 = arith.truncf %684 : vector<16x16xf32> to vector<16x16xbf16>
    %c48_259 = arith.constant 48 : index
    %c0_260 = arith.constant 0 : index
    %686 = vector.load %arg32[%c48_259, %c0_260] : memref<64x64xbf16, #tpu.memory_space<vmem>>, vector<16x64xbf16>
    %cst_261 = arith.constant dense<0.000000e+00> : vector<16x64xf32>
    %687 = tpu.matmul %685, %686, %cst_261 {dimension_numbers = #tpu.dot_dimension_numbers<[1], [0], [0], [1], [0, 0, 1, 1], [], []>} : vector<16x16xbf16>, vector<16x64xbf16>, vector<16x64xf32> -> vector<16x64xf32>
    %688 = arith.addf %683, %687 : vector<16x64xf32>
    %689 = vector.extract_strided_slice %603 {offsets = [3, 0], sizes = [1, 64], strides = [1, 1]} : vector<8x64xf32> to vector<1x64xf32>
    %690 = vector.extract_strided_slice %603 {offsets = [4, 0], sizes = [1, 64], strides = [1, 1]} : vector<8x64xf32> to vector<1x64xf32>
    %cst_262 = arith.constant dense<0.000000e+00> : vector<16xf32>
    %691 = vector.multi_reduction <add>, %688, %cst_262 [1] : vector<16x64xf32> to vector<16xf32>
    %692 = vector.shape_cast %691 : vector<16xf32> to vector<16x1xf32>
    %cst_263 = arith.constant 6.400000e+01 : f32
    %693 = vector.broadcast %cst_263 : f32 to vector<16x1xf32>
    %694 = arith.divf %692, %693 : vector<16x1xf32>
    %695 = vector.broadcast %694 : vector<16x1xf32> to vector<16x64xf32>
    %696 = arith.subf %688, %695 : vector<16x64xf32>
    %697 = arith.mulf %696, %696 : vector<16x64xf32>
    %cst_264 = arith.constant dense<0.000000e+00> : vector<16xf32>
    %698 = vector.multi_reduction <add>, %697, %cst_264 [1] : vector<16x64xf32> to vector<16xf32>
    %699 = vector.shape_cast %698 : vector<16xf32> to vector<16x1xf32>
    %cst_265 = arith.constant 6.400000e+01 : f32
    %700 = vector.broadcast %cst_265 : f32 to vector<16x1xf32>
    %701 = arith.divf %699, %700 : vector<16x1xf32>
    %702 = vector.broadcast %694 : vector<16x1xf32> to vector<16x64xf32>
    %703 = arith.subf %688, %702 : vector<16x64xf32>
    %cst_266 = arith.constant 9.99999974E-6 : f32
    %704 = vector.broadcast %cst_266 : f32 to vector<16x1xf32>
    %705 = arith.addf %701, %704 : vector<16x1xf32>
    %706 = math.rsqrt %705 : vector<16x1xf32>
    %707 = vector.broadcast %706 : vector<16x1xf32> to vector<16x64xf32>
    %708 = arith.mulf %703, %707 : vector<16x64xf32>
    %709 = vector.broadcast %689 : vector<1x64xf32> to vector<16x64xf32>
    %710 = arith.mulf %708, %709 : vector<16x64xf32>
    %711 = vector.broadcast %690 : vector<1x64xf32> to vector<16x64xf32>
    %712 = arith.addf %710, %711 : vector<16x64xf32>
    %713 = arith.addf %602, %712 : vector<16x64xf32>
    %714 = arith.truncf %713 : vector<16x64xf32> to vector<16x64xbf16>
    %c0_267 = arith.constant 0 : index
    %c0_268 = arith.constant 0 : index
    %715 = vector.load %arg33[%c0_267, %c0_268] : memref<64x256xbf16, #tpu.memory_space<vmem>>, vector<64x256xbf16>
    %cst_269 = arith.constant dense<0.000000e+00> : vector<16x256xf32>
    %716 = tpu.matmul %714, %715, %cst_269 {dimension_numbers = #tpu.dot_dimension_numbers<[1], [0], [0], [1], [0, 0, 1, 1], [], []>} : vector<16x64xbf16>, vector<64x256xbf16>, vector<16x256xf32> -> vector<16x256xf32>
    %c0_270 = arith.constant 0 : index
    %c0_271 = arith.constant 0 : index
    %717 = vector.load %arg36[%c0_270, %c0_271] : memref<1x256xf32, #tpu.memory_space<vmem>>, vector<1x256xf32>
    %718 = vector.broadcast %717 : vector<1x256xf32> to vector<16x256xf32>
    %719 = arith.addf %716, %718 : vector<16x256xf32>
    %cst_272 = arith.constant 5.000000e-01 : f32
    %720 = vector.broadcast %cst_272 : f32 to vector<16x256xf32>
    %721 = arith.mulf %720, %719 : vector<16x256xf32>
    %cst_273 = arith.constant 0.707106769 : f32
    %722 = vector.broadcast %cst_273 : f32 to vector<16x256xf32>
    %723 = arith.mulf %719, %722 : vector<16x256xf32>
    %cst_274 = arith.constant 0.000000e+00 : f32
    %724 = vector.broadcast %cst_274 : f32 to vector<16x256xf32>
    %725 = arith.cmpf olt, %723, %724 : vector<16x256xf32>
    %cst_275 = arith.constant -1.000000e+00 : f32
    %cst_276 = arith.constant 1.000000e+00 : f32
    %726 = vector.broadcast %cst_275 : f32 to vector<16x256xf32>
    %727 = vector.broadcast %cst_276 : f32 to vector<16x256xf32>
    %728 = arith.select %725, %726, %727 : vector<16x256xi1>, vector<16x256xf32>
    %729 = math.absf %723 : vector<16x256xf32>
    %cst_277 = arith.constant 0.327591091 : f32
    %730 = vector.broadcast %cst_277 : f32 to vector<16x256xf32>
    %731 = arith.mulf %730, %729 : vector<16x256xf32>
    %cst_278 = arith.constant 1.000000e+00 : f32
    %732 = vector.broadcast %cst_278 : f32 to vector<16x256xf32>
    %733 = arith.addf %732, %731 : vector<16x256xf32>
    %cst_279 = arith.constant 1.000000e+00 : f32
    %734 = vector.broadcast %cst_279 : f32 to vector<16x256xf32>
    %735 = arith.divf %734, %733 : vector<16x256xf32>
    %cst_280 = arith.constant 1.06140542 : f32
    %736 = vector.broadcast %cst_280 : f32 to vector<16x256xf32>
    %737 = arith.mulf %736, %735 : vector<16x256xf32>
    %cst_281 = arith.constant -1.45315206 : f32
    %738 = vector.broadcast %cst_281 : f32 to vector<16x256xf32>
    %739 = arith.addf %737, %738 : vector<16x256xf32>
    %740 = arith.mulf %739, %735 : vector<16x256xf32>
    %cst_282 = arith.constant 1.42141378 : f32
    %741 = vector.broadcast %cst_282 : f32 to vector<16x256xf32>
    %742 = arith.addf %740, %741 : vector<16x256xf32>
    %743 = arith.mulf %742, %735 : vector<16x256xf32>
    %cst_283 = arith.constant -0.284496725 : f32
    %744 = vector.broadcast %cst_283 : f32 to vector<16x256xf32>
    %745 = arith.addf %743, %744 : vector<16x256xf32>
    %746 = arith.mulf %745, %735 : vector<16x256xf32>
    %cst_284 = arith.constant 0.254829586 : f32
    %747 = vector.broadcast %cst_284 : f32 to vector<16x256xf32>
    %748 = arith.addf %746, %747 : vector<16x256xf32>
    %749 = arith.mulf %748, %735 : vector<16x256xf32>
    %cst_285 = arith.constant 0.000000e+00 : f32
    %750 = vector.broadcast %cst_285 : f32 to vector<16x256xf32>
    %751 = arith.subf %750, %729 : vector<16x256xf32>
    %752 = arith.mulf %751, %729 : vector<16x256xf32>
    %753 = math.exp %752 : vector<16x256xf32>
    %754 = arith.mulf %749, %753 : vector<16x256xf32>
    %cst_286 = arith.constant 1.000000e+00 : f32
    %755 = vector.broadcast %cst_286 : f32 to vector<16x256xf32>
    %756 = arith.subf %755, %754 : vector<16x256xf32>
    %757 = arith.mulf %728, %756 : vector<16x256xf32>
    %cst_287 = arith.constant 1.000000e+00 : f32
    %758 = vector.broadcast %cst_287 : f32 to vector<16x256xf32>
    %759 = arith.addf %758, %757 : vector<16x256xf32>
    %760 = arith.mulf %721, %759 : vector<16x256xf32>
    %761 = arith.truncf %760 : vector<16x256xf32> to vector<16x256xbf16>
    %c0_288 = arith.constant 0 : index
    %c0_289 = arith.constant 0 : index
    %762 = vector.load %arg34[%c0_288, %c0_289] : memref<256x64xbf16, #tpu.memory_space<vmem>>, vector<256x64xbf16>
    %cst_290 = arith.constant dense<0.000000e+00> : vector<16x64xf32>
    %763 = tpu.matmul %761, %762, %cst_290 {dimension_numbers = #tpu.dot_dimension_numbers<[1], [0], [0], [1], [0, 0, 1, 1], [], []>} : vector<16x256xbf16>, vector<256x64xbf16>, vector<16x64xf32> -> vector<16x64xf32>
    %764 = vector.extract_strided_slice %603 {offsets = [5, 0], sizes = [1, 64], strides = [1, 1]} : vector<8x64xf32> to vector<1x64xf32>
    %765 = vector.broadcast %764 : vector<1x64xf32> to vector<16x64xf32>
    %766 = arith.addf %763, %765 : vector<16x64xf32>
    %767 = vector.extract_strided_slice %603 {offsets = [6, 0], sizes = [1, 64], strides = [1, 1]} : vector<8x64xf32> to vector<1x64xf32>
    %768 = vector.extract_strided_slice %603 {offsets = [7, 0], sizes = [1, 64], strides = [1, 1]} : vector<8x64xf32> to vector<1x64xf32>
    %cst_291 = arith.constant dense<0.000000e+00> : vector<16xf32>
    %769 = vector.multi_reduction <add>, %766, %cst_291 [1] : vector<16x64xf32> to vector<16xf32>
    %770 = vector.shape_cast %769 : vector<16xf32> to vector<16x1xf32>
    %cst_292 = arith.constant 6.400000e+01 : f32
    %771 = vector.broadcast %cst_292 : f32 to vector<16x1xf32>
    %772 = arith.divf %770, %771 : vector<16x1xf32>
    %773 = vector.broadcast %772 : vector<16x1xf32> to vector<16x64xf32>
    %774 = arith.subf %766, %773 : vector<16x64xf32>
    %775 = arith.mulf %774, %774 : vector<16x64xf32>
    %cst_293 = arith.constant dense<0.000000e+00> : vector<16xf32>
    %776 = vector.multi_reduction <add>, %775, %cst_293 [1] : vector<16x64xf32> to vector<16xf32>
    %777 = vector.shape_cast %776 : vector<16xf32> to vector<16x1xf32>
    %cst_294 = arith.constant 6.400000e+01 : f32
    %778 = vector.broadcast %cst_294 : f32 to vector<16x1xf32>
    %779 = arith.divf %777, %778 : vector<16x1xf32>
    %780 = vector.broadcast %772 : vector<16x1xf32> to vector<16x64xf32>
    %781 = arith.subf %766, %780 : vector<16x64xf32>
    %cst_295 = arith.constant 9.99999974E-6 : f32
    %782 = vector.broadcast %cst_295 : f32 to vector<16x1xf32>
    %783 = arith.addf %779, %782 : vector<16x1xf32>
    %784 = math.rsqrt %783 : vector<16x1xf32>
    %785 = vector.broadcast %784 : vector<16x1xf32> to vector<16x64xf32>
    %786 = arith.mulf %781, %785 : vector<16x64xf32>
    %787 = vector.broadcast %767 : vector<1x64xf32> to vector<16x64xf32>
    %788 = arith.mulf %786, %787 : vector<16x64xf32>
    %789 = vector.broadcast %768 : vector<1x64xf32> to vector<16x64xf32>
    %790 = arith.addf %788, %789 : vector<16x64xf32>
    %791 = arith.addf %713, %790 : vector<16x64xf32>
    %c0_296 = arith.constant 0 : index
    %c0_297 = arith.constant 0 : index
    %792 = vector.load %arg40[%c0_296, %c0_297] : memref<16x64xf32, #tpu.memory_space<vmem>>, vector<16x64xf32>
    tpu.vector_store %arg40[%c0_296, %c0_297], %791 {strides = array<i32>} : memref<16x64xf32, #tpu.memory_space<vmem>>, vector<16x64xf32>,
    return
  }
  func.func @transform_0(%arg0: i32) -> (i32, i32) {
    %c0_i32 = arith.constant 0 : i32
    %c0_i32_0 = arith.constant 0 : i32
    return %arg0, %c0_i32 : i32, i32
  }
  func.func @transform_1(%arg0: i32) -> (i32, i32) {
    %c0_i32 = arith.constant 0 : i32
    %c0_i32_0 = arith.constant 0 : i32
    %c0_i32_1 = arith.constant 0 : i32
    return %c0_i32, %c0_i32_0 : i32, i32
  }
  func.func @transform_2(%arg0: i32) -> (i32, i32) {
    %c0_i32 = arith.constant 0 : i32
    %c0_i32_0 = arith.constant 0 : i32
    %c0_i32_1 = arith.constant 0 : i32
    return %c0_i32, %c0_i32_0 : i32, i32
  }
  func.func @transform_3(%arg0: i32) -> (i32, i32, i32) {
    %c0_i32 = arith.constant 0 : i32
    %c0_i32_0 = arith.constant 0 : i32
    %c0_i32_1 = arith.constant 0 : i32
    %c0_i32_2 = arith.constant 0 : i32
    return %c0_i32, %c0_i32_0, %c0_i32_1 : i32, i32, i32
  }
  func.func @transform_4(%arg0: i32) -> (i32, i32) {
    %c0_i32 = arith.constant 0 : i32
    %c0_i32_0 = arith.constant 0 : i32
    %c0_i32_1 = arith.constant 0 : i32
    return %c0_i32, %c0_i32_0 : i32, i32
  }
  func.func @transform_5(%arg0: i32) -> (i32, i32) {
    %c0_i32 = arith.constant 0 : i32
    %c0_i32_0 = arith.constant 0 : i32
    %c0_i32_1 = arith.constant 0 : i32
    return %c0_i32, %c0_i32_0 : i32, i32
  }
  func.func @transform_6(%arg0: i32) -> (i32, i32) {
    %c0_i32 = arith.constant 0 : i32
    %c0_i32_0 = arith.constant 0 : i32
    %c0_i32_1 = arith.constant 0 : i32
    return %c0_i32, %c0_i32_0 : i32, i32
  }
  func.func @transform_7(%arg0: i32) -> (i32, i32) {
    %c0_i32 = arith.constant 0 : i32
    %c0_i32_0 = arith.constant 0 : i32
    %c0_i32_1 = arith.constant 0 : i32
    return %c0_i32, %c0_i32_0 : i32, i32
  }
  func.func @transform_8(%arg0: i32) -> (i32, i32) {
    %c0_i32 = arith.constant 0 : i32
    %c0_i32_0 = arith.constant 0 : i32
    %c0_i32_1 = arith.constant 0 : i32
    return %c0_i32, %c0_i32_0 : i32, i32
  }
  func.func @transform_9(%arg0: i32) -> (i32, i32) {
    %c0_i32 = arith.constant 0 : i32
    %c0_i32_0 = arith.constant 0 : i32
    %c0_i32_1 = arith.constant 0 : i32
    return %c0_i32, %c0_i32_0 : i32, i32
  }
  func.func @transform_10(%arg0: i32) -> (i32, i32) {
    %c0_i32 = arith.constant 0 : i32
    %c0_i32_0 = arith.constant 0 : i32
    %c0_i32_1 = arith.constant 0 : i32
    return %c0_i32, %c0_i32_0 : i32, i32
  }
  func.func @transform_11(%arg0: i32) -> (i32, i32, i32) {
    %c0_i32 = arith.constant 0 : i32
    %c0_i32_0 = arith.constant 0 : i32
    %c0_i32_1 = arith.constant 0 : i32
    %c0_i32_2 = arith.constant 0 : i32
    return %c0_i32, %c0_i32_0, %c0_i32_1 : i32, i32, i32
  }
  func.func @transform_12(%arg0: i32) -> (i32, i32) {
    %c0_i32 = arith.constant 0 : i32
    %c0_i32_0 = arith.constant 0 : i32
    %c0_i32_1 = arith.constant 0 : i32
    return %c0_i32, %c0_i32_0 : i32, i32
  }
  func.func @transform_13(%arg0: i32) -> (i32, i32) {
    %c0_i32 = arith.constant 0 : i32
    %c0_i32_0 = arith.constant 0 : i32
    %c0_i32_1 = arith.constant 0 : i32
    return %c0_i32, %c0_i32_0 : i32, i32
  }
  func.func @transform_14(%arg0: i32) -> (i32, i32) {
    %c0_i32 = arith.constant 0 : i32
    %c0_i32_0 = arith.constant 0 : i32
    %c0_i32_1 = arith.constant 0 : i32
    return %c0_i32, %c0_i32_0 : i32, i32
  }
  func.func @transform_15(%arg0: i32) -> (i32, i32) {
    %c0_i32 = arith.constant 0 : i32
    %c0_i32_0 = arith.constant 0 : i32
    %c0_i32_1 = arith.constant 0 : i32
    return %c0_i32, %c0_i32_0 : i32, i32
  }
  func.func @transform_16(%arg0: i32) -> (i32, i32) {
    %c0_i32 = arith.constant 0 : i32
    %c0_i32_0 = arith.constant 0 : i32
    %c0_i32_1 = arith.constant 0 : i32
    return %c0_i32, %c0_i32_0 : i32, i32
  }
  func.func @transform_17(%arg0: i32) -> (i32, i32) {
    %c0_i32 = arith.constant 0 : i32
    %c0_i32_0 = arith.constant 0 : i32
    %c0_i32_1 = arith.constant 0 : i32
    return %c0_i32, %c0_i32_0 : i32, i32
  }
  func.func @transform_18(%arg0: i32) -> (i32, i32) {
    %c0_i32 = arith.constant 0 : i32
    %c0_i32_0 = arith.constant 0 : i32
    %c0_i32_1 = arith.constant 0 : i32
    return %c0_i32, %c0_i32_0 : i32, i32
  }
  func.func @transform_19(%arg0: i32) -> (i32, i32) {
    %c0_i32 = arith.constant 0 : i32
    %c0_i32_0 = arith.constant 0 : i32
    %c0_i32_1 = arith.constant 0 : i32
    return %c0_i32, %c0_i32_0 : i32, i32
  }
  func.func @transform_20(%arg0: i32) -> (i32, i32) {
    %c0_i32 = arith.constant 0 : i32
    %c0_i32_0 = arith.constant 0 : i32
    %c0_i32_1 = arith.constant 0 : i32
    return %c0_i32, %c0_i32_0 : i32, i32
  }
  func.func @transform_21(%arg0: i32) -> (i32, i32) {
    %c0_i32 = arith.constant 0 : i32
    %c0_i32_0 = arith.constant 0 : i32
    %c0_i32_1 = arith.constant 0 : i32
    return %c0_i32, %c0_i32_0 : i32, i32
  }
  func.func @transform_22(%arg0: i32) -> (i32, i32, i32) {
    %c0_i32 = arith.constant 0 : i32
    %c0_i32_0 = arith.constant 0 : i32
    %c0_i32_1 = arith.constant 0 : i32
    %c0_i32_2 = arith.constant 0 : i32
    return %c0_i32, %c0_i32_0, %c0_i32_1 : i32, i32, i32
  }
  func.func @transform_23(%arg0: i32) -> (i32, i32) {
    %c0_i32 = arith.constant 0 : i32
    %c0_i32_0 = arith.constant 0 : i32
    %c0_i32_1 = arith.constant 0 : i32
    return %c0_i32, %c0_i32_0 : i32, i32
  }
  func.func @transform_24(%arg0: i32) -> (i32, i32) {
    %c0_i32 = arith.constant 0 : i32
    %c0_i32_0 = arith.constant 0 : i32
    %c0_i32_1 = arith.constant 0 : i32
    return %c0_i32, %c0_i32_0 : i32, i32
  }
  func.func @transform_25(%arg0: i32) -> (i32, i32) {
    %c0_i32 = arith.constant 0 : i32
    %c0_i32_0 = arith.constant 0 : i32
    %c0_i32_1 = arith.constant 0 : i32
    return %c0_i32, %c0_i32_0 : i32, i32
  }
  func.func @transform_26(%arg0: i32) -> (i32, i32) {
    %c0_i32 = arith.constant 0 : i32
    %c0_i32_0 = arith.constant 0 : i32
    %c0_i32_1 = arith.constant 0 : i32
    return %c0_i32, %c0_i32_0 : i32, i32
  }
  func.func @transform_27(%arg0: i32) -> (i32, i32) {
    %c0_i32 = arith.constant 0 : i32
    %c0_i32_0 = arith.constant 0 : i32
    %c0_i32_1 = arith.constant 0 : i32
    return %c0_i32, %c0_i32_0 : i32, i32
  }
  func.func @transform_28(%arg0: i32) -> (i32, i32) {
    %c0_i32 = arith.constant 0 : i32
    %c0_i32_0 = arith.constant 0 : i32
    %c0_i32_1 = arith.constant 0 : i32
    return %c0_i32, %c0_i32_0 : i32, i32
  }
  func.func @transform_29(%arg0: i32) -> (i32, i32) {
    %c0_i32 = arith.constant 0 : i32
    %c0_i32_0 = arith.constant 0 : i32
    %c0_i32_1 = arith.constant 0 : i32
    return %c0_i32, %c0_i32_0 : i32, i32
  }
  func.func @transform_30(%arg0: i32) -> (i32, i32, i32) {
    %c0_i32 = arith.constant 0 : i32
    %c0_i32_0 = arith.constant 0 : i32
    %c0_i32_1 = arith.constant 0 : i32
    %c0_i32_2 = arith.constant 0 : i32
    return %c0_i32, %c0_i32_0, %c0_i32_1 : i32, i32, i32
  }
  func.func @transform_31(%arg0: i32) -> (i32, i32) {
    %c0_i32 = arith.constant 0 : i32
    %c0_i32_0 = arith.constant 0 : i32
    %c0_i32_1 = arith.constant 0 : i32
    return %c0_i32, %c0_i32_0 : i32, i32
  }
  func.func @transform_32(%arg0: i32) -> (i32, i32) {
    %c0_i32 = arith.constant 0 : i32
    %c0_i32_0 = arith.constant 0 : i32
    %c0_i32_1 = arith.constant 0 : i32
    return %c0_i32, %c0_i32_0 : i32, i32
  }
  func.func @transform_33(%arg0: i32) -> (i32, i32) {
    %c0_i32 = arith.constant 0 : i32
    %c0_i32_0 = arith.constant 0 : i32
    %c0_i32_1 = arith.constant 0 : i32
    return %c0_i32, %c0_i32_0 : i32, i32
  }
  func.func @transform_34(%arg0: i32) -> (i32, i32) {
    %c0_i32 = arith.constant 0 : i32
    %c0_i32_0 = arith.constant 0 : i32
    %c0_i32_1 = arith.constant 0 : i32
    return %c0_i32, %c0_i32_0 : i32, i32
  }
  func.func @transform_35(%arg0: i32) -> (i32, i32) {
    %c0_i32 = arith.constant 0 : i32
    %c0_i32_0 = arith.constant 0 : i32
    %c0_i32_1 = arith.constant 0 : i32
    return %c0_i32, %c0_i32_0 : i32, i32
  }
  func.func @transform_36(%arg0: i32) -> (i32, i32) {
    %c0_i32 = arith.constant 0 : i32
    %c0_i32_0 = arith.constant 0 : i32
    %c0_i32_1 = arith.constant 0 : i32
    return %c0_i32, %c0_i32_0 : i32, i32
  }
  func.func @transform_37(%arg0: i32) -> (i32, i32) {
    %c0_i32 = arith.constant 0 : i32
    %c0_i32_0 = arith.constant 0 : i32
    %c0_i32_1 = arith.constant 0 : i32
    return %c0_i32, %c0_i32_0 : i32, i32
  }
  func.func @transform_38(%arg0: i32) -> (i32, i32) {
    %c0_i32 = arith.constant 0 : i32
    %c0_i32_0 = arith.constant 0 : i32
    return %arg0, %c0_i32 : i32, i32
  }
  func.func @transform_39(%arg0: i32) -> (i32, i32) {
    %c0_i32 = arith.constant 0 : i32
    %c0_i32_0 = arith.constant 0 : i32
    return %arg0, %c0_i32 : i32, i32
  }
}

</mosaic_0001>

<llo_original>
// kernel: swin_feature_extractor.1
$region0: #{swin_feature_extractor.1}
  #allocation0 [shape = 'u32[]', space=smem, size = 0x4, offset = 0x4, fixed_abs, tag = 'smem constant byte address 0x4 - core index']
  #allocation1 [shape = 'u32[144,128]{1,0:T(1,128)}', space=vmem, size = 0x12000, scoped, tag = 'internal scratch']
  %s0 = inlined_call_operand.smem [shape: u32[40], index: -1, kind: input, shape index: {}]
  %s1 = sld [smem:[%s0]]
  %s2 = scalar_lea.smem %s0, 1
  %s3 = sld [smem:[%s2]]
  %s4 = scalar_lea.smem %s0, 2
  %s5 = sld [smem:[%s4]]
  %s6 = scalar_lea.smem %s0, 3
  %s7 = sld [smem:[%s6]]
  %s8 = scalar_lea.smem %s0, 4
  %s9 = sld [smem:[%s8]]
  %s10 = scalar_lea.smem %s0, 5
  %s11 = sld [smem:[%s10]]
  %s12 = scalar_lea.smem %s0, 6
  %s13 = sld [smem:[%s12]]
  %s14 = scalar_lea.smem %s0, 7
  %s15 = sld [smem:[%s14]]
  %s16 = scalar_lea.smem %s0, 8
  %s17 = sld [smem:[%s16]]
  %s18 = scalar_lea.smem %s0, 9
  %s19 = sld [smem:[%s18]]
  %s20 = scalar_lea.smem %s0, 10
  %s21 = sld [smem:[%s20]]
  %s22 = scalar_lea.smem %s0, 11
  %s23 = sld [smem:[%s22]]
  %s24 = scalar_lea.smem %s0, 12
  %s25 = sld [smem:[%s24]]
  %s26 = scalar_lea.smem %s0, 13
  %s27 = sld [smem:[%s26]]
  %s28 = scalar_lea.smem %s0, 14
  %s29 = sld [smem:[%s28]]
  %s30 = scalar_lea.smem %s0, 15
  %s31 = sld [smem:[%s30]]
  %s32 = scalar_lea.smem %s0, 16
  %s33 = sld [smem:[%s32]]
  %s34 = scalar_lea.smem %s0, 17
  %s35 = sld [smem:[%s34]]
  %s36 = scalar_lea.smem %s0, 18
  %s37 = sld [smem:[%s36]]
  %s38 = scalar_lea.smem %s0, 19
  %s39 = sld [smem:[%s38]]
  %s40 = scalar_lea.smem %s0, 20
  %s41 = sld [smem:[%s40]]
  %s42 = scalar_lea.smem %s0, 21
  %s43 = sld [smem:[%s42]]
  %s44 = scalar_lea.smem %s0, 22
  %s45 = sld [smem:[%s44]]
  %s46 = scalar_lea.smem %s0, 23
  %s47 = sld [smem:[%s46]]
  %s48 = scalar_lea.smem %s0, 24
  %s49 = sld [smem:[%s48]]
  %s50 = scalar_lea.smem %s0, 25
  %s51 = sld [smem:[%s50]]
  %s52 = scalar_lea.smem %s0, 26
  %s53 = sld [smem:[%s52]]
  %s54 = scalar_lea.smem %s0, 27
  %s55 = sld [smem:[%s54]]
  %s56 = scalar_lea.smem %s0, 28
  %s57 = sld [smem:[%s56]]
  %s58 = scalar_lea.smem %s0, 29
  %s59 = sld [smem:[%s58]]
  %s60 = scalar_lea.smem %s0, 30
  %s61 = sld [smem:[%s60]]
  %s62 = scalar_lea.smem %s0, 31
  %s63 = sld [smem:[%s62]]
  %s64 = scalar_lea.smem %s0, 32
  %s65 = sld [smem:[%s64]]
  %s66 = scalar_lea.smem %s0, 33
  %s67 = sld [smem:[%s66]]
  %s68 = scalar_lea.smem %s0, 34
  %s69 = sld [smem:[%s68]]
  %s70 = scalar_lea.smem %s0, 35
  %s71 = sld [smem:[%s70]]
  %s72 = scalar_lea.smem %s0, 36
  %s73 = sld [smem:[%s72]]
  %s74 = scalar_lea.smem %s0, 37
  %s75 = sld [smem:[%s74]]
  %s76 = scalar_lea.smem %s0, 38
  %s77 = sld [smem:[%s76]]
  %s78 = scalar_lea.smem %s0, 39
  %s79 = sld [smem:[%s78]]
  %80 = xla_tuple %s77, %s79
  %s81 = sld [smem:[#allocation0]]
  $region193: #{swin_feature_extractor.1} parent=0
    _
  %s83 = ssub.s32 1, %s81
  %s84 = scalar_select 0, %s83, %s81
  $region1: #{swin_feature_extractor.1} parent=0
    #allocation2 [shape = 'u8[65536]{0}', space=vmem, size = 0x10000, scoped, tag = 'output window, operand 0']
    #allocation3 [shape = 's32[2]{0}', space=sflag, size = 0x8, scoped, tag = 'scoped memory for swin_feature_extractor.1']
    #allocation4 [shape = 'u8[16384]{0}', space=vmem, size = 0x4000, scoped, tag = 'output window, operand 1']
    #allocation5 [shape = 's32[2]{0}', space=sflag, size = 0x8, scoped, tag = 'scoped memory for swin_feature_extractor.1']
    %85 = vsyncpa [#allocation3], 0
    %s86 = scalar_lea.sflag [#allocation3], 1
    %87 = vsyncpa %s86, 0
    %88 = vsyncpa [#allocation5], 0
    %s89 = scalar_lea.sflag [#allocation5], 1
    %90 = vsyncpa %s89, 0
    loop: start=0, step=1, limit=4
    $region2: #{swin_feature_extractor.1} parent=1 // loop_pre_header
      _
    $region3: #{swin_feature_extractor.1} parent=1 // loop_header
      %s92 = sphi 0, %s96
      %p93 = scmp.ge.s32.totalorder %s92, 4
      %s102 = sphi 0, %s104
      %s105 = sphi 0, %s102
      %s106 = sphi 0, %s105
      %s122 = sphi 0, %s106
      %s126 = sphi 0, %s126
      %s128 = sphi 0, %s126
      %s129 = sphi 0, %s128
      %s143 = sphi 0, %s129
      %s147 = sphi 0, %s147
      %s149 = sphi 0, %s147
      %s150 = sphi 0, %s149
      %s164 = sphi 0, %s150
      %s168 = sphi 0, %s168
      %s170 = sphi 0, %s168
      %s171 = sphi 0, %s170
      %s185 = sphi 0, %s171
      %s189 = sphi 0, %s189
      %s191 = sphi 0, %s189
      %s192 = sphi 0, %s191
      %s206 = sphi 0, %s192
      %s210 = sphi 0, %s210
      %s212 = sphi 0, %s210
      %s213 = sphi 0, %s212
      %s227 = sphi 0, %s213
      %s231 = sphi 0, %s231
      %s233 = sphi 0, %s231
      %s234 = sphi 0, %s233
      %s248 = sphi 0, %s234
      %s252 = sphi 0, %s252
      %s254 = sphi 0, %s252
      %s255 = sphi 0, %s254
      %s269 = sphi 0, %s255
      %s273 = sphi 0, %s273
      %s275 = sphi 0, %s273
      %s276 = sphi 0, %s275
      %s290 = sphi 0, %s276
      %s294 = sphi 0, %s294
      %s296 = sphi 0, %s294
      %s297 = sphi 0, %s296
      %s311 = sphi 0, %s297
      %s315 = sphi 0, %s315
      %s317 = sphi 0, %s315
      %s318 = sphi 0, %s317
      %s332 = sphi 0, %s318
      %s336 = sphi 0, %s336
      %s338 = sphi 0, %s336
      %s339 = sphi 0, %s338
      %s353 = sphi 0, %s339
      %s357 = sphi 0, %s357
      %s359 = sphi 0, %s357
      %s360 = sphi 0, %s359
      %s374 = sphi 0, %s360
      %s378 = sphi 0, %s378
      %s380 = sphi 0, %s378
      %s381 = sphi 0, %s380
      %s395 = sphi 0, %s381
      %s399 = sphi 0, %s399
      %s401 = sphi 0, %s399
      %s402 = sphi 0, %s401
      %s416 = sphi 0, %s402
      %s420 = sphi 0, %s420
      %s422 = sphi 0, %s420
      %s423 = sphi 0, %s422
      %s437 = sphi 0, %s423
      %s441 = sphi 0, %s441
      %s443 = sphi 0, %s441
      %s444 = sphi 0, %s443
      %s458 = sphi 0, %s444
      %s462 = sphi 0, %s462
      %s464 = sphi 0, %s462
      %s465 = sphi 0, %s464
      %s479 = sphi 0, %s465
      %s483 = sphi 0, %s483
      %s485 = sphi 0, %s483
      %s486 = sphi 0, %s485
      %s500 = sphi 0, %s486
      %s504 = sphi 0, %s504
      %s506 = sphi 0, %s504
      %s507 = sphi 0, %s506
      %s521 = sphi 0, %s507
      %s525 = sphi 0, %s525
      %s527 = sphi 0, %s525
      %s528 = sphi 0, %s527
      %s542 = sphi 0, %s528
      %s546 = sphi 0, %s546
      %s548 = sphi 0, %s546
      %s549 = sphi 0, %s548
      %s563 = sphi 0, %s549
      %s567 = sphi 0, %s567
      %s569 = sphi 0, %s567
      %s570 = sphi 0, %s569
      %s584 = sphi 0, %s570
      %s588 = sphi 0, %s588
      %s590 = sphi 0, %s588
      %s591 = sphi 0, %s590
      %s605 = sphi 0, %s591
      %s609 = sphi 0, %s609
      %s611 = sphi 0, %s609
      %s612 = sphi 0, %s611
      %s626 = sphi 0, %s612
      %s630 = sphi 0, %s630
      %s632 = sphi 0, %s630
      %s633 = sphi 0, %s632
      %s647 = sphi 0, %s633
      %s651 = sphi 0, %s651
      %s653 = sphi 0, %s651
      %s654 = sphi 0, %s653
      %s668 = sphi 0, %s654
      %s672 = sphi 0, %s672
      %s674 = sphi 0, %s672
      %s675 = sphi 0, %s674
      %s689 = sphi 0, %s675
      %s693 = sphi 0, %s693
      %s695 = sphi 0, %s693
      %s696 = sphi 0, %s695
      %s710 = sphi 0, %s696
      %s714 = sphi 0, %s714
      %s716 = sphi 0, %s714
      %s717 = sphi 0, %s716
      %s731 = sphi 0, %s717
      %s735 = sphi 0, %s735
      %s737 = sphi 0, %s735
      %s738 = sphi 0, %s737
      %s752 = sphi 0, %s738
      %s756 = sphi 0, %s756
      %s758 = sphi 0, %s756
      %s759 = sphi 0, %s758
      %s773 = sphi 0, %s759
      %s777 = sphi 0, %s777
      %s779 = sphi 0, %s777
      %s780 = sphi 0, %s779
      %s794 = sphi 0, %s780
      %s798 = sphi 0, %s798
      %s800 = sphi 0, %s798
      %s801 = sphi 0, %s800
      %s815 = sphi 0, %s801
      %s819 = sphi 0, %s819
      %s821 = sphi 0, %s819
      %s822 = sphi 0, %s821
      %s836 = sphi 0, %s822
      %s840 = sphi 0, %s840
      %s842 = sphi 0, %s840
      %s843 = sphi 0, %s842
      %s857 = sphi 0, %s843
      %s861 = sphi 0, %s861
      %s863 = sphi 0, %s861
      %s864 = sphi 0, %s863
      %s878 = sphi 0, %s864
      %s882 = sphi 0, %s882
      %s884 = sphi 0, %s882
      %s885 = sphi 0, %s884
      %s899 = sphi 0, %s885
      %s905 = sphi 0, %s907
      %s908 = sphi 0, %s905
      %s909 = sphi 0, %s908
      %s925 = sphi 0, %s909
      %s931 = sphi 0, %s933
      %s934 = sphi 0, %s931
      %s935 = sphi 0, %s934
      %s951 = sphi 0, %s935
    $region4: #{swin_feature_extractor.1} parent=1 // loop_header_branch
      %95 = sbr.rel (%p93) target = $region8
    $region5: #{swin_feature_extractor.1} parent=1 // loop_body
      %s97 = ssub.s32 %s92, 1
      %s98 = ssub.s32 %s92, 2
      %s99 = sadd.s32 %s92, 1
      %s100 = ssub.s32 %s92, %s99
      %p101 = scmp.eq.s32.totalorder %s100, 0
      %s103 = sadd.s32 %s102, 1
      %s104 = scalar_select %p101, %s102, %s103
      %p107 = pneg %p101
      %p108 = scmp.eq.s32.totalorder %s92, 1
      %p109 = por %p107, %p108
      %p110 = scmp.ne.s32.totalorder %s102, %s105
      %p111 = scmp.eq.s32.totalorder %s92, 0
      %p112 = por %p110, %p111
      %p113 = scmp.ne.s32.totalorder %s102, %s105
      %p114 = scmp.eq.s32.totalorder %s97, 1
      %p115 = por %p113, %p114
      %p116 = scmp.ne.s32.totalorder %s105, %s106
      %p117 = scmp.eq.s32.totalorder %s97, 0
      %p118 = por %p116, %p117
      %p119 = scmp.ne.s32.totalorder %s105, %s106
      %p120 = scmp.eq.s32.totalorder %s98, 1
      %p121 = por %p119, %p120
      %p123 = scmp.ne.s32.totalorder %s106, %s122
      %p124 = scmp.eq.s32.totalorder %s98, 0
      %p125 = por %p123, %p124
      %s127 = sadd.s32 %s126, 1
      %p130 = scmp.eq.s32.totalorder %s92, 1
      %p131 = scmp.ne.s32.totalorder %s126, %s128
      %p132 = scmp.eq.s32.totalorder %s92, 0
      %p133 = por %p131, %p132
      %p134 = scmp.ne.s32.totalorder %s126, %s128
      %p135 = scmp.eq.s32.totalorder %s97, 1
      %p136 = por %p134, %p135
      %p137 = scmp.ne.s32.totalorder %s128, %s129
      %p138 = scmp.eq.s32.totalorder %s97, 0
      %p139 = por %p137, %p138
      %p140 = scmp.ne.s32.totalorder %s128, %s129
      %p141 = scmp.eq.s32.totalorder %s98, 1
      %p142 = por %p140, %p141
      %p144 = scmp.ne.s32.totalorder %s129, %s143
      %p145 = scmp.eq.s32.totalorder %s98, 0
      %p146 = por %p144, %p145
      %s148 = sadd.s32 %s147, 1
      %p151 = scmp.eq.s32.totalorder %s92, 1
      %p152 = scmp.ne.s32.totalorder %s147, %s149
      %p153 = scmp.eq.s32.totalorder %s92, 0
      %p154 = por %p152, %p153
      %p155 = scmp.ne.s32.totalorder %s147, %s149
      %p156 = scmp.eq.s32.totalorder %s97, 1
      %p157 = por %p155, %p156
      %p158 = scmp.ne.s32.totalorder %s149, %s150
      %p159 = scmp.eq.s32.totalorder %s97, 0
      %p160 = por %p158, %p159
      %p161 = scmp.ne.s32.totalorder %s149, %s150
      %p162 = scmp.eq.s32.totalorder %s98, 1
      %p163 = por %p161, %p162
      %p165 = scmp.ne.s32.totalorder %s150, %s164
      %p166 = scmp.eq.s32.totalorder %s98, 0
      %p167 = por %p165, %p166
      %s169 = sadd.s32 %s168, 1
      %p172 = scmp.eq.s32.totalorder %s92, 1
      %p173 = scmp.ne.s32.totalorder %s168, %s170
      %p174 = scmp.eq.s32.totalorder %s92, 0
      %p175 = por %p173, %p174
      %p176 = scmp.ne.s32.totalorder %s168, %s170
      %p177 = scmp.eq.s32.totalorder %s97, 1
      %p178 = por %p176, %p177
      %p179 = scmp.ne.s32.totalorder %s170, %s171
      %p180 = scmp.eq.s32.totalorder %s97, 0
      %p181 = por %p179, %p180
      %p182 = scmp.ne.s32.totalorder %s170, %s171
      %p183 = scmp.eq.s32.totalorder %s98, 1
      %p184 = por %p182, %p183
      %p186 = scmp.ne.s32.totalorder %s171, %s185
      %p187 = scmp.eq.s32.totalorder %s98, 0
      %p188 = por %p186, %p187
      %s190 = sadd.s32 %s189, 1
      %p193 = scmp.eq.s32.totalorder %s92, 1
      %p194 = scmp.ne.s32.totalorder %s189, %s191
      %p195 = scmp.eq.s32.totalorder %s92, 0
      %p196 = por %p194, %p195
      %p197 = scmp.ne.s32.totalorder %s189, %s191
      %p198 = scmp.eq.s32.totalorder %s97, 1
      %p199 = por %p197, %p198
      %p200 = scmp.ne.s32.totalorder %s191, %s192
      %p201 = scmp.eq.s32.totalorder %s97, 0
      %p202 = por %p200, %p201
      %p203 = scmp.ne.s32.totalorder %s191, %s192
      %p204 = scmp.eq.s32.totalorder %s98, 1
      %p205 = por %p203, %p204
      %p207 = scmp.ne.s32.totalorder %s192, %s206
      %p208 = scmp.eq.s32.totalorder %s98, 0
      %p209 = por %p207, %p208
      %s211 = sadd.s32 %s210, 1
      %p214 = scmp.eq.s32.totalorder %s92, 1
      %p215 = scmp.ne.s32.totalorder %s210, %s212
      %p216 = scmp.eq.s32.totalorder %s92, 0
      %p217 = por %p215, %p216
      %p218 = scmp.ne.s32.totalorder %s210, %s212
      %p219 = scmp.eq.s32.totalorder %s97, 1
      %p220 = por %p218, %p219
      %p221 = scmp.ne.s32.totalorder %s212, %s213
      %p222 = scmp.eq.s32.totalorder %s97, 0
      %p223 = por %p221, %p222
      %p224 = scmp.ne.s32.totalorder %s212, %s213
      %p225 = scmp.eq.s32.totalorder %s98, 1
      %p226 = por %p224, %p225
      %p228 = scmp.ne.s32.totalorder %s213, %s227
      %p229 = scmp.eq.s32.totalorder %s98, 0
      %p230 = por %p228, %p229
      %s232 = sadd.s32 %s231, 1
      %p235 = scmp.eq.s32.totalorder %s92, 1
      %p236 = scmp.ne.s32.totalorder %s231, %s233
      %p237 = scmp.eq.s32.totalorder %s92, 0
      %p238 = por %p236, %p237
      %p239 = scmp.ne.s32.totalorder %s231, %s233
      %p240 = scmp.eq.s32.totalorder %s97, 1
      %p241 = por %p239, %p240
      %p242 = scmp.ne.s32.totalorder %s233, %s234
      %p243 = scmp.eq.s32.totalorder %s97, 0
      %p244 = por %p242, %p243
      %p245 = scmp.ne.s32.totalorder %s233, %s234
      %p246 = scmp.eq.s32.totalorder %s98, 1
      %p247 = por %p245, %p246
      %p249 = scmp.ne.s32.totalorder %s234, %s248
      %p250 = scmp.eq.s32.totalorder %s98, 0
      %p251 = por %p249, %p250
      %s253 = sadd.s32 %s252, 1
      %p256 = scmp.eq.s32.totalorder %s92, 1
      %p257 = scmp.ne.s32.totalorder %s252, %s254
      %p258 = scmp.eq.s32.totalorder %s92, 0
      %p259 = por %p257, %p258
      %p260 = scmp.ne.s32.totalorder %s252, %s254
      %p261 = scmp.eq.s32.totalorder %s97, 1
      %p262 = por %p260, %p261
      %p263 = scmp.ne.s32.totalorder %s254, %s255
      %p264 = scmp.eq.s32.totalorder %s97, 0
      %p265 = por %p263, %p264
      %p266 = scmp.ne.s32.totalorder %s254, %s255
      %p267 = scmp.eq.s32.totalorder %s98, 1
      %p268 = por %p266, %p267
      %p270 = scmp.ne.s32.totalorder %s255, %s269
      %p271 = scmp.eq.s32.totalorder %s98, 0
      %p272 = por %p270, %p271
      %s274 = sadd.s32 %s273, 1
      %p277 = scmp.eq.s32.totalorder %s92, 1
      %p278 = scmp.ne.s32.totalorder %s273, %s275
      %p279 = scmp.eq.s32.totalorder %s92, 0
      %p280 = por %p278, %p279
      %p281 = scmp.ne.s32.totalorder %s273, %s275
      %p282 = scmp.eq.s32.totalorder %s97, 1
      %p283 = por %p281, %p282
      %p284 = scmp.ne.s32.totalorder %s275, %s276
      %p285 = scmp.eq.s32.totalorder %s97, 0
      %p286 = por %p284, %p285
      %p287 = scmp.ne.s32.totalorder %s275, %s276
      %p288 = scmp.eq.s32.totalorder %s98, 1
      %p289 = por %p287, %p288
      %p291 = scmp.ne.s32.totalorder %s276, %s290
      %p292 = scmp.eq.s32.totalorder %s98, 0
      %p293 = por %p291, %p292
      %s295 = sadd.s32 %s294, 1
      %p298 = scmp.eq.s32.totalorder %s92, 1
      %p299 = scmp.ne.s32.totalorder %s294, %s296
      %p300 = scmp.eq.s32.totalorder %s92, 0
      %p301 = por %p299, %p300
      %p302 = scmp.ne.s32.totalorder %s294, %s296
      %p303 = scmp.eq.s32.totalorder %s97, 1
      %p304 = por %p302, %p303
      %p305 = scmp.ne.s32.totalorder %s296, %s297
      %p306 = scmp.eq.s32.totalorder %s97, 0
      %p307 = por %p305, %p306
      %p308 = scmp.ne.s32.totalorder %s296, %s297
      %p309 = scmp.eq.s32.totalorder %s98, 1
      %p310 = por %p308, %p309
      %p312 = scmp.ne.s32.totalorder %s297, %s311
      %p313 = scmp.eq.s32.totalorder %s98, 0
      %p314 = por %p312, %p313
      %s316 = sadd.s32 %s315, 1
      %p319 = scmp.eq.s32.totalorder %s92, 1
      %p320 = scmp.ne.s32.totalorder %s315, %s317
      %p321 = scmp.eq.s32.totalorder %s92, 0
      %p322 = por %p320, %p321
      %p323 = scmp.ne.s32.totalorder %s315, %s317
      %p324 = scmp.eq.s32.totalorder %s97, 1
      %p325 = por %p323, %p324
      %p326 = scmp.ne.s32.totalorder %s317, %s318
      %p327 = scmp.eq.s32.totalorder %s97, 0
      %p328 = por %p326, %p327
      %p329 = scmp.ne.s32.totalorder %s317, %s318
      %p330 = scmp.eq.s32.totalorder %s98, 1
      %p331 = por %p329, %p330
      %p333 = scmp.ne.s32.totalorder %s318, %s332
      %p334 = scmp.eq.s32.totalorder %s98, 0
      %p335 = por %p333, %p334
      %s337 = sadd.s32 %s336, 1
      %p340 = scmp.eq.s32.totalorder %s92, 1
      %p341 = scmp.ne.s32.totalorder %s336, %s338
      %p342 = scmp.eq.s32.totalorder %s92, 0
      %p343 = por %p341, %p342
      %p344 = scmp.ne.s32.totalorder %s336, %s338
      %p345 = scmp.eq.s32.totalorder %s97, 1
      %p346 = por %p344, %p345
      %p347 = scmp.ne.s32.totalorder %s338, %s339
      %p348 = scmp.eq.s32.totalorder %s97, 0
      %p349 = por %p347, %p348
      %p350 = scmp.ne.s32.totalorder %s338, %s339
      %p351 = scmp.eq.s32.totalorder %s98, 1
      %p352 = por %p350, %p351
      %p354 = scmp.ne.s32.totalorder %s339, %s353
      %p355 = scmp.eq.s32.totalorder %s98, 0
      %p356 = por %p354, %p355
      %s358 = sadd.s32 %s357, 1
      %p361 = scmp.eq.s32.totalorder %s92, 1
      %p362 = scmp.ne.s32.totalorder %s357, %s359
      %p363 = scmp.eq.s32.totalorder %s92, 0
      %p364 = por %p362, %p363
      %p365 = scmp.ne.s32.totalorder %s357, %s359
      %p366 = scmp.eq.s32.totalorder %s97, 1
      %p367 = por %p365, %p366
      %p368 = scmp.ne.s32.totalorder %s359, %s360
      %p369 = scmp.eq.s32.totalorder %s97, 0
      %p370 = por %p368, %p369
      %p371 = scmp.ne.s32.totalorder %s359, %s360
      %p372 = scmp.eq.s32.totalorder %s98, 1
      %p373 = por %p371, %p372
      %p375 = scmp.ne.s32.totalorder %s360, %s374
      %p376 = scmp.eq.s32.totalorder %s98, 0
      %p377 = por %p375, %p376
      %s379 = sadd.s32 %s378, 1
      %p382 = scmp.eq.s32.totalorder %s92, 1
      %p383 = scmp.ne.s32.totalorder %s378, %s380
      %p384 = scmp.eq.s32.totalorder %s92, 0
      %p385 = por %p383, %p384
      %p386 = scmp.ne.s32.totalorder %s378, %s380
      %p387 = scmp.eq.s32.totalorder %s97, 1
      %p388 = por %p386, %p387
      %p389 = scmp.ne.s32.totalorder %s380, %s381
      %p390 = scmp.eq.s32.totalorder %s97, 0
      %p391 = por %p389, %p390
      %p392 = scmp.ne.s32.totalorder %s380, %s381
      %p393 = scmp.eq.s32.totalorder %s98, 1
      %p394 = por %p392, %p393
      %p396 = scmp.ne.s32.totalorder %s381, %s395
      %p397 = scmp.eq.s32.totalorder %s98, 0
      %p398 = por %p396, %p397
      %s400 = sadd.s32 %s399, 1
      %p403 = scmp.eq.s32.totalorder %s92, 1
      %p404 = scmp.ne.s32.totalorder %s399, %s401
      %p405 = scmp.eq.s32.totalorder %s92, 0
      %p406 = por %p404, %p405
      %p407 = scmp.ne.s32.totalorder %s399, %s401
      %p408 = scmp.eq.s32.totalorder %s97, 1
      %p409 = por %p407, %p408
      %p410 = scmp.ne.s32.totalorder %s401, %s402
      %p411 = scmp.eq.s32.totalorder %s97, 0
      %p412 = por %p410, %p411
      %p413 = scmp.ne.s32.totalorder %s401, %s402
      %p414 = scmp.eq.s32.totalorder %s98, 1
      %p415 = por %p413, %p414
      %p417 = scmp.ne.s32.totalorder %s402, %s416
      %p418 = scmp.eq.s32.totalorder %s98, 0
      %p419 = por %p417, %p418
      %s421 = sadd.s32 %s420, 1
      %p424 = scmp.eq.s32.totalorder %s92, 1
      %p425 = scmp.ne.s32.totalorder %s420, %s422
      %p426 = scmp.eq.s32.totalorder %s92, 0
      %p427 = por %p425, %p426
      %p428 = scmp.ne.s32.totalorder %s420, %s422
      %p429 = scmp.eq.s32.totalorder %s97, 1
      %p430 = por %p428, %p429
      %p431 = scmp.ne.s32.totalorder %s422, %s423
      %p432 = scmp.eq.s32.totalorder %s97, 0
      %p433 = por %p431, %p432
      %p434 = scmp.ne.s32.totalorder %s422, %s423
      %p435 = scmp.eq.s32.totalorder %s98, 1
      %p436 = por %p434, %p435
      %p438 = scmp.ne.s32.totalorder %s423, %s437
      %p439 = scmp.eq.s32.totalorder %s98, 0
      %p440 = por %p438, %p439
      %s442 = sadd.s32 %s441, 1
      %p445 = scmp.eq.s32.totalorder %s92, 1
      %p446 = scmp.ne.s32.totalorder %s441, %s443
      %p447 = scmp.eq.s32.totalorder %s92, 0
      %p448 = por %p446, %p447
      %p449 = scmp.ne.s32.totalorder %s441, %s443
      %p450 = scmp.eq.s32.totalorder %s97, 1
      %p451 = por %p449, %p450
      %p452 = scmp.ne.s32.totalorder %s443, %s444
      %p453 = scmp.eq.s32.totalorder %s97, 0
      %p454 = por %p452, %p453
      %p455 = scmp.ne.s32.totalorder %s443, %s444
      %p456 = scmp.eq.s32.totalorder %s98, 1
      %p457 = por %p455, %p456
      %p459 = scmp.ne.s32.totalorder %s444, %s458
      %p460 = scmp.eq.s32.totalorder %s98, 0
      %p461 = por %p459, %p460
      %s463 = sadd.s32 %s462, 1
      %p466 = scmp.eq.s32.totalorder %s92, 1
      %p467 = scmp.ne.s32.totalorder %s462, %s464
      %p468 = scmp.eq.s32.totalorder %s92, 0
      %p469 = por %p467, %p468
      %p470 = scmp.ne.s32.totalorder %s462, %s464
      %p471 = scmp.eq.s32.totalorder %s97, 1
      %p472 = por %p470, %p471
      %p473 = scmp.ne.s32.totalorder %s464, %s465
      %p474 = scmp.eq.s32.totalorder %s97, 0
      %p475 = por %p473, %p474
      %p476 = scmp.ne.s32.totalorder %s464, %s465
      %p477 = scmp.eq.s32.totalorder %s98, 1
      %p478 = por %p476, %p477
      %p480 = scmp.ne.s32.totalorder %s465, %s479
      %p481 = scmp.eq.s32.totalorder %s98, 0
      %p482 = por %p480, %p481
      %s484 = sadd.s32 %s483, 1
      %p487 = scmp.eq.s32.totalorder %s92, 1
      %p488 = scmp.ne.s32.totalorder %s483, %s485
      %p489 = scmp.eq.s32.totalorder %s92, 0
      %p490 = por %p488, %p489
      %p491 = scmp.ne.s32.totalorder %s483, %s485
      %p492 = scmp.eq.s32.totalorder %s97, 1
      %p493 = por %p491, %p492
      %p494 = scmp.ne.s32.totalorder %s485, %s486
      %p495 = scmp.eq.s32.totalorder %s97, 0
      %p496 = por %p494, %p495
      %p497 = scmp.ne.s32.totalorder %s485, %s486
      %p498 = scmp.eq.s32.totalorder %s98, 1
      %p499 = por %p497, %p498
      %p501 = scmp.ne.s32.totalorder %s486, %s500
      %p502 = scmp.eq.s32.totalorder %s98, 0
      %p503 = por %p501, %p502
      %s505 = sadd.s32 %s504, 1
      %p508 = scmp.eq.s32.totalorder %s92, 1
      %p509 = scmp.ne.s32.totalorder %s504, %s506
      %p510 = scmp.eq.s32.totalorder %s92, 0
      %p511 = por %p509, %p510
      %p512 = scmp.ne.s32.totalorder %s504, %s506
      %p513 = scmp.eq.s32.totalorder %s97, 1
      %p514 = por %p512, %p513
      %p515 = scmp.ne.s32.totalorder %s506, %s507
      %p516 = scmp.eq.s32.totalorder %s97, 0
      %p517 = por %p515, %p516
      %p518 = scmp.ne.s32.totalorder %s506, %s507
      %p519 = scmp.eq.s32.totalorder %s98, 1
      %p520 = por %p518, %p519
      %p522 = scmp.ne.s32.totalorder %s507, %s521
      %p523 = scmp.eq.s32.totalorder %s98, 0
      %p524 = por %p522, %p523
      %s526 = sadd.s32 %s525, 1
      %p529 = scmp.eq.s32.totalorder %s92, 1
      %p530 = scmp.ne.s32.totalorder %s525, %s527
      %p531 = scmp.eq.s32.totalorder %s92, 0
      %p532 = por %p530, %p531
      %p533 = scmp.ne.s32.totalorder %s525, %s527
      %p534 = scmp.eq.s32.totalorder %s97, 1
      %p535 = por %p533, %p534
      %p536 = scmp.ne.s32.totalorder %s527, %s528
      %p537 = scmp.eq.s32.totalorder %s97, 0
      %p538 = por %p536, %p537
      %p539 = scmp.ne.s32.totalorder %s527, %s528
      %p540 = scmp.eq.s32.totalorder %s98, 1
      %p541 = por %p539, %p540
      %p543 = scmp.ne.s32.totalorder %s528, %s542
      %p544 = scmp.eq.s32.totalorder %s98, 0
      %p545 = por %p543, %p544
      %s547 = sadd.s32 %s546, 1
      %p550 = scmp.eq.s32.totalorder %s92, 1
      %p551 = scmp.ne.s32.totalorder %s546, %s548
      %p552 = scmp.eq.s32.totalorder %s92, 0
      %p553 = por %p551, %p552
      %p554 = scmp.ne.s32.totalorder %s546, %s548
      %p555 = scmp.eq.s32.totalorder %s97, 1
      %p556 = por %p554, %p555
      %p557 = scmp.ne.s32.totalorder %s548, %s549
      %p558 = scmp.eq.s32.totalorder %s97, 0
      %p559 = por %p557, %p558
      %p560 = scmp.ne.s32.totalorder %s548, %s549
      %p561 = scmp.eq.s32.totalorder %s98, 1
      %p562 = por %p560, %p561
      %p564 = scmp.ne.s32.totalorder %s549, %s563
      %p565 = scmp.eq.s32.totalorder %s98, 0
      %p566 = por %p564, %p565
      %s568 = sadd.s32 %s567, 1
      %p571 = scmp.eq.s32.totalorder %s92, 1
      %p572 = scmp.ne.s32.totalorder %s567, %s569
      %p573 = scmp.eq.s32.totalorder %s92, 0
      %p574 = por %p572, %p573
      %p575 = scmp.ne.s32.totalorder %s567, %s569
      %p576 = scmp.eq.s32.totalorder %s97, 1
      %p577 = por %p575, %p576
      %p578 = scmp.ne.s32.totalorder %s569, %s570
      %p579 = scmp.eq.s32.totalorder %s97, 0
      %p580 = por %p578, %p579
      %p581 = scmp.ne.s32.totalorder %s569, %s570
      %p582 = scmp.eq.s32.totalorder %s98, 1
      %p583 = por %p581, %p582
      %p585 = scmp.ne.s32.totalorder %s570, %s584
      %p586 = scmp.eq.s32.totalorder %s98, 0
      %p587 = por %p585, %p586
      %s589 = sadd.s32 %s588, 1
      %p592 = scmp.eq.s32.totalorder %s92, 1
      %p593 = scmp.ne.s32.totalorder %s588, %s590
      %p594 = scmp.eq.s32.totalorder %s92, 0
      %p595 = por %p593, %p594
      %p596 = scmp.ne.s32.totalorder %s588, %s590
      %p597 = scmp.eq.s32.totalorder %s97, 1
      %p598 = por %p596, %p597
      %p599 = scmp.ne.s32.totalorder %s590, %s591
      %p600 = scmp.eq.s32.totalorder %s97, 0
      %p601 = por %p599, %p600
      %p602 = scmp.ne.s32.totalorder %s590, %s591
      %p603 = scmp.eq.s32.totalorder %s98, 1
      %p604 = por %p602, %p603
      %p606 = scmp.ne.s32.totalorder %s591, %s605
      %p607 = scmp.eq.s32.totalorder %s98, 0
      %p608 = por %p606, %p607
      %s610 = sadd.s32 %s609, 1
      %p613 = scmp.eq.s32.totalorder %s92, 1
      %p614 = scmp.ne.s32.totalorder %s609, %s611
      %p615 = scmp.eq.s32.totalorder %s92, 0
      %p616 = por %p614, %p615
      %p617 = scmp.ne.s32.totalorder %s609, %s611
      %p618 = scmp.eq.s32.totalorder %s97, 1
      %p619 = por %p617, %p618
      %p620 = scmp.ne.s32.totalorder %s611, %s612
      %p621 = scmp.eq.s32.totalorder %s97, 0
      %p622 = por %p620, %p621
      %p623 = scmp.ne.s32.totalorder %s611, %s612
      %p624 = scmp.eq.s32.totalorder %s98, 1
      %p625 = por %p623, %p624
      %p627 = scmp.ne.s32.totalorder %s612, %s626
      %p628 = scmp.eq.s32.totalorder %s98, 0
      %p629 = por %p627, %p628
      %s631 = sadd.s32 %s630, 1
      %p634 = scmp.eq.s32.totalorder %s92, 1
      %p635 = scmp.ne.s32.totalorder %s630, %s632
      %p636 = scmp.eq.s32.totalorder %s92, 0
      %p637 = por %p635, %p636
      %p638 = scmp.ne.s32.totalorder %s630, %s632
      %p639 = scmp.eq.s32.totalorder %s97, 1
      %p640 = por %p638, %p639
      %p641 = scmp.ne.s32.totalorder %s632, %s633
      %p642 = scmp.eq.s32.totalorder %s97, 0
      %p643 = por %p641, %p642
      %p644 = scmp.ne.s32.totalorder %s632, %s633
      %p645 = scmp.eq.s32.totalorder %s98, 1
      %p646 = por %p644, %p645
      %p648 = scmp.ne.s32.totalorder %s633, %s647
      %p649 = scmp.eq.s32.totalorder %s98, 0
      %p650 = por %p648, %p649
      %s652 = sadd.s32 %s651, 1
      %p655 = scmp.eq.s32.totalorder %s92, 1
      %p656 = scmp.ne.s32.totalorder %s651, %s653
      %p657 = scmp.eq.s32.totalorder %s92, 0
      %p658 = por %p656, %p657
      %p659 = scmp.ne.s32.totalorder %s651, %s653
      %p660 = scmp.eq.s32.totalorder %s97, 1
      %p661 = por %p659, %p660
      %p662 = scmp.ne.s32.totalorder %s653, %s654
      %p663 = scmp.eq.s32.totalorder %s97, 0
      %p664 = por %p662, %p663
      %p665 = scmp.ne.s32.totalorder %s653, %s654
      %p666 = scmp.eq.s32.totalorder %s98, 1
      %p667 = por %p665, %p666
      %p669 = scmp.ne.s32.totalorder %s654, %s668
      %p670 = scmp.eq.s32.totalorder %s98, 0
      %p671 = por %p669, %p670
      %s673 = sadd.s32 %s672, 1
      %p676 = scmp.eq.s32.totalorder %s92, 1
      %p677 = scmp.ne.s32.totalorder %s672, %s674
      %p678 = scmp.eq.s32.totalorder %s92, 0
      %p679 = por %p677, %p678
      %p680 = scmp.ne.s32.totalorder %s672, %s674
      %p681 = scmp.eq.s32.totalorder %s97, 1
      %p682 = por %p680, %p681
      %p683 = scmp.ne.s32.totalorder %s674, %s675
      %p684 = scmp.eq.s32.totalorder %s97, 0
      %p685 = por %p683, %p684
      %p686 = scmp.ne.s32.totalorder %s674, %s675
      %p687 = scmp.eq.s32.totalorder %s98, 1
      %p688 = por %p686, %p687
      %p690 = scmp.ne.s32.totalorder %s675, %s689
      %p691 = scmp.eq.s32.totalorder %s98, 0
      %p692 = por %p690, %p691
      %s694 = sadd.s32 %s693, 1
      %p697 = scmp.eq.s32.totalorder %s92, 1
      %p698 = scmp.ne.s32.totalorder %s693, %s695
      %p699 = scmp.eq.s32.totalorder %s92, 0
      %p700 = por %p698, %p699
      %p701 = scmp.ne.s32.totalorder %s693, %s695
      %p702 = scmp.eq.s32.totalorder %s97, 1
      %p703 = por %p701, %p702
      %p704 = scmp.ne.s32.totalorder %s695, %s696
      %p705 = scmp.eq.s32.totalorder %s97, 0
      %p706 = por %p704, %p705
      %p707 = scmp.ne.s32.totalorder %s695, %s696
      %p708 = scmp.eq.s32.totalorder %s98, 1
      %p709 = por %p707, %p708
      %p711 = scmp.ne.s32.totalorder %s696, %s710
      %p712 = scmp.eq.s32.totalorder %s98, 0
      %p713 = por %p711, %p712
      %s715 = sadd.s32 %s714, 1
      %p718 = scmp.eq.s32.totalorder %s92, 1
      %p719 = scmp.ne.s32.totalorder %s714, %s716
      %p720 = scmp.eq.s32.totalorder %s92, 0
      %p721 = por %p719, %p720
      %p722 = scmp.ne.s32.totalorder %s714, %s716
      %p723 = scmp.eq.s32.totalorder %s97, 1
      %p724 = por %p722, %p723
      %p725 = scmp.ne.s32.totalorder %s716, %s717
      %p726 = scmp.eq.s32.totalorder %s97, 0
      %p727 = por %p725, %p726
      %p728 = scmp.ne.s32.totalorder %s716, %s717
      %p729 = scmp.eq.s32.totalorder %s98, 1
      %p730 = por %p728, %p729
      %p732 = scmp.ne.s32.totalorder %s717, %s731
      %p733 = scmp.eq.s32.totalorder %s98, 0
      %p734 = por %p732, %p733
      %s736 = sadd.s32 %s735, 1
      %p739 = scmp.eq.s32.totalorder %s92, 1
      %p740 = scmp.ne.s32.totalorder %s735, %s737
      %p741 = scmp.eq.s32.totalorder %s92, 0
      %p742 = por %p740, %p741
      %p743 = scmp.ne.s32.totalorder %s735, %s737
      %p744 = scmp.eq.s32.totalorder %s97, 1
      %p745 = por %p743, %p744
      %p746 = scmp.ne.s32.totalorder %s737, %s738
      %p747 = scmp.eq.s32.totalorder %s97, 0
      %p748 = por %p746, %p747
      %p749 = scmp.ne.s32.totalorder %s737, %s738
      %p750 = scmp.eq.s32.totalorder %s98, 1
      %p751 = por %p749, %p750
      %p753 = scmp.ne.s32.totalorder %s738, %s752
      %p754 = scmp.eq.s32.totalorder %s98, 0
      %p755 = por %p753, %p754
      %s757 = sadd.s32 %s756, 1
      %p760 = scmp.eq.s32.totalorder %s92, 1
      %p761 = scmp.ne.s32.totalorder %s756, %s758
      %p762 = scmp.eq.s32.totalorder %s92, 0
      %p763 = por %p761, %p762
      %p764 = scmp.ne.s32.totalorder %s756, %s758
      %p765 = scmp.eq.s32.totalorder %s97, 1
      %p766 = por %p764, %p765
      %p767 = scmp.ne.s32.totalorder %s758, %s759
      %p768 = scmp.eq.s32.totalorder %s97, 0
      %p769 = por %p767, %p768
      %p770 = scmp.ne.s32.totalorder %s758, %s759
      %p771 = scmp.eq.s32.totalorder %s98, 1
      %p772 = por %p770, %p771
      %p774 = scmp.ne.s32.totalorder %s759, %s773
      %p775 = scmp.eq.s32.totalorder %s98, 0
      %p776 = por %p774, %p775
      %s778 = sadd.s32 %s777, 1
      %p781 = scmp.eq.s32.totalorder %s92, 1
      %p782 = scmp.ne.s32.totalorder %s777, %s779
      %p783 = scmp.eq.s32.totalorder %s92, 0
      %p784 = por %p782, %p783
      %p785 = scmp.ne.s32.totalorder %s777, %s779
      %p786 = scmp.eq.s32.totalorder %s97, 1
      %p787 = por %p785, %p786
      %p788 = scmp.ne.s32.totalorder %s779, %s780
      %p789 = scmp.eq.s32.totalorder %s97, 0
      %p790 = por %p788, %p789
      %p791 = scmp.ne.s32.totalorder %s779, %s780
      %p792 = scmp.eq.s32.totalorder %s98, 1
      %p793 = por %p791, %p792
      %p795 = scmp.ne.s32.totalorder %s780, %s794
      %p796 = scmp.eq.s32.totalorder %s98, 0
      %p797 = por %p795, %p796
      %s799 = sadd.s32 %s798, 1
      %p802 = scmp.eq.s32.totalorder %s92, 1
      %p803 = scmp.ne.s32.totalorder %s798, %s800
      %p804 = scmp.eq.s32.totalorder %s92, 0
      %p805 = por %p803, %p804
      %p806 = scmp.ne.s32.totalorder %s798, %s800
      %p807 = scmp.eq.s32.totalorder %s97, 1
      %p808 = por %p806, %p807
      %p809 = scmp.ne.s32.totalorder %s800, %s801
      %p810 = scmp.eq.s32.totalorder %s97, 0
      %p811 = por %p809, %p810
      %p812 = scmp.ne.s32.totalorder %s800, %s801
      %p813 = scmp.eq.s32.totalorder %s98, 1
      %p814 = por %p812, %p813
      %p816 = scmp.ne.s32.totalorder %s801, %s815
      %p817 = scmp.eq.s32.totalorder %s98, 0
      %p818 = por %p816, %p817
      %s820 = sadd.s32 %s819, 1
      %p823 = scmp.eq.s32.totalorder %s92, 1
      %p824 = scmp.ne.s32.totalorder %s819, %s821
      %p825 = scmp.eq.s32.totalorder %s92, 0
      %p826 = por %p824, %p825
      %p827 = scmp.ne.s32.totalorder %s819, %s821
      %p828 = scmp.eq.s32.totalorder %s97, 1
      %p829 = por %p827, %p828
      %p830 = scmp.ne.s32.totalorder %s821, %s822
      %p831 = scmp.eq.s32.totalorder %s97, 0
      %p832 = por %p830, %p831
      %p833 = scmp.ne.s32.totalorder %s821, %s822
      %p834 = scmp.eq.s32.totalorder %s98, 1
      %p835 = por %p833, %p834
      %p837 = scmp.ne.s32.totalorder %s822, %s836
      %p838 = scmp.eq.s32.totalorder %s98, 0
      %p839 = por %p837, %p838
      %s841 = sadd.s32 %s840, 1
      %p844 = scmp.eq.s32.totalorder %s92, 1
      %p845 = scmp.ne.s32.totalorder %s840, %s842
      %p846 = scmp.eq.s32.totalorder %s92, 0
      %p847 = por %p845, %p846
      %p848 = scmp.ne.s32.totalorder %s840, %s842
      %p849 = scmp.eq.s32.totalorder %s97, 1
      %p850 = por %p848, %p849
      %p851 = scmp.ne.s32.totalorder %s842, %s843
      %p852 = scmp.eq.s32.totalorder %s97, 0
      %p853 = por %p851, %p852
      %p854 = scmp.ne.s32.totalorder %s842, %s843
      %p855 = scmp.eq.s32.totalorder %s98, 1
      %p856 = por %p854, %p855
      %p858 = scmp.ne.s32.totalorder %s843, %s857
      %p859 = scmp.eq.s32.totalorder %s98, 0
      %p860 = por %p858, %p859
      %s862 = sadd.s32 %s861, 1
      %p865 = scmp.eq.s32.totalorder %s92, 1
      %p866 = scmp.ne.s32.totalorder %s861, %s863
      %p867 = scmp.eq.s32.totalorder %s92, 0
      %p868 = por %p866, %p867
      %p869 = scmp.ne.s32.totalorder %s861, %s863
      %p870 = scmp.eq.s32.totalorder %s97, 1
      %p871 = por %p869, %p870
      %p872 = scmp.ne.s32.totalorder %s863, %s864
      %p873 = scmp.eq.s32.totalorder %s97, 0
      %p874 = por %p872, %p873
      %p875 = scmp.ne.s32.totalorder %s863, %s864
      %p876 = scmp.eq.s32.totalorder %s98, 1
      %p877 = por %p875, %p876
      %p879 = scmp.ne.s32.totalorder %s864, %s878
      %p880 = scmp.eq.s32.totalorder %s98, 0
      %p881 = por %p879, %p880
      %s883 = sadd.s32 %s882, 1
      %p886 = scmp.eq.s32.totalorder %s92, 1
      %p887 = scmp.ne.s32.totalorder %s882, %s884
      %p888 = scmp.eq.s32.totalorder %s92, 0
      %p889 = por %p887, %p888
      %p890 = scmp.ne.s32.totalorder %s882, %s884
      %p891 = scmp.eq.s32.totalorder %s97, 1
      %p892 = por %p890, %p891
      %p893 = scmp.ne.s32.totalorder %s884, %s885
      %p894 = scmp.eq.s32.totalorder %s97, 0
      %p895 = por %p893, %p894
      %p896 = scmp.ne.s32.totalorder %s884, %s885
      %p897 = scmp.eq.s32.totalorder %s98, 1
      %p898 = por %p896, %p897
      %p900 = scmp.ne.s32.totalorder %s885, %s899
      %p901 = scmp.eq.s32.totalorder %s98, 0
      %p902 = por %p900, %p901
      %s903 = ssub.s32 %s92, %s99
      %p904 = scmp.eq.s32.totalorder %s903, 0
      %s906 = sadd.s32 %s905, 1
      %s907 = scalar_select %p904, %s905, %s906
      %p910 = pneg %p904
      %p911 = scmp.eq.s32.totalorder %s92, 1
      %p912 = por %p910, %p911
      %p913 = scmp.ne.s32.totalorder %s905, %s908
      %p914 = scmp.eq.s32.totalorder %s92, 0
      %p915 = por %p913, %p914
      %p916 = scmp.ne.s32.totalorder %s905, %s908
      %p917 = scmp.eq.s32.totalorder %s97, 1
      %p918 = por %p916, %p917
      %p919 = scmp.ne.s32.totalorder %s908, %s909
      %p920 = scmp.eq.s32.totalorder %s97, 0
      %p921 = por %p919, %p920
      %p922 = scmp.ne.s32.totalorder %s908, %s909
      %p923 = scmp.eq.s32.totalorder %s98, 1
      %p924 = por %p922, %p923
      %p926 = scmp.ne.s32.totalorder %s909, %s925
      %p927 = scmp.eq.s32.totalorder %s98, 0
      %p928 = por %p926, %p927
      %s929 = ssub.s32 %s92, %s99
      %p930 = scmp.eq.s32.totalorder %s929, 0
      %s932 = sadd.s32 %s931, 1
      %s933 = scalar_select %p930, %s931, %s932
      %p936 = pneg %p930
      %p937 = scmp.eq.s32.totalorder %s92, 1
      %p938 = por %p936, %p937
      %p939 = scmp.ne.s32.totalorder %s931, %s934
      %p940 = scmp.eq.s32.totalorder %s92, 0
      %p941 = por %p939, %p940
      %p942 = scmp.ne.s32.totalorder %s931, %s934
      %p943 = scmp.eq.s32.totalorder %s97, 1
      %p944 = por %p942, %p943
      %p945 = scmp.ne.s32.totalorder %s934, %s935
      %p946 = scmp.eq.s32.totalorder %s97, 0
      %p947 = por %p945, %p946
      %p948 = scmp.ne.s32.totalorder %s934, %s935
      %p949 = scmp.eq.s32.totalorder %s98, 1
      %p950 = por %p948, %p949
      %p952 = scmp.ne.s32.totalorder %s935, %s951
      %p953 = scmp.eq.s32.totalorder %s98, 0
      %p954 = por %p952, %p953
      %p955 = scmp.le.s32.totalorder 1, %s92
      %p956 = scmp.lt.s32.totalorder %s92, 3
      %p957 = pnand %p955, %p956
      %p958 = pneg %p957
      // Predicated region
      $region9: #{swin_feature_extractor.1} parent=5 // pred_check
        _
      $region10: #{swin_feature_extractor.1} parent=5 // pred_check_branch
        %960 = sbr.rel (%p957) target = $region12
      $region11: #{swin_feature_extractor.1} parent=5 // pred_region
        %s961 = ssub.s32 %s92, 1
        // Predicated region
        $region13: #{swin_feature_extractor.1} parent=11 // pred_check
          %p962 = pneg %p139
        $region14: #{swin_feature_extractor.1} parent=11 // pred_check_branch
          %964 = sbr.rel (%p962) target = $region16
        $region15: #{swin_feature_extractor.1} parent=11 // pred_region
          _
        $region16: #{swin_feature_extractor.1} parent=11 // pred_fallthru
          _
        // Predicated region
        $region17: #{swin_feature_extractor.1} parent=11 // pred_check
          %p965 = pneg %p160
        $region18: #{swin_feature_extractor.1} parent=11 // pred_check_branch
          %967 = sbr.rel (%p965) target = $region20
        $region19: #{swin_feature_extractor.1} parent=11 // pred_region
          _
        $region20: #{swin_feature_extractor.1} parent=11 // pred_fallthru
          _
        // Predicated region
        $region21: #{swin_feature_extractor.1} parent=11 // pred_check
          %p968 = pneg %p181
        $region22: #{swin_feature_extractor.1} parent=11 // pred_check_branch
          %970 = sbr.rel (%p968) target = $region24
        $region23: #{swin_feature_extractor.1} parent=11 // pred_region
          _
        $region24: #{swin_feature_extractor.1} parent=11 // pred_fallthru
          _
        // Predicated region
        $region25: #{swin_feature_extractor.1} parent=11 // pred_check
          %p971 = pneg %p202
        $region26: #{swin_feature_extractor.1} parent=11 // pred_check_branch
          %973 = sbr.rel (%p971) target = $region28
        $region27: #{swin_feature_extractor.1} parent=11 // pred_region
          _
        $region28: #{swin_feature_extractor.1} parent=11 // pred_fallthru
          _
        // Predicated region
        $region29: #{swin_feature_extractor.1} parent=11 // pred_check
          %p974 = pneg %p223
        $region30: #{swin_feature_extractor.1} parent=11 // pred_check_branch
          %976 = sbr.rel (%p974) target = $region32
        $region31: #{swin_feature_extractor.1} parent=11 // pred_region
          _
        $region32: #{swin_feature_extractor.1} parent=11 // pred_fallthru
          _
        // Predicated region
        $region33: #{swin_feature_extractor.1} parent=11 // pred_check
          %p977 = pneg %p244
        $region34: #{swin_feature_extractor.1} parent=11 // pred_check_branch
          %979 = sbr.rel (%p977) target = $region36
        $region35: #{swin_feature_extractor.1} parent=11 // pred_region
          _
        $region36: #{swin_feature_extractor.1} parent=11 // pred_fallthru
          _
        // Predicated region
        $region37: #{swin_feature_extractor.1} parent=11 // pred_check
          %p980 = pneg %p265
        $region38: #{swin_feature_extractor.1} parent=11 // pred_check_branch
          %982 = sbr.rel (%p980) target = $region40
        $region39: #{swin_feature_extractor.1} parent=11 // pred_region
          _
        $region40: #{swin_feature_extractor.1} parent=11 // pred_fallthru
          _
        // Predicated region
        $region41: #{swin_feature_extractor.1} parent=11 // pred_check
          %p983 = pneg %p286
        $region42: #{swin_feature_extractor.1} parent=11 // pred_check_branch
          %985 = sbr.rel (%p983) target = $region44
        $region43: #{swin_feature_extractor.1} parent=11 // pred_region
          _
        $region44: #{swin_feature_extractor.1} parent=11 // pred_fallthru
          _
        // Predicated region
        $region45: #{swin_feature_extractor.1} parent=11 // pred_check
          %p986 = pneg %p307
        $region46: #{swin_feature_extractor.1} parent=11 // pred_check_branch
          %988 = sbr.rel (%p986) target = $region48
        $region47: #{swin_feature_extractor.1} parent=11 // pred_region
          _
        $region48: #{swin_feature_extractor.1} parent=11 // pred_fallthru
          _
        // Predicated region
        $region49: #{swin_feature_extractor.1} parent=11 // pred_check
          %p989 = pneg %p328
        $region50: #{swin_feature_extractor.1} parent=11 // pred_check_branch
          %991 = sbr.rel (%p989) target = $region52
        $region51: #{swin_feature_extractor.1} parent=11 // pred_region
          _
        $region52: #{swin_feature_extractor.1} parent=11 // pred_fallthru
          _
        // Predicated region
        $region53: #{swin_feature_extractor.1} parent=11 // pred_check
          %p992 = pneg %p349
        $region54: #{swin_feature_extractor.1} parent=11 // pred_check_branch
          %994 = sbr.rel (%p992) target = $region56
        $region55: #{swin_feature_extractor.1} parent=11 // pred_region
          _
        $region56: #{swin_feature_extractor.1} parent=11 // pred_fallthru
          _
        // Predicated region
        $region57: #{swin_feature_extractor.1} parent=11 // pred_check
          %p995 = pneg %p370
        $region58: #{swin_feature_extractor.1} parent=11 // pred_check_branch
          %997 = sbr.rel (%p995) target = $region60
        $region59: #{swin_feature_extractor.1} parent=11 // pred_region
          _
        $region60: #{swin_feature_extractor.1} parent=11 // pred_fallthru
          _
        // Predicated region
        $region61: #{swin_feature_extractor.1} parent=11 // pred_check
          %p998 = pneg %p391
        $region62: #{swin_feature_extractor.1} parent=11 // pred_check_branch
          %1000 = sbr.rel (%p998) target = $region64
        $region63: #{swin_feature_extractor.1} parent=11 // pred_region
          _
        $region64: #{swin_feature_extractor.1} parent=11 // pred_fallthru
          _
        // Predicated region
        $region65: #{swin_feature_extractor.1} parent=11 // pred_check
          %p1001 = pneg %p412
        $region66: #{swin_feature_extractor.1} parent=11 // pred_check_branch
          %1003 = sbr.rel (%p1001) target = $region68
        $region67: #{swin_feature_extractor.1} parent=11 // pred_region
          _
        $region68: #{swin_feature_extractor.1} parent=11 // pred_fallthru
          _
        // Predicated region
        $region69: #{swin_feature_extractor.1} parent=11 // pred_check
          %p1004 = pneg %p433
        $region70: #{swin_feature_extractor.1} parent=11 // pred_check_branch
          %1006 = sbr.rel (%p1004) target = $region72
        $region71: #{swin_feature_extractor.1} parent=11 // pred_region
          _
        $region72: #{swin_feature_extractor.1} parent=11 // pred_fallthru
          _
        // Predicated region
        $region73: #{swin_feature_extractor.1} parent=11 // pred_check
          %p1007 = pneg %p454
        $region74: #{swin_feature_extractor.1} parent=11 // pred_check_branch
          %1009 = sbr.rel (%p1007) target = $region76
        $region75: #{swin_feature_extractor.1} parent=11 // pred_region
          _
        $region76: #{swin_feature_extractor.1} parent=11 // pred_fallthru
          _
        // Predicated region
        $region77: #{swin_feature_extractor.1} parent=11 // pred_check
          %p1010 = pneg %p475
        $region78: #{swin_feature_extractor.1} parent=11 // pred_check_branch
          %1012 = sbr.rel (%p1010) target = $region80
        $region79: #{swin_feature_extractor.1} parent=11 // pred_region
          _
        $region80: #{swin_feature_extractor.1} parent=11 // pred_fallthru
          _
        // Predicated region
        $region81: #{swin_feature_extractor.1} parent=11 // pred_check
          %p1013 = pneg %p496
        $region82: #{swin_feature_extractor.1} parent=11 // pred_check_branch
          %1015 = sbr.rel (%p1013) target = $region84
        $region83: #{swin_feature_extractor.1} parent=11 // pred_region
          _
        $region84: #{swin_feature_extractor.1} parent=11 // pred_fallthru
          _
        // Predicated region
        $region85: #{swin_feature_extractor.1} parent=11 // pred_check
          %p1016 = pneg %p517
        $region86: #{swin_feature_extractor.1} parent=11 // pred_check_branch
          %1018 = sbr.rel (%p1016) target = $region88
        $region87: #{swin_feature_extractor.1} parent=11 // pred_region
          _
        $region88: #{swin_feature_extractor.1} parent=11 // pred_fallthru
          _
        // Predicated region
        $region89: #{swin_feature_extractor.1} parent=11 // pred_check
          %p1019 = pneg %p538
        $region90: #{swin_feature_extractor.1} parent=11 // pred_check_branch
          %1021 = sbr.rel (%p1019) target = $region92
        $region91: #{swin_feature_extractor.1} parent=11 // pred_region
          _
        $region92: #{swin_feature_extractor.1} parent=11 // pred_fallthru
          _
        // Predicated region
        $region93: #{swin_feature_extractor.1} parent=11 // pred_check
          %p1022 = pneg %p559
        $region94: #{swin_feature_extractor.1} parent=11 // pred_check_branch
          %1024 = sbr.rel (%p1022) target = $region96
        $region95: #{swin_feature_extractor.1} parent=11 // pred_region
          _
        $region96: #{swin_feature_extractor.1} parent=11 // pred_fallthru
          _
        // Predicated region
        $region97: #{swin_feature_extractor.1} parent=11 // pred_check
          %p1025 = pneg %p580
        $region98: #{swin_feature_extractor.1} parent=11 // pred_check_branch
          %1027 = sbr.rel (%p1025) target = $region100
        $region99: #{swin_feature_extractor.1} parent=11 // pred_region
          _
        $region100: #{swin_feature_extractor.1} parent=11 // pred_fallthru
          _
        // Predicated region
        $region101: #{swin_feature_extractor.1} parent=11 // pred_check
          %p1028 = pneg %p601
        $region102: #{swin_feature_extractor.1} parent=11 // pred_check_branch
          %1030 = sbr.rel (%p1028) target = $region104
        $region103: #{swin_feature_extractor.1} parent=11 // pred_region
          _
        $region104: #{swin_feature_extractor.1} parent=11 // pred_fallthru
          _
        // Predicated region
        $region105: #{swin_feature_extractor.1} parent=11 // pred_check
          %p1031 = pneg %p622
        $region106: #{swin_feature_extractor.1} parent=11 // pred_check_branch
          %1033 = sbr.rel (%p1031) target = $region108
        $region107: #{swin_feature_extractor.1} parent=11 // pred_region
          _
        $region108: #{swin_feature_extractor.1} parent=11 // pred_fallthru
          _
        // Predicated region
        $region109: #{swin_feature_extractor.1} parent=11 // pred_check
          %p1034 = pneg %p643
        $region110: #{swin_feature_extractor.1} parent=11 // pred_check_branch
          %1036 = sbr.rel (%p1034) target = $region112
        $region111: #{swin_feature_extractor.1} parent=11 // pred_region
          _
        $region112: #{swin_feature_extractor.1} parent=11 // pred_fallthru
          _
        // Predicated region
        $region113: #{swin_feature_extractor.1} parent=11 // pred_check
          %p1037 = pneg %p664
        $region114: #{swin_feature_extractor.1} parent=11 // pred_check_branch
          %1039 = sbr.rel (%p1037) target = $region116
        $region115: #{swin_feature_extractor.1} parent=11 // pred_region
          _
        $region116: #{swin_feature_extractor.1} parent=11 // pred_fallthru
          _
        // Predicated region
        $region117: #{swin_feature_extractor.1} parent=11 // pred_check
          %p1040 = pneg %p685
        $region118: #{swin_feature_extractor.1} parent=11 // pred_check_branch
          %1042 = sbr.rel (%p1040) target = $region120
        $region119: #{swin_feature_extractor.1} parent=11 // pred_region
          _
        $region120: #{swin_feature_extractor.1} parent=11 // pred_fallthru
          _
        // Predicated region
        $region121: #{swin_feature_extractor.1} parent=11 // pred_check
          %p1043 = pneg %p706
        $region122: #{swin_feature_extractor.1} parent=11 // pred_check_branch
          %1045 = sbr.rel (%p1043) target = $region124
        $region123: #{swin_feature_extractor.1} parent=11 // pred_region
          _
        $region124: #{swin_feature_extractor.1} parent=11 // pred_fallthru
          _
        // Predicated region
        $region125: #{swin_feature_extractor.1} parent=11 // pred_check
          %p1046 = pneg %p727
        $region126: #{swin_feature_extractor.1} parent=11 // pred_check_branch
          %1048 = sbr.rel (%p1046) target = $region128
        $region127: #{swin_feature_extractor.1} parent=11 // pred_region
          _
        $region128: #{swin_feature_extractor.1} parent=11 // pred_fallthru
          _
        // Predicated region
        $region129: #{swin_feature_extractor.1} parent=11 // pred_check
          %p1049 = pneg %p748
        $region130: #{swin_feature_extractor.1} parent=11 // pred_check_branch
          %1051 = sbr.rel (%p1049) target = $region132
        $region131: #{swin_feature_extractor.1} parent=11 // pred_region
          _
        $region132: #{swin_feature_extractor.1} parent=11 // pred_fallthru
          _
        // Predicated region
        $region133: #{swin_feature_extractor.1} parent=11 // pred_check
          %p1052 = pneg %p769
        $region134: #{swin_feature_extractor.1} parent=11 // pred_check_branch
          %1054 = sbr.rel (%p1052) target = $region136
        $region135: #{swin_feature_extractor.1} parent=11 // pred_region
          _
        $region136: #{swin_feature_extractor.1} parent=11 // pred_fallthru
          _
        // Predicated region
        $region137: #{swin_feature_extractor.1} parent=11 // pred_check
          %p1055 = pneg %p790
        $region138: #{swin_feature_extractor.1} parent=11 // pred_check_branch
          %1057 = sbr.rel (%p1055) target = $region140
        $region139: #{swin_feature_extractor.1} parent=11 // pred_region
          _
        $region140: #{swin_feature_extractor.1} parent=11 // pred_fallthru
          _
        // Predicated region
        $region141: #{swin_feature_extractor.1} parent=11 // pred_check
          %p1058 = pneg %p811
        $region142: #{swin_feature_extractor.1} parent=11 // pred_check_branch
          %1060 = sbr.rel (%p1058) target = $region144
        $region143: #{swin_feature_extractor.1} parent=11 // pred_region
          _
        $region144: #{swin_feature_extractor.1} parent=11 // pred_fallthru
          _
        // Predicated region
        $region145: #{swin_feature_extractor.1} parent=11 // pred_check
          %p1061 = pneg %p832
        $region146: #{swin_feature_extractor.1} parent=11 // pred_check_branch
          %1063 = sbr.rel (%p1061) target = $region148
        $region147: #{swin_feature_extractor.1} parent=11 // pred_region
          _
        $region148: #{swin_feature_extractor.1} parent=11 // pred_fallthru
          _
        // Predicated region
        $region149: #{swin_feature_extractor.1} parent=11 // pred_check
          %p1064 = pneg %p853
        $region150: #{swin_feature_extractor.1} parent=11 // pred_check_branch
          %1066 = sbr.rel (%p1064) target = $region152
        $region151: #{swin_feature_extractor.1} parent=11 // pred_region
          _
        $region152: #{swin_feature_extractor.1} parent=11 // pred_fallthru
          _
        // Predicated region
        $region153: #{swin_feature_extractor.1} parent=11 // pred_check
          %p1067 = pneg %p874
        $region154: #{swin_feature_extractor.1} parent=11 // pred_check_branch
          %1069 = sbr.rel (%p1067) target = $region156
        $region155: #{swin_feature_extractor.1} parent=11 // pred_region
          _
        $region156: #{swin_feature_extractor.1} parent=11 // pred_fallthru
          _
        // Predicated region
        $region157: #{swin_feature_extractor.1} parent=11 // pred_check
          %p1070 = pneg %p895
        $region158: #{swin_feature_extractor.1} parent=11 // pred_check_branch
          %1072 = sbr.rel (%p1070) target = $region160
        $region159: #{swin_feature_extractor.1} parent=11 // pred_region
          _
        $region160: #{swin_feature_extractor.1} parent=11 // pred_fallthru
          _
      $region12: #{swin_feature_extractor.1} parent=5 // pred_fallthru
        _
      %p1073 = scmp.lt.s32.totalorder %s92, 2
      // Predicated region
      $region161: #{swin_feature_extractor.1} parent=5 // pred_check
        %p1074 = pneg %p1073
      $region162: #{swin_feature_extractor.1} parent=5 // pred_check_branch
        %1076 = sbr.rel (%p1074) target = $region164
      $region163: #{swin_feature_extractor.1} parent=5 // pred_region
        // Predicated region
        $region165: #{swin_feature_extractor.1} parent=163 // pred_check
          %p1077 = pneg %p112
        $region166: #{swin_feature_extractor.1} parent=163 // pred_check_branch
          %1079 = sbr.rel (%p1077) target = $region168
        $region167: #{swin_feature_extractor.1} parent=163 // pred_region
          %s1080 = smul.u32 8, %s92
          %p1081 = scmp.lt.s32.totalorder %s1080, 15
          %s1082 = scalar_select %p1081, %s1080, 15
          %s1083 = smul.addr %s1082, 8
          %s1084 = scalar_lea.vmem %s1, %s1083
          %s1085 = smul.u32 8, %s92
        $region168: #{swin_feature_extractor.1} parent=163 // pred_fallthru
          _
      $region164: #{swin_feature_extractor.1} parent=5 // pred_fallthru
        _
      %p1086 = scmp.le.s32.totalorder 1, %s92
      %p1087 = scmp.lt.s32.totalorder %s92, 3
      %p1088 = pnand %p1086, %p1087
      %p1089 = pneg %p1088
      // Predicated region
      $region169: #{swin_feature_extractor.1} parent=5 // pred_check
        _
      $region170: #{swin_feature_extractor.1} parent=5 // pred_check_branch
        %1091 = sbr.rel (%p1088) target = $region172
      $region171: #{swin_feature_extractor.1} parent=5 // pred_region
        %s1092 = ssub.s32 %s92, 1
        %s1093 = smul.u32 8, %s97
        %p1094 = scmp.lt.s32.totalorder %s1093, 15
        %s1095 = scalar_select %p1094, %s1093, 15
        %s1096 = smul.addr %s1095, 8
        %s1097 = scalar_lea.vmem %s1, %s1096
        %p1098 = pneg %p118
        %p1099 = pneg %p115
        %p1100 = pneg %p139
        %p1101 = pneg %p136
        %p1102 = pneg %p160
        %p1103 = pneg %p157
        %p1104 = pneg %p181
        %p1105 = pneg %p178
        %p1106 = pneg %p202
        %p1107 = pneg %p199
        %p1108 = pneg %p223
        %p1109 = pneg %p220
        %p1110 = pneg %p244
        %p1111 = pneg %p241
        %p1112 = pneg %p265
        %p1113 = pneg %p262
        %p1114 = pneg %p286
        %p1115 = pneg %p283
        %p1116 = pneg %p307
        %p1117 = pneg %p304
        %p1118 = pneg %p328
        %p1119 = pneg %p325
        %p1120 = pneg %p349
        %p1121 = pneg %p346
        %p1122 = pneg %p370
        %p1123 = pneg %p367
        %p1124 = pneg %p391
        %p1125 = pneg %p388
        %p1126 = pneg %p412
        %p1127 = pneg %p409
        %p1128 = pneg %p433
        %p1129 = pneg %p430
        %p1130 = pneg %p454
        %p1131 = pneg %p451
        %p1132 = pneg %p475
        %p1133 = pneg %p472
        %p1134 = pneg %p496
        %p1135 = pneg %p493
        %p1136 = pneg %p517
        %p1137 = pneg %p514
        %p1138 = pneg %p538
        %p1139 = pneg %p535
        %p1140 = pneg %p559
        %p1141 = pneg %p556
        %p1142 = pneg %p580
        %p1143 = pneg %p577
        %p1144 = pneg %p601
        %p1145 = pneg %p598
        %p1146 = pneg %p622
        %p1147 = pneg %p619
        %p1148 = pneg %p643
        %p1149 = pneg %p640
        %p1150 = pneg %p664
        %p1151 = pneg %p661
        %p1152 = pneg %p685
        %p1153 = pneg %p682
        %p1154 = pneg %p706
        %p1155 = pneg %p703
        %p1156 = pneg %p727
        %p1157 = pneg %p724
        %p1158 = pneg %p748
        %p1159 = pneg %p745
        %p1160 = pneg %p769
        %p1161 = pneg %p766
        %p1162 = pneg %p790
        %p1163 = pneg %p787
        %p1164 = pneg %p811
        %p1165 = pneg %p808
        %p1166 = pneg %p832
        %p1167 = pneg %p829
        %p1168 = pneg %p853
        %p1169 = pneg %p850
        %p1170 = pneg %p874
        %p1171 = pneg %p871
        %p1172 = pneg %p895
        %p1173 = pneg %p892
        %p1174 = pneg %p921
        %p1175 = pneg %p918
        %s1176 = sand.u32 %s908, 1
        %s1177 = scalar_lea.sflag [#allocation3], %s1176
        %s1178 = sand.u32 %s908, 1
        %s1179 = smul.addr %s1178, 64
        %s1180 = scalar_lea.vmem [#allocation2], %s1179
        %p1181 = pneg %p947
        %p1182 = pneg %p944
        %s1183 = sand.u32 %s934, 1
        %s1184 = scalar_lea.sflag [#allocation5], %s1183
        %s1185 = sand.u32 %s934, 1
        %s1186 = smul.addr %s1185, 16
        %s1187 = scalar_lea.vmem [#allocation4], %s1186
        %s1188 = smul.u32 8, %s97
        %p1189 = scmp.lt.s32.totalorder %s1188, 15
        %s1190 = scalar_select %p1189, %s1188, 15
        %s1191 = smul.addr %s1190, 8
        %s1192 = scalar_lea.vmem %s1, %s1191
        %s1193 = smul.u32 8, %s97
        %s1194 = smul.u32 8, %s97
        %s1195 = smul.u32 2, %s97
        %v1197 = vld [vmem:[%s5] sm:$0x7]
        %v1198 = vld [vmem:[%s1192] sm:$0xff]
        %v1199 = vld [vmem:[%s1192 + $0x8] sm:$0xff]
        %v1200 = vld [vmem:[%s1192 + $0x10] sm:$0xff]
        %v1201 = vld [vmem:[%s1192 + $0x18] sm:$0xff]
        %v1202 = vld [vmem:[%s1192 + $0x20] sm:$0xff]
        %v1203 = vld [vmem:[%s1192 + $0x28] sm:$0xff]
        %v1204 = vld [vmem:[%s1192 + $0x30] sm:$0xff]
        %v1205 = vld [vmem:[%s1192 + $0x38] sm:$0xff]
        %v1206 = vpack.c.bf16 %v1199, %v1198
        %v1207 = vpack.c.bf16 %v1201, %v1200
        %v1208 = vpack.c.bf16 %v1203, %v1202
        %v1209 = vpack.c.bf16 %v1205, %v1204
        %v1210 = vld [vmem:[%s3] sm:$0xf]
        %v1211 = vld [vmem:[%s3 + $0x4] sm:$0xf]
        %v1212 = vlaneseq
        %v1213 = vshrl.u32 %v1212, 7
        %v1214 = vsub.s32 0, %v1213
        %v1215 = vrot.slane %v1197, %v1214
        %v1218 = vunpack.c.l.b16 %v1210
        %v1219 = vunpack.c.l.b16 %v1211
        %v1220 = vpack.c.b16 %v1219, %v1218
        %vm1222 = vcmask 130048
        %v1224 = vsel %vm1222, %v1206, 0
        %v1227 = vsel %vm1222, %v1207, 0
        %v1230 = vsel %vm1222, %v1208, 0
        %v1233 = vsel %vm1222, %v1209, 0
        %1235 = vmatprep.subr.bf16.mxu0 0
        %1236 = vmatpush1.bf16.msra.mxu0 %v1220
        %1237 = vmatprep.subr.bf16.mxu0 0
        %1238 = vmatpush1.bf16.msra.mxu0 0
        %1239 = vmatprep.subr.bf16.mxu0 0
        %1240 = vmatpush1.bf16.msra.mxu0 0
        %1241 = vmatprep.subr.bf16.mxu0 0
        %1242 = vmatpush1.bf16.msra.mxu0 0
        %1243 = vmatprep.subr.bf16.mxu0 0
        %1244 = vmatpush1.bf16.msra.mxu0 0
        %1245 = vmatprep.subr.bf16.mxu0 0
        %1246 = vmatpush1.bf16.msra.mxu0 0
        %1247 = vmatprep.subr.bf16.mxu0 0
        %1248 = vmatpush1.bf16.msra.mxu0 0
        %1249 = vmatprep.subr.bf16.mxu0 0
        %1250 = vmatpush1.bf16.msra.mxu0 0
        %1251 = vmatprep.subr.bf16.mxu0 0
        %1252 = vmatpush1.bf16.msra.mxu0 0
        %1253 = vmatprep.subr.bf16.mxu0 0
        %1254 = vmatpush1.bf16.msra.mxu0 0
        %1255 = vmatprep.subr.bf16.mxu0 0
        %1256 = vmatpush1.bf16.msra.mxu0 0
        %1257 = vmatprep.subr.bf16.mxu0 0
        %1258 = vmatpush1.bf16.msra.mxu0 0
        %1259 = vmatprep.subr.bf16.mxu0 0
        %1260 = vmatpush1.bf16.msra.mxu0 0
        %1261 = vmatprep.subr.bf16.mxu0 0
        %1262 = vmatpush1.bf16.msra.mxu0 0
        %1263 = vmatprep.subr.bf16.mxu0 0
        %1264 = vmatpush1.bf16.msra.mxu0 0
        %1265 = vmatprep.subr.bf16.mxu0 0
        %1266 = vmatpush1.bf16.msra.mxu0 0
        %1267 = vmatprep.mubr.bf16.mxu0 0
        %1268 = vmatmul.mubr.bf16.gmra.mrb[0].mxu0 %v1224
        %v1269 = vpop.f32.mrb[0].mxu0
        %v1270 = vadd.f32 %v1215, %v1269
        %v1271 = vpop.f32.mrb[0].mxu0
        %v1272 = vpop.f32.mrb[0].mxu0
        %v1273 = vadd.f32 %v1215, %v1272
        %v1274 = vpop.f32.mrb[0].mxu0
        %1275 = vmatprep.mubr.bf16.mxu0 0
        %1276 = vmatmul.mubr.bf16.gmra.mrb[0].mxu0 %v1227
        %v1277 = vpop.f32.mrb[0].mxu0
        %v1278 = vadd.f32 %v1215, %v1277
        %v1279 = vpop.f32.mrb[0].mxu0
        %v1280 = vpop.f32.mrb[0].mxu0
        %v1281 = vadd.f32 %v1215, %v1280
        %v1282 = vpop.f32.mrb[0].mxu0
        %1283 = vmatprep.mubr.bf16.mxu0 0
        %1284 = vmatmul.mubr.bf16.gmra.mrb[0].mxu0 %v1230
        %v1285 = vpop.f32.mrb[0].mxu0
        %v1286 = vadd.f32 %v1215, %v1285
        %v1287 = vpop.f32.mrb[0].mxu0
        %v1288 = vpop.f32.mrb[0].mxu0
        %v1289 = vadd.f32 %v1215, %v1288
        %v1290 = vpop.f32.mrb[0].mxu0
        %1291 = vmatprep.mubr.bf16.mxu0 0
        %1292 = vmatmul.mubr.bf16.gmra.mrb[0].mxu0 %v1233
        %v1293 = vpop.f32.mrb[0].mxu0
        %v1294 = vadd.f32 %v1215, %v1293
        %v1295 = vpop.f32.mrb[0].mxu0
        %v1296 = vpop.f32.mrb[0].mxu0
        %v1297 = vadd.f32 %v1215, %v1296
        %v1298 = vpop.f32.mrb[0].mxu0
        %1299 = vdwg.mxu0
        %vm1300 = vcmask 261120
        %v1301 = vsel %vm1300, %v1270, 0.0
        %1302 = vadd.xlane.f32.xlu0 %v1301
        %v1303 = vpop.xlane.xlu0 %1302
        %v1304 = vsel %vm1300, %v1273, 0.0
        %1305 = vadd.xlane.f32.xlu0 %v1304
        %v1306 = vpop.xlane.xlu0 %1305
        %v1307 = vsel %vm1300, %v1278, 0.0
        %1308 = vadd.xlane.f32.xlu0 %v1307
        %v1309 = vpop.xlane.xlu0 %1308
        %v1310 = vsel %vm1300, %v1281, 0.0
        %1311 = vadd.xlane.f32.xlu0 %v1310
        %v1312 = vpop.xlane.xlu0 %1311
        %v1313 = vsel %vm1300, %v1286, 0.0
        %1314 = vadd.xlane.f32.xlu0 %v1313
        %v1315 = vpop.xlane.xlu0 %1314
        %v1316 = vsel %vm1300, %v1289, 0.0
        %1317 = vadd.xlane.f32.xlu0 %v1316
        %v1318 = vpop.xlane.xlu0 %1317
        %v1319 = vsel %vm1300, %v1294, 0.0
        %1320 = vadd.xlane.f32.xlu0 %v1319
        %v1321 = vpop.xlane.xlu0 %1320
        %v1322 = vsel %vm1300, %v1297, 0.0
        %1323 = vadd.xlane.f32.xlu0 %v1322
        %v1324 = vpop.xlane.xlu0 %1323
        %v1325 = vrcp.pop 32.0
        %v1326 = vmul.f32 %v1303, %v1325
        %v1327 = vmul.f32 %v1306, %v1325
        %v1328 = vmul.f32 %v1309, %v1325
        %v1329 = vmul.f32 %v1312, %v1325
        %v1330 = vmul.f32 %v1315, %v1325
        %v1331 = vmul.f32 %v1318, %v1325
        %v1332 = vmul.f32 %v1321, %v1325
        %v1333 = vmul.f32 %v1324, %v1325
        %v1334 = vsub.f32 %v1270, %v1326
        %v1335 = vsub.f32 %v1273, %v1327
        %v1336 = vsub.f32 %v1278, %v1328
        %v1337 = vsub.f32 %v1281, %v1329
        %v1338 = vsub.f32 %v1286, %v1330
        %v1339 = vsub.f32 %v1289, %v1331
        %v1340 = vsub.f32 %v1294, %v1332
        %v1341 = vsub.f32 %v1297, %v1333
        %v1342 = vmul.f32 %v1334, %v1334
        %v1343 = vmul.f32 %v1335, %v1335
        %v1344 = vmul.f32 %v1336, %v1336
        %v1345 = vmul.f32 %v1337, %v1337
        %v1346 = vmul.f32 %v1338, %v1338
        %v1347 = vmul.f32 %v1339, %v1339
        %v1348 = vmul.f32 %v1340, %v1340
        %v1349 = vmul.f32 %v1341, %v1341
        %v1350 = vsel %vm1300, %v1342, 0.0
        %1351 = vadd.xlane.f32.xlu0 %v1350
        %v1352 = vpop.xlane.xlu0 %1351
        %v1353 = vsel %vm1300, %v1343, 0.0
        %1354 = vadd.xlane.f32.xlu0 %v1353
        %v1355 = vpop.xlane.xlu0 %1354
        %v1356 = vsel %vm1300, %v1344, 0.0
        %1357 = vadd.xlane.f32.xlu0 %v1356
        %v1358 = vpop.xlane.xlu0 %1357
        %v1359 = vsel %vm1300, %v1345, 0.0
        %1360 = vadd.xlane.f32.xlu0 %v1359
        %v1361 = vpop.xlane.xlu0 %1360
        %v1362 = vsel %vm1300, %v1346, 0.0
        %1363 = vadd.xlane.f32.xlu0 %v1362
        %v1364 = vpop.xlane.xlu0 %1363
        %v1365 = vsel %vm1300, %v1347, 0.0
        %1366 = vadd.xlane.f32.xlu0 %v1365
        %v1367 = vpop.xlane.xlu0 %1366
        %v1368 = vsel %vm1300, %v1348, 0.0
        %1369 = vadd.xlane.f32.xlu0 %v1368
        %v1370 = vpop.xlane.xlu0 %1369
        %v1371 = vsel %vm1300, %v1349, 0.0
        %1372 = vadd.xlane.f32.xlu0 %v1371
        %v1373 = vpop.xlane.xlu0 %1372
        %v1374 = vmul.f32 %v1352, %v1325
        %v1375 = vmul.f32 %v1355, %v1325
        %v1376 = vmul.f32 %v1358, %v1325
        %v1377 = vmul.f32 %v1361, %v1325
        %v1378 = vmul.f32 %v1364, %v1325
        %v1379 = vmul.f32 %v1367, %v1325
        %v1380 = vmul.f32 %v1370, %v1325
        %v1381 = vmul.f32 %v1373, %v1325
        %v1382 = vadd.f32 %v1374, 1e-05
        %v1383 = vadd.f32 %v1375, 1e-05
        %v1384 = vadd.f32 %v1376, 1e-05
        %v1385 = vadd.f32 %v1377, 1e-05
        %v1386 = vadd.f32 %v1378, 1e-05
        %v1387 = vadd.f32 %v1379, 1e-05
        %v1388 = vadd.f32 %v1380, 1e-05
        %v1389 = vadd.f32 %v1381, 1e-05
        %v1390 = vrsqrt.pop %v1382
        %v1391 = vrsqrt.pop %v1383
        %v1392 = vrsqrt.pop %v1384
        %v1393 = vrsqrt.pop %v1385
        %v1394 = vrsqrt.pop %v1386
        %v1395 = vrsqrt.pop %v1387
        %v1396 = vrsqrt.pop %v1388
        %v1397 = vrsqrt.pop %v1389
        %v1398 = vmul.f32 %v1334, %v1390
        %v1399 = vmul.f32 %v1335, %v1391
        %v1400 = vmul.f32 %v1336, %v1392
        %v1401 = vmul.f32 %v1337, %v1393
        %v1402 = vmul.f32 %v1338, %v1394
        %v1403 = vmul.f32 %v1339, %v1395
        %v1404 = vmul.f32 %v1340, %v1396
        %v1405 = vmul.f32 %v1341, %v1397
        %v1406 = vlaneseq
        %v1407 = vshrl.u32 %v1406, 7
        %v1408 = vsub.s32 1, %v1407
        %v1409 = vrot.slane %v1197, %v1408
        %v1410 = vmul.f32 %v1398, %v1409
        %v1411 = vmul.f32 %v1399, %v1409
        %v1412 = vmul.f32 %v1400, %v1409
        %v1413 = vmul.f32 %v1401, %v1409
        %v1414 = vmul.f32 %v1402, %v1409
        %v1415 = vmul.f32 %v1403, %v1409
        %v1416 = vmul.f32 %v1404, %v1409
        %v1417 = vmul.f32 %v1405, %v1409
        %v1418 = vlaneseq
        %v1419 = vshrl.u32 %v1418, 7
        %v1420 = vsub.s32 2, %v1419
        %v1421 = vrot.slane %v1197, %v1420
        %v1422 = vadd.f32 %v1410, %v1421
        %v1423 = vadd.f32 %v1411, %v1421
        %v1424 = vadd.f32 %v1412, %v1421
        %v1425 = vadd.f32 %v1413, %v1421
        %v1426 = vadd.f32 %v1414, %v1421
        %v1427 = vadd.f32 %v1415, %v1421
        %v1428 = vadd.f32 %v1416, %v1421
        %v1429 = vadd.f32 %v1417, %v1421
        %v1430 = vld [vmem:[%s15] sm:$0xff]
        %v1431 = vpack.c.bf16 %v1423, %v1422
        %v1432 = vpack.c.bf16 %v1425, %v1424
        %v1433 = vpack.c.bf16 %v1427, %v1426
        %v1434 = vpack.c.bf16 %v1429, %v1428
        %v1435 = vld [vmem:[%s7] sm:$0xf]
        %v1436 = vld [vmem:[%s7 + $0x4] sm:$0xf]
        %v1437 = vld [vmem:[%s7 + $0x8] sm:$0xf]
        %v1438 = vld [vmem:[%s7 + $0xc] sm:$0xf]
        %v1439 = vlaneseq
        %v1440 = vshrl.u32 %v1439, 7
        %v1441 = vsub.s32 0, %v1440
        %v1442 = vrot.slane %v1430, %v1441
        %v1447 = vunpack.c.l.b16 %v1435
        %v1448 = vunpack.c.l.b16 %v1436
        %v1449 = vunpack.c.l.b16 %v1437
        %v1450 = vunpack.c.l.b16 %v1438
        %v1451 = vpack.c.b16 %v1448, %v1447
        %v1452 = vpack.c.b16 %v1450, %v1449
        %v1456 = vsel %vm1300, %v1431, 0
        %v1459 = vsel %vm1300, %v1432, 0
        %v1462 = vsel %vm1300, %v1433, 0
        %v1465 = vsel %vm1300, %v1434, 0
        %1467 = vmatprep.subr.bf16.mxu0 0
        %1468 = vmatpush1.bf16.msra.mxu0 %v1451
        %1469 = vmatprep.subr.bf16.mxu0 0
        %1470 = vmatpush1.bf16.msra.mxu0 %v1452
        %1471 = vmatprep.subr.bf16.mxu0 0
        %1472 = vmatpush1.bf16.msra.mxu0 0
        %1473 = vmatprep.subr.bf16.mxu0 0
        %1474 = vmatpush1.bf16.msra.mxu0 0
        %1475 = vmatprep.subr.bf16.mxu0 0
        %1476 = vmatpush1.bf16.msra.mxu0 0
        %1477 = vmatprep.subr.bf16.mxu0 0
        %1478 = vmatpush1.bf16.msra.mxu0 0
        %1479 = vmatprep.subr.bf16.mxu0 0
        %1480 = vmatpush1.bf16.msra.mxu0 0
        %1481 = vmatprep.subr.bf16.mxu0 0
        %1482 = vmatpush1.bf16.msra.mxu0 0
        %1483 = vmatprep.subr.bf16.mxu0 0
        %1484 = vmatpush1.bf16.msra.mxu0 0
        %1485 = vmatprep.subr.bf16.mxu0 0
        %1486 = vmatpush1.bf16.msra.mxu0 0
        %1487 = vmatprep.subr.bf16.mxu0 0
        %1488 = vmatpush1.bf16.msra.mxu0 0
        %1489 = vmatprep.subr.bf16.mxu0 0
        %1490 = vmatpush1.bf16.msra.mxu0 0
        %1491 = vmatprep.subr.bf16.mxu0 0
        %1492 = vmatpush1.bf16.msra.mxu0 0
        %1493 = vmatprep.subr.bf16.mxu0 0
        %1494 = vmatpush1.bf16.msra.mxu0 0
        %1495 = vmatprep.subr.bf16.mxu0 0
        %1496 = vmatpush1.bf16.msra.mxu0 0
        %1497 = vmatprep.subr.bf16.mxu0 0
        %1498 = vmatpush1.bf16.msra.mxu0 0
        %1499 = vmatprep.mubr.bf16.mxu0 0
        %1500 = vmatmul.mubr.bf16.gmra.mrb[0].mxu0 %v1456
        %v1501 = vpop.f32.mrb[0].mxu0
        %v1502 = vadd.f32 %v1442, %v1501
        %v1503 = vpop.f32.mrb[0].mxu0
        %v1504 = vpop.f32.mrb[0].mxu0
        %v1505 = vadd.f32 %v1442, %v1504
        %v1506 = vpop.f32.mrb[0].mxu0
        %1507 = vmatprep.mubr.bf16.mxu0 0
        %1508 = vmatmul.mubr.bf16.gmra.mrb[0].mxu0 %v1459
        %v1509 = vpop.f32.mrb[0].mxu0
        %v1510 = vadd.f32 %v1442, %v1509
        %v1511 = vpop.f32.mrb[0].mxu0
        %v1512 = vpop.f32.mrb[0].mxu0
        %v1513 = vadd.f32 %v1442, %v1512
        %v1514 = vpop.f32.mrb[0].mxu0
        %1515 = vmatprep.mubr.bf16.mxu0 0
        %1516 = vmatmul.mubr.bf16.gmra.mrb[0].mxu0 %v1462
        %v1517 = vpop.f32.mrb[0].mxu0
        %v1518 = vadd.f32 %v1442, %v1517
        %v1519 = vpop.f32.mrb[0].mxu0
        %v1520 = vpop.f32.mrb[0].mxu0
        %v1521 = vadd.f32 %v1442, %v1520
        %v1522 = vpop.f32.mrb[0].mxu0
        %1523 = vmatprep.mubr.bf16.mxu0 0
        %1524 = vmatmul.mubr.bf16.gmra.mrb[0].mxu0 %v1465
        %v1525 = vpop.f32.mrb[0].mxu0
        %v1526 = vadd.f32 %v1442, %v1525
        %v1527 = vpop.f32.mrb[0].mxu0
        %v1528 = vpop.f32.mrb[0].mxu0
        %v1529 = vadd.f32 %v1442, %v1528
        %v1530 = vpop.f32.mrb[0].mxu0
        %1531 = vdwg.mxu0
        %s1532 = scalar_lea.vmem %s7, 16
        %v1533 = vld [vmem:[%s1532] sm:$0xf]
        %v1534 = vld [vmem:[%s1532 + $0x4] sm:$0xf]
        %v1535 = vld [vmem:[%s1532 + $0x8] sm:$0xf]
        %v1536 = vld [vmem:[%s1532 + $0xc] sm:$0xf]
        %v1541 = vunpack.c.l.b16 %v1533
        %v1542 = vunpack.c.l.b16 %v1534
        %v1543 = vunpack.c.l.b16 %v1535
        %v1544 = vunpack.c.l.b16 %v1536
        %v1545 = vpack.c.b16 %v1542, %v1541
        %v1546 = vpack.c.b16 %v1544, %v1543
        %1549 = vmatprep.subr.bf16.mxu0 0
        %1550 = vmatpush1.bf16.msra.mxu0 %v1545
        %1551 = vmatprep.subr.bf16.mxu0 0
        %1552 = vmatpush1.bf16.msra.mxu0 %v1546
        %1553 = vmatprep.subr.bf16.mxu0 0
        %1554 = vmatpush1.bf16.msra.mxu0 0
        %1555 = vmatprep.subr.bf16.mxu0 0
        %1556 = vmatpush1.bf16.msra.mxu0 0
        %1557 = vmatprep.subr.bf16.mxu0 0
        %1558 = vmatpush1.bf16.msra.mxu0 0
        %1559 = vmatprep.subr.bf16.mxu0 0
        %1560 = vmatpush1.bf16.msra.mxu0 0
        %1561 = vmatprep.subr.bf16.mxu0 0
        %1562 = vmatpush1.bf16.msra.mxu0 0
        %1563 = vmatprep.subr.bf16.mxu0 0
        %1564 = vmatpush1.bf16.msra.mxu0 0
        %1565 = vmatprep.subr.bf16.mxu0 0
        %1566 = vmatpush1.bf16.msra.mxu0 0
        %1567 = vmatprep.subr.bf16.mxu0 0
        %1568 = vmatpush1.bf16.msra.mxu0 0
        %1569 = vmatprep.subr.bf16.mxu0 0
        %1570 = vmatpush1.bf16.msra.mxu0 0
        %1571 = vmatprep.subr.bf16.mxu0 0
        %1572 = vmatpush1.bf16.msra.mxu0 0
        %1573 = vmatprep.subr.bf16.mxu0 0
        %1574 = vmatpush1.bf16.msra.mxu0 0
        %1575 = vmatprep.subr.bf16.mxu0 0
        %1576 = vmatpush1.bf16.msra.mxu0 0
        %1577 = vmatprep.subr.bf16.mxu0 0
        %1578 = vmatpush1.bf16.msra.mxu0 0
        %1579 = vmatprep.subr.bf16.mxu0 0
        %1580 = vmatpush1.bf16.msra.mxu0 0
        %1581 = vmatprep.mubr.bf16.mxu0 0
        %1582 = vmatmul.mubr.bf16.gmra.mrb[0].mxu0 %v1456
        %v1583 = vpop.f32.mrb[0].mxu0
        %v1584 = vadd.f32 0.0, %v1583
        %v1585 = vpop.f32.mrb[0].mxu0
        %v1586 = vpop.f32.mrb[0].mxu0
        %v1587 = vadd.f32 0.0, %v1586
        %v1588 = vpop.f32.mrb[0].mxu0
        %1589 = vmatprep.mubr.bf16.mxu0 0
        %1590 = vmatmul.mubr.bf16.gmra.mrb[0].mxu0 %v1459
        %v1591 = vpop.f32.mrb[0].mxu0
        %v1592 = vadd.f32 0.0, %v1591
        %v1593 = vpop.f32.mrb[0].mxu0
        %v1594 = vpop.f32.mrb[0].mxu0
        %v1595 = vadd.f32 0.0, %v1594
        %v1596 = vpop.f32.mrb[0].mxu0
        %1597 = vmatprep.mubr.bf16.mxu0 0
        %1598 = vmatmul.mubr.bf16.gmra.mrb[0].mxu0 %v1462
        %v1599 = vpop.f32.mrb[0].mxu0
        %v1600 = vadd.f32 0.0, %v1599
        %v1601 = vpop.f32.mrb[0].mxu0
        %v1602 = vpop.f32.mrb[0].mxu0
        %v1603 = vadd.f32 0.0, %v1602
        %v1604 = vpop.f32.mrb[0].mxu0
        %1605 = vmatprep.mubr.bf16.mxu0 0
        %1606 = vmatmul.mubr.bf16.gmra.mrb[0].mxu0 %v1465
        %v1607 = vpop.f32.mrb[0].mxu0
        %v1608 = vadd.f32 0.0, %v1607
        %v1609 = vpop.f32.mrb[0].mxu0
        %v1610 = vpop.f32.mrb[0].mxu0
        %v1611 = vadd.f32 0.0, %v1610
        %v1612 = vpop.f32.mrb[0].mxu0
        %1613 = vdwg.mxu0
        %s1614 = scalar_lea.vmem %s7, 32
        %v1615 = vld [vmem:[%s1614] sm:$0xf]
        %v1616 = vld [vmem:[%s1614 + $0x4] sm:$0xf]
        %v1617 = vld [vmem:[%s1614 + $0x8] sm:$0xf]
        %v1618 = vld [vmem:[%s1614 + $0xc] sm:$0xf]
        %v1619 = vlaneseq
        %v1620 = vshrl.u32 %v1619, 7
        %v1621 = vsub.s32 1, %v1620
        %v1622 = vrot.slane %v1430, %v1621
        %v1627 = vunpack.c.l.b16 %v1615
        %v1628 = vunpack.c.l.b16 %v1616
        %v1629 = vunpack.c.l.b16 %v1617
        %v1630 = vunpack.c.l.b16 %v1618
        %v1631 = vpack.c.b16 %v1628, %v1627
        %v1632 = vpack.c.b16 %v1630, %v1629
        %1635 = vmatprep.subr.bf16.mxu0 0
        %1636 = vmatpush1.bf16.msra.mxu0 %v1631
        %1637 = vmatprep.subr.bf16.mxu0 0
        %1638 = vmatpush1.bf16.msra.mxu0 %v1632
        %1639 = vmatprep.subr.bf16.mxu0 0
        %1640 = vmatpush1.bf16.msra.mxu0 0
        %1641 = vmatprep.subr.bf16.mxu0 0
        %1642 = vmatpush1.bf16.msra.mxu0 0
        %1643 = vmatprep.subr.bf16.mxu0 0
        %1644 = vmatpush1.bf16.msra.mxu0 0
        %1645 = vmatprep.subr.bf16.mxu0 0
        %1646 = vmatpush1.bf16.msra.mxu0 0
        %1647 = vmatprep.subr.bf16.mxu0 0
        %1648 = vmatpush1.bf16.msra.mxu0 0
        %1649 = vmatprep.subr.bf16.mxu0 0
        %1650 = vmatpush1.bf16.msra.mxu0 0
        %1651 = vmatprep.subr.bf16.mxu0 0
        %1652 = vmatpush1.bf16.msra.mxu0 0
        %1653 = vmatprep.subr.bf16.mxu0 0
        %1654 = vmatpush1.bf16.msra.mxu0 0
        %1655 = vmatprep.subr.bf16.mxu0 0
        %1656 = vmatpush1.bf16.msra.mxu0 0
        %1657 = vmatprep.subr.bf16.mxu0 0
        %1658 = vmatpush1.bf16.msra.mxu0 0
        %1659 = vmatprep.subr.bf16.mxu0 0
        %1660 = vmatpush1.bf16.msra.mxu0 0
        %1661 = vmatprep.subr.bf16.mxu0 0
        %1662 = vmatpush1.bf16.msra.mxu0 0
        %1663 = vmatprep.subr.bf16.mxu0 0
        %1664 = vmatpush1.bf16.msra.mxu0 0
        %1665 = vmatprep.subr.bf16.mxu0 0
        %1666 = vmatpush1.bf16.msra.mxu0 0
        %1667 = vmatprep.mubr.bf16.mxu0 0
        %1668 = vmatmul.mubr.bf16.gmra.mrb[0].mxu0 %v1456
        %v1669 = vpop.f32.mrb[0].mxu0
        %v1670 = vadd.f32 %v1622, %v1669
        %v1671 = vpop.f32.mrb[0].mxu0
        %v1672 = vpop.f32.mrb[0].mxu0
        %v1673 = vadd.f32 %v1622, %v1672
        %v1674 = vpop.f32.mrb[0].mxu0
        %1675 = vmatprep.mubr.bf16.mxu0 0
        %1676 = vmatmul.mubr.bf16.gmra.mrb[0].mxu0 %v1459
        %v1677 = vpop.f32.mrb[0].mxu0
        %v1678 = vadd.f32 %v1622, %v1677
        %v1679 = vpop.f32.mrb[0].mxu0
        %v1680 = vpop.f32.mrb[0].mxu0
        %v1681 = vadd.f32 %v1622, %v1680
        %v1682 = vpop.f32.mrb[0].mxu0
        %1683 = vmatprep.mubr.bf16.mxu0 0
        %1684 = vmatmul.mubr.bf16.gmra.mrb[0].mxu0 %v1462
        %v1685 = vpop.f32.mrb[0].mxu0
        %v1686 = vadd.f32 %v1622, %v1685
        %v1687 = vpop.f32.mrb[0].mxu0
        %v1688 = vpop.f32.mrb[0].mxu0
        %v1689 = vadd.f32 %v1622, %v1688
        %v1690 = vpop.f32.mrb[0].mxu0
        %1691 = vmatprep.mubr.bf16.mxu0 0
        %1692 = vmatmul.mubr.bf16.gmra.mrb[0].mxu0 %v1465
        %v1693 = vpop.f32.mrb[0].mxu0
        %v1694 = vadd.f32 %v1622, %v1693
        %v1695 = vpop.f32.mrb[0].mxu0
        %v1696 = vpop.f32.mrb[0].mxu0
        %v1697 = vadd.f32 %v1622, %v1696
        %v1698 = vpop.f32.mrb[0].mxu0
        %1699 = vdwg.mxu0
        %1708 = vrot.lane.b32.xlu0 %v1502, 112
        %v1709 = vpop.permute.xlu0 %1708
        %1710 = vrot.lane.b32.xlu0 %v1505, 112
        %v1711 = vpop.permute.xlu0 %1710
        %1712 = vrot.lane.b32.xlu0 %v1510, 112
        %v1713 = vpop.permute.xlu0 %1712
        %1714 = vrot.lane.b32.xlu0 %v1513, 112
        %v1715 = vpop.permute.xlu0 %1714
        %1716 = vrot.lane.b32.xlu0 %v1518, 112
        %v1717 = vpop.permute.xlu0 %1716
        %1718 = vrot.lane.b32.xlu0 %v1521, 112
        %v1719 = vpop.permute.xlu0 %1718
        %1720 = vrot.lane.b32.xlu0 %v1526, 112
        %v1721 = vpop.permute.xlu0 %1720
        %1722 = vrot.lane.b32.xlu0 %v1529, 112
        %v1723 = vpop.permute.xlu0 %1722
        %1740 = vrot.lane.b32.xlu0 %v1584, 112
        %v1741 = vpop.permute.xlu0 %1740
        %1742 = vrot.lane.b32.xlu0 %v1587, 112
        %v1743 = vpop.permute.xlu0 %1742
        %1744 = vrot.lane.b32.xlu0 %v1592, 112
        %v1745 = vpop.permute.xlu0 %1744
        %1746 = vrot.lane.b32.xlu0 %v1595, 112
        %v1747 = vpop.permute.xlu0 %1746
        %1748 = vrot.lane.b32.xlu0 %v1600, 112
        %v1749 = vpop.permute.xlu0 %1748
        %1750 = vrot.lane.b32.xlu0 %v1603, 112
        %v1751 = vpop.permute.xlu0 %1750
        %1752 = vrot.lane.b32.xlu0 %v1608, 112
        %v1753 = vpop.permute.xlu0 %1752
        %1754 = vrot.lane.b32.xlu0 %v1611, 112
        %v1755 = vpop.permute.xlu0 %1754
        %1772 = vrot.lane.b32.xlu0 %v1670, 112
        %v1773 = vpop.permute.xlu0 %1772
        %1774 = vrot.lane.b32.xlu0 %v1673, 112
        %v1775 = vpop.permute.xlu0 %1774
        %1776 = vrot.lane.b32.xlu0 %v1678, 112
        %v1777 = vpop.permute.xlu0 %1776
        %1778 = vrot.lane.b32.xlu0 %v1681, 112
        %v1779 = vpop.permute.xlu0 %1778
        %1780 = vrot.lane.b32.xlu0 %v1686, 112
        %v1781 = vpop.permute.xlu0 %1780
        %1782 = vrot.lane.b32.xlu0 %v1689, 112
        %v1783 = vpop.permute.xlu0 %1782
        %1784 = vrot.lane.b32.xlu0 %v1694, 112
        %v1785 = vpop.permute.xlu0 %1784
        %1786 = vrot.lane.b32.xlu0 %v1697, 112
        %v1787 = vpop.permute.xlu0 %1786
        %v1796 = vmul.f32 %v1502, %v1502
        %v1797 = vmul.f32 %v1505, %v1505
        %v1798 = vmul.f32 %v1510, %v1510
        %v1799 = vmul.f32 %v1513, %v1513
        %v1800 = vmul.f32 %v1518, %v1518
        %v1801 = vmul.f32 %v1521, %v1521
        %v1802 = vmul.f32 %v1526, %v1526
        %v1803 = vmul.f32 %v1529, %v1529
        %v1804 = vmul.f32 %v1709, %v1709
        %v1805 = vmul.f32 %v1711, %v1711
        %v1806 = vmul.f32 %v1713, %v1713
        %v1807 = vmul.f32 %v1715, %v1715
        %v1808 = vmul.f32 %v1717, %v1717
        %v1809 = vmul.f32 %v1719, %v1719
        %v1810 = vmul.f32 %v1721, %v1721
        %v1811 = vmul.f32 %v1723, %v1723
        %v1812 = vsel %vm1222, %v1796, 0.0
        %1813 = vadd.xlane.f32.xlu0 %v1812
        %v1814 = vpop.xlane.xlu0 %1813
        %v1815 = vsel %vm1222, %v1797, 0.0
        %1816 = vadd.xlane.f32.xlu0 %v1815
        %v1817 = vpop.xlane.xlu0 %1816
        %v1818 = vsel %vm1222, %v1798, 0.0
        %1819 = vadd.xlane.f32.xlu0 %v1818
        %v1820 = vpop.xlane.xlu0 %1819
        %v1821 = vsel %vm1222, %v1799, 0.0
        %1822 = vadd.xlane.f32.xlu0 %v1821
        %v1823 = vpop.xlane.xlu0 %1822
        %v1824 = vsel %vm1222, %v1800, 0.0
        %1825 = vadd.xlane.f32.xlu0 %v1824
        %v1826 = vpop.xlane.xlu0 %1825
        %v1827 = vsel %vm1222, %v1801, 0.0
        %1828 = vadd.xlane.f32.xlu0 %v1827
        %v1829 = vpop.xlane.xlu0 %1828
        %v1830 = vsel %vm1222, %v1802, 0.0
        %1831 = vadd.xlane.f32.xlu0 %v1830
        %v1832 = vpop.xlane.xlu0 %1831
        %v1833 = vsel %vm1222, %v1803, 0.0
        %1834 = vadd.xlane.f32.xlu0 %v1833
        %v1835 = vpop.xlane.xlu0 %1834
        %v1836 = vsel %vm1222, %v1804, 0.0
        %1837 = vadd.xlane.f32.xlu0 %v1836
        %v1838 = vpop.xlane.xlu0 %1837
        %v1839 = vsel %vm1222, %v1805, 0.0
        %1840 = vadd.xlane.f32.xlu0 %v1839
        %v1841 = vpop.xlane.xlu0 %1840
        %v1842 = vsel %vm1222, %v1806, 0.0
        %1843 = vadd.xlane.f32.xlu0 %v1842
        %v1844 = vpop.xlane.xlu0 %1843
        %v1845 = vsel %vm1222, %v1807, 0.0
        %1846 = vadd.xlane.f32.xlu0 %v1845
        %v1847 = vpop.xlane.xlu0 %1846
        %v1848 = vsel %vm1222, %v1808, 0.0
        %1849 = vadd.xlane.f32.xlu0 %v1848
        %v1850 = vpop.xlane.xlu0 %1849
        %v1851 = vsel %vm1222, %v1809, 0.0
        %1852 = vadd.xlane.f32.xlu0 %v1851
        %v1853 = vpop.xlane.xlu0 %1852
        %v1854 = vsel %vm1222, %v1810, 0.0
        %1855 = vadd.xlane.f32.xlu0 %v1854
        %v1856 = vpop.xlane.xlu0 %1855
        %v1857 = vsel %vm1222, %v1811, 0.0
        %1858 = vadd.xlane.f32.xlu0 %v1857
        %v1859 = vpop.xlane.xlu0 %1858
        %v1860 = vmax.f32 %v1814, 1e-24
        %v1861 = vmax.f32 %v1817, 1e-24
        %v1862 = vmax.f32 %v1820, 1e-24
        %v1863 = vmax.f32 %v1823, 1e-24
        %v1864 = vmax.f32 %v1826, 1e-24
        %v1865 = vmax.f32 %v1829, 1e-24
        %v1866 = vmax.f32 %v1832, 1e-24
        %v1867 = vmax.f32 %v1835, 1e-24
        %v1868 = vmax.f32 %v1838, 1e-24
        %v1869 = vmax.f32 %v1841, 1e-24
        %v1870 = vmax.f32 %v1844, 1e-24
        %v1871 = vmax.f32 %v1847, 1e-24
        %v1872 = vmax.f32 %v1850, 1e-24
        %v1873 = vmax.f32 %v1853, 1e-24
        %v1874 = vmax.f32 %v1856, 1e-24
        %v1875 = vmax.f32 %v1859, 1e-24
        %v1876 = vrsqrt.pop %v1860
        %v1877 = vrsqrt.pop %v1861
        %v1878 = vrsqrt.pop %v1862
        %v1879 = vrsqrt.pop %v1863
        %v1880 = vrsqrt.pop %v1864
        %v1881 = vrsqrt.pop %v1865
        %v1882 = vrsqrt.pop %v1866
        %v1883 = vrsqrt.pop %v1867
        %v1884 = vrsqrt.pop %v1868
        %v1885 = vrsqrt.pop %v1869
        %v1886 = vrsqrt.pop %v1870
        %v1887 = vrsqrt.pop %v1871
        %v1888 = vrsqrt.pop %v1872
        %v1889 = vrsqrt.pop %v1873
        %v1890 = vrsqrt.pop %v1874
        %v1891 = vrsqrt.pop %v1875
        %v1892 = vmul.f32 %v1502, %v1876
        %v1893 = vmul.f32 %v1505, %v1877
        %v1894 = vmul.f32 %v1510, %v1878
        %v1895 = vmul.f32 %v1513, %v1879
        %v1896 = vmul.f32 %v1518, %v1880
        %v1897 = vmul.f32 %v1521, %v1881
        %v1898 = vmul.f32 %v1526, %v1882
        %v1899 = vmul.f32 %v1529, %v1883
        %v1900 = vmul.f32 %v1709, %v1884
        %v1901 = vmul.f32 %v1711, %v1885
        %v1902 = vmul.f32 %v1713, %v1886
        %v1903 = vmul.f32 %v1715, %v1887
        %v1904 = vmul.f32 %v1717, %v1888
        %v1905 = vmul.f32 %v1719, %v1889
        %v1906 = vmul.f32 %v1721, %v1890
        %v1907 = vmul.f32 %v1723, %v1891
        %v1908 = vld [vmem:[%s21] sm:$0xff]
        %v1909 = vld [vmem:[%s21 + $0x8] sm:$0xff]
        %v1910 = vld [vmem:[%s21 + $0x10] sm:$0xff]
        %v1911 = vld [vmem:[%s21 + $0x18] sm:$0xff]
        %v1912 = vld [vmem:[%s21 + $0x20] sm:$0xff]
        %v1913 = vld [vmem:[%s21 + $0x28] sm:$0xff]
        %v1914 = vld [vmem:[%s21 + $0x30] sm:$0xff]
        %v1915 = vld [vmem:[%s21 + $0x38] sm:$0xff]
        %v1916 = vld [vmem:[%s21 + $0x40] sm:$0xff]
        %v1917 = vld [vmem:[%s21 + $0x48] sm:$0xff]
        %v1918 = vld [vmem:[%s21 + $0x50] sm:$0xff]
        %v1919 = vld [vmem:[%s21 + $0x58] sm:$0xff]
        %v1920 = vld [vmem:[%s21 + $0x60] sm:$0xff]
        %v1921 = vld [vmem:[%s21 + $0x68] sm:$0xff]
        %v1922 = vld [vmem:[%s21 + $0x70] sm:$0xff]
        %v1923 = vld [vmem:[%s21 + $0x78] sm:$0xff]
        %1925 = vset.pattern.permute.xlu0 0
        %1926 = vperm.xlu0 %1925, %v1908
        %v1927 = vpop.permute.xlu0 %1926
        %1930 = vset.pattern.permute.xlu0 0
        %1931 = vperm.xlu0 %1930, %v1909
        %v1932 = vpop.permute.xlu0 %1931
        %1935 = vset.pattern.permute.xlu0 0
        %1936 = vperm.xlu0 %1935, %v1910
        %v1937 = vpop.permute.xlu0 %1936
        %1940 = vset.pattern.permute.xlu0 0
        %1941 = vperm.xlu0 %1940, %v1911
        %v1942 = vpop.permute.xlu0 %1941
        %1945 = vset.pattern.permute.xlu0 0
        %1946 = vperm.xlu0 %1945, %v1912
        %v1947 = vpop.permute.xlu0 %1946
        %1950 = vset.pattern.permute.xlu0 0
        %1951 = vperm.xlu0 %1950, %v1913
        %v1952 = vpop.permute.xlu0 %1951
        %1955 = vset.pattern.permute.xlu0 0
        %1956 = vperm.xlu0 %1955, %v1914
        %v1957 = vpop.permute.xlu0 %1956
        %1960 = vset.pattern.permute.xlu0 0
        %1961 = vperm.xlu0 %1960, %v1915
        %v1962 = vpop.permute.xlu0 %1961
        %1965 = vset.pattern.permute.xlu0 0
        %1966 = vperm.xlu0 %1965, %v1916
        %v1967 = vpop.permute.xlu0 %1966
        %1970 = vset.pattern.permute.xlu0 0
        %1971 = vperm.xlu0 %1970, %v1917
        %v1972 = vpop.permute.xlu0 %1971
        %1975 = vset.pattern.permute.xlu0 0
        %1976 = vperm.xlu0 %1975, %v1918
        %v1977 = vpop.permute.xlu0 %1976
        %1980 = vset.pattern.permute.xlu0 0
        %1981 = vperm.xlu0 %1980, %v1919
        %v1982 = vpop.permute.xlu0 %1981
        %1985 = vset.pattern.permute.xlu0 0
        %1986 = vperm.xlu0 %1985, %v1920
        %v1987 = vpop.permute.xlu0 %1986
        %1990 = vset.pattern.permute.xlu0 0
        %1991 = vperm.xlu0 %1990, %v1921
        %v1992 = vpop.permute.xlu0 %1991
        %1995 = vset.pattern.permute.xlu0 0
        %1996 = vperm.xlu0 %1995, %v1922
        %v1997 = vpop.permute.xlu0 %1996
        %2000 = vset.pattern.permute.xlu0 0
        %2001 = vperm.xlu0 %2000, %v1923
        %v2002 = vpop.permute.xlu0 %2001
        %v2004 = vmul.f32 %v1892, %v1927
        %v2005 = vmul.f32 %v1893, %v1932
        %v2006 = vmul.f32 %v1894, %v1937
        %v2007 = vmul.f32 %v1895, %v1942
        %v2008 = vmul.f32 %v1896, %v1947
        %v2009 = vmul.f32 %v1897, %v1952
        %v2010 = vmul.f32 %v1898, %v1957
        %v2011 = vmul.f32 %v1899, %v1962
        %v2012 = vmul.f32 %v1900, %v1967
        %v2013 = vmul.f32 %v1901, %v1972
        %v2014 = vmul.f32 %v1902, %v1977
        %v2015 = vmul.f32 %v1903, %v1982
        %v2016 = vmul.f32 %v1904, %v1987
        %v2017 = vmul.f32 %v1905, %v1992
        %v2018 = vmul.f32 %v1906, %v1997
        %v2019 = vmul.f32 %v1907, %v2002
        %v2020 = vmul.f32 %v1584, %v1584
        %v2021 = vmul.f32 %v1587, %v1587
        %v2022 = vmul.f32 %v1592, %v1592
        %v2023 = vmul.f32 %v1595, %v1595
        %v2024 = vmul.f32 %v1600, %v1600
        %v2025 = vmul.f32 %v1603, %v1603
        %v2026 = vmul.f32 %v1608, %v1608
        %v2027 = vmul.f32 %v1611, %v1611
        %v2028 = vmul.f32 %v1741, %v1741
        %v2029 = vmul.f32 %v1743, %v1743
        %v2030 = vmul.f32 %v1745, %v1745
        %v2031 = vmul.f32 %v1747, %v1747
        %v2032 = vmul.f32 %v1749, %v1749
        %v2033 = vmul.f32 %v1751, %v1751
        %v2034 = vmul.f32 %v1753, %v1753
        %v2035 = vmul.f32 %v1755, %v1755
        %v2036 = vsel %vm1222, %v2020, 0.0
        %2037 = vadd.xlane.f32.xlu0 %v2036
        %v2038 = vpop.xlane.xlu0 %2037
        %v2039 = vsel %vm1222, %v2021, 0.0
        %2040 = vadd.xlane.f32.xlu0 %v2039
        %v2041 = vpop.xlane.xlu0 %2040
        %v2042 = vsel %vm1222, %v2022, 0.0
        %2043 = vadd.xlane.f32.xlu0 %v2042
        %v2044 = vpop.xlane.xlu0 %2043
        %v2045 = vsel %vm1222, %v2023, 0.0
        %2046 = vadd.xlane.f32.xlu0 %v2045
        %v2047 = vpop.xlane.xlu0 %2046
        %v2048 = vsel %vm1222, %v2024, 0.0
        %2049 = vadd.xlane.f32.xlu0 %v2048
        %v2050 = vpop.xlane.xlu0 %2049
        %v2051 = vsel %vm1222, %v2025, 0.0
        %2052 = vadd.xlane.f32.xlu0 %v2051
        %v2053 = vpop.xlane.xlu0 %2052
        %v2054 = vsel %vm1222, %v2026, 0.0
        %2055 = vadd.xlane.f32.xlu0 %v2054
        %v2056 = vpop.xlane.xlu0 %2055
        %v2057 = vsel %vm1222, %v2027, 0.0
        %2058 = vadd.xlane.f32.xlu0 %v2057
        %v2059 = vpop.xlane.xlu0 %2058
        %v2060 = vsel %vm1222, %v2028, 0.0
        %2061 = vadd.xlane.f32.xlu0 %v2060
        %v2062 = vpop.xlane.xlu0 %2061
        %v2063 = vsel %vm1222, %v2029, 0.0
        %2064 = vadd.xlane.f32.xlu0 %v2063
        %v2065 = vpop.xlane.xlu0 %2064
        %v2066 = vsel %vm1222, %v2030, 0.0
        %2067 = vadd.xlane.f32.xlu0 %v2066
        %v2068 = vpop.xlane.xlu0 %2067
        %v2069 = vsel %vm1222, %v2031, 0.0
        %2070 = vadd.xlane.f32.xlu0 %v2069
        %v2071 = vpop.xlane.xlu0 %2070
        %v2072 = vsel %vm1222, %v2032, 0.0
        %2073 = vadd.xlane.f32.xlu0 %v2072
        %v2074 = vpop.xlane.xlu0 %2073
        %v2075 = vsel %vm1222, %v2033, 0.0
        %2076 = vadd.xlane.f32.xlu0 %v2075
        %v2077 = vpop.xlane.xlu0 %2076
        %v2078 = vsel %vm1222, %v2034, 0.0
        %2079 = vadd.xlane.f32.xlu0 %v2078
        %v2080 = vpop.xlane.xlu0 %2079
        %v2081 = vsel %vm1222, %v2035, 0.0
        %2082 = vadd.xlane.f32.xlu0 %v2081
        %v2083 = vpop.xlane.xlu0 %2082
        %v2084 = vmax.f32 %v2038, 1e-24
        %v2085 = vmax.f32 %v2041, 1e-24
        %v2086 = vmax.f32 %v2044, 1e-24
        %v2087 = vmax.f32 %v2047, 1e-24
        %v2088 = vmax.f32 %v2050, 1e-24
        %v2089 = vmax.f32 %v2053, 1e-24
        %v2090 = vmax.f32 %v2056, 1e-24
        %v2091 = vmax.f32 %v2059, 1e-24
        %v2092 = vmax.f32 %v2062, 1e-24
        %v2093 = vmax.f32 %v2065, 1e-24
        %v2094 = vmax.f32 %v2068, 1e-24
        %v2095 = vmax.f32 %v2071, 1e-24
        %v2096 = vmax.f32 %v2074, 1e-24
        %v2097 = vmax.f32 %v2077, 1e-24
        %v2098 = vmax.f32 %v2080, 1e-24
        %v2099 = vmax.f32 %v2083, 1e-24
        %v2100 = vrsqrt.pop %v2084
        %v2101 = vrsqrt.pop %v2085
        %v2102 = vrsqrt.pop %v2086
        %v2103 = vrsqrt.pop %v2087
        %v2104 = vrsqrt.pop %v2088
        %v2105 = vrsqrt.pop %v2089
        %v2106 = vrsqrt.pop %v2090
        %v2107 = vrsqrt.pop %v2091
        %v2108 = vrsqrt.pop %v2092
        %v2109 = vrsqrt.pop %v2093
        %v2110 = vrsqrt.pop %v2094
        %v2111 = vrsqrt.pop %v2095
        %v2112 = vrsqrt.pop %v2096
        %v2113 = vrsqrt.pop %v2097
        %v2114 = vrsqrt.pop %v2098
        %v2115 = vrsqrt.pop %v2099
        %v2116 = vmul.f32 %v1584, %v2100
        %v2117 = vmul.f32 %v1587, %v2101
        %v2118 = vmul.f32 %v1592, %v2102
        %v2119 = vmul.f32 %v1595, %v2103
        %v2120 = vmul.f32 %v1600, %v2104
        %v2121 = vmul.f32 %v1603, %v2105
        %v2122 = vmul.f32 %v1608, %v2106
        %v2123 = vmul.f32 %v1611, %v2107
        %v2124 = vmul.f32 %v1741, %v2108
        %v2125 = vmul.f32 %v1743, %v2109
        %v2126 = vmul.f32 %v1745, %v2110
        %v2127 = vmul.f32 %v1747, %v2111
        %v2128 = vmul.f32 %v1749, %v2112
        %v2129 = vmul.f32 %v1751, %v2113
        %v2130 = vmul.f32 %v1753, %v2114
        %v2131 = vmul.f32 %v1755, %v2115
        %v2132 = vld [vmem:[%s19] sm:$0xff]
        %v2133 = vld [vmem:[%s19 + $0x8] sm:$0xff]
        %v2134 = vld [vmem:[%s19 + $0x10] sm:$0xff]
        %v2135 = vld [vmem:[%s19 + $0x18] sm:$0xff]
        %v2136 = vld [vmem:[%s19 + $0x20] sm:$0xff]
        %v2137 = vld [vmem:[%s19 + $0x28] sm:$0xff]
        %v2138 = vld [vmem:[%s19 + $0x30] sm:$0xff]
        %v2139 = vld [vmem:[%s19 + $0x38] sm:$0xff]
        %v2140 = vld [vmem:[%s19 + $0x40] sm:$0xff]
        %v2141 = vld [vmem:[%s19 + $0x48] sm:$0xff]
        %v2142 = vld [vmem:[%s19 + $0x50] sm:$0xff]
        %v2143 = vld [vmem:[%s19 + $0x58] sm:$0xff]
        %v2144 = vld [vmem:[%s19 + $0x60] sm:$0xff]
        %v2145 = vld [vmem:[%s19 + $0x68] sm:$0xff]
        %v2146 = vld [vmem:[%s19 + $0x70] sm:$0xff]
        %v2147 = vld [vmem:[%s19 + $0x78] sm:$0xff]
        %v2149 = vsel %vm1222, %v2004, 0
        %v2152 = vsel %vm1222, %v2005, 0
        %v2155 = vsel %vm1222, %v2006, 0
        %v2158 = vsel %vm1222, %v2007, 0
        %v2161 = vsel %vm1222, %v2008, 0
        %v2164 = vsel %vm1222, %v2009, 0
        %v2167 = vsel %vm1222, %v2010, 0
        %v2170 = vsel %vm1222, %v2011, 0
        %v2173 = vsel %vm1222, %v2012, 0
        %v2176 = vsel %vm1222, %v2013, 0
        %v2179 = vsel %vm1222, %v2014, 0
        %v2182 = vsel %vm1222, %v2015, 0
        %v2185 = vsel %vm1222, %v2016, 0
        %v2188 = vsel %vm1222, %v2017, 0
        %v2191 = vsel %vm1222, %v2018, 0
        %v2194 = vsel %vm1222, %v2019, 0
        %v2197 = vsel %vm1222, %v2116, 0
        %v2200 = vsel %vm1222, %v2117, 0
        %v2203 = vsel %vm1222, %v2118, 0
        %v2206 = vsel %vm1222, %v2119, 0
        %v2209 = vsel %vm1222, %v2120, 0
        %v2212 = vsel %vm1222, %v2121, 0
        %v2215 = vsel %vm1222, %v2122, 0
        %v2218 = vsel %vm1222, %v2123, 0
        %v2221 = vsel %vm1222, %v2124, 0
        %v2224 = vsel %vm1222, %v2125, 0
        %v2227 = vsel %vm1222, %v2126, 0
        %v2230 = vsel %vm1222, %v2127, 0
        %v2233 = vsel %vm1222, %v2128, 0
        %v2236 = vsel %vm1222, %v2129, 0
        %v2239 = vsel %vm1222, %v2130, 0
        %v2242 = vsel %vm1222, %v2131, 0
        %2244 = vmatprep.subr.mxu0 0.0
        %2245 = vmatpush1.xpose.msra.mxu0 %v2197
        %2246 = vmatprep.subr.mxu0 0.0
        %2247 = vmatpush1.xpose.msra.mxu0 %v2200
        %2248 = vmatprep.subr.mxu0 0.0
        %2249 = vmatpush1.xpose.msra.mxu0 %v2203
        %2250 = vmatprep.subr.mxu0 0.0
        %2251 = vmatpush1.xpose.msra.mxu0 %v2206
        %2252 = vmatprep.subr.mxu0 0.0
        %2253 = vmatpush1.xpose.msra.mxu0 %v2209
        %2254 = vmatprep.subr.mxu0 0.0
        %2255 = vmatpush1.xpose.msra.mxu0 %v2212
        %2256 = vmatprep.subr.mxu0 0.0
        %2257 = vmatpush1.xpose.msra.mxu0 %v2215
        %2258 = vmatprep.subr.mxu0 0.0
        %2259 = vmatpush1.xpose.msra.mxu0 %v2218
        %2260 = vmatprep.subr.mxu0 0.0
        %2261 = vmatpush1.xpose.msra.mxu0 %v2221
        %2262 = vmatprep.subr.mxu0 0.0
        %2263 = vmatpush1.xpose.msra.mxu0 %v2224
        %2264 = vmatprep.subr.mxu0 0.0
        %2265 = vmatpush1.xpose.msra.mxu0 %v2227
        %2266 = vmatprep.subr.mxu0 0.0
        %2267 = vmatpush1.xpose.msra.mxu0 %v2230
        %2268 = vmatprep.subr.mxu0 0.0
        %2269 = vmatpush1.xpose.msra.mxu0 %v2233
        %2270 = vmatprep.subr.mxu0 0.0
        %2271 = vmatpush1.xpose.msra.mxu0 %v2236
        %2272 = vmatprep.subr.mxu0 0.0
        %2273 = vmatpush1.xpose.msra.mxu0 %v2239
        %2274 = vmatprep.subr.mxu0 0.0
        %2275 = vmatpush1.xpose.msra.mxu0 %v2242
        %2276 = vmatprep.subr.mxu0 0.0
        %2277 = vmatpush1.xpose.msra.mxu0 0.0
        %2278 = vmatprep.subr.mxu0 0.0
        %2279 = vmatpush1.xpose.msra.mxu0 0.0
        %2280 = vmatprep.subr.mxu0 0.0
        %2281 = vmatpush1.xpose.msra.mxu0 0.0
        %2282 = vmatprep.subr.mxu0 0.0
        %2283 = vmatpush1.xpose.msra.mxu0 0.0
        %2284 = vmatprep.subr.mxu0 0.0
        %2285 = vmatpush1.xpose.msra.mxu0 0.0
        %2286 = vmatprep.subr.mxu0 0.0
        %2287 = vmatpush1.xpose.msra.mxu0 0.0
        %2288 = vmatprep.subr.mxu0 0.0
        %2289 = vmatpush1.xpose.msra.mxu0 0.0
        %2290 = vmatprep.subr.mxu0 0.0
        %2291 = vmatpush1.xpose.msra.mxu0 0.0
        %2292 = vmatprep.subr.mxu0 0.0
        %2293 = vmatpush1.xpose.msra.mxu0 0.0
        %2294 = vmatprep.subr.mxu0 0.0
        %2295 = vmatpush1.xpose.msra.mxu0 0.0
        %2296 = vmatprep.subr.mxu0 0.0
        %2297 = vmatpush1.xpose.msra.mxu0 0.0
        %2298 = vmatprep.subr.mxu0 0.0
        %2299 = vmatpush1.xpose.msra.mxu0 0.0
        %2300 = vmatprep.subr.mxu0 0.0
        %2301 = vmatpush1.xpose.msra.mxu0 0.0
        %2302 = vmatprep.subr.mxu0 0.0
        %2303 = vmatpush1.xpose.msra.mxu0 0.0
        %2304 = vmatprep.subr.mxu0 0.0
        %2305 = vmatpush1.xpose.msra.mxu0 0.0
        %2306 = vmatprep.subr.mxu0 0.0
        %2307 = vmatpush1.xpose.msra.mxu0 0.0
        %2308 = vmatprep.mubr.f32.mxu0 0.0
        %2309 = vmatmul.mubr.f32.gmra.mrb[0].mxu0 %v2149
        %v2310 = vpop.f32.mrb[0].mxu0
        %v2311 = vadd.f32 %v2132, %v2310
        %v2312 = vpop.f32.mrb[0].mxu0
        %2313 = vmatprep.mubr.f32.mxu0 0.0
        %2314 = vmatmul.mubr.f32.gmra.mrb[0].mxu0 %v2152
        %v2315 = vpop.f32.mrb[0].mxu0
        %v2316 = vadd.f32 %v2133, %v2315
        %v2317 = vpop.f32.mrb[0].mxu0
        %2318 = vmatprep.mubr.f32.mxu0 0.0
        %2319 = vmatmul.mubr.f32.gmra.mrb[0].mxu0 %v2155
        %v2320 = vpop.f32.mrb[0].mxu0
        %v2321 = vadd.f32 %v2134, %v2320
        %v2322 = vpop.f32.mrb[0].mxu0
        %2323 = vmatprep.mubr.f32.mxu0 0.0
        %2324 = vmatmul.mubr.f32.gmra.mrb[0].mxu0 %v2158
        %v2325 = vpop.f32.mrb[0].mxu0
        %v2326 = vadd.f32 %v2135, %v2325
        %v2327 = vpop.f32.mrb[0].mxu0
        %2328 = vmatprep.mubr.f32.mxu0 0.0
        %2329 = vmatmul.mubr.f32.gmra.mrb[0].mxu0 %v2161
        %v2330 = vpop.f32.mrb[0].mxu0
        %v2331 = vadd.f32 %v2136, %v2330
        %v2332 = vpop.f32.mrb[0].mxu0
        %2333 = vmatprep.mubr.f32.mxu0 0.0
        %2334 = vmatmul.mubr.f32.gmra.mrb[0].mxu0 %v2164
        %v2335 = vpop.f32.mrb[0].mxu0
        %v2336 = vadd.f32 %v2137, %v2335
        %v2337 = vpop.f32.mrb[0].mxu0
        %2338 = vmatprep.mubr.f32.mxu0 0.0
        %2339 = vmatmul.mubr.f32.gmra.mrb[0].mxu0 %v2167
        %v2340 = vpop.f32.mrb[0].mxu0
        %v2341 = vadd.f32 %v2138, %v2340
        %v2342 = vpop.f32.mrb[0].mxu0
        %2343 = vmatprep.mubr.f32.mxu0 0.0
        %2344 = vmatmul.mubr.f32.gmra.mrb[0].mxu0 %v2170
        %v2345 = vpop.f32.mrb[0].mxu0
        %v2346 = vadd.f32 %v2139, %v2345
        %v2347 = vpop.f32.mrb[0].mxu0
        %2348 = vmatprep.mubr.f32.mxu0 0.0
        %2349 = vmatmul.mubr.f32.gmra.mrb[0].mxu0 %v2173
        %v2350 = vpop.f32.mrb[0].mxu0
        %v2351 = vadd.f32 %v2140, %v2350
        %v2352 = vpop.f32.mrb[0].mxu0
        %2353 = vmatprep.mubr.f32.mxu0 0.0
        %2354 = vmatmul.mubr.f32.gmra.mrb[0].mxu0 %v2176
        %v2355 = vpop.f32.mrb[0].mxu0
        %v2356 = vadd.f32 %v2141, %v2355
        %v2357 = vpop.f32.mrb[0].mxu0
        %2358 = vmatprep.mubr.f32.mxu0 0.0
        %2359 = vmatmul.mubr.f32.gmra.mrb[0].mxu0 %v2179
        %v2360 = vpop.f32.mrb[0].mxu0
        %v2361 = vadd.f32 %v2142, %v2360
        %v2362 = vpop.f32.mrb[0].mxu0
        %2363 = vmatprep.mubr.f32.mxu0 0.0
        %2364 = vmatmul.mubr.f32.gmra.mrb[0].mxu0 %v2182
        %v2365 = vpop.f32.mrb[0].mxu0
        %v2366 = vadd.f32 %v2143, %v2365
        %v2367 = vpop.f32.mrb[0].mxu0
        %2368 = vmatprep.mubr.f32.mxu0 0.0
        %2369 = vmatmul.mubr.f32.gmra.mrb[0].mxu0 %v2185
        %v2370 = vpop.f32.mrb[0].mxu0
        %v2371 = vadd.f32 %v2144, %v2370
        %v2372 = vpop.f32.mrb[0].mxu0
        %2373 = vmatprep.mubr.f32.mxu0 0.0
        %2374 = vmatmul.mubr.f32.gmra.mrb[0].mxu0 %v2188
        %v2375 = vpop.f32.mrb[0].mxu0
        %v2376 = vadd.f32 %v2145, %v2375
        %v2377 = vpop.f32.mrb[0].mxu0
        %2378 = vmatprep.mubr.f32.mxu0 0.0
        %2379 = vmatmul.mubr.f32.gmra.mrb[0].mxu0 %v2191
        %v2380 = vpop.f32.mrb[0].mxu0
        %v2381 = vadd.f32 %v2146, %v2380
        %v2382 = vpop.f32.mrb[0].mxu0
        %2383 = vmatprep.mubr.f32.mxu0 0.0
        %2384 = vmatmul.mubr.f32.gmra.mrb[0].mxu0 %v2194
        %v2385 = vpop.f32.mrb[0].mxu0
        %v2386 = vadd.f32 %v2147, %v2385
        %v2387 = vpop.f32.mrb[0].mxu0
        %2388 = vdwg.mxu0
        %2389 = vmax.xlane.f32.xlu0 %v2311
        %v2390 = vpop.xlane.xlu0 %2389
        %2391 = vmax.xlane.f32.xlu0 %v2316
        %v2392 = vpop.xlane.xlu0 %2391
        %2393 = vmax.xlane.f32.xlu0 %v2321
        %v2394 = vpop.xlane.xlu0 %2393
        %2395 = vmax.xlane.f32.xlu0 %v2326
        %v2396 = vpop.xlane.xlu0 %2395
        %2397 = vmax.xlane.f32.xlu0 %v2331
        %v2398 = vpop.xlane.xlu0 %2397
        %2399 = vmax.xlane.f32.xlu0 %v2336
        %v2400 = vpop.xlane.xlu0 %2399
        %2401 = vmax.xlane.f32.xlu0 %v2341
        %v2402 = vpop.xlane.xlu0 %2401
        %2403 = vmax.xlane.f32.xlu0 %v2346
        %v2404 = vpop.xlane.xlu0 %2403
        %2405 = vmax.xlane.f32.xlu0 %v2351
        %v2406 = vpop.xlane.xlu0 %2405
        %2407 = vmax.xlane.f32.xlu0 %v2356
        %v2408 = vpop.xlane.xlu0 %2407
        %2409 = vmax.xlane.f32.xlu0 %v2361
        %v2410 = vpop.xlane.xlu0 %2409
        %2411 = vmax.xlane.f32.xlu0 %v2366
        %v2412 = vpop.xlane.xlu0 %2411
        %2413 = vmax.xlane.f32.xlu0 %v2371
        %v2414 = vpop.xlane.xlu0 %2413
        %2415 = vmax.xlane.f32.xlu0 %v2376
        %v2416 = vpop.xlane.xlu0 %2415
        %2417 = vmax.xlane.f32.xlu0 %v2381
        %v2418 = vpop.xlane.xlu0 %2417
        %2419 = vmax.xlane.f32.xlu0 %v2386
        %v2420 = vpop.xlane.xlu0 %2419
        %v2421 = vsub.f32 %v2311, %v2390
        %v2422 = vsub.f32 %v2316, %v2392
        %v2423 = vsub.f32 %v2321, %v2394
        %v2424 = vsub.f32 %v2326, %v2396
        %v2425 = vsub.f32 %v2331, %v2398
        %v2426 = vsub.f32 %v2336, %v2400
        %v2427 = vsub.f32 %v2341, %v2402
        %v2428 = vsub.f32 %v2346, %v2404
        %v2429 = vsub.f32 %v2351, %v2406
        %v2430 = vsub.f32 %v2356, %v2408
        %v2431 = vsub.f32 %v2361, %v2410
        %v2432 = vsub.f32 %v2366, %v2412
        %v2433 = vsub.f32 %v2371, %v2414
        %v2434 = vsub.f32 %v2376, %v2416
        %v2435 = vsub.f32 %v2381, %v2418
        %v2436 = vsub.f32 %v2386, %v2420
        %v2437 = vmul.f32 %v2421, 1.442695
        %v2438 = vpow.pop %v2437
        %v2439 = vmul.f32 %v2422, 1.442695
        %v2440 = vpow.pop %v2439
        %v2441 = vmul.f32 %v2423, 1.442695
        %v2442 = vpow.pop %v2441
        %v2443 = vmul.f32 %v2424, 1.442695
        %v2444 = vpow.pop %v2443
        %v2445 = vmul.f32 %v2425, 1.442695
        %v2446 = vpow.pop %v2445
        %v2447 = vmul.f32 %v2426, 1.442695
        %v2448 = vpow.pop %v2447
        %v2449 = vmul.f32 %v2427, 1.442695
        %v2450 = vpow.pop %v2449
        %v2451 = vmul.f32 %v2428, 1.442695
        %v2452 = vpow.pop %v2451
        %v2453 = vmul.f32 %v2429, 1.442695
        %v2454 = vpow.pop %v2453
        %v2455 = vmul.f32 %v2430, 1.442695
        %v2456 = vpow.pop %v2455
        %v2457 = vmul.f32 %v2431, 1.442695
        %v2458 = vpow.pop %v2457
        %v2459 = vmul.f32 %v2432, 1.442695
        %v2460 = vpow.pop %v2459
        %v2461 = vmul.f32 %v2433, 1.442695
        %v2462 = vpow.pop %v2461
        %v2463 = vmul.f32 %v2434, 1.442695
        %v2464 = vpow.pop %v2463
        %v2465 = vmul.f32 %v2435, 1.442695
        %v2466 = vpow.pop %v2465
        %v2467 = vmul.f32 %v2436, 1.442695
        %v2468 = vpow.pop %v2467
        %2469 = vadd.xlane.f32.xlu0 %v2438
        %v2470 = vpop.xlane.xlu0 %2469
        %2471 = vadd.xlane.f32.xlu0 %v2440
        %v2472 = vpop.xlane.xlu0 %2471
        %2473 = vadd.xlane.f32.xlu0 %v2442
        %v2474 = vpop.xlane.xlu0 %2473
        %2475 = vadd.xlane.f32.xlu0 %v2444
        %v2476 = vpop.xlane.xlu0 %2475
        %2477 = vadd.xlane.f32.xlu0 %v2446
        %v2478 = vpop.xlane.xlu0 %2477
        %2479 = vadd.xlane.f32.xlu0 %v2448
        %v2480 = vpop.xlane.xlu0 %2479
        %2481 = vadd.xlane.f32.xlu0 %v2450
        %v2482 = vpop.xlane.xlu0 %2481
        %2483 = vadd.xlane.f32.xlu0 %v2452
        %v2484 = vpop.xlane.xlu0 %2483
        %2485 = vadd.xlane.f32.xlu0 %v2454
        %v2486 = vpop.xlane.xlu0 %2485
        %2487 = vadd.xlane.f32.xlu0 %v2456
        %v2488 = vpop.xlane.xlu0 %2487
        %2489 = vadd.xlane.f32.xlu0 %v2458
        %v2490 = vpop.xlane.xlu0 %2489
        %2491 = vadd.xlane.f32.xlu0 %v2460
        %v2492 = vpop.xlane.xlu0 %2491
        %2493 = vadd.xlane.f32.xlu0 %v2462
        %v2494 = vpop.xlane.xlu0 %2493
        %2495 = vadd.xlane.f32.xlu0 %v2464
        %v2496 = vpop.xlane.xlu0 %2495
        %2497 = vadd.xlane.f32.xlu0 %v2466
        %v2498 = vpop.xlane.xlu0 %2497
        %2499 = vadd.xlane.f32.xlu0 %v2468
        %v2500 = vpop.xlane.xlu0 %2499
        %v2501 = vrcp.pop %v2470
        %v2502 = vmul.f32 %v2438, %v2501
        %v2503 = vrcp.pop %v2472
        %v2504 = vmul.f32 %v2440, %v2503
        %v2505 = vrcp.pop %v2474
        %v2506 = vmul.f32 %v2442, %v2505
        %v2507 = vrcp.pop %v2476
        %v2508 = vmul.f32 %v2444, %v2507
        %v2509 = vrcp.pop %v2478
        %v2510 = vmul.f32 %v2446, %v2509
        %v2511 = vrcp.pop %v2480
        %v2512 = vmul.f32 %v2448, %v2511
        %v2513 = vrcp.pop %v2482
        %v2514 = vmul.f32 %v2450, %v2513
        %v2515 = vrcp.pop %v2484
        %v2516 = vmul.f32 %v2452, %v2515
        %v2517 = vrcp.pop %v2486
        %v2518 = vmul.f32 %v2454, %v2517
        %v2519 = vrcp.pop %v2488
        %v2520 = vmul.f32 %v2456, %v2519
        %v2521 = vrcp.pop %v2490
        %v2522 = vmul.f32 %v2458, %v2521
        %v2523 = vrcp.pop %v2492
        %v2524 = vmul.f32 %v2460, %v2523
        %v2525 = vrcp.pop %v2494
        %v2526 = vmul.f32 %v2462, %v2525
        %v2527 = vrcp.pop %v2496
        %v2528 = vmul.f32 %v2464, %v2527
        %v2529 = vrcp.pop %v2498
        %v2530 = vmul.f32 %v2466, %v2529
        %v2531 = vrcp.pop %v2500
        %v2532 = vmul.f32 %v2468, %v2531
        %2533 = vmatprep.subr.mxu0 0.0
        %2534 = vmatpush1.msra.mxu0 %v1670
        %2535 = vmatprep.subr.mxu0 0.0
        %2536 = vmatpush1.msra.mxu0 %v1673
        %2537 = vmatprep.subr.mxu0 0.0
        %2538 = vmatpush1.msra.mxu0 %v1678
        %2539 = vmatprep.subr.mxu0 0.0
        %2540 = vmatpush1.msra.mxu0 %v1681
        %2541 = vmatprep.subr.mxu0 0.0
        %2542 = vmatpush1.msra.mxu0 %v1686
        %2543 = vmatprep.subr.mxu0 0.0
        %2544 = vmatpush1.msra.mxu0 %v1689
        %2545 = vmatprep.subr.mxu0 0.0
        %2546 = vmatpush1.msra.mxu0 %v1694
        %2547 = vmatprep.subr.mxu0 0.0
        %2548 = vmatpush1.msra.mxu0 %v1697
        %2549 = vmatprep.subr.mxu0 0.0
        %2550 = vmatpush1.msra.mxu0 %v1773
        %2551 = vmatprep.subr.mxu0 0.0
        %2552 = vmatpush1.msra.mxu0 %v1775
        %2553 = vmatprep.subr.mxu0 0.0
        %2554 = vmatpush1.msra.mxu0 %v1777
        %2555 = vmatprep.subr.mxu0 0.0
        %2556 = vmatpush1.msra.mxu0 %v1779
        %2557 = vmatprep.subr.mxu0 0.0
        %2558 = vmatpush1.msra.mxu0 %v1781
        %2559 = vmatprep.subr.mxu0 0.0
        %2560 = vmatpush1.msra.mxu0 %v1783
        %2561 = vmatprep.subr.mxu0 0.0
        %2562 = vmatpush1.msra.mxu0 %v1785
        %2563 = vmatprep.subr.mxu0 0.0
        %2564 = vmatpush1.msra.mxu0 %v1787
        %2565 = vmatprep.subr.mxu0 0.0
        %2566 = vmatpush1.msra.mxu0 0.0
        %2567 = vmatprep.subr.mxu0 0.0
        %2568 = vmatpush1.msra.mxu0 0.0
        %2569 = vmatprep.subr.mxu0 0.0
        %2570 = vmatpush1.msra.mxu0 0.0
        %2571 = vmatprep.subr.mxu0 0.0
        %2572 = vmatpush1.msra.mxu0 0.0
        %2573 = vmatprep.subr.mxu0 0.0
        %2574 = vmatpush1.msra.mxu0 0.0
        %2575 = vmatprep.subr.mxu0 0.0
        %2576 = vmatpush1.msra.mxu0 0.0
        %2577 = vmatprep.subr.mxu0 0.0
        %2578 = vmatpush1.msra.mxu0 0.0
        %2579 = vmatprep.subr.mxu0 0.0
        %2580 = vmatpush1.msra.mxu0 0.0
        %2581 = vmatprep.subr.mxu0 0.0
        %2582 = vmatpush1.msra.mxu0 0.0
        %2583 = vmatprep.subr.mxu0 0.0
        %2584 = vmatpush1.msra.mxu0 0.0
        %2585 = vmatprep.subr.mxu0 0.0
        %2586 = vmatpush1.msra.mxu0 0.0
        %2587 = vmatprep.subr.mxu0 0.0
        %2588 = vmatpush1.msra.mxu0 0.0
        %2589 = vmatprep.subr.mxu0 0.0
        %2590 = vmatpush1.msra.mxu0 0.0
        %2591 = vmatprep.subr.mxu0 0.0
        %2592 = vmatpush1.msra.mxu0 0.0
        %2593 = vmatprep.subr.mxu0 0.0
        %2594 = vmatpush1.msra.mxu0 0.0
        %2595 = vmatprep.subr.mxu0 0.0
        %2596 = vmatpush1.msra.mxu0 0.0
        %2597 = vmatprep.mubr.f32.mxu0 0.0
        %2598 = vmatmul.mubr.f32.gmra.mrb[0].mxu0 %v2502
        %v2599 = vpop.f32.mrb[0].mxu0
        %v2600 = vadd.f32 0.0, %v2599
        %v2601 = vpop.f32.mrb[0].mxu0
        %2602 = vmatprep.mubr.f32.mxu0 0.0
        %2603 = vmatmul.mubr.f32.gmra.mrb[0].mxu0 %v2504
        %v2604 = vpop.f32.mrb[0].mxu0
        %v2605 = vadd.f32 0.0, %v2604
        %v2606 = vpop.f32.mrb[0].mxu0
        %2607 = vmatprep.mubr.f32.mxu0 0.0
        %2608 = vmatmul.mubr.f32.gmra.mrb[0].mxu0 %v2506
        %v2609 = vpop.f32.mrb[0].mxu0
        %v2610 = vadd.f32 0.0, %v2609
        %v2611 = vpop.f32.mrb[0].mxu0
        %2612 = vmatprep.mubr.f32.mxu0 0.0
        %2613 = vmatmul.mubr.f32.gmra.mrb[0].mxu0 %v2508
        %v2614 = vpop.f32.mrb[0].mxu0
        %v2615 = vadd.f32 0.0, %v2614
        %v2616 = vpop.f32.mrb[0].mxu0
        %2617 = vmatprep.mubr.f32.mxu0 0.0
        %2618 = vmatmul.mubr.f32.gmra.mrb[0].mxu0 %v2510
        %v2619 = vpop.f32.mrb[0].mxu0
        %v2620 = vadd.f32 0.0, %v2619
        %v2621 = vpop.f32.mrb[0].mxu0
        %2622 = vmatprep.mubr.f32.mxu0 0.0
        %2623 = vmatmul.mubr.f32.gmra.mrb[0].mxu0 %v2512
        %v2624 = vpop.f32.mrb[0].mxu0
        %v2625 = vadd.f32 0.0, %v2624
        %v2626 = vpop.f32.mrb[0].mxu0
        %2627 = vmatprep.mubr.f32.mxu0 0.0
        %2628 = vmatmul.mubr.f32.gmra.mrb[0].mxu0 %v2514
        %v2629 = vpop.f32.mrb[0].mxu0
        %v2630 = vadd.f32 0.0, %v2629
        %v2631 = vpop.f32.mrb[0].mxu0
        %2632 = vmatprep.mubr.f32.mxu0 0.0
        %2633 = vmatmul.mubr.f32.gmra.mrb[0].mxu0 %v2516
        %v2634 = vpop.f32.mrb[0].mxu0
        %v2635 = vadd.f32 0.0, %v2634
        %v2636 = vpop.f32.mrb[0].mxu0
        %2637 = vmatprep.mubr.f32.mxu0 0.0
        %2638 = vmatmul.mubr.f32.gmra.mrb[0].mxu0 %v2518
        %v2639 = vpop.f32.mrb[0].mxu0
        %v2640 = vadd.f32 0.0, %v2639
        %v2641 = vpop.f32.mrb[0].mxu0
        %2642 = vmatprep.mubr.f32.mxu0 0.0
        %2643 = vmatmul.mubr.f32.gmra.mrb[0].mxu0 %v2520
        %v2644 = vpop.f32.mrb[0].mxu0
        %v2645 = vadd.f32 0.0, %v2644
        %v2646 = vpop.f32.mrb[0].mxu0
        %2647 = vmatprep.mubr.f32.mxu0 0.0
        %2648 = vmatmul.mubr.f32.gmra.mrb[0].mxu0 %v2522
        %v2649 = vpop.f32.mrb[0].mxu0
        %v2650 = vadd.f32 0.0, %v2649
        %v2651 = vpop.f32.mrb[0].mxu0
        %2652 = vmatprep.mubr.f32.mxu0 0.0
        %2653 = vmatmul.mubr.f32.gmra.mrb[0].mxu0 %v2524
        %v2654 = vpop.f32.mrb[0].mxu0
        %v2655 = vadd.f32 0.0, %v2654
        %v2656 = vpop.f32.mrb[0].mxu0
        %2657 = vmatprep.mubr.f32.mxu0 0.0
        %2658 = vmatmul.mubr.f32.gmra.mrb[0].mxu0 %v2526
        %v2659 = vpop.f32.mrb[0].mxu0
        %v2660 = vadd.f32 0.0, %v2659
        %v2661 = vpop.f32.mrb[0].mxu0
        %2662 = vmatprep.mubr.f32.mxu0 0.0
        %2663 = vmatmul.mubr.f32.gmra.mrb[0].mxu0 %v2528
        %v2664 = vpop.f32.mrb[0].mxu0
        %v2665 = vadd.f32 0.0, %v2664
        %v2666 = vpop.f32.mrb[0].mxu0
        %2667 = vmatprep.mubr.f32.mxu0 0.0
        %2668 = vmatmul.mubr.f32.gmra.mrb[0].mxu0 %v2530
        %v2669 = vpop.f32.mrb[0].mxu0
        %v2670 = vadd.f32 0.0, %v2669
        %v2671 = vpop.f32.mrb[0].mxu0
        %2672 = vmatprep.mubr.f32.mxu0 0.0
        %2673 = vmatmul.mubr.f32.gmra.mrb[0].mxu0 %v2532
        %v2674 = vpop.f32.mrb[0].mxu0
        %v2675 = vadd.f32 0.0, %v2674
        %v2676 = vpop.f32.mrb[0].mxu0
        %2677 = vdwg.mxu0
        %v2678 = vpack.c.bf16 %v2605, %v2600
        %v2679 = vpack.c.bf16 %v2615, %v2610
        %v2680 = vpack.c.bf16 %v2625, %v2620
        %v2681 = vpack.c.bf16 %v2635, %v2630
        %v2682 = vld [vmem:[%s9] sm:$0xf]
        %v2683 = vld [vmem:[%s9 + $0x4] sm:$0xf]
        %v2686 = vunpack.c.l.b16 %v2682
        %v2687 = vunpack.c.l.b16 %v2683
        %v2688 = vpack.c.b16 %v2687, %v2686
        %v2691 = vsel %vm1222, %v2678, 0
        %v2694 = vsel %vm1222, %v2679, 0
        %v2697 = vsel %vm1222, %v2680, 0
        %v2700 = vsel %vm1222, %v2681, 0
        %2702 = vmatprep.subr.bf16.mxu0 0
        %2703 = vmatpush1.bf16.msra.mxu0 %v2688
        %2704 = vmatprep.subr.bf16.mxu0 0
        %2705 = vmatpush1.bf16.msra.mxu0 0
        %2706 = vmatprep.subr.bf16.mxu0 0
        %2707 = vmatpush1.bf16.msra.mxu0 0
        %2708 = vmatprep.subr.bf16.mxu0 0
        %2709 = vmatpush1.bf16.msra.mxu0 0
        %2710 = vmatprep.subr.bf16.mxu0 0
        %2711 = vmatpush1.bf16.msra.mxu0 0
        %2712 = vmatprep.subr.bf16.mxu0 0
        %2713 = vmatpush1.bf16.msra.mxu0 0
        %2714 = vmatprep.subr.bf16.mxu0 0
        %2715 = vmatpush1.bf16.msra.mxu0 0
        %2716 = vmatprep.subr.bf16.mxu0 0
        %2717 = vmatpush1.bf16.msra.mxu0 0
        %2718 = vmatprep.subr.bf16.mxu0 0
        %2719 = vmatpush1.bf16.msra.mxu0 0
        %2720 = vmatprep.subr.bf16.mxu0 0
        %2721 = vmatpush1.bf16.msra.mxu0 0
        %2722 = vmatprep.subr.bf16.mxu0 0
        %2723 = vmatpush1.bf16.msra.mxu0 0
        %2724 = vmatprep.subr.bf16.mxu0 0
        %2725 = vmatpush1.bf16.msra.mxu0 0
        %2726 = vmatprep.subr.bf16.mxu0 0
        %2727 = vmatpush1.bf16.msra.mxu0 0
        %2728 = vmatprep.subr.bf16.mxu0 0
        %2729 = vmatpush1.bf16.msra.mxu0 0
        %2730 = vmatprep.subr.bf16.mxu0 0
        %2731 = vmatpush1.bf16.msra.mxu0 0
        %2732 = vmatprep.subr.bf16.mxu0 0
        %2733 = vmatpush1.bf16.msra.mxu0 0
        %2734 = vmatprep.mubr.bf16.mxu0 0
        %2735 = vmatmul.mubr.bf16.gmra.mrb[0].mxu0 %v2691
        %v2736 = vpop.f32.mrb[0].mxu0
        %v2737 = vadd.f32 0.0, %v2736
        %v2738 = vpop.f32.mrb[0].mxu0
        %v2739 = vpop.f32.mrb[0].mxu0
        %v2740 = vadd.f32 0.0, %v2739
        %v2741 = vpop.f32.mrb[0].mxu0
        %2742 = vmatprep.mubr.bf16.mxu0 0
        %2743 = vmatmul.mubr.bf16.gmra.mrb[0].mxu0 %v2694
        %v2744 = vpop.f32.mrb[0].mxu0
        %v2745 = vadd.f32 0.0, %v2744
        %v2746 = vpop.f32.mrb[0].mxu0
        %v2747 = vpop.f32.mrb[0].mxu0
        %v2748 = vadd.f32 0.0, %v2747
        %v2749 = vpop.f32.mrb[0].mxu0
        %2750 = vmatprep.mubr.bf16.mxu0 0
        %2751 = vmatmul.mubr.bf16.gmra.mrb[0].mxu0 %v2697
        %v2752 = vpop.f32.mrb[0].mxu0
        %v2753 = vadd.f32 0.0, %v2752
        %v2754 = vpop.f32.mrb[0].mxu0
        %v2755 = vpop.f32.mrb[0].mxu0
        %v2756 = vadd.f32 0.0, %v2755
        %v2757 = vpop.f32.mrb[0].mxu0
        %2758 = vmatprep.mubr.bf16.mxu0 0
        %2759 = vmatmul.mubr.bf16.gmra.mrb[0].mxu0 %v2700
        %v2760 = vpop.f32.mrb[0].mxu0
        %v2761 = vadd.f32 0.0, %v2760
        %v2762 = vpop.f32.mrb[0].mxu0
        %v2763 = vpop.f32.mrb[0].mxu0
        %v2764 = vadd.f32 0.0, %v2763
        %v2765 = vpop.f32.mrb[0].mxu0
        %2766 = vdwg.mxu0
        %v2767 = vlaneseq
        %v2768 = vshrl.u32 %v2767, 7
        %v2769 = vsub.s32 2, %v2768
        %v2770 = vrot.slane %v1430, %v2769
        %v2771 = vadd.f32 %v2770, %v2737
        %v2772 = vadd.f32 %v2770, %v2740
        %v2773 = vadd.f32 %v2770, %v2745
        %v2774 = vadd.f32 %v2770, %v2748
        %v2775 = vadd.f32 %v2770, %v2753
        %v2776 = vadd.f32 %v2770, %v2756
        %v2777 = vadd.f32 %v2770, %v2761
        %v2778 = vadd.f32 %v2770, %v2764
        %v2779 = vpack.c.bf16 %v2645, %v2640
        %v2780 = vpack.c.bf16 %v2655, %v2650
        %v2781 = vpack.c.bf16 %v2665, %v2660
        %v2782 = vpack.c.bf16 %v2675, %v2670
        %v2783 = vld [vmem:[%s9 + $0x8] sm:$0xf]
        %v2784 = vld [vmem:[%s9 + $0xc] sm:$0xf]
        %v2787 = vunpack.c.l.b16 %v2783
        %v2788 = vunpack.c.l.b16 %v2784
        %v2789 = vpack.c.b16 %v2788, %v2787
        %v2792 = vsel %vm1222, %v2779, 0
        %v2795 = vsel %vm1222, %v2780, 0
        %v2798 = vsel %vm1222, %v2781, 0
        %v2801 = vsel %vm1222, %v2782, 0
        %2803 = vmatprep.subr.bf16.mxu0 0
        %2804 = vmatpush1.bf16.msra.mxu0 %v2789
        %2805 = vmatprep.subr.bf16.mxu0 0
        %2806 = vmatpush1.bf16.msra.mxu0 0
        %2807 = vmatprep.subr.bf16.mxu0 0
        %2808 = vmatpush1.bf16.msra.mxu0 0
        %2809 = vmatprep.subr.bf16.mxu0 0
        %2810 = vmatpush1.bf16.msra.mxu0 0
        %2811 = vmatprep.subr.bf16.mxu0 0
        %2812 = vmatpush1.bf16.msra.mxu0 0
        %2813 = vmatprep.subr.bf16.mxu0 0
        %2814 = vmatpush1.bf16.msra.mxu0 0
        %2815 = vmatprep.subr.bf16.mxu0 0
        %2816 = vmatpush1.bf16.msra.mxu0 0
        %2817 = vmatprep.subr.bf16.mxu0 0
        %2818 = vmatpush1.bf16.msra.mxu0 0
        %2819 = vmatprep.subr.bf16.mxu0 0
        %2820 = vmatpush1.bf16.msra.mxu0 0
        %2821 = vmatprep.subr.bf16.mxu0 0
        %2822 = vmatpush1.bf16.msra.mxu0 0
        %2823 = vmatprep.subr.bf16.mxu0 0
        %2824 = vmatpush1.bf16.msra.mxu0 0
        %2825 = vmatprep.subr.bf16.mxu0 0
        %2826 = vmatpush1.bf16.msra.mxu0 0
        %2827 = vmatprep.subr.bf16.mxu0 0
        %2828 = vmatpush1.bf16.msra.mxu0 0
        %2829 = vmatprep.subr.bf16.mxu0 0
        %2830 = vmatpush1.bf16.msra.mxu0 0
        %2831 = vmatprep.subr.bf16.mxu0 0
        %2832 = vmatpush1.bf16.msra.mxu0 0
        %2833 = vmatprep.subr.bf16.mxu0 0
        %2834 = vmatpush1.bf16.msra.mxu0 0
        %2835 = vmatprep.mubr.bf16.mxu0 0
        %2836 = vmatmul.mubr.bf16.gmra.mrb[0].mxu0 %v2792
        %v2837 = vpop.f32.mrb[0].mxu0
        %v2838 = vadd.f32 0.0, %v2837
        %v2839 = vpop.f32.mrb[0].mxu0
        %v2840 = vpop.f32.mrb[0].mxu0
        %v2841 = vadd.f32 0.0, %v2840
        %v2842 = vpop.f32.mrb[0].mxu0
        %2843 = vmatprep.mubr.bf16.mxu0 0
        %2844 = vmatmul.mubr.bf16.gmra.mrb[0].mxu0 %v2795
        %v2845 = vpop.f32.mrb[0].mxu0
        %v2846 = vadd.f32 0.0, %v2845
        %v2847 = vpop.f32.mrb[0].mxu0
        %v2848 = vpop.f32.mrb[0].mxu0
        %v2849 = vadd.f32 0.0, %v2848
        %v2850 = vpop.f32.mrb[0].mxu0
        %2851 = vmatprep.mubr.bf16.mxu0 0
        %2852 = vmatmul.mubr.bf16.gmra.mrb[0].mxu0 %v2798
        %v2853 = vpop.f32.mrb[0].mxu0
        %v2854 = vadd.f32 0.0, %v2853
        %v2855 = vpop.f32.mrb[0].mxu0
        %v2856 = vpop.f32.mrb[0].mxu0
        %v2857 = vadd.f32 0.0, %v2856
        %v2858 = vpop.f32.mrb[0].mxu0
        %2859 = vmatprep.mubr.bf16.mxu0 0
        %2860 = vmatmul.mubr.bf16.gmra.mrb[0].mxu0 %v2801
        %v2861 = vpop.f32.mrb[0].mxu0
        %v2862 = vadd.f32 0.0, %v2861
        %v2863 = vpop.f32.mrb[0].mxu0
        %v2864 = vpop.f32.mrb[0].mxu0
        %v2865 = vadd.f32 0.0, %v2864
        %v2866 = vpop.f32.mrb[0].mxu0
        %2867 = vdwg.mxu0
        %v2868 = vadd.f32 %v2771, %v2838
        %v2869 = vadd.f32 %v2772, %v2841
        %v2870 = vadd.f32 %v2773, %v2846
        %v2871 = vadd.f32 %v2774, %v2849
        %v2872 = vadd.f32 %v2775, %v2854
        %v2873 = vadd.f32 %v2776, %v2857
        %v2874 = vadd.f32 %v2777, %v2862
        %v2875 = vadd.f32 %v2778, %v2865
        %v2876 = vsel %vm1300, %v2868, 0.0
        %2877 = vadd.xlane.f32.xlu0 %v2876
        %v2878 = vpop.xlane.xlu0 %2877
        %v2879 = vsel %vm1300, %v2869, 0.0
        %2880 = vadd.xlane.f32.xlu0 %v2879
        %v2881 = vpop.xlane.xlu0 %2880
        %v2882 = vsel %vm1300, %v2870, 0.0
        %2883 = vadd.xlane.f32.xlu0 %v2882
        %v2884 = vpop.xlane.xlu0 %2883
        %v2885 = vsel %vm1300, %v2871, 0.0
        %2886 = vadd.xlane.f32.xlu0 %v2885
        %v2887 = vpop.xlane.xlu0 %2886
        %v2888 = vsel %vm1300, %v2872, 0.0
        %2889 = vadd.xlane.f32.xlu0 %v2888
        %v2890 = vpop.xlane.xlu0 %2889
        %v2891 = vsel %vm1300, %v2873, 0.0
        %2892 = vadd.xlane.f32.xlu0 %v2891
        %v2893 = vpop.xlane.xlu0 %2892
        %v2894 = vsel %vm1300, %v2874, 0.0
        %2895 = vadd.xlane.f32.xlu0 %v2894
        %v2896 = vpop.xlane.xlu0 %2895
        %v2897 = vsel %vm1300, %v2875, 0.0
        %2898 = vadd.xlane.f32.xlu0 %v2897
        %v2899 = vpop.xlane.xlu0 %2898
        %v2900 = vmul.f32 %v2878, %v1325
        %v2901 = vmul.f32 %v2881, %v1325
        %v2902 = vmul.f32 %v2884, %v1325
        %v2903 = vmul.f32 %v2887, %v1325
        %v2904 = vmul.f32 %v2890, %v1325
        %v2905 = vmul.f32 %v2893, %v1325
        %v2906 = vmul.f32 %v2896, %v1325
        %v2907 = vmul.f32 %v2899, %v1325
        %v2908 = vsub.f32 %v2868, %v2900
        %v2909 = vsub.f32 %v2869, %v2901
        %v2910 = vsub.f32 %v2870, %v2902
        %v2911 = vsub.f32 %v2871, %v2903
        %v2912 = vsub.f32 %v2872, %v2904
        %v2913 = vsub.f32 %v2873, %v2905
        %v2914 = vsub.f32 %v2874, %v2906
        %v2915 = vsub.f32 %v2875, %v2907
        %v2916 = vmul.f32 %v2908, %v2908
        %v2917 = vmul.f32 %v2909, %v2909
        %v2918 = vmul.f32 %v2910, %v2910
        %v2919 = vmul.f32 %v2911, %v2911
        %v2920 = vmul.f32 %v2912, %v2912
        %v2921 = vmul.f32 %v2913, %v2913
        %v2922 = vmul.f32 %v2914, %v2914
        %v2923 = vmul.f32 %v2915, %v2915
        %v2924 = vsel %vm1300, %v2916, 0.0
        %2925 = vadd.xlane.f32.xlu0 %v2924
        %v2926 = vpop.xlane.xlu0 %2925
        %v2927 = vsel %vm1300, %v2917, 0.0
        %2928 = vadd.xlane.f32.xlu0 %v2927
        %v2929 = vpop.xlane.xlu0 %2928
        %v2930 = vsel %vm1300, %v2918, 0.0
        %2931 = vadd.xlane.f32.xlu0 %v2930
        %v2932 = vpop.xlane.xlu0 %2931
        %v2933 = vsel %vm1300, %v2919, 0.0
        %2934 = vadd.xlane.f32.xlu0 %v2933
        %v2935 = vpop.xlane.xlu0 %2934
        %v2936 = vsel %vm1300, %v2920, 0.0
        %2937 = vadd.xlane.f32.xlu0 %v2936
        %v2938 = vpop.xlane.xlu0 %2937
        %v2939 = vsel %vm1300, %v2921, 0.0
        %2940 = vadd.xlane.f32.xlu0 %v2939
        %v2941 = vpop.xlane.xlu0 %2940
        %v2942 = vsel %vm1300, %v2922, 0.0
        %2943 = vadd.xlane.f32.xlu0 %v2942
        %v2944 = vpop.xlane.xlu0 %2943
        %v2945 = vsel %vm1300, %v2923, 0.0
        %2946 = vadd.xlane.f32.xlu0 %v2945
        %v2947 = vpop.xlane.xlu0 %2946
        %v2948 = vmul.f32 %v2926, %v1325
        %v2949 = vmul.f32 %v2929, %v1325
        %v2950 = vmul.f32 %v2932, %v1325
        %v2951 = vmul.f32 %v2935, %v1325
        %v2952 = vmul.f32 %v2938, %v1325
        %v2953 = vmul.f32 %v2941, %v1325
        %v2954 = vmul.f32 %v2944, %v1325
        %v2955 = vmul.f32 %v2947, %v1325
        %v2956 = vadd.f32 %v2948, 1e-05
        %v2957 = vadd.f32 %v2949, 1e-05
        %v2958 = vadd.f32 %v2950, 1e-05
        %v2959 = vadd.f32 %v2951, 1e-05
        %v2960 = vadd.f32 %v2952, 1e-05
        %v2961 = vadd.f32 %v2953, 1e-05
        %v2962 = vadd.f32 %v2954, 1e-05
        %v2963 = vadd.f32 %v2955, 1e-05
        %v2964 = vrsqrt.pop %v2956
        %v2965 = vrsqrt.pop %v2957
        %v2966 = vrsqrt.pop %v2958
        %v2967 = vrsqrt.pop %v2959
        %v2968 = vrsqrt.pop %v2960
        %v2969 = vrsqrt.pop %v2961
        %v2970 = vrsqrt.pop %v2962
        %v2971 = vrsqrt.pop %v2963
        %v2972 = vmul.f32 %v2908, %v2964
        %v2973 = vmul.f32 %v2909, %v2965
        %v2974 = vmul.f32 %v2910, %v2966
        %v2975 = vmul.f32 %v2911, %v2967
        %v2976 = vmul.f32 %v2912, %v2968
        %v2977 = vmul.f32 %v2913, %v2969
        %v2978 = vmul.f32 %v2914, %v2970
        %v2979 = vmul.f32 %v2915, %v2971
        %v2980 = vlaneseq
        %v2981 = vshrl.u32 %v2980, 7
        %v2982 = vsub.s32 3, %v2981
        %v2983 = vrot.slane %v1430, %v2982
        %v2984 = vmul.f32 %v2972, %v2983
        %v2985 = vmul.f32 %v2973, %v2983
        %v2986 = vmul.f32 %v2974, %v2983
        %v2987 = vmul.f32 %v2975, %v2983
        %v2988 = vmul.f32 %v2976, %v2983
        %v2989 = vmul.f32 %v2977, %v2983
        %v2990 = vmul.f32 %v2978, %v2983
        %v2991 = vmul.f32 %v2979, %v2983
        %v2992 = vlaneseq
        %v2993 = vshrl.u32 %v2992, 7
        %v2994 = vsub.s32 4, %v2993
        %v2995 = vrot.slane %v1430, %v2994
        %v2996 = vadd.f32 %v2984, %v2995
        %v2997 = vadd.f32 %v2985, %v2995
        %v2998 = vadd.f32 %v2986, %v2995
        %v2999 = vadd.f32 %v2987, %v2995
        %v3000 = vadd.f32 %v2988, %v2995
        %v3001 = vadd.f32 %v2989, %v2995
        %v3002 = vadd.f32 %v2990, %v2995
        %v3003 = vadd.f32 %v2991, %v2995
        %v3004 = vadd.f32 %v1422, %v2996
        %v3005 = vadd.f32 %v1423, %v2997
        %v3006 = vadd.f32 %v1424, %v2998
        %v3007 = vadd.f32 %v1425, %v2999
        %v3008 = vadd.f32 %v1426, %v3000
        %v3009 = vadd.f32 %v1427, %v3001
        %v3010 = vadd.f32 %v1428, %v3002
        %v3011 = vadd.f32 %v1429, %v3003
        %v3012 = vpack.c.bf16 %v3005, %v3004
        %v3013 = vpack.c.bf16 %v3007, %v3006
        %v3014 = vpack.c.bf16 %v3009, %v3008
        %v3015 = vpack.c.bf16 %v3011, %v3010
        %v3016 = vld [vmem:[%s11] sm:$0xf]
        %v3017 = vld [vmem:[%s11 + $0x4] sm:$0xf]
        %v3018 = vld [vmem:[%s11 + $0x8] sm:$0xf]
        %v3019 = vld [vmem:[%s11 + $0xc] sm:$0xf]
        %v3020 = vld [vmem:[%s17] sm:$0x1]
        %v3022 = vlaneseq
        %v3023 = vshrl.u32 %v3022, 7
        %v3024 = vsub.s32 0, %v3023
        %v3025 = vrot.slane %v3020, %v3024
        %v3031 = vunpack.c.l.b16 %v3016
        %v3032 = vunpack.c.l.b16 %v3017
        %v3033 = vunpack.c.l.b16 %v3018
        %v3034 = vunpack.c.l.b16 %v3019
        %v3035 = vpack.c.b16 %v3032, %v3031
        %v3036 = vpack.c.b16 %v3034, %v3033
        %v3040 = vsel %vm1300, %v3012, 0
        %v3043 = vsel %vm1300, %v3013, 0
        %v3046 = vsel %vm1300, %v3014, 0
        %v3049 = vsel %vm1300, %v3015, 0
        %3051 = vmatprep.subr.bf16.mxu0 0
        %3052 = vmatpush1.bf16.msra.mxu0 %v3035
        %3053 = vmatprep.subr.bf16.mxu0 0
        %3054 = vmatpush1.bf16.msra.mxu0 %v3036
        %3055 = vmatprep.subr.bf16.mxu0 0
        %3056 = vmatpush1.bf16.msra.mxu0 0
        %3057 = vmatprep.subr.bf16.mxu0 0
        %3058 = vmatpush1.bf16.msra.mxu0 0
        %3059 = vmatprep.subr.bf16.mxu0 0
        %3060 = vmatpush1.bf16.msra.mxu0 0
        %3061 = vmatprep.subr.bf16.mxu0 0
        %3062 = vmatpush1.bf16.msra.mxu0 0
        %3063 = vmatprep.subr.bf16.mxu0 0
        %3064 = vmatpush1.bf16.msra.mxu0 0
        %3065 = vmatprep.subr.bf16.mxu0 0
        %3066 = vmatpush1.bf16.msra.mxu0 0
        %3067 = vmatprep.subr.bf16.mxu0 0
        %3068 = vmatpush1.bf16.msra.mxu0 0
        %3069 = vmatprep.subr.bf16.mxu0 0
        %3070 = vmatpush1.bf16.msra.mxu0 0
        %3071 = vmatprep.subr.bf16.mxu0 0
        %3072 = vmatpush1.bf16.msra.mxu0 0
        %3073 = vmatprep.subr.bf16.mxu0 0
        %3074 = vmatpush1.bf16.msra.mxu0 0
        %3075 = vmatprep.subr.bf16.mxu0 0
        %3076 = vmatpush1.bf16.msra.mxu0 0
        %3077 = vmatprep.subr.bf16.mxu0 0
        %3078 = vmatpush1.bf16.msra.mxu0 0
        %3079 = vmatprep.subr.bf16.mxu0 0
        %3080 = vmatpush1.bf16.msra.mxu0 0
        %3081 = vmatprep.subr.bf16.mxu0 0
        %3082 = vmatpush1.bf16.msra.mxu0 0
        %3083 = vmatprep.mubr.bf16.mxu0 0
        %3084 = vmatmul.mubr.bf16.gmra.mrb[0].mxu0 %v3040
        %v3085 = vpop.f32.mrb[0].mxu0
        %v3086 = vadd.f32 %v3025, %v3085
        %v3087 = vpop.f32.mrb[0].mxu0
        %v3088 = vpop.f32.mrb[0].mxu0
        %v3089 = vadd.f32 %v3025, %v3088
        %v3090 = vpop.f32.mrb[0].mxu0
        %3091 = vmatprep.mubr.bf16.mxu0 0
        %3092 = vmatmul.mubr.bf16.gmra.mrb[0].mxu0 %v3043
        %v3093 = vpop.f32.mrb[0].mxu0
        %v3094 = vadd.f32 %v3025, %v3093
        %v3095 = vpop.f32.mrb[0].mxu0
        %v3096 = vpop.f32.mrb[0].mxu0
        %v3097 = vadd.f32 %v3025, %v3096
        %v3098 = vpop.f32.mrb[0].mxu0
        %3099 = vmatprep.mubr.bf16.mxu0 0
        %3100 = vmatmul.mubr.bf16.gmra.mrb[0].mxu0 %v3046
        %v3101 = vpop.f32.mrb[0].mxu0
        %v3102 = vadd.f32 %v3025, %v3101
        %v3103 = vpop.f32.mrb[0].mxu0
        %v3104 = vpop.f32.mrb[0].mxu0
        %v3105 = vadd.f32 %v3025, %v3104
        %v3106 = vpop.f32.mrb[0].mxu0
        %3107 = vmatprep.mubr.bf16.mxu0 0
        %3108 = vmatmul.mubr.bf16.gmra.mrb[0].mxu0 %v3049
        %v3109 = vpop.f32.mrb[0].mxu0
        %v3110 = vadd.f32 %v3025, %v3109
        %v3111 = vpop.f32.mrb[0].mxu0
        %v3112 = vpop.f32.mrb[0].mxu0
        %v3113 = vadd.f32 %v3025, %v3112
        %v3114 = vpop.f32.mrb[0].mxu0
        %3115 = vdwg.mxu0
        %v3116 = vmul.f32 %v3086, 0.5
        %v3117 = vmul.f32 %v3089, 0.5
        %v3118 = vmul.f32 %v3094, 0.5
        %v3119 = vmul.f32 %v3097, 0.5
        %v3120 = vmul.f32 %v3102, 0.5
        %v3121 = vmul.f32 %v3105, 0.5
        %v3122 = vmul.f32 %v3110, 0.5
        %v3123 = vmul.f32 %v3113, 0.5
        %v3124 = vmul.f32 %v3086, 0.70710677
        %v3125 = vmul.f32 %v3089, 0.70710677
        %v3126 = vmul.f32 %v3094, 0.70710677
        %v3127 = vmul.f32 %v3097, 0.70710677
        %v3128 = vmul.f32 %v3102, 0.70710677
        %v3129 = vmul.f32 %v3105, 0.70710677
        %v3130 = vmul.f32 %v3110, 0.70710677
        %v3131 = vmul.f32 %v3113, 0.70710677
        %vm3132 = vcmp.lt.f32.partialorder %v3124, 0.0
        %vm3133 = vcmp.lt.f32.partialorder %v3125, 0.0
        %vm3134 = vcmp.lt.f32.partialorder %v3126, 0.0
        %vm3135 = vcmp.lt.f32.partialorder %v3127, 0.0
        %vm3136 = vcmp.lt.f32.partialorder %v3128, 0.0
        %vm3137 = vcmp.lt.f32.partialorder %v3129, 0.0
        %vm3138 = vcmp.lt.f32.partialorder %v3130, 0.0
        %vm3139 = vcmp.lt.f32.partialorder %v3131, 0.0
        %v3140 = vsel %vm3132, -1.0, 1.0
        %v3141 = vsel %vm3133, -1.0, 1.0
        %v3142 = vsel %vm3134, -1.0, 1.0
        %v3143 = vsel %vm3135, -1.0, 1.0
        %v3144 = vsel %vm3136, -1.0, 1.0
        %v3145 = vsel %vm3137, -1.0, 1.0
        %v3146 = vsel %vm3138, -1.0, 1.0
        %v3147 = vsel %vm3139, -1.0, 1.0
        %v3148 = vand.u32 2147483647, %v3124
        %v3149 = vand.u32 2147483647, %v3125
        %v3150 = vand.u32 2147483647, %v3126
        %v3151 = vand.u32 2147483647, %v3127
        %v3152 = vand.u32 2147483647, %v3128
        %v3153 = vand.u32 2147483647, %v3129
        %v3154 = vand.u32 2147483647, %v3130
        %v3155 = vand.u32 2147483647, %v3131
        %v3156 = vmul.f32 %v3148, 0.3275911
        %v3157 = vmul.f32 %v3149, 0.3275911
        %v3158 = vmul.f32 %v3150, 0.3275911
        %v3159 = vmul.f32 %v3151, 0.3275911
        %v3160 = vmul.f32 %v3152, 0.3275911
        %v3161 = vmul.f32 %v3153, 0.3275911
        %v3162 = vmul.f32 %v3154, 0.3275911
        %v3163 = vmul.f32 %v3155, 0.3275911
        %v3164 = vadd.f32 %v3156, 1.0
        %v3165 = vadd.f32 %v3157, 1.0
        %v3166 = vadd.f32 %v3158, 1.0
        %v3167 = vadd.f32 %v3159, 1.0
        %v3168 = vadd.f32 %v3160, 1.0
        %v3169 = vadd.f32 %v3161, 1.0
        %v3170 = vadd.f32 %v3162, 1.0
        %v3171 = vadd.f32 %v3163, 1.0
        %v3172 = vrcp.pop %v3164
        %v3173 = vmul.f32 1.0, %v3172
        %v3174 = vrcp.pop %v3165
        %v3175 = vmul.f32 1.0, %v3174
        %v3176 = vrcp.pop %v3166
        %v3177 = vmul.f32 1.0, %v3176
        %v3178 = vrcp.pop %v3167
        %v3179 = vmul.f32 1.0, %v3178
        %v3180 = vrcp.pop %v3168
        %v3181 = vmul.f32 1.0, %v3180
        %v3182 = vrcp.pop %v3169
        %v3183 = vmul.f32 1.0, %v3182
        %v3184 = vrcp.pop %v3170
        %v3185 = vmul.f32 1.0, %v3184
        %v3186 = vrcp.pop %v3171
        %v3187 = vmul.f32 1.0, %v3186
        %v3188 = vmul.f32 %v3173, 1.0614054
        %v3189 = vmul.f32 %v3175, 1.0614054
        %v3190 = vmul.f32 %v3177, 1.0614054
        %v3191 = vmul.f32 %v3179, 1.0614054
        %v3192 = vmul.f32 %v3181, 1.0614054
        %v3193 = vmul.f32 %v3183, 1.0614054
        %v3194 = vmul.f32 %v3185, 1.0614054
        %v3195 = vmul.f32 %v3187, 1.0614054
        %v3196 = vadd.f32 %v3188, -1.4531521
        %v3197 = vadd.f32 %v3189, -1.4531521
        %v3198 = vadd.f32 %v3190, -1.4531521
        %v3199 = vadd.f32 %v3191, -1.4531521
        %v3200 = vadd.f32 %v3192, -1.4531521
        %v3201 = vadd.f32 %v3193, -1.4531521
        %v3202 = vadd.f32 %v3194, -1.4531521
        %v3203 = vadd.f32 %v3195, -1.4531521
        %v3204 = vmul.f32 %v3196, %v3173
        %v3205 = vmul.f32 %v3197, %v3175
        %v3206 = vmul.f32 %v3198, %v3177
        %v3207 = vmul.f32 %v3199, %v3179
        %v3208 = vmul.f32 %v3200, %v3181
        %v3209 = vmul.f32 %v3201, %v3183
        %v3210 = vmul.f32 %v3202, %v3185
        %v3211 = vmul.f32 %v3203, %v3187
        %v3212 = vadd.f32 %v3204, 1.4214138
        %v3213 = vadd.f32 %v3205, 1.4214138
        %v3214 = vadd.f32 %v3206, 1.4214138
        %v3215 = vadd.f32 %v3207, 1.4214138
        %v3216 = vadd.f32 %v3208, 1.4214138
        %v3217 = vadd.f32 %v3209, 1.4214138
        %v3218 = vadd.f32 %v3210, 1.4214138
        %v3219 = vadd.f32 %v3211, 1.4214138
        %v3220 = vmul.f32 %v3212, %v3173
        %v3221 = vmul.f32 %v3213, %v3175
        %v3222 = vmul.f32 %v3214, %v3177
        %v3223 = vmul.f32 %v3215, %v3179
        %v3224 = vmul.f32 %v3216, %v3181
        %v3225 = vmul.f32 %v3217, %v3183
        %v3226 = vmul.f32 %v3218, %v3185
        %v3227 = vmul.f32 %v3219, %v3187
        %v3228 = vadd.f32 %v3220, -0.28449672
        %v3229 = vadd.f32 %v3221, -0.28449672
        %v3230 = vadd.f32 %v3222, -0.28449672
        %v3231 = vadd.f32 %v3223, -0.28449672
        %v3232 = vadd.f32 %v3224, -0.28449672
        %v3233 = vadd.f32 %v3225, -0.28449672
        %v3234 = vadd.f32 %v3226, -0.28449672
        %v3235 = vadd.f32 %v3227, -0.28449672
        %v3236 = vmul.f32 %v3228, %v3173
        %v3237 = vmul.f32 %v3229, %v3175
        %v3238 = vmul.f32 %v3230, %v3177
        %v3239 = vmul.f32 %v3231, %v3179
        %v3240 = vmul.f32 %v3232, %v3181
        %v3241 = vmul.f32 %v3233, %v3183
        %v3242 = vmul.f32 %v3234, %v3185
        %v3243 = vmul.f32 %v3235, %v3187
        %v3244 = vadd.f32 %v3236, 0.2548296
        %v3245 = vadd.f32 %v3237, 0.2548296
        %v3246 = vadd.f32 %v3238, 0.2548296
        %v3247 = vadd.f32 %v3239, 0.2548296
        %v3248 = vadd.f32 %v3240, 0.2548296
        %v3249 = vadd.f32 %v3241, 0.2548296
        %v3250 = vadd.f32 %v3242, 0.2548296
        %v3251 = vadd.f32 %v3243, 0.2548296
        %v3252 = vmul.f32 %v3244, %v3173
        %v3253 = vmul.f32 %v3245, %v3175
        %v3254 = vmul.f32 %v3246, %v3177
        %v3255 = vmul.f32 %v3247, %v3179
        %v3256 = vmul.f32 %v3248, %v3181
        %v3257 = vmul.f32 %v3249, %v3183
        %v3258 = vmul.f32 %v3250, %v3185
        %v3259 = vmul.f32 %v3251, %v3187
        %v3260 = vsub.f32 0.0, %v3148
        %v3261 = vsub.f32 0.0, %v3149
        %v3262 = vsub.f32 0.0, %v3150
        %v3263 = vsub.f32 0.0, %v3151
        %v3264 = vsub.f32 0.0, %v3152
        %v3265 = vsub.f32 0.0, %v3153
        %v3266 = vsub.f32 0.0, %v3154
        %v3267 = vsub.f32 0.0, %v3155
        %v3268 = vmul.f32 %v3260, %v3148
        %v3269 = vmul.f32 %v3261, %v3149
        %v3270 = vmul.f32 %v3262, %v3150
        %v3271 = vmul.f32 %v3263, %v3151
        %v3272 = vmul.f32 %v3264, %v3152
        %v3273 = vmul.f32 %v3265, %v3153
        %v3274 = vmul.f32 %v3266, %v3154
        %v3275 = vmul.f32 %v3267, %v3155
        %v3276 = vmul.f32 %v3268, 1.442695
        %v3277 = vpow.pop %v3276
        %v3278 = vmul.f32 %v3269, 1.442695
        %v3279 = vpow.pop %v3278
        %v3280 = vmul.f32 %v3270, 1.442695
        %v3281 = vpow.pop %v3280
        %v3282 = vmul.f32 %v3271, 1.442695
        %v3283 = vpow.pop %v3282
        %v3284 = vmul.f32 %v3272, 1.442695
        %v3285 = vpow.pop %v3284
        %v3286 = vmul.f32 %v3273, 1.442695
        %v3287 = vpow.pop %v3286
        %v3288 = vmul.f32 %v3274, 1.442695
        %v3289 = vpow.pop %v3288
        %v3290 = vmul.f32 %v3275, 1.442695
        %v3291 = vpow.pop %v3290
        %v3292 = vmul.f32 %v3252, %v3277
        %v3293 = vmul.f32 %v3253, %v3279
        %v3294 = vmul.f32 %v3254, %v3281
        %v3295 = vmul.f32 %v3255, %v3283
        %v3296 = vmul.f32 %v3256, %v3285
        %v3297 = vmul.f32 %v3257, %v3287
        %v3298 = vmul.f32 %v3258, %v3289
        %v3299 = vmul.f32 %v3259, %v3291
        %v3300 = vsub.f32 1.0, %v3292
        %v3301 = vsub.f32 1.0, %v3293
        %v3302 = vsub.f32 1.0, %v3294
        %v3303 = vsub.f32 1.0, %v3295
        %v3304 = vsub.f32 1.0, %v3296
        %v3305 = vsub.f32 1.0, %v3297
        %v3306 = vsub.f32 1.0, %v3298
        %v3307 = vsub.f32 1.0, %v3299
        %v3308 = vmul.f32 %v3140, %v3300
        %v3309 = vmul.f32 %v3141, %v3301
        %v3310 = vmul.f32 %v3142, %v3302
        %v3311 = vmul.f32 %v3143, %v3303
        %v3312 = vmul.f32 %v3144, %v3304
        %v3313 = vmul.f32 %v3145, %v3305
        %v3314 = vmul.f32 %v3146, %v3306
        %v3315 = vmul.f32 %v3147, %v3307
        %v3316 = vadd.f32 %v3308, 1.0
        %v3317 = vadd.f32 %v3309, 1.0
        %v3318 = vadd.f32 %v3310, 1.0
        %v3319 = vadd.f32 %v3311, 1.0
        %v3320 = vadd.f32 %v3312, 1.0
        %v3321 = vadd.f32 %v3313, 1.0
        %v3322 = vadd.f32 %v3314, 1.0
        %v3323 = vadd.f32 %v3315, 1.0
        %v3324 = vmul.f32 %v3116, %v3316
        %v3325 = vmul.f32 %v3117, %v3317
        %v3326 = vmul.f32 %v3118, %v3318
        %v3327 = vmul.f32 %v3119, %v3319
        %v3328 = vmul.f32 %v3120, %v3320
        %v3329 = vmul.f32 %v3121, %v3321
        %v3330 = vmul.f32 %v3122, %v3322
        %v3331 = vmul.f32 %v3123, %v3323
        %v3332 = vpack.c.bf16 %v3325, %v3324
        %v3333 = vpack.c.bf16 %v3327, %v3326
        %v3334 = vpack.c.bf16 %v3329, %v3328
        %v3335 = vpack.c.bf16 %v3331, %v3330
        %v3336 = vld [vmem:[%s13] sm:$0xf]
        %v3337 = vld [vmem:[%s13 + $0x4] sm:$0xf]
        %v3338 = vld [vmem:[%s13 + $0x8] sm:$0xf]
        %v3339 = vld [vmem:[%s13 + $0xc] sm:$0xf]
        %v3340 = vld [vmem:[%s13 + $0x10] sm:$0xf]
        %v3341 = vld [vmem:[%s13 + $0x14] sm:$0xf]
        %v3342 = vld [vmem:[%s13 + $0x18] sm:$0xf]
        %v3343 = vld [vmem:[%s13 + $0x1c] sm:$0xf]
        %v3344 = vld [vmem:[%s13 + $0x20] sm:$0xf]
        %v3345 = vld [vmem:[%s13 + $0x24] sm:$0xf]
        %v3346 = vld [vmem:[%s13 + $0x28] sm:$0xf]
        %v3347 = vld [vmem:[%s13 + $0x2c] sm:$0xf]
        %v3348 = vld [vmem:[%s13 + $0x30] sm:$0xf]
        %v3349 = vld [vmem:[%s13 + $0x34] sm:$0xf]
        %v3350 = vld [vmem:[%s13 + $0x38] sm:$0xf]
        %v3351 = vld [vmem:[%s13 + $0x3c] sm:$0xf]
        %v3352 = vlaneseq
        %v3353 = vshrl.u32 %v3352, 7
        %v3354 = vsub.s32 5, %v3353
        %v3355 = vrot.slane %v1430, %v3354
        %v3372 = vunpack.c.l.b16 %v3336
        %v3373 = vunpack.c.l.b16 %v3337
        %v3374 = vunpack.c.l.b16 %v3338
        %v3375 = vunpack.c.l.b16 %v3339
        %v3376 = vunpack.c.l.b16 %v3340
        %v3377 = vunpack.c.l.b16 %v3341
        %v3378 = vunpack.c.l.b16 %v3342
        %v3379 = vunpack.c.l.b16 %v3343
        %v3380 = vunpack.c.l.b16 %v3344
        %v3381 = vunpack.c.l.b16 %v3345
        %v3382 = vunpack.c.l.b16 %v3346
        %v3383 = vunpack.c.l.b16 %v3347
        %v3384 = vunpack.c.l.b16 %v3348
        %v3385 = vunpack.c.l.b16 %v3349
        %v3386 = vunpack.c.l.b16 %v3350
        %v3387 = vunpack.c.l.b16 %v3351
        %v3388 = vpack.c.b16 %v3373, %v3372
        %v3389 = vpack.c.b16 %v3375, %v3374
        %v3390 = vpack.c.b16 %v3377, %v3376
        %v3391 = vpack.c.b16 %v3379, %v3378
        %v3392 = vpack.c.b16 %v3381, %v3380
        %v3393 = vpack.c.b16 %v3383, %v3382
        %v3394 = vpack.c.b16 %v3385, %v3384
        %v3395 = vpack.c.b16 %v3387, %v3386
        %3404 = vmatprep.subr.bf16.mxu0 0
        %3405 = vmatpush1.bf16.msra.mxu0 %v3388
        %3406 = vmatprep.subr.bf16.mxu0 0
        %3407 = vmatpush1.bf16.msra.mxu0 %v3389
        %3408 = vmatprep.subr.bf16.mxu0 0
        %3409 = vmatpush1.bf16.msra.mxu0 %v3390
        %3410 = vmatprep.subr.bf16.mxu0 0
        %3411 = vmatpush1.bf16.msra.mxu0 %v3391
        %3412 = vmatprep.subr.bf16.mxu0 0
        %3413 = vmatpush1.bf16.msra.mxu0 %v3392
        %3414 = vmatprep.subr.bf16.mxu0 0
        %3415 = vmatpush1.bf16.msra.mxu0 %v3393
        %3416 = vmatprep.subr.bf16.mxu0 0
        %3417 = vmatpush1.bf16.msra.mxu0 %v3394
        %3418 = vmatprep.subr.bf16.mxu0 0
        %3419 = vmatpush1.bf16.msra.mxu0 %v3395
        %3420 = vmatprep.subr.bf16.mxu0 0
        %3421 = vmatpush1.bf16.msra.mxu0 0
        %3422 = vmatprep.subr.bf16.mxu0 0
        %3423 = vmatpush1.bf16.msra.mxu0 0
        %3424 = vmatprep.subr.bf16.mxu0 0
        %3425 = vmatpush1.bf16.msra.mxu0 0
        %3426 = vmatprep.subr.bf16.mxu0 0
        %3427 = vmatpush1.bf16.msra.mxu0 0
        %3428 = vmatprep.subr.bf16.mxu0 0
        %3429 = vmatpush1.bf16.msra.mxu0 0
        %3430 = vmatprep.subr.bf16.mxu0 0
        %3431 = vmatpush1.bf16.msra.mxu0 0
        %3432 = vmatprep.subr.bf16.mxu0 0
        %3433 = vmatpush1.bf16.msra.mxu0 0
        %3434 = vmatprep.subr.bf16.mxu0 0
        %3435 = vmatpush1.bf16.msra.mxu0 0
        %3436 = vmatprep.mubr.bf16.mxu0 0
        %3437 = vmatmul.mubr.bf16.gmra.mrb[0].mxu0 %v3332
        %v3438 = vpop.f32.mrb[0].mxu0
        %v3439 = vadd.f32 %v3355, %v3438
        %v3440 = vpop.f32.mrb[0].mxu0
        %v3441 = vpop.f32.mrb[0].mxu0
        %v3442 = vadd.f32 %v3355, %v3441
        %v3443 = vpop.f32.mrb[0].mxu0
        %3444 = vmatprep.mubr.bf16.mxu0 0
        %3445 = vmatmul.mubr.bf16.gmra.mrb[0].mxu0 %v3333
        %v3446 = vpop.f32.mrb[0].mxu0
        %v3447 = vadd.f32 %v3355, %v3446
        %v3448 = vpop.f32.mrb[0].mxu0
        %v3449 = vpop.f32.mrb[0].mxu0
        %v3450 = vadd.f32 %v3355, %v3449
        %v3451 = vpop.f32.mrb[0].mxu0
        %3452 = vmatprep.mubr.bf16.mxu0 0
        %3453 = vmatmul.mubr.bf16.gmra.mrb[0].mxu0 %v3334
        %v3454 = vpop.f32.mrb[0].mxu0
        %v3455 = vadd.f32 %v3355, %v3454
        %v3456 = vpop.f32.mrb[0].mxu0
        %v3457 = vpop.f32.mrb[0].mxu0
        %v3458 = vadd.f32 %v3355, %v3457
        %v3459 = vpop.f32.mrb[0].mxu0
        %3460 = vmatprep.mubr.bf16.mxu0 0
        %3461 = vmatmul.mubr.bf16.gmra.mrb[0].mxu0 %v3335
        %v3462 = vpop.f32.mrb[0].mxu0
        %v3463 = vadd.f32 %v3355, %v3462
        %v3464 = vpop.f32.mrb[0].mxu0
        %v3465 = vpop.f32.mrb[0].mxu0
        %v3466 = vadd.f32 %v3355, %v3465
        %v3467 = vpop.f32.mrb[0].mxu0
        %3468 = vdwg.mxu0
        %v3469 = vsel %vm1300, %v3439, 0.0
        %3470 = vadd.xlane.f32.xlu0 %v3469
        %v3471 = vpop.xlane.xlu0 %3470
        %v3472 = vsel %vm1300, %v3442, 0.0
        %3473 = vadd.xlane.f32.xlu0 %v3472
        %v3474 = vpop.xlane.xlu0 %3473
        %v3475 = vsel %vm1300, %v3447, 0.0
        %3476 = vadd.xlane.f32.xlu0 %v3475
        %v3477 = vpop.xlane.xlu0 %3476
        %v3478 = vsel %vm1300, %v3450, 0.0
        %3479 = vadd.xlane.f32.xlu0 %v3478
        %v3480 = vpop.xlane.xlu0 %3479
        %v3481 = vsel %vm1300, %v3455, 0.0
        %3482 = vadd.xlane.f32.xlu0 %v3481
        %v3483 = vpop.xlane.xlu0 %3482
        %v3484 = vsel %vm1300, %v3458, 0.0
        %3485 = vadd.xlane.f32.xlu0 %v3484
        %v3486 = vpop.xlane.xlu0 %3485
        %v3487 = vsel %vm1300, %v3463, 0.0
        %3488 = vadd.xlane.f32.xlu0 %v3487
        %v3489 = vpop.xlane.xlu0 %3488
        %v3490 = vsel %vm1300, %v3466, 0.0
        %3491 = vadd.xlane.f32.xlu0 %v3490
        %v3492 = vpop.xlane.xlu0 %3491
        %v3493 = vmul.f32 %v3471, %v1325
        %v3494 = vmul.f32 %v3474, %v1325
        %v3495 = vmul.f32 %v3477, %v1325
        %v3496 = vmul.f32 %v3480, %v1325
        %v3497 = vmul.f32 %v3483, %v1325
        %v3498 = vmul.f32 %v3486, %v1325
        %v3499 = vmul.f32 %v3489, %v1325
        %v3500 = vmul.f32 %v3492, %v1325
        %v3501 = vsub.f32 %v3439, %v3493
        %v3502 = vsub.f32 %v3442, %v3494
        %v3503 = vsub.f32 %v3447, %v3495
        %v3504 = vsub.f32 %v3450, %v3496
        %v3505 = vsub.f32 %v3455, %v3497
        %v3506 = vsub.f32 %v3458, %v3498
        %v3507 = vsub.f32 %v3463, %v3499
        %v3508 = vsub.f32 %v3466, %v3500
        %v3509 = vmul.f32 %v3501, %v3501
        %v3510 = vmul.f32 %v3502, %v3502
        %v3511 = vmul.f32 %v3503, %v3503
        %v3512 = vmul.f32 %v3504, %v3504
        %v3513 = vmul.f32 %v3505, %v3505
        %v3514 = vmul.f32 %v3506, %v3506
        %v3515 = vmul.f32 %v3507, %v3507
        %v3516 = vmul.f32 %v3508, %v3508
        %v3517 = vsel %vm1300, %v3509, 0.0
        %3518 = vadd.xlane.f32.xlu0 %v3517
        %v3519 = vpop.xlane.xlu0 %3518
        %v3520 = vsel %vm1300, %v3510, 0.0
        %3521 = vadd.xlane.f32.xlu0 %v3520
        %v3522 = vpop.xlane.xlu0 %3521
        %v3523 = vsel %vm1300, %v3511, 0.0
        %3524 = vadd.xlane.f32.xlu0 %v3523
        %v3525 = vpop.xlane.xlu0 %3524
        %v3526 = vsel %vm1300, %v3512, 0.0
        %3527 = vadd.xlane.f32.xlu0 %v3526
        %v3528 = vpop.xlane.xlu0 %3527
        %v3529 = vsel %vm1300, %v3513, 0.0
        %3530 = vadd.xlane.f32.xlu0 %v3529
        %v3531 = vpop.xlane.xlu0 %3530
        %v3532 = vsel %vm1300, %v3514, 0.0
        %3533 = vadd.xlane.f32.xlu0 %v3532
        %v3534 = vpop.xlane.xlu0 %3533
        %v3535 = vsel %vm1300, %v3515, 0.0
        %3536 = vadd.xlane.f32.xlu0 %v3535
        %v3537 = vpop.xlane.xlu0 %3536
        %v3538 = vsel %vm1300, %v3516, 0.0
        %3539 = vadd.xlane.f32.xlu0 %v3538
        %v3540 = vpop.xlane.xlu0 %3539
        %v3541 = vmul.f32 %v3519, %v1325
        %v3542 = vmul.f32 %v3522, %v1325
        %v3543 = vmul.f32 %v3525, %v1325
        %v3544 = vmul.f32 %v3528, %v1325
        %v3545 = vmul.f32 %v3531, %v1325
        %v3546 = vmul.f32 %v3534, %v1325
        %v3547 = vmul.f32 %v3537, %v1325
        %v3548 = vmul.f32 %v3540, %v1325
        %v3549 = vadd.f32 %v3541, 1e-05
        %v3550 = vadd.f32 %v3542, 1e-05
        %v3551 = vadd.f32 %v3543, 1e-05
        %v3552 = vadd.f32 %v3544, 1e-05
        %v3553 = vadd.f32 %v3545, 1e-05
        %v3554 = vadd.f32 %v3546, 1e-05
        %v3555 = vadd.f32 %v3547, 1e-05
        %v3556 = vadd.f32 %v3548, 1e-05
        %v3557 = vrsqrt.pop %v3549
        %v3558 = vrsqrt.pop %v3550
        %v3559 = vrsqrt.pop %v3551
        %v3560 = vrsqrt.pop %v3552
        %v3561 = vrsqrt.pop %v3553
        %v3562 = vrsqrt.pop %v3554
        %v3563 = vrsqrt.pop %v3555
        %v3564 = vrsqrt.pop %v3556
        %v3565 = vmul.f32 %v3501, %v3557
        %v3566 = vmul.f32 %v3502, %v3558
        %v3567 = vmul.f32 %v3503, %v3559
        %v3568 = vmul.f32 %v3504, %v3560
        %v3569 = vmul.f32 %v3505, %v3561
        %v3570 = vmul.f32 %v3506, %v3562
        %v3571 = vmul.f32 %v3507, %v3563
        %v3572 = vmul.f32 %v3508, %v3564
        %v3573 = vlaneseq
        %v3574 = vshrl.u32 %v3573, 7
        %v3575 = vsub.s32 6, %v3574
        %v3576 = vrot.slane %v1430, %v3575
        %v3577 = vmul.f32 %v3565, %v3576
        %v3578 = vmul.f32 %v3566, %v3576
        %v3579 = vmul.f32 %v3567, %v3576
        %v3580 = vmul.f32 %v3568, %v3576
        %v3581 = vmul.f32 %v3569, %v3576
        %v3582 = vmul.f32 %v3570, %v3576
        %v3583 = vmul.f32 %v3571, %v3576
        %v3584 = vmul.f32 %v3572, %v3576
        %v3585 = vlaneseq
        %v3586 = vshrl.u32 %v3585, 7
        %v3587 = vsub.s32 7, %v3586
        %v3588 = vrot.slane %v1430, %v3587
        %v3589 = vadd.f32 %v3577, %v3588
        %v3590 = vadd.f32 %v3578, %v3588
        %v3591 = vadd.f32 %v3579, %v3588
        %v3592 = vadd.f32 %v3580, %v3588
        %v3593 = vadd.f32 %v3581, %v3588
        %v3594 = vadd.f32 %v3582, %v3588
        %v3595 = vadd.f32 %v3583, %v3588
        %v3596 = vadd.f32 %v3584, %v3588
        %v3597 = vadd.f32 %v3004, %v3589
        %v3598 = vadd.f32 %v3005, %v3590
        %v3599 = vadd.f32 %v3006, %v3591
        %v3600 = vadd.f32 %v3007, %v3592
        %v3601 = vadd.f32 %v3008, %v3593
        %v3602 = vadd.f32 %v3009, %v3594
        %v3603 = vadd.f32 %v3010, %v3595
        %v3604 = vadd.f32 %v3011, %v3596
        %v3605 = vld [vmem:[%s31] sm:$0xff]
        %v3606 = vpack.c.bf16 %v3598, %v3597
        %v3607 = vpack.c.bf16 %v3600, %v3599
        %v3608 = vpack.c.bf16 %v3602, %v3601
        %v3609 = vpack.c.bf16 %v3604, %v3603
        %v3610 = vld [vmem:[%s23] sm:$0xf]
        %v3611 = vld [vmem:[%s23 + $0x4] sm:$0xf]
        %v3612 = vld [vmem:[%s23 + $0x8] sm:$0xf]
        %v3613 = vld [vmem:[%s23 + $0xc] sm:$0xf]
        %v3614 = vlaneseq
        %v3615 = vshrl.u32 %v3614, 7
        %v3616 = vsub.s32 0, %v3615
        %v3617 = vrot.slane %v3605, %v3616
        %v3622 = vunpack.c.l.b16 %v3610
        %v3623 = vunpack.c.l.b16 %v3611
        %v3624 = vunpack.c.l.b16 %v3612
        %v3625 = vunpack.c.l.b16 %v3613
        %v3626 = vpack.c.b16 %v3623, %v3622
        %v3627 = vpack.c.b16 %v3625, %v3624
        %v3631 = vsel %vm1300, %v3606, 0
        %v3634 = vsel %vm1300, %v3607, 0
        %v3637 = vsel %vm1300, %v3608, 0
        %v3640 = vsel %vm1300, %v3609, 0
        %3642 = vmatprep.subr.bf16.mxu0 0
        %3643 = vmatpush1.bf16.msra.mxu0 %v3626
        %3644 = vmatprep.subr.bf16.mxu0 0
        %3645 = vmatpush1.bf16.msra.mxu0 %v3627
        %3646 = vmatprep.subr.bf16.mxu0 0
        %3647 = vmatpush1.bf16.msra.mxu0 0
        %3648 = vmatprep.subr.bf16.mxu0 0
        %3649 = vmatpush1.bf16.msra.mxu0 0
        %3650 = vmatprep.subr.bf16.mxu0 0
        %3651 = vmatpush1.bf16.msra.mxu0 0
        %3652 = vmatprep.subr.bf16.mxu0 0
        %3653 = vmatpush1.bf16.msra.mxu0 0
        %3654 = vmatprep.subr.bf16.mxu0 0
        %3655 = vmatpush1.bf16.msra.mxu0 0
        %3656 = vmatprep.subr.bf16.mxu0 0
        %3657 = vmatpush1.bf16.msra.mxu0 0
        %3658 = vmatprep.subr.bf16.mxu0 0
        %3659 = vmatpush1.bf16.msra.mxu0 0
        %3660 = vmatprep.subr.bf16.mxu0 0
        %3661 = vmatpush1.bf16.msra.mxu0 0
        %3662 = vmatprep.subr.bf16.mxu0 0
        %3663 = vmatpush1.bf16.msra.mxu0 0
        %3664 = vmatprep.subr.bf16.mxu0 0
        %3665 = vmatpush1.bf16.msra.mxu0 0
        %3666 = vmatprep.subr.bf16.mxu0 0
        %3667 = vmatpush1.bf16.msra.mxu0 0
        %3668 = vmatprep.subr.bf16.mxu0 0
        %3669 = vmatpush1.bf16.msra.mxu0 0
        %3670 = vmatprep.subr.bf16.mxu0 0
        %3671 = vmatpush1.bf16.msra.mxu0 0
        %3672 = vmatprep.subr.bf16.mxu0 0
        %3673 = vmatpush1.bf16.msra.mxu0 0
        %3674 = vmatprep.mubr.bf16.mxu0 0
        %3675 = vmatmul.mubr.bf16.gmra.mrb[0].mxu0 %v3631
        %v3676 = vpop.f32.mrb[0].mxu0
        %v3677 = vadd.f32 %v3617, %v3676
        %v3678 = vpop.f32.mrb[0].mxu0
        %v3679 = vpop.f32.mrb[0].mxu0
        %v3680 = vadd.f32 %v3617, %v3679
        %v3681 = vpop.f32.mrb[0].mxu0
        %3682 = vmatprep.mubr.bf16.mxu0 0
        %3683 = vmatmul.mubr.bf16.gmra.mrb[0].mxu0 %v3634
        %v3684 = vpop.f32.mrb[0].mxu0
        %v3685 = vadd.f32 %v3617, %v3684
        %v3686 = vpop.f32.mrb[0].mxu0
        %v3687 = vpop.f32.mrb[0].mxu0
        %v3688 = vadd.f32 %v3617, %v3687
        %v3689 = vpop.f32.mrb[0].mxu0
        %3690 = vmatprep.mubr.bf16.mxu0 0
        %3691 = vmatmul.mubr.bf16.gmra.mrb[0].mxu0 %v3637
        %v3692 = vpop.f32.mrb[0].mxu0
        %v3693 = vadd.f32 %v3617, %v3692
        %v3694 = vpop.f32.mrb[0].mxu0
        %v3695 = vpop.f32.mrb[0].mxu0
        %v3696 = vadd.f32 %v3617, %v3695
        %v3697 = vpop.f32.mrb[0].mxu0
        %3698 = vmatprep.mubr.bf16.mxu0 0
        %3699 = vmatmul.mubr.bf16.gmra.mrb[0].mxu0 %v3640
        %v3700 = vpop.f32.mrb[0].mxu0
        %v3701 = vadd.f32 %v3617, %v3700
        %v3702 = vpop.f32.mrb[0].mxu0
        %v3703 = vpop.f32.mrb[0].mxu0
        %v3704 = vadd.f32 %v3617, %v3703
        %v3705 = vpop.f32.mrb[0].mxu0
        %3706 = vdwg.mxu0
        %s3707 = scalar_lea.vmem %s23, 16
        %v3708 = vld [vmem:[%s3707] sm:$0xf]
        %v3709 = vld [vmem:[%s3707 + $0x4] sm:$0xf]
        %v3710 = vld [vmem:[%s3707 + $0x8] sm:$0xf]
        %v3711 = vld [vmem:[%s3707 + $0xc] sm:$0xf]
        %v3716 = vunpack.c.l.b16 %v3708
        %v3717 = vunpack.c.l.b16 %v3709
        %v3718 = vunpack.c.l.b16 %v3710
        %v3719 = vunpack.c.l.b16 %v3711
        %v3720 = vpack.c.b16 %v3717, %v3716
        %v3721 = vpack.c.b16 %v3719, %v3718
        %3724 = vmatprep.subr.bf16.mxu0 0
        %3725 = vmatpush1.bf16.msra.mxu0 %v3720
        %3726 = vmatprep.subr.bf16.mxu0 0
        %3727 = vmatpush1.bf16.msra.mxu0 %v3721
        %3728 = vmatprep.subr.bf16.mxu0 0
        %3729 = vmatpush1.bf16.msra.mxu0 0
        %3730 = vmatprep.subr.bf16.mxu0 0
        %3731 = vmatpush1.bf16.msra.mxu0 0
        %3732 = vmatprep.subr.bf16.mxu0 0
        %3733 = vmatpush1.bf16.msra.mxu0 0
        %3734 = vmatprep.subr.bf16.mxu0 0
        %3735 = vmatpush1.bf16.msra.mxu0 0
        %3736 = vmatprep.subr.bf16.mxu0 0
        %3737 = vmatpush1.bf16.msra.mxu0 0
        %3738 = vmatprep.subr.bf16.mxu0 0
        %3739 = vmatpush1.bf16.msra.mxu0 0
        %3740 = vmatprep.subr.bf16.mxu0 0
        %3741 = vmatpush1.bf16.msra.mxu0 0
        %3742 = vmatprep.subr.bf16.mxu0 0
        %3743 = vmatpush1.bf16.msra.mxu0 0
        %3744 = vmatprep.subr.bf16.mxu0 0
        %3745 = vmatpush1.bf16.msra.mxu0 0
        %3746 = vmatprep.subr.bf16.mxu0 0
        %3747 = vmatpush1.bf16.msra.mxu0 0
        %3748 = vmatprep.subr.bf16.mxu0 0
        %3749 = vmatpush1.bf16.msra.mxu0 0
        %3750 = vmatprep.subr.bf16.mxu0 0
        %3751 = vmatpush1.bf16.msra.mxu0 0
        %3752 = vmatprep.subr.bf16.mxu0 0
        %3753 = vmatpush1.bf16.msra.mxu0 0
        %3754 = vmatprep.subr.bf16.mxu0 0
        %3755 = vmatpush1.bf16.msra.mxu0 0
        %3756 = vmatprep.mubr.bf16.mxu0 0
        %3757 = vmatmul.mubr.bf16.gmra.mrb[0].mxu0 %v3631
        %v3758 = vpop.f32.mrb[0].mxu0
        %v3759 = vadd.f32 0.0, %v3758
        %v3760 = vpop.f32.mrb[0].mxu0
        %v3761 = vpop.f32.mrb[0].mxu0
        %v3762 = vadd.f32 0.0, %v3761
        %v3763 = vpop.f32.mrb[0].mxu0
        %3764 = vmatprep.mubr.bf16.mxu0 0
        %3765 = vmatmul.mubr.bf16.gmra.mrb[0].mxu0 %v3634
        %v3766 = vpop.f32.mrb[0].mxu0
        %v3767 = vadd.f32 0.0, %v3766
        %v3768 = vpop.f32.mrb[0].mxu0
        %v3769 = vpop.f32.mrb[0].mxu0
        %v3770 = vadd.f32 0.0, %v3769
        %v3771 = vpop.f32.mrb[0].mxu0
        %3772 = vmatprep.mubr.bf16.mxu0 0
        %3773 = vmatmul.mubr.bf16.gmra.mrb[0].mxu0 %v3637
        %v3774 = vpop.f32.mrb[0].mxu0
        %v3775 = vadd.f32 0.0, %v3774
        %v3776 = vpop.f32.mrb[0].mxu0
        %v3777 = vpop.f32.mrb[0].mxu0
        %v3778 = vadd.f32 0.0, %v3777
        %v3779 = vpop.f32.mrb[0].mxu0
        %3780 = vmatprep.mubr.bf16.mxu0 0
        %3781 = vmatmul.mubr.bf16.gmra.mrb[0].mxu0 %v3640
        %v3782 = vpop.f32.mrb[0].mxu0
        %v3783 = vadd.f32 0.0, %v3782
        %v3784 = vpop.f32.mrb[0].mxu0
        %v3785 = vpop.f32.mrb[0].mxu0
        %v3786 = vadd.f32 0.0, %v3785
        %v3787 = vpop.f32.mrb[0].mxu0
        %3788 = vdwg.mxu0
        %s3789 = scalar_lea.vmem %s23, 32
        %v3790 = vld [vmem:[%s3789] sm:$0xf]
        %v3791 = vld [vmem:[%s3789 + $0x4] sm:$0xf]
        %v3792 = vld [vmem:[%s3789 + $0x8] sm:$0xf]
        %v3793 = vld [vmem:[%s3789 + $0xc] sm:$0xf]
        %v3794 = vlaneseq
        %v3795 = vshrl.u32 %v3794, 7
        %v3796 = vsub.s32 1, %v3795
        %v3797 = vrot.slane %v3605, %v3796
        %v3802 = vunpack.c.l.b16 %v3790
        %v3803 = vunpack.c.l.b16 %v3791
        %v3804 = vunpack.c.l.b16 %v3792
        %v3805 = vunpack.c.l.b16 %v3793
        %v3806 = vpack.c.b16 %v3803, %v3802
        %v3807 = vpack.c.b16 %v3805, %v3804
        %3810 = vmatprep.subr.bf16.mxu0 0
        %3811 = vmatpush1.bf16.msra.mxu0 %v3806
        %3812 = vmatprep.subr.bf16.mxu0 0
        %3813 = vmatpush1.bf16.msra.mxu0 %v3807
        %3814 = vmatprep.subr.bf16.mxu0 0
        %3815 = vmatpush1.bf16.msra.mxu0 0
        %3816 = vmatprep.subr.bf16.mxu0 0
        %3817 = vmatpush1.bf16.msra.mxu0 0
        %3818 = vmatprep.subr.bf16.mxu0 0
        %3819 = vmatpush1.bf16.msra.mxu0 0
        %3820 = vmatprep.subr.bf16.mxu0 0
        %3821 = vmatpush1.bf16.msra.mxu0 0
        %3822 = vmatprep.subr.bf16.mxu0 0
        %3823 = vmatpush1.bf16.msra.mxu0 0
        %3824 = vmatprep.subr.bf16.mxu0 0
        %3825 = vmatpush1.bf16.msra.mxu0 0
        %3826 = vmatprep.subr.bf16.mxu0 0
        %3827 = vmatpush1.bf16.msra.mxu0 0
        %3828 = vmatprep.subr.bf16.mxu0 0
        %3829 = vmatpush1.bf16.msra.mxu0 0
        %3830 = vmatprep.subr.bf16.mxu0 0
        %3831 = vmatpush1.bf16.msra.mxu0 0
        %3832 = vmatprep.subr.bf16.mxu0 0
        %3833 = vmatpush1.bf16.msra.mxu0 0
        %3834 = vmatprep.subr.bf16.mxu0 0
        %3835 = vmatpush1.bf16.msra.mxu0 0
        %3836 = vmatprep.subr.bf16.mxu0 0
        %3837 = vmatpush1.bf16.msra.mxu0 0
        %3838 = vmatprep.subr.bf16.mxu0 0
        %3839 = vmatpush1.bf16.msra.mxu0 0
        %3840 = vmatprep.subr.bf16.mxu0 0
        %3841 = vmatpush1.bf16.msra.mxu0 0
        %3842 = vmatprep.mubr.bf16.mxu0 0
        %3843 = vmatmul.mubr.bf16.gmra.mrb[0].mxu0 %v3631
        %v3844 = vpop.f32.mrb[0].mxu0
        %v3845 = vadd.f32 %v3797, %v3844
        %v3846 = vpop.f32.mrb[0].mxu0
        %v3847 = vpop.f32.mrb[0].mxu0
        %v3848 = vadd.f32 %v3797, %v3847
        %v3849 = vpop.f32.mrb[0].mxu0
        %3850 = vmatprep.mubr.bf16.mxu0 0
        %3851 = vmatmul.mubr.bf16.gmra.mrb[0].mxu0 %v3634
        %v3852 = vpop.f32.mrb[0].mxu0
        %v3853 = vadd.f32 %v3797, %v3852
        %v3854 = vpop.f32.mrb[0].mxu0
        %v3855 = vpop.f32.mrb[0].mxu0
        %v3856 = vadd.f32 %v3797, %v3855
        %v3857 = vpop.f32.mrb[0].mxu0
        %3858 = vmatprep.mubr.bf16.mxu0 0
        %3859 = vmatmul.mubr.bf16.gmra.mrb[0].mxu0 %v3637
        %v3860 = vpop.f32.mrb[0].mxu0
        %v3861 = vadd.f32 %v3797, %v3860
        %v3862 = vpop.f32.mrb[0].mxu0
        %v3863 = vpop.f32.mrb[0].mxu0
        %v3864 = vadd.f32 %v3797, %v3863
        %v3865 = vpop.f32.mrb[0].mxu0
        %3866 = vmatprep.mubr.bf16.mxu0 0
        %3867 = vmatmul.mubr.bf16.gmra.mrb[0].mxu0 %v3640
        %v3868 = vpop.f32.mrb[0].mxu0
        %v3869 = vadd.f32 %v3797, %v3868
        %v3870 = vpop.f32.mrb[0].mxu0
        %v3871 = vpop.f32.mrb[0].mxu0
        %v3872 = vadd.f32 %v3797, %v3871
        %v3873 = vpop.f32.mrb[0].mxu0
        %3874 = vdwg.mxu0
        %3883 = vrot.lane.b32.xlu0 %v3677, 112
        %v3884 = vpop.permute.xlu0 %3883
        %3885 = vrot.lane.b32.xlu0 %v3680, 112
        %v3886 = vpop.permute.xlu0 %3885
        %3887 = vrot.lane.b32.xlu0 %v3685, 112
        %v3888 = vpop.permute.xlu0 %3887
        %3889 = vrot.lane.b32.xlu0 %v3688, 112
        %v3890 = vpop.permute.xlu0 %3889
        %3891 = vrot.lane.b32.xlu0 %v3693, 112
        %v3892 = vpop.permute.xlu0 %3891
        %3893 = vrot.lane.b32.xlu0 %v3696, 112
        %v3894 = vpop.permute.xlu0 %3893
        %3895 = vrot.lane.b32.xlu0 %v3701, 112
        %v3896 = vpop.permute.xlu0 %3895
        %3897 = vrot.lane.b32.xlu0 %v3704, 112
        %v3898 = vpop.permute.xlu0 %3897
        %3915 = vrot.lane.b32.xlu0 %v3759, 112
        %v3916 = vpop.permute.xlu0 %3915
        %3917 = vrot.lane.b32.xlu0 %v3762, 112
        %v3918 = vpop.permute.xlu0 %3917
        %3919 = vrot.lane.b32.xlu0 %v3767, 112
        %v3920 = vpop.permute.xlu0 %3919
        %3921 = vrot.lane.b32.xlu0 %v3770, 112
        %v3922 = vpop.permute.xlu0 %3921
        %3923 = vrot.lane.b32.xlu0 %v3775, 112
        %v3924 = vpop.permute.xlu0 %3923
        %3925 = vrot.lane.b32.xlu0 %v3778, 112
        %v3926 = vpop.permute.xlu0 %3925
        %3927 = vrot.lane.b32.xlu0 %v3783, 112
        %v3928 = vpop.permute.xlu0 %3927
        %3929 = vrot.lane.b32.xlu0 %v3786, 112
        %v3930 = vpop.permute.xlu0 %3929
        %3947 = vrot.lane.b32.xlu0 %v3845, 112
        %v3948 = vpop.permute.xlu0 %3947
        %3949 = vrot.lane.b32.xlu0 %v3848, 112
        %v3950 = vpop.permute.xlu0 %3949
        %3951 = vrot.lane.b32.xlu0 %v3853, 112
        %v3952 = vpop.permute.xlu0 %3951
        %3953 = vrot.lane.b32.xlu0 %v3856, 112
        %v3954 = vpop.permute.xlu0 %3953
        %3955 = vrot.lane.b32.xlu0 %v3861, 112
        %v3956 = vpop.permute.xlu0 %3955
        %3957 = vrot.lane.b32.xlu0 %v3864, 112
        %v3958 = vpop.permute.xlu0 %3957
        %3959 = vrot.lane.b32.xlu0 %v3869, 112
        %v3960 = vpop.permute.xlu0 %3959
        %3961 = vrot.lane.b32.xlu0 %v3872, 112
        %v3962 = vpop.permute.xlu0 %3961
        %v3971 = vmul.f32 %v3677, %v3677
        %v3972 = vmul.f32 %v3680, %v3680
        %v3973 = vmul.f32 %v3685, %v3685
        %v3974 = vmul.f32 %v3688, %v3688
        %v3975 = vmul.f32 %v3693, %v3693
        %v3976 = vmul.f32 %v3696, %v3696
        %v3977 = vmul.f32 %v3701, %v3701
        %v3978 = vmul.f32 %v3704, %v3704
        %v3979 = vmul.f32 %v3884, %v3884
        %v3980 = vmul.f32 %v3886, %v3886
        %v3981 = vmul.f32 %v3888, %v3888
        %v3982 = vmul.f32 %v3890, %v3890
        %v3983 = vmul.f32 %v3892, %v3892
        %v3984 = vmul.f32 %v3894, %v3894
        %v3985 = vmul.f32 %v3896, %v3896
        %v3986 = vmul.f32 %v3898, %v3898
        %v3987 = vsel %vm1222, %v3971, 0.0
        %3988 = vadd.xlane.f32.xlu0 %v3987
        %v3989 = vpop.xlane.xlu0 %3988
        %v3990 = vsel %vm1222, %v3972, 0.0
        %3991 = vadd.xlane.f32.xlu0 %v3990
        %v3992 = vpop.xlane.xlu0 %3991
        %v3993 = vsel %vm1222, %v3973, 0.0
        %3994 = vadd.xlane.f32.xlu0 %v3993
        %v3995 = vpop.xlane.xlu0 %3994
        %v3996 = vsel %vm1222, %v3974, 0.0
        %3997 = vadd.xlane.f32.xlu0 %v3996
        %v3998 = vpop.xlane.xlu0 %3997
        %v3999 = vsel %vm1222, %v3975, 0.0
        %4000 = vadd.xlane.f32.xlu0 %v3999
        %v4001 = vpop.xlane.xlu0 %4000
        %v4002 = vsel %vm1222, %v3976, 0.0
        %4003 = vadd.xlane.f32.xlu0 %v4002
        %v4004 = vpop.xlane.xlu0 %4003
        %v4005 = vsel %vm1222, %v3977, 0.0
        %4006 = vadd.xlane.f32.xlu0 %v4005
        %v4007 = vpop.xlane.xlu0 %4006
        %v4008 = vsel %vm1222, %v3978, 0.0
        %4009 = vadd.xlane.f32.xlu0 %v4008
        %v4010 = vpop.xlane.xlu0 %4009
        %v4011 = vsel %vm1222, %v3979, 0.0
        %4012 = vadd.xlane.f32.xlu0 %v4011
        %v4013 = vpop.xlane.xlu0 %4012
        %v4014 = vsel %vm1222, %v3980, 0.0
        %4015 = vadd.xlane.f32.xlu0 %v4014
        %v4016 = vpop.xlane.xlu0 %4015
        %v4017 = vsel %vm1222, %v3981, 0.0
        %4018 = vadd.xlane.f32.xlu0 %v4017
        %v4019 = vpop.xlane.xlu0 %4018
        %v4020 = vsel %vm1222, %v3982, 0.0
        %4021 = vadd.xlane.f32.xlu0 %v4020
        %v4022 = vpop.xlane.xlu0 %4021
        %v4023 = vsel %vm1222, %v3983, 0.0
        %4024 = vadd.xlane.f32.xlu0 %v4023
        %v4025 = vpop.xlane.xlu0 %4024
        %v4026 = vsel %vm1222, %v3984, 0.0
        %4027 = vadd.xlane.f32.xlu0 %v4026
        %v4028 = vpop.xlane.xlu0 %4027
        %v4029 = vsel %vm1222, %v3985, 0.0
        %4030 = vadd.xlane.f32.xlu0 %v4029
        %v4031 = vpop.xlane.xlu0 %4030
        %v4032 = vsel %vm1222, %v3986, 0.0
        %4033 = vadd.xlane.f32.xlu0 %v4032
        %v4034 = vpop.xlane.xlu0 %4033
        %v4035 = vmax.f32 %v3989, 1e-24
        %v4036 = vmax.f32 %v3992, 1e-24
        %v4037 = vmax.f32 %v3995, 1e-24
        %v4038 = vmax.f32 %v3998, 1e-24
        %v4039 = vmax.f32 %v4001, 1e-24
        %v4040 = vmax.f32 %v4004, 1e-24
        %v4041 = vmax.f32 %v4007, 1e-24
        %v4042 = vmax.f32 %v4010, 1e-24
        %v4043 = vmax.f32 %v4013, 1e-24
        %v4044 = vmax.f32 %v4016, 1e-24
        %v4045 = vmax.f32 %v4019, 1e-24
        %v4046 = vmax.f32 %v4022, 1e-24
        %v4047 = vmax.f32 %v4025, 1e-24
        %v4048 = vmax.f32 %v4028, 1e-24
        %v4049 = vmax.f32 %v4031, 1e-24
        %v4050 = vmax.f32 %v4034, 1e-24
        %v4051 = vrsqrt.pop %v4035
        %v4052 = vrsqrt.pop %v4036
        %v4053 = vrsqrt.pop %v4037
        %v4054 = vrsqrt.pop %v4038
        %v4055 = vrsqrt.pop %v4039
        %v4056 = vrsqrt.pop %v4040
        %v4057 = vrsqrt.pop %v4041
        %v4058 = vrsqrt.pop %v4042
        %v4059 = vrsqrt.pop %v4043
        %v4060 = vrsqrt.pop %v4044
        %v4061 = vrsqrt.pop %v4045
        %v4062 = vrsqrt.pop %v4046
        %v4063 = vrsqrt.pop %v4047
        %v4064 = vrsqrt.pop %v4048
        %v4065 = vrsqrt.pop %v4049
        %v4066 = vrsqrt.pop %v4050
        %v4067 = vmul.f32 %v3677, %v4051
        %v4068 = vmul.f32 %v3680, %v4052
        %v4069 = vmul.f32 %v3685, %v4053
        %v4070 = vmul.f32 %v3688, %v4054
        %v4071 = vmul.f32 %v3693, %v4055
        %v4072 = vmul.f32 %v3696, %v4056
        %v4073 = vmul.f32 %v3701, %v4057
        %v4074 = vmul.f32 %v3704, %v4058
        %v4075 = vmul.f32 %v3884, %v4059
        %v4076 = vmul.f32 %v3886, %v4060
        %v4077 = vmul.f32 %v3888, %v4061
        %v4078 = vmul.f32 %v3890, %v4062
        %v4079 = vmul.f32 %v3892, %v4063
        %v4080 = vmul.f32 %v3894, %v4064
        %v4081 = vmul.f32 %v3896, %v4065
        %v4082 = vmul.f32 %v3898, %v4066
        %v4083 = vld [vmem:[%s37] sm:$0xff]
        %v4084 = vld [vmem:[%s37 + $0x8] sm:$0xff]
        %v4085 = vld [vmem:[%s37 + $0x10] sm:$0xff]
        %v4086 = vld [vmem:[%s37 + $0x18] sm:$0xff]
        %v4087 = vld [vmem:[%s37 + $0x20] sm:$0xff]
        %v4088 = vld [vmem:[%s37 + $0x28] sm:$0xff]
        %v4089 = vld [vmem:[%s37 + $0x30] sm:$0xff]
        %v4090 = vld [vmem:[%s37 + $0x38] sm:$0xff]
        %v4091 = vld [vmem:[%s37 + $0x40] sm:$0xff]
        %v4092 = vld [vmem:[%s37 + $0x48] sm:$0xff]
        %v4093 = vld [vmem:[%s37 + $0x50] sm:$0xff]
        %v4094 = vld [vmem:[%s37 + $0x58] sm:$0xff]
        %v4095 = vld [vmem:[%s37 + $0x60] sm:$0xff]
        %v4096 = vld [vmem:[%s37 + $0x68] sm:$0xff]
        %v4097 = vld [vmem:[%s37 + $0x70] sm:$0xff]
        %v4098 = vld [vmem:[%s37 + $0x78] sm:$0xff]
        %4100 = vset.pattern.permute.xlu0 0
        %4101 = vperm.xlu0 %4100, %v4083
        %v4102 = vpop.permute.xlu0 %4101
        %4105 = vset.pattern.permute.xlu0 0
        %4106 = vperm.xlu0 %4105, %v4084
        %v4107 = vpop.permute.xlu0 %4106
        %4110 = vset.pattern.permute.xlu0 0
        %4111 = vperm.xlu0 %4110, %v4085
        %v4112 = vpop.permute.xlu0 %4111
        %4115 = vset.pattern.permute.xlu0 0
        %4116 = vperm.xlu0 %4115, %v4086
        %v4117 = vpop.permute.xlu0 %4116
        %4120 = vset.pattern.permute.xlu0 0
        %4121 = vperm.xlu0 %4120, %v4087
        %v4122 = vpop.permute.xlu0 %4121
        %4125 = vset.pattern.permute.xlu0 0
        %4126 = vperm.xlu0 %4125, %v4088
        %v4127 = vpop.permute.xlu0 %4126
        %4130 = vset.pattern.permute.xlu0 0
        %4131 = vperm.xlu0 %4130, %v4089
        %v4132 = vpop.permute.xlu0 %4131
        %4135 = vset.pattern.permute.xlu0 0
        %4136 = vperm.xlu0 %4135, %v4090
        %v4137 = vpop.permute.xlu0 %4136
        %4140 = vset.pattern.permute.xlu0 0
        %4141 = vperm.xlu0 %4140, %v4091
        %v4142 = vpop.permute.xlu0 %4141
        %4145 = vset.pattern.permute.xlu0 0
        %4146 = vperm.xlu0 %4145, %v4092
        %v4147 = vpop.permute.xlu0 %4146
        %4150 = vset.pattern.permute.xlu0 0
        %4151 = vperm.xlu0 %4150, %v4093
        %v4152 = vpop.permute.xlu0 %4151
        %4155 = vset.pattern.permute.xlu0 0
        %4156 = vperm.xlu0 %4155, %v4094
        %v4157 = vpop.permute.xlu0 %4156
        %4160 = vset.pattern.permute.xlu0 0
        %4161 = vperm.xlu0 %4160, %v4095
        %v4162 = vpop.permute.xlu0 %4161
        %4165 = vset.pattern.permute.xlu0 0
        %4166 = vperm.xlu0 %4165, %v4096
        %v4167 = vpop.permute.xlu0 %4166
        %4170 = vset.pattern.permute.xlu0 0
        %4171 = vperm.xlu0 %4170, %v4097
        %v4172 = vpop.permute.xlu0 %4171
        %4175 = vset.pattern.permute.xlu0 0
        %4176 = vperm.xlu0 %4175, %v4098
        %v4177 = vpop.permute.xlu0 %4176
        %v4179 = vmul.f32 %v4067, %v4102
        %v4180 = vmul.f32 %v4068, %v4107
        %v4181 = vmul.f32 %v4069, %v4112
        %v4182 = vmul.f32 %v4070, %v4117
        %v4183 = vmul.f32 %v4071, %v4122
        %v4184 = vmul.f32 %v4072, %v4127
        %v4185 = vmul.f32 %v4073, %v4132
        %v4186 = vmul.f32 %v4074, %v4137
        %v4187 = vmul.f32 %v4075, %v4142
        %v4188 = vmul.f32 %v4076, %v4147
        %v4189 = vmul.f32 %v4077, %v4152
        %v4190 = vmul.f32 %v4078, %v4157
        %v4191 = vmul.f32 %v4079, %v4162
        %v4192 = vmul.f32 %v4080, %v4167
        %v4193 = vmul.f32 %v4081, %v4172
        %v4194 = vmul.f32 %v4082, %v4177
        %v4195 = vmul.f32 %v3759, %v3759
        %v4196 = vmul.f32 %v3762, %v3762
        %v4197 = vmul.f32 %v3767, %v3767
        %v4198 = vmul.f32 %v3770, %v3770
        %v4199 = vmul.f32 %v3775, %v3775
        %v4200 = vmul.f32 %v3778, %v3778
        %v4201 = vmul.f32 %v3783, %v3783
        %v4202 = vmul.f32 %v3786, %v3786
        %v4203 = vmul.f32 %v3916, %v3916
        %v4204 = vmul.f32 %v3918, %v3918
        %v4205 = vmul.f32 %v3920, %v3920
        %v4206 = vmul.f32 %v3922, %v3922
        %v4207 = vmul.f32 %v3924, %v3924
        %v4208 = vmul.f32 %v3926, %v3926
        %v4209 = vmul.f32 %v3928, %v3928
        %v4210 = vmul.f32 %v3930, %v3930
        %v4211 = vsel %vm1222, %v4195, 0.0
        %4212 = vadd.xlane.f32.xlu0 %v4211
        %v4213 = vpop.xlane.xlu0 %4212
        %v4214 = vsel %vm1222, %v4196, 0.0
        %4215 = vadd.xlane.f32.xlu0 %v4214
        %v4216 = vpop.xlane.xlu0 %4215
        %v4217 = vsel %vm1222, %v4197, 0.0
        %4218 = vadd.xlane.f32.xlu0 %v4217
        %v4219 = vpop.xlane.xlu0 %4218
        %v4220 = vsel %vm1222, %v4198, 0.0
        %4221 = vadd.xlane.f32.xlu0 %v4220
        %v4222 = vpop.xlane.xlu0 %4221
        %v4223 = vsel %vm1222, %v4199, 0.0
        %4224 = vadd.xlane.f32.xlu0 %v4223
        %v4225 = vpop.xlane.xlu0 %4224
        %v4226 = vsel %vm1222, %v4200, 0.0
        %4227 = vadd.xlane.f32.xlu0 %v4226
        %v4228 = vpop.xlane.xlu0 %4227
        %v4229 = vsel %vm1222, %v4201, 0.0
        %4230 = vadd.xlane.f32.xlu0 %v4229
        %v4231 = vpop.xlane.xlu0 %4230
        %v4232 = vsel %vm1222, %v4202, 0.0
        %4233 = vadd.xlane.f32.xlu0 %v4232
        %v4234 = vpop.xlane.xlu0 %4233
        %v4235 = vsel %vm1222, %v4203, 0.0
        %4236 = vadd.xlane.f32.xlu0 %v4235
        %v4237 = vpop.xlane.xlu0 %4236
        %v4238 = vsel %vm1222, %v4204, 0.0
        %4239 = vadd.xlane.f32.xlu0 %v4238
        %v4240 = vpop.xlane.xlu0 %4239
        %v4241 = vsel %vm1222, %v4205, 0.0
        %4242 = vadd.xlane.f32.xlu0 %v4241
        %v4243 = vpop.xlane.xlu0 %4242
        %v4244 = vsel %vm1222, %v4206, 0.0
        %4245 = vadd.xlane.f32.xlu0 %v4244
        %v4246 = vpop.xlane.xlu0 %4245
        %v4247 = vsel %vm1222, %v4207, 0.0
        %4248 = vadd.xlane.f32.xlu0 %v4247
        %v4249 = vpop.xlane.xlu0 %4248
        %v4250 = vsel %vm1222, %v4208, 0.0
        %4251 = vadd.xlane.f32.xlu0 %v4250
        %v4252 = vpop.xlane.xlu0 %4251
        %v4253 = vsel %vm1222, %v4209, 0.0
        %4254 = vadd.xlane.f32.xlu0 %v4253
        %v4255 = vpop.xlane.xlu0 %4254
        %v4256 = vsel %vm1222, %v4210, 0.0
        %4257 = vadd.xlane.f32.xlu0 %v4256
        %v4258 = vpop.xlane.xlu0 %4257
        %v4259 = vmax.f32 %v4213, 1e-24
        %v4260 = vmax.f32 %v4216, 1e-24
        %v4261 = vmax.f32 %v4219, 1e-24
        %v4262 = vmax.f32 %v4222, 1e-24
        %v4263 = vmax.f32 %v4225, 1e-24
        %v4264 = vmax.f32 %v4228, 1e-24
        %v4265 = vmax.f32 %v4231, 1e-24
        %v4266 = vmax.f32 %v4234, 1e-24
        %v4267 = vmax.f32 %v4237, 1e-24
        %v4268 = vmax.f32 %v4240, 1e-24
        %v4269 = vmax.f32 %v4243, 1e-24
        %v4270 = vmax.f32 %v4246, 1e-24
        %v4271 = vmax.f32 %v4249, 1e-24
        %v4272 = vmax.f32 %v4252, 1e-24
        %v4273 = vmax.f32 %v4255, 1e-24
        %v4274 = vmax.f32 %v4258, 1e-24
        %v4275 = vrsqrt.pop %v4259
        %v4276 = vrsqrt.pop %v4260
        %v4277 = vrsqrt.pop %v4261
        %v4278 = vrsqrt.pop %v4262
        %v4279 = vrsqrt.pop %v4263
        %v4280 = vrsqrt.pop %v4264
        %v4281 = vrsqrt.pop %v4265
        %v4282 = vrsqrt.pop %v4266
        %v4283 = vrsqrt.pop %v4267
        %v4284 = vrsqrt.pop %v4268
        %v4285 = vrsqrt.pop %v4269
        %v4286 = vrsqrt.pop %v4270
        %v4287 = vrsqrt.pop %v4271
        %v4288 = vrsqrt.pop %v4272
        %v4289 = vrsqrt.pop %v4273
        %v4290 = vrsqrt.pop %v4274
        %v4291 = vmul.f32 %v3759, %v4275
        %v4292 = vmul.f32 %v3762, %v4276
        %v4293 = vmul.f32 %v3767, %v4277
        %v4294 = vmul.f32 %v3770, %v4278
        %v4295 = vmul.f32 %v3775, %v4279
        %v4296 = vmul.f32 %v3778, %v4280
        %v4297 = vmul.f32 %v3783, %v4281
        %v4298 = vmul.f32 %v3786, %v4282
        %v4299 = vmul.f32 %v3916, %v4283
        %v4300 = vmul.f32 %v3918, %v4284
        %v4301 = vmul.f32 %v3920, %v4285
        %v4302 = vmul.f32 %v3922, %v4286
        %v4303 = vmul.f32 %v3924, %v4287
        %v4304 = vmul.f32 %v3926, %v4288
        %v4305 = vmul.f32 %v3928, %v4289
        %v4306 = vmul.f32 %v3930, %v4290
        %v4307 = vld [vmem:[%s35] sm:$0xff]
        %v4308 = vld [vmem:[%s35 + $0x8] sm:$0xff]
        %v4309 = vld [vmem:[%s35 + $0x10] sm:$0xff]
        %v4310 = vld [vmem:[%s35 + $0x18] sm:$0xff]
        %v4311 = vld [vmem:[%s35 + $0x20] sm:$0xff]
        %v4312 = vld [vmem:[%s35 + $0x28] sm:$0xff]
        %v4313 = vld [vmem:[%s35 + $0x30] sm:$0xff]
        %v4314 = vld [vmem:[%s35 + $0x38] sm:$0xff]
        %v4315 = vld [vmem:[%s35 + $0x40] sm:$0xff]
        %v4316 = vld [vmem:[%s35 + $0x48] sm:$0xff]
        %v4317 = vld [vmem:[%s35 + $0x50] sm:$0xff]
        %v4318 = vld [vmem:[%s35 + $0x58] sm:$0xff]
        %v4319 = vld [vmem:[%s35 + $0x60] sm:$0xff]
        %v4320 = vld [vmem:[%s35 + $0x68] sm:$0xff]
        %v4321 = vld [vmem:[%s35 + $0x70] sm:$0xff]
        %v4322 = vld [vmem:[%s35 + $0x78] sm:$0xff]
        %v4324 = vsel %vm1222, %v4179, 0
        %v4327 = vsel %vm1222, %v4180, 0
        %v4330 = vsel %vm1222, %v4181, 0
        %v4333 = vsel %vm1222, %v4182, 0
        %v4336 = vsel %vm1222, %v4183, 0
        %v4339 = vsel %vm1222, %v4184, 0
        %v4342 = vsel %vm1222, %v4185, 0
        %v4345 = vsel %vm1222, %v4186, 0
        %v4348 = vsel %vm1222, %v4187, 0
        %v4351 = vsel %vm1222, %v4188, 0
        %v4354 = vsel %vm1222, %v4189, 0
        %v4357 = vsel %vm1222, %v4190, 0
        %v4360 = vsel %vm1222, %v4191, 0
        %v4363 = vsel %vm1222, %v4192, 0
        %v4366 = vsel %vm1222, %v4193, 0
        %v4369 = vsel %vm1222, %v4194, 0
        %v4372 = vsel %vm1222, %v4291, 0
        %v4375 = vsel %vm1222, %v4292, 0
        %v4378 = vsel %vm1222, %v4293, 0
        %v4381 = vsel %vm1222, %v4294, 0
        %v4384 = vsel %vm1222, %v4295, 0
        %v4387 = vsel %vm1222, %v4296, 0
        %v4390 = vsel %vm1222, %v4297, 0
        %v4393 = vsel %vm1222, %v4298, 0
        %v4396 = vsel %vm1222, %v4299, 0
        %v4399 = vsel %vm1222, %v4300, 0
        %v4402 = vsel %vm1222, %v4301, 0
        %v4405 = vsel %vm1222, %v4302, 0
        %v4408 = vsel %vm1222, %v4303, 0
        %v4411 = vsel %vm1222, %v4304, 0
        %v4414 = vsel %vm1222, %v4305, 0
        %v4417 = vsel %vm1222, %v4306, 0
        %4419 = vmatprep.subr.mxu0 0.0
        %4420 = vmatpush1.xpose.msra.mxu0 %v4372
        %4421 = vmatprep.subr.mxu0 0.0
        %4422 = vmatpush1.xpose.msra.mxu0 %v4375
        %4423 = vmatprep.subr.mxu0 0.0
        %4424 = vmatpush1.xpose.msra.mxu0 %v4378
        %4425 = vmatprep.subr.mxu0 0.0
        %4426 = vmatpush1.xpose.msra.mxu0 %v4381
        %4427 = vmatprep.subr.mxu0 0.0
        %4428 = vmatpush1.xpose.msra.mxu0 %v4384
        %4429 = vmatprep.subr.mxu0 0.0
        %4430 = vmatpush1.xpose.msra.mxu0 %v4387
        %4431 = vmatprep.subr.mxu0 0.0
        %4432 = vmatpush1.xpose.msra.mxu0 %v4390
        %4433 = vmatprep.subr.mxu0 0.0
        %4434 = vmatpush1.xpose.msra.mxu0 %v4393
        %4435 = vmatprep.subr.mxu0 0.0
        %4436 = vmatpush1.xpose.msra.mxu0 %v4396
        %4437 = vmatprep.subr.mxu0 0.0
        %4438 = vmatpush1.xpose.msra.mxu0 %v4399
        %4439 = vmatprep.subr.mxu0 0.0
        %4440 = vmatpush1.xpose.msra.mxu0 %v4402
        %4441 = vmatprep.subr.mxu0 0.0
        %4442 = vmatpush1.xpose.msra.mxu0 %v4405
        %4443 = vmatprep.subr.mxu0 0.0
        %4444 = vmatpush1.xpose.msra.mxu0 %v4408
        %4445 = vmatprep.subr.mxu0 0.0
        %4446 = vmatpush1.xpose.msra.mxu0 %v4411
        %4447 = vmatprep.subr.mxu0 0.0
        %4448 = vmatpush1.xpose.msra.mxu0 %v4414
        %4449 = vmatprep.subr.mxu0 0.0
        %4450 = vmatpush1.xpose.msra.mxu0 %v4417
        %4451 = vmatprep.subr.mxu0 0.0
        %4452 = vmatpush1.xpose.msra.mxu0 0.0
        %4453 = vmatprep.subr.mxu0 0.0
        %4454 = vmatpush1.xpose.msra.mxu0 0.0
        %4455 = vmatprep.subr.mxu0 0.0
        %4456 = vmatpush1.xpose.msra.mxu0 0.0
        %4457 = vmatprep.subr.mxu0 0.0
        %4458 = vmatpush1.xpose.msra.mxu0 0.0
        %4459 = vmatprep.subr.mxu0 0.0
        %4460 = vmatpush1.xpose.msra.mxu0 0.0
        %4461 = vmatprep.subr.mxu0 0.0
        %4462 = vmatpush1.xpose.msra.mxu0 0.0
        %4463 = vmatprep.subr.mxu0 0.0
        %4464 = vmatpush1.xpose.msra.mxu0 0.0
        %4465 = vmatprep.subr.mxu0 0.0
        %4466 = vmatpush1.xpose.msra.mxu0 0.0
        %4467 = vmatprep.subr.mxu0 0.0
        %4468 = vmatpush1.xpose.msra.mxu0 0.0
        %4469 = vmatprep.subr.mxu0 0.0
        %4470 = vmatpush1.xpose.msra.mxu0 0.0
        %4471 = vmatprep.subr.mxu0 0.0
        %4472 = vmatpush1.xpose.msra.mxu0 0.0
        %4473 = vmatprep.subr.mxu0 0.0
        %4474 = vmatpush1.xpose.msra.mxu0 0.0
        %4475 = vmatprep.subr.mxu0 0.0
        %4476 = vmatpush1.xpose.msra.mxu0 0.0
        %4477 = vmatprep.subr.mxu0 0.0
        %4478 = vmatpush1.xpose.msra.mxu0 0.0
        %4479 = vmatprep.subr.mxu0 0.0
        %4480 = vmatpush1.xpose.msra.mxu0 0.0
        %4481 = vmatprep.subr.mxu0 0.0
        %4482 = vmatpush1.xpose.msra.mxu0 0.0
        %4483 = vmatprep.mubr.f32.mxu0 0.0
        %4484 = vmatmul.mubr.f32.gmra.mrb[0].mxu0 %v4324
        %v4485 = vpop.f32.mrb[0].mxu0
        %v4486 = vadd.f32 %v4307, %v4485
        %v4487 = vpop.f32.mrb[0].mxu0
        %4488 = vmatprep.mubr.f32.mxu0 0.0
        %4489 = vmatmul.mubr.f32.gmra.mrb[0].mxu0 %v4327
        %v4490 = vpop.f32.mrb[0].mxu0
        %v4491 = vadd.f32 %v4308, %v4490
        %v4492 = vpop.f32.mrb[0].mxu0
        %4493 = vmatprep.mubr.f32.mxu0 0.0
        %4494 = vmatmul.mubr.f32.gmra.mrb[0].mxu0 %v4330
        %v4495 = vpop.f32.mrb[0].mxu0
        %v4496 = vadd.f32 %v4309, %v4495
        %v4497 = vpop.f32.mrb[0].mxu0
        %4498 = vmatprep.mubr.f32.mxu0 0.0
        %4499 = vmatmul.mubr.f32.gmra.mrb[0].mxu0 %v4333
        %v4500 = vpop.f32.mrb[0].mxu0
        %v4501 = vadd.f32 %v4310, %v4500
        %v4502 = vpop.f32.mrb[0].mxu0
        %4503 = vmatprep.mubr.f32.mxu0 0.0
        %4504 = vmatmul.mubr.f32.gmra.mrb[0].mxu0 %v4336
        %v4505 = vpop.f32.mrb[0].mxu0
        %v4506 = vadd.f32 %v4311, %v4505
        %v4507 = vpop.f32.mrb[0].mxu0
        %4508 = vmatprep.mubr.f32.mxu0 0.0
        %4509 = vmatmul.mubr.f32.gmra.mrb[0].mxu0 %v4339
        %v4510 = vpop.f32.mrb[0].mxu0
        %v4511 = vadd.f32 %v4312, %v4510
        %v4512 = vpop.f32.mrb[0].mxu0
        %4513 = vmatprep.mubr.f32.mxu0 0.0
        %4514 = vmatmul.mubr.f32.gmra.mrb[0].mxu0 %v4342
        %v4515 = vpop.f32.mrb[0].mxu0
        %v4516 = vadd.f32 %v4313, %v4515
        %v4517 = vpop.f32.mrb[0].mxu0
        %4518 = vmatprep.mubr.f32.mxu0 0.0
        %4519 = vmatmul.mubr.f32.gmra.mrb[0].mxu0 %v4345
        %v4520 = vpop.f32.mrb[0].mxu0
        %v4521 = vadd.f32 %v4314, %v4520
        %v4522 = vpop.f32.mrb[0].mxu0
        %4523 = vmatprep.mubr.f32.mxu0 0.0
        %4524 = vmatmul.mubr.f32.gmra.mrb[0].mxu0 %v4348
        %v4525 = vpop.f32.mrb[0].mxu0
        %v4526 = vadd.f32 %v4315, %v4525
        %v4527 = vpop.f32.mrb[0].mxu0
        %4528 = vmatprep.mubr.f32.mxu0 0.0
        %4529 = vmatmul.mubr.f32.gmra.mrb[0].mxu0 %v4351
        %v4530 = vpop.f32.mrb[0].mxu0
        %v4531 = vadd.f32 %v4316, %v4530
        %v4532 = vpop.f32.mrb[0].mxu0
        %4533 = vmatprep.mubr.f32.mxu0 0.0
        %4534 = vmatmul.mubr.f32.gmra.mrb[0].mxu0 %v4354
        %v4535 = vpop.f32.mrb[0].mxu0
        %v4536 = vadd.f32 %v4317, %v4535
        %v4537 = vpop.f32.mrb[0].mxu0
        %4538 = vmatprep.mubr.f32.mxu0 0.0
        %4539 = vmatmul.mubr.f32.gmra.mrb[0].mxu0 %v4357
        %v4540 = vpop.f32.mrb[0].mxu0
        %v4541 = vadd.f32 %v4318, %v4540
        %v4542 = vpop.f32.mrb[0].mxu0
        %4543 = vmatprep.mubr.f32.mxu0 0.0
        %4544 = vmatmul.mubr.f32.gmra.mrb[0].mxu0 %v4360
        %v4545 = vpop.f32.mrb[0].mxu0
        %v4546 = vadd.f32 %v4319, %v4545
        %v4547 = vpop.f32.mrb[0].mxu0
        %4548 = vmatprep.mubr.f32.mxu0 0.0
        %4549 = vmatmul.mubr.f32.gmra.mrb[0].mxu0 %v4363
        %v4550 = vpop.f32.mrb[0].mxu0
        %v4551 = vadd.f32 %v4320, %v4550
        %v4552 = vpop.f32.mrb[0].mxu0
        %4553 = vmatprep.mubr.f32.mxu0 0.0
        %4554 = vmatmul.mubr.f32.gmra.mrb[0].mxu0 %v4366
        %v4555 = vpop.f32.mrb[0].mxu0
        %v4556 = vadd.f32 %v4321, %v4555
        %v4557 = vpop.f32.mrb[0].mxu0
        %4558 = vmatprep.mubr.f32.mxu0 0.0
        %4559 = vmatmul.mubr.f32.gmra.mrb[0].mxu0 %v4369
        %v4560 = vpop.f32.mrb[0].mxu0
        %v4561 = vadd.f32 %v4322, %v4560
        %v4562 = vpop.f32.mrb[0].mxu0
        %4563 = vdwg.mxu0
        %4564 = vmax.xlane.f32.xlu0 %v4486
        %v4565 = vpop.xlane.xlu0 %4564
        %4566 = vmax.xlane.f32.xlu0 %v4491
        %v4567 = vpop.xlane.xlu0 %4566
        %4568 = vmax.xlane.f32.xlu0 %v4496
        %v4569 = vpop.xlane.xlu0 %4568
        %4570 = vmax.xlane.f32.xlu0 %v4501
        %v4571 = vpop.xlane.xlu0 %4570
        %4572 = vmax.xlane.f32.xlu0 %v4506
        %v4573 = vpop.xlane.xlu0 %4572
        %4574 = vmax.xlane.f32.xlu0 %v4511
        %v4575 = vpop.xlane.xlu0 %4574
        %4576 = vmax.xlane.f32.xlu0 %v4516
        %v4577 = vpop.xlane.xlu0 %4576
        %4578 = vmax.xlane.f32.xlu0 %v4521
        %v4579 = vpop.xlane.xlu0 %4578
        %4580 = vmax.xlane.f32.xlu0 %v4526
        %v4581 = vpop.xlane.xlu0 %4580
        %4582 = vmax.xlane.f32.xlu0 %v4531
        %v4583 = vpop.xlane.xlu0 %4582
        %4584 = vmax.xlane.f32.xlu0 %v4536
        %v4585 = vpop.xlane.xlu0 %4584
        %4586 = vmax.xlane.f32.xlu0 %v4541
        %v4587 = vpop.xlane.xlu0 %4586
        %4588 = vmax.xlane.f32.xlu0 %v4546
        %v4589 = vpop.xlane.xlu0 %4588
        %4590 = vmax.xlane.f32.xlu0 %v4551
        %v4591 = vpop.xlane.xlu0 %4590
        %4592 = vmax.xlane.f32.xlu0 %v4556
        %v4593 = vpop.xlane.xlu0 %4592
        %4594 = vmax.xlane.f32.xlu0 %v4561
        %v4595 = vpop.xlane.xlu0 %4594
        %v4596 = vsub.f32 %v4486, %v4565
        %v4597 = vsub.f32 %v4491, %v4567
        %v4598 = vsub.f32 %v4496, %v4569
        %v4599 = vsub.f32 %v4501, %v4571
        %v4600 = vsub.f32 %v4506, %v4573
        %v4601 = vsub.f32 %v4511, %v4575
        %v4602 = vsub.f32 %v4516, %v4577
        %v4603 = vsub.f32 %v4521, %v4579
        %v4604 = vsub.f32 %v4526, %v4581
        %v4605 = vsub.f32 %v4531, %v4583
        %v4606 = vsub.f32 %v4536, %v4585
        %v4607 = vsub.f32 %v4541, %v4587
        %v4608 = vsub.f32 %v4546, %v4589
        %v4609 = vsub.f32 %v4551, %v4591
        %v4610 = vsub.f32 %v4556, %v4593
        %v4611 = vsub.f32 %v4561, %v4595
        %v4612 = vmul.f32 %v4596, 1.442695
        %v4613 = vpow.pop %v4612
        %v4614 = vmul.f32 %v4597, 1.442695
        %v4615 = vpow.pop %v4614
        %v4616 = vmul.f32 %v4598, 1.442695
        %v4617 = vpow.pop %v4616
        %v4618 = vmul.f32 %v4599, 1.442695
        %v4619 = vpow.pop %v4618
        %v4620 = vmul.f32 %v4600, 1.442695
        %v4621 = vpow.pop %v4620
        %v4622 = vmul.f32 %v4601, 1.442695
        %v4623 = vpow.pop %v4622
        %v4624 = vmul.f32 %v4602, 1.442695
        %v4625 = vpow.pop %v4624
        %v4626 = vmul.f32 %v4603, 1.442695
        %v4627 = vpow.pop %v4626
        %v4628 = vmul.f32 %v4604, 1.442695
        %v4629 = vpow.pop %v4628
        %v4630 = vmul.f32 %v4605, 1.442695
        %v4631 = vpow.pop %v4630
        %v4632 = vmul.f32 %v4606, 1.442695
        %v4633 = vpow.pop %v4632
        %v4634 = vmul.f32 %v4607, 1.442695
        %v4635 = vpow.pop %v4634
        %v4636 = vmul.f32 %v4608, 1.442695
        %v4637 = vpow.pop %v4636
        %v4638 = vmul.f32 %v4609, 1.442695
        %v4639 = vpow.pop %v4638
        %v4640 = vmul.f32 %v4610, 1.442695
        %v4641 = vpow.pop %v4640
        %v4642 = vmul.f32 %v4611, 1.442695
        %v4643 = vpow.pop %v4642
        %4644 = vadd.xlane.f32.xlu0 %v4613
        %v4645 = vpop.xlane.xlu0 %4644
        %4646 = vadd.xlane.f32.xlu0 %v4615
        %v4647 = vpop.xlane.xlu0 %4646
        %4648 = vadd.xlane.f32.xlu0 %v4617
        %v4649 = vpop.xlane.xlu0 %4648
        %4650 = vadd.xlane.f32.xlu0 %v4619
        %v4651 = vpop.xlane.xlu0 %4650
        %4652 = vadd.xlane.f32.xlu0 %v4621
        %v4653 = vpop.xlane.xlu0 %4652
        %4654 = vadd.xlane.f32.xlu0 %v4623
        %v4655 = vpop.xlane.xlu0 %4654
        %4656 = vadd.xlane.f32.xlu0 %v4625
        %v4657 = vpop.xlane.xlu0 %4656
        %4658 = vadd.xlane.f32.xlu0 %v4627
        %v4659 = vpop.xlane.xlu0 %4658
        %4660 = vadd.xlane.f32.xlu0 %v4629
        %v4661 = vpop.xlane.xlu0 %4660
        %4662 = vadd.xlane.f32.xlu0 %v4631
        %v4663 = vpop.xlane.xlu0 %4662
        %4664 = vadd.xlane.f32.xlu0 %v4633
        %v4665 = vpop.xlane.xlu0 %4664
        %4666 = vadd.xlane.f32.xlu0 %v4635
        %v4667 = vpop.xlane.xlu0 %4666
        %4668 = vadd.xlane.f32.xlu0 %v4637
        %v4669 = vpop.xlane.xlu0 %4668
        %4670 = vadd.xlane.f32.xlu0 %v4639
        %v4671 = vpop.xlane.xlu0 %4670
        %4672 = vadd.xlane.f32.xlu0 %v4641
        %v4673 = vpop.xlane.xlu0 %4672
        %4674 = vadd.xlane.f32.xlu0 %v4643
        %v4675 = vpop.xlane.xlu0 %4674
        %v4676 = vrcp.pop %v4645
        %v4677 = vmul.f32 %v4613, %v4676
        %v4678 = vrcp.pop %v4647
        %v4679 = vmul.f32 %v4615, %v4678
        %v4680 = vrcp.pop %v4649
        %v4681 = vmul.f32 %v4617, %v4680
        %v4682 = vrcp.pop %v4651
        %v4683 = vmul.f32 %v4619, %v4682
        %v4684 = vrcp.pop %v4653
        %v4685 = vmul.f32 %v4621, %v4684
        %v4686 = vrcp.pop %v4655
        %v4687 = vmul.f32 %v4623, %v4686
        %v4688 = vrcp.pop %v4657
        %v4689 = vmul.f32 %v4625, %v4688
        %v4690 = vrcp.pop %v4659
        %v4691 = vmul.f32 %v4627, %v4690
        %v4692 = vrcp.pop %v4661
        %v4693 = vmul.f32 %v4629, %v4692
        %v4694 = vrcp.pop %v4663
        %v4695 = vmul.f32 %v4631, %v4694
        %v4696 = vrcp.pop %v4665
        %v4697 = vmul.f32 %v4633, %v4696
        %v4698 = vrcp.pop %v4667
        %v4699 = vmul.f32 %v4635, %v4698
        %v4700 = vrcp.pop %v4669
        %v4701 = vmul.f32 %v4637, %v4700
        %v4702 = vrcp.pop %v4671
        %v4703 = vmul.f32 %v4639, %v4702
        %v4704 = vrcp.pop %v4673
        %v4705 = vmul.f32 %v4641, %v4704
        %v4706 = vrcp.pop %v4675
        %v4707 = vmul.f32 %v4643, %v4706
        %4708 = vmatprep.subr.mxu0 0.0
        %4709 = vmatpush1.msra.mxu0 %v3845
        %4710 = vmatprep.subr.mxu0 0.0
        %4711 = vmatpush1.msra.mxu0 %v3848
        %4712 = vmatprep.subr.mxu0 0.0
        %4713 = vmatpush1.msra.mxu0 %v3853
        %4714 = vmatprep.subr.mxu0 0.0
        %4715 = vmatpush1.msra.mxu0 %v3856
        %4716 = vmatprep.subr.mxu0 0.0
        %4717 = vmatpush1.msra.mxu0 %v3861
        %4718 = vmatprep.subr.mxu0 0.0
        %4719 = vmatpush1.msra.mxu0 %v3864
        %4720 = vmatprep.subr.mxu0 0.0
        %4721 = vmatpush1.msra.mxu0 %v3869
        %4722 = vmatprep.subr.mxu0 0.0
        %4723 = vmatpush1.msra.mxu0 %v3872
        %4724 = vmatprep.subr.mxu0 0.0
        %4725 = vmatpush1.msra.mxu0 %v3948
        %4726 = vmatprep.subr.mxu0 0.0
        %4727 = vmatpush1.msra.mxu0 %v3950
        %4728 = vmatprep.subr.mxu0 0.0
        %4729 = vmatpush1.msra.mxu0 %v3952
        %4730 = vmatprep.subr.mxu0 0.0
        %4731 = vmatpush1.msra.mxu0 %v3954
        %4732 = vmatprep.subr.mxu0 0.0
        %4733 = vmatpush1.msra.mxu0 %v3956
        %4734 = vmatprep.subr.mxu0 0.0
        %4735 = vmatpush1.msra.mxu0 %v3958
        %4736 = vmatprep.subr.mxu0 0.0
        %4737 = vmatpush1.msra.mxu0 %v3960
        %4738 = vmatprep.subr.mxu0 0.0
        %4739 = vmatpush1.msra.mxu0 %v3962
        %4740 = vmatprep.subr.mxu0 0.0
        %4741 = vmatpush1.msra.mxu0 0.0
        %4742 = vmatprep.subr.mxu0 0.0
        %4743 = vmatpush1.msra.mxu0 0.0
        %4744 = vmatprep.subr.mxu0 0.0
        %4745 = vmatpush1.msra.mxu0 0.0
        %4746 = vmatprep.subr.mxu0 0.0
        %4747 = vmatpush1.msra.mxu0 0.0
        %4748 = vmatprep.subr.mxu0 0.0
        %4749 = vmatpush1.msra.mxu0 0.0
        %4750 = vmatprep.subr.mxu0 0.0
        %4751 = vmatpush1.msra.mxu0 0.0
        %4752 = vmatprep.subr.mxu0 0.0
        %4753 = vmatpush1.msra.mxu0 0.0
        %4754 = vmatprep.subr.mxu0 0.0
        %4755 = vmatpush1.msra.mxu0 0.0
        %4756 = vmatprep.subr.mxu0 0.0
        %4757 = vmatpush1.msra.mxu0 0.0
        %4758 = vmatprep.subr.mxu0 0.0
        %4759 = vmatpush1.msra.mxu0 0.0
        %4760 = vmatprep.subr.mxu0 0.0
        %4761 = vmatpush1.msra.mxu0 0.0
        %4762 = vmatprep.subr.mxu0 0.0
        %4763 = vmatpush1.msra.mxu0 0.0
        %4764 = vmatprep.subr.mxu0 0.0
        %4765 = vmatpush1.msra.mxu0 0.0
        %4766 = vmatprep.subr.mxu0 0.0
        %4767 = vmatpush1.msra.mxu0 0.0
        %4768 = vmatprep.subr.mxu0 0.0
        %4769 = vmatpush1.msra.mxu0 0.0
        %4770 = vmatprep.subr.mxu0 0.0
        %4771 = vmatpush1.msra.mxu0 0.0
        %4772 = vmatprep.mubr.f32.mxu0 0.0
        %4773 = vmatmul.mubr.f32.gmra.mrb[0].mxu0 %v4677
        %v4774 = vpop.f32.mrb[0].mxu0
        %v4775 = vadd.f32 0.0, %v4774
        %v4776 = vpop.f32.mrb[0].mxu0
        %4777 = vmatprep.mubr.f32.mxu0 0.0
        %4778 = vmatmul.mubr.f32.gmra.mrb[0].mxu0 %v4679
        %v4779 = vpop.f32.mrb[0].mxu0
        %v4780 = vadd.f32 0.0, %v4779
        %v4781 = vpop.f32.mrb[0].mxu0
        %4782 = vmatprep.mubr.f32.mxu0 0.0
        %4783 = vmatmul.mubr.f32.gmra.mrb[0].mxu0 %v4681
        %v4784 = vpop.f32.mrb[0].mxu0
        %v4785 = vadd.f32 0.0, %v4784
        %v4786 = vpop.f32.mrb[0].mxu0
        %4787 = vmatprep.mubr.f32.mxu0 0.0
        %4788 = vmatmul.mubr.f32.gmra.mrb[0].mxu0 %v4683
        %v4789 = vpop.f32.mrb[0].mxu0
        %v4790 = vadd.f32 0.0, %v4789
        %v4791 = vpop.f32.mrb[0].mxu0
        %4792 = vmatprep.mubr.f32.mxu0 0.0
        %4793 = vmatmul.mubr.f32.gmra.mrb[0].mxu0 %v4685
        %v4794 = vpop.f32.mrb[0].mxu0
        %v4795 = vadd.f32 0.0, %v4794
        %v4796 = vpop.f32.mrb[0].mxu0
        %4797 = vmatprep.mubr.f32.mxu0 0.0
        %4798 = vmatmul.mubr.f32.gmra.mrb[0].mxu0 %v4687
        %v4799 = vpop.f32.mrb[0].mxu0
        %v4800 = vadd.f32 0.0, %v4799
        %v4801 = vpop.f32.mrb[0].mxu0
        %4802 = vmatprep.mubr.f32.mxu0 0.0
        %4803 = vmatmul.mubr.f32.gmra.mrb[0].mxu0 %v4689
        %v4804 = vpop.f32.mrb[0].mxu0
        %v4805 = vadd.f32 0.0, %v4804
        %v4806 = vpop.f32.mrb[0].mxu0
        %4807 = vmatprep.mubr.f32.mxu0 0.0
        %4808 = vmatmul.mubr.f32.gmra.mrb[0].mxu0 %v4691
        %v4809 = vpop.f32.mrb[0].mxu0
        %v4810 = vadd.f32 0.0, %v4809
        %v4811 = vpop.f32.mrb[0].mxu0
        %4812 = vmatprep.mubr.f32.mxu0 0.0
        %4813 = vmatmul.mubr.f32.gmra.mrb[0].mxu0 %v4693
        %v4814 = vpop.f32.mrb[0].mxu0
        %v4815 = vadd.f32 0.0, %v4814
        %v4816 = vpop.f32.mrb[0].mxu0
        %4817 = vmatprep.mubr.f32.mxu0 0.0
        %4818 = vmatmul.mubr.f32.gmra.mrb[0].mxu0 %v4695
        %v4819 = vpop.f32.mrb[0].mxu0
        %v4820 = vadd.f32 0.0, %v4819
        %v4821 = vpop.f32.mrb[0].mxu0
        %4822 = vmatprep.mubr.f32.mxu0 0.0
        %4823 = vmatmul.mubr.f32.gmra.mrb[0].mxu0 %v4697
        %v4824 = vpop.f32.mrb[0].mxu0
        %v4825 = vadd.f32 0.0, %v4824
        %v4826 = vpop.f32.mrb[0].mxu0
        %4827 = vmatprep.mubr.f32.mxu0 0.0
        %4828 = vmatmul.mubr.f32.gmra.mrb[0].mxu0 %v4699
        %v4829 = vpop.f32.mrb[0].mxu0
        %v4830 = vadd.f32 0.0, %v4829
        %v4831 = vpop.f32.mrb[0].mxu0
        %4832 = vmatprep.mubr.f32.mxu0 0.0
        %4833 = vmatmul.mubr.f32.gmra.mrb[0].mxu0 %v4701
        %v4834 = vpop.f32.mrb[0].mxu0
        %v4835 = vadd.f32 0.0, %v4834
        %v4836 = vpop.f32.mrb[0].mxu0
        %4837 = vmatprep.mubr.f32.mxu0 0.0
        %4838 = vmatmul.mubr.f32.gmra.mrb[0].mxu0 %v4703
        %v4839 = vpop.f32.mrb[0].mxu0
        %v4840 = vadd.f32 0.0, %v4839
        %v4841 = vpop.f32.mrb[0].mxu0
        %4842 = vmatprep.mubr.f32.mxu0 0.0
        %4843 = vmatmul.mubr.f32.gmra.mrb[0].mxu0 %v4705
        %v4844 = vpop.f32.mrb[0].mxu0
        %v4845 = vadd.f32 0.0, %v4844
        %v4846 = vpop.f32.mrb[0].mxu0
        %4847 = vmatprep.mubr.f32.mxu0 0.0
        %4848 = vmatmul.mubr.f32.gmra.mrb[0].mxu0 %v4707
        %v4849 = vpop.f32.mrb[0].mxu0
        %v4850 = vadd.f32 0.0, %v4849
        %v4851 = vpop.f32.mrb[0].mxu0
        %4852 = vdwg.mxu0
        %v4853 = vpack.c.bf16 %v4780, %v4775
        %v4854 = vpack.c.bf16 %v4790, %v4785
        %v4855 = vpack.c.bf16 %v4800, %v4795
        %v4856 = vpack.c.bf16 %v4810, %v4805
        %v4857 = vld [vmem:[%s25] sm:$0xf]
        %v4858 = vld [vmem:[%s25 + $0x4] sm:$0xf]
        %v4861 = vunpack.c.l.b16 %v4857
        %v4862 = vunpack.c.l.b16 %v4858
        %v4863 = vpack.c.b16 %v4862, %v4861
        %v4866 = vsel %vm1222, %v4853, 0
        %v4869 = vsel %vm1222, %v4854, 0
        %v4872 = vsel %vm1222, %v4855, 0
        %v4875 = vsel %vm1222, %v4856, 0
        %4877 = vmatprep.subr.bf16.mxu0 0
        %4878 = vmatpush1.bf16.msra.mxu0 %v4863
        %4879 = vmatprep.subr.bf16.mxu0 0
        %4880 = vmatpush1.bf16.msra.mxu0 0
        %4881 = vmatprep.subr.bf16.mxu0 0
        %4882 = vmatpush1.bf16.msra.mxu0 0
        %4883 = vmatprep.subr.bf16.mxu0 0
        %4884 = vmatpush1.bf16.msra.mxu0 0
        %4885 = vmatprep.subr.bf16.mxu0 0
        %4886 = vmatpush1.bf16.msra.mxu0 0
        %4887 = vmatprep.subr.bf16.mxu0 0
        %4888 = vmatpush1.bf16.msra.mxu0 0
        %4889 = vmatprep.subr.bf16.mxu0 0
        %4890 = vmatpush1.bf16.msra.mxu0 0
        %4891 = vmatprep.subr.bf16.mxu0 0
        %4892 = vmatpush1.bf16.msra.mxu0 0
        %4893 = vmatprep.subr.bf16.mxu0 0
        %4894 = vmatpush1.bf16.msra.mxu0 0
        %4895 = vmatprep.subr.bf16.mxu0 0
        %4896 = vmatpush1.bf16.msra.mxu0 0
        %4897 = vmatprep.subr.bf16.mxu0 0
        %4898 = vmatpush1.bf16.msra.mxu0 0
        %4899 = vmatprep.subr.bf16.mxu0 0
        %4900 = vmatpush1.bf16.msra.mxu0 0
        %4901 = vmatprep.subr.bf16.mxu0 0
        %4902 = vmatpush1.bf16.msra.mxu0 0
        %4903 = vmatprep.subr.bf16.mxu0 0
        %4904 = vmatpush1.bf16.msra.mxu0 0
        %4905 = vmatprep.subr.bf16.mxu0 0
        %4906 = vmatpush1.bf16.msra.mxu0 0
        %4907 = vmatprep.subr.bf16.mxu0 0
        %4908 = vmatpush1.bf16.msra.mxu0 0
        %4909 = vmatprep.mubr.bf16.mxu0 0
        %4910 = vmatmul.mubr.bf16.gmra.mrb[0].mxu0 %v4866
        %v4911 = vpop.f32.mrb[0].mxu0
        %v4912 = vadd.f32 0.0, %v4911
        %v4913 = vpop.f32.mrb[0].mxu0
        %v4914 = vpop.f32.mrb[0].mxu0
        %v4915 = vadd.f32 0.0, %v4914
        %v4916 = vpop.f32.mrb[0].mxu0
        %4917 = vmatprep.mubr.bf16.mxu0 0
        %4918 = vmatmul.mubr.bf16.gmra.mrb[0].mxu0 %v4869
        %v4919 = vpop.f32.mrb[0].mxu0
        %v4920 = vadd.f32 0.0, %v4919
        %v4921 = vpop.f32.mrb[0].mxu0
        %v4922 = vpop.f32.mrb[0].mxu0
        %v4923 = vadd.f32 0.0, %v4922
        %v4924 = vpop.f32.mrb[0].mxu0
        %4925 = vmatprep.mubr.bf16.mxu0 0
        %4926 = vmatmul.mubr.bf16.gmra.mrb[0].mxu0 %v4872
        %v4927 = vpop.f32.mrb[0].mxu0
        %v4928 = vadd.f32 0.0, %v4927
        %v4929 = vpop.f32.mrb[0].mxu0
        %v4930 = vpop.f32.mrb[0].mxu0
        %v4931 = vadd.f32 0.0, %v4930
        %v4932 = vpop.f32.mrb[0].mxu0
        %4933 = vmatprep.mubr.bf16.mxu0 0
        %4934 = vmatmul.mubr.bf16.gmra.mrb[0].mxu0 %v4875
        %v4935 = vpop.f32.mrb[0].mxu0
        %v4936 = vadd.f32 0.0, %v4935
        %v4937 = vpop.f32.mrb[0].mxu0
        %v4938 = vpop.f32.mrb[0].mxu0
        %v4939 = vadd.f32 0.0, %v4938
        %v4940 = vpop.f32.mrb[0].mxu0
        %4941 = vdwg.mxu0
        %v4942 = vlaneseq
        %v4943 = vshrl.u32 %v4942, 7
        %v4944 = vsub.s32 2, %v4943
        %v4945 = vrot.slane %v3605, %v4944
        %v4946 = vadd.f32 %v4945, %v4912
        %v4947 = vadd.f32 %v4945, %v4915
        %v4948 = vadd.f32 %v4945, %v4920
        %v4949 = vadd.f32 %v4945, %v4923
        %v4950 = vadd.f32 %v4945, %v4928
        %v4951 = vadd.f32 %v4945, %v4931
        %v4952 = vadd.f32 %v4945, %v4936
        %v4953 = vadd.f32 %v4945, %v4939
        %v4954 = vpack.c.bf16 %v4820, %v4815
        %v4955 = vpack.c.bf16 %v4830, %v4825
        %v4956 = vpack.c.bf16 %v4840, %v4835
        %v4957 = vpack.c.bf16 %v4850, %v4845
        %v4958 = vld [vmem:[%s25 + $0x8] sm:$0xf]
        %v4959 = vld [vmem:[%s25 + $0xc] sm:$0xf]
        %v4962 = vunpack.c.l.b16 %v4958
        %v4963 = vunpack.c.l.b16 %v4959
        %v4964 = vpack.c.b16 %v4963, %v4962
        %v4967 = vsel %vm1222, %v4954, 0
        %v4970 = vsel %vm1222, %v4955, 0
        %v4973 = vsel %vm1222, %v4956, 0
        %v4976 = vsel %vm1222, %v4957, 0
        %4978 = vmatprep.subr.bf16.mxu0 0
        %4979 = vmatpush1.bf16.msra.mxu0 %v4964
        %4980 = vmatprep.subr.bf16.mxu0 0
        %4981 = vmatpush1.bf16.msra.mxu0 0
        %4982 = vmatprep.subr.bf16.mxu0 0
        %4983 = vmatpush1.bf16.msra.mxu0 0
        %4984 = vmatprep.subr.bf16.mxu0 0
        %4985 = vmatpush1.bf16.msra.mxu0 0
        %4986 = vmatprep.subr.bf16.mxu0 0
        %4987 = vmatpush1.bf16.msra.mxu0 0
        %4988 = vmatprep.subr.bf16.mxu0 0
        %4989 = vmatpush1.bf16.msra.mxu0 0
        %4990 = vmatprep.subr.bf16.mxu0 0
        %4991 = vmatpush1.bf16.msra.mxu0 0
        %4992 = vmatprep.subr.bf16.mxu0 0
        %4993 = vmatpush1.bf16.msra.mxu0 0
        %4994 = vmatprep.subr.bf16.mxu0 0
        %4995 = vmatpush1.bf16.msra.mxu0 0
        %4996 = vmatprep.subr.bf16.mxu0 0
        %4997 = vmatpush1.bf16.msra.mxu0 0
        %4998 = vmatprep.subr.bf16.mxu0 0
        %4999 = vmatpush1.bf16.msra.mxu0 0
        %5000 = vmatprep.subr.bf16.mxu0 0
        %5001 = vmatpush1.bf16.msra.mxu0 0
        %5002 = vmatprep.subr.bf16.mxu0 0
        %5003 = vmatpush1.bf16.msra.mxu0 0
        %5004 = vmatprep.subr.bf16.mxu0 0
        %5005 = vmatpush1.bf16.msra.mxu0 0
        %5006 = vmatprep.subr.bf16.mxu0 0
        %5007 = vmatpush1.bf16.msra.mxu0 0
        %5008 = vmatprep.subr.bf16.mxu0 0
        %5009 = vmatpush1.bf16.msra.mxu0 0
        %5010 = vmatprep.mubr.bf16.mxu0 0
        %5011 = vmatmul.mubr.bf16.gmra.mrb[0].mxu0 %v4967
        %v5012 = vpop.f32.mrb[0].mxu0
        %v5013 = vadd.f32 0.0, %v5012
        %v5014 = vpop.f32.mrb[0].mxu0
        %v5015 = vpop.f32.mrb[0].mxu0
        %v5016 = vadd.f32 0.0, %v5015
        %v5017 = vpop.f32.mrb[0].mxu0
        %5018 = vmatprep.mubr.bf16.mxu0 0
        %5019 = vmatmul.mubr.bf16.gmra.mrb[0].mxu0 %v4970
        %v5020 = vpop.f32.mrb[0].mxu0
        %v5021 = vadd.f32 0.0, %v5020
        %v5022 = vpop.f32.mrb[0].mxu0
        %v5023 = vpop.f32.mrb[0].mxu0
        %v5024 = vadd.f32 0.0, %v5023
        %v5025 = vpop.f32.mrb[0].mxu0
        %5026 = vmatprep.mubr.bf16.mxu0 0
        %5027 = vmatmul.mubr.bf16.gmra.mrb[0].mxu0 %v4973
        %v5028 = vpop.f32.mrb[0].mxu0
        %v5029 = vadd.f32 0.0, %v5028
        %v5030 = vpop.f32.mrb[0].mxu0
        %v5031 = vpop.f32.mrb[0].mxu0
        %v5032 = vadd.f32 0.0, %v5031
        %v5033 = vpop.f32.mrb[0].mxu0
        %5034 = vmatprep.mubr.bf16.mxu0 0
        %5035 = vmatmul.mubr.bf16.gmra.mrb[0].mxu0 %v4976
        %v5036 = vpop.f32.mrb[0].mxu0
        %v5037 = vadd.f32 0.0, %v5036
        %v5038 = vpop.f32.mrb[0].mxu0
        %v5039 = vpop.f32.mrb[0].mxu0
        %v5040 = vadd.f32 0.0, %v5039
        %v5041 = vpop.f32.mrb[0].mxu0
        %5042 = vdwg.mxu0
        %v5043 = vadd.f32 %v4946, %v5013
        %v5044 = vadd.f32 %v4947, %v5016
        %v5045 = vadd.f32 %v4948, %v5021
        %v5046 = vadd.f32 %v4949, %v5024
        %v5047 = vadd.f32 %v4950, %v5029
        %v5048 = vadd.f32 %v4951, %v5032
        %v5049 = vadd.f32 %v4952, %v5037
        %v5050 = vadd.f32 %v4953, %v5040
        %v5051 = vsel %vm1300, %v5043, 0.0
        %5052 = vadd.xlane.f32.xlu0 %v5051
        %v5053 = vpop.xlane.xlu0 %5052
        %v5054 = vsel %vm1300, %v5044, 0.0
        %5055 = vadd.xlane.f32.xlu0 %v5054
        %v5056 = vpop.xlane.xlu0 %5055
        %v5057 = vsel %vm1300, %v5045, 0.0
        %5058 = vadd.xlane.f32.xlu0 %v5057
        %v5059 = vpop.xlane.xlu0 %5058
        %v5060 = vsel %vm1300, %v5046, 0.0
        %5061 = vadd.xlane.f32.xlu0 %v5060
        %v5062 = vpop.xlane.xlu0 %5061
        %v5063 = vsel %vm1300, %v5047, 0.0
        %5064 = vadd.xlane.f32.xlu0 %v5063
        %v5065 = vpop.xlane.xlu0 %5064
        %v5066 = vsel %vm1300, %v5048, 0.0
        %5067 = vadd.xlane.f32.xlu0 %v5066
        %v5068 = vpop.xlane.xlu0 %5067
        %v5069 = vsel %vm1300, %v5049, 0.0
        %5070 = vadd.xlane.f32.xlu0 %v5069
        %v5071 = vpop.xlane.xlu0 %5070
        %v5072 = vsel %vm1300, %v5050, 0.0
        %5073 = vadd.xlane.f32.xlu0 %v5072
        %v5074 = vpop.xlane.xlu0 %5073
        %v5075 = vmul.f32 %v5053, %v1325
        %v5076 = vmul.f32 %v5056, %v1325
        %v5077 = vmul.f32 %v5059, %v1325
        %v5078 = vmul.f32 %v5062, %v1325
        %v5079 = vmul.f32 %v5065, %v1325
        %v5080 = vmul.f32 %v5068, %v1325
        %v5081 = vmul.f32 %v5071, %v1325
        %v5082 = vmul.f32 %v5074, %v1325
        %v5083 = vsub.f32 %v5043, %v5075
        %v5084 = vsub.f32 %v5044, %v5076
        %v5085 = vsub.f32 %v5045, %v5077
        %v5086 = vsub.f32 %v5046, %v5078
        %v5087 = vsub.f32 %v5047, %v5079
        %v5088 = vsub.f32 %v5048, %v5080
        %v5089 = vsub.f32 %v5049, %v5081
        %v5090 = vsub.f32 %v5050, %v5082
        %v5091 = vmul.f32 %v5083, %v5083
        %v5092 = vmul.f32 %v5084, %v5084
        %v5093 = vmul.f32 %v5085, %v5085
        %v5094 = vmul.f32 %v5086, %v5086
        %v5095 = vmul.f32 %v5087, %v5087
        %v5096 = vmul.f32 %v5088, %v5088
        %v5097 = vmul.f32 %v5089, %v5089
        %v5098 = vmul.f32 %v5090, %v5090
        %v5099 = vsel %vm1300, %v5091, 0.0
        %5100 = vadd.xlane.f32.xlu0 %v5099
        %v5101 = vpop.xlane.xlu0 %5100
        %v5102 = vsel %vm1300, %v5092, 0.0
        %5103 = vadd.xlane.f32.xlu0 %v5102
        %v5104 = vpop.xlane.xlu0 %5103
        %v5105 = vsel %vm1300, %v5093, 0.0
        %5106 = vadd.xlane.f32.xlu0 %v5105
        %v5107 = vpop.xlane.xlu0 %5106
        %v5108 = vsel %vm1300, %v5094, 0.0
        %5109 = vadd.xlane.f32.xlu0 %v5108
        %v5110 = vpop.xlane.xlu0 %5109
        %v5111 = vsel %vm1300, %v5095, 0.0
        %5112 = vadd.xlane.f32.xlu0 %v5111
        %v5113 = vpop.xlane.xlu0 %5112
        %v5114 = vsel %vm1300, %v5096, 0.0
        %5115 = vadd.xlane.f32.xlu0 %v5114
        %v5116 = vpop.xlane.xlu0 %5115
        %v5117 = vsel %vm1300, %v5097, 0.0
        %5118 = vadd.xlane.f32.xlu0 %v5117
        %v5119 = vpop.xlane.xlu0 %5118
        %v5120 = vsel %vm1300, %v5098, 0.0
        %5121 = vadd.xlane.f32.xlu0 %v5120
        %v5122 = vpop.xlane.xlu0 %5121
        %v5123 = vmul.f32 %v5101, %v1325
        %v5124 = vmul.f32 %v5104, %v1325
        %v5125 = vmul.f32 %v5107, %v1325
        %v5126 = vmul.f32 %v5110, %v1325
        %v5127 = vmul.f32 %v5113, %v1325
        %v5128 = vmul.f32 %v5116, %v1325
        %v5129 = vmul.f32 %v5119, %v1325
        %v5130 = vmul.f32 %v5122, %v1325
        %v5131 = vadd.f32 %v5123, 1e-05
        %v5132 = vadd.f32 %v5124, 1e-05
        %v5133 = vadd.f32 %v5125, 1e-05
        %v5134 = vadd.f32 %v5126, 1e-05
        %v5135 = vadd.f32 %v5127, 1e-05
        %v5136 = vadd.f32 %v5128, 1e-05
        %v5137 = vadd.f32 %v5129, 1e-05
        %v5138 = vadd.f32 %v5130, 1e-05
        %v5139 = vrsqrt.pop %v5131
        %v5140 = vrsqrt.pop %v5132
        %v5141 = vrsqrt.pop %v5133
        %v5142 = vrsqrt.pop %v5134
        %v5143 = vrsqrt.pop %v5135
        %v5144 = vrsqrt.pop %v5136
        %v5145 = vrsqrt.pop %v5137
        %v5146 = vrsqrt.pop %v5138
        %v5147 = vmul.f32 %v5083, %v5139
        %v5148 = vmul.f32 %v5084, %v5140
        %v5149 = vmul.f32 %v5085, %v5141
        %v5150 = vmul.f32 %v5086, %v5142
        %v5151 = vmul.f32 %v5087, %v5143
        %v5152 = vmul.f32 %v5088, %v5144
        %v5153 = vmul.f32 %v5089, %v5145
        %v5154 = vmul.f32 %v5090, %v5146
        %v5155 = vlaneseq
        %v5156 = vshrl.u32 %v5155, 7
        %v5157 = vsub.s32 3, %v5156
        %v5158 = vrot.slane %v3605, %v5157
        %v5159 = vmul.f32 %v5147, %v5158
        %v5160 = vmul.f32 %v5148, %v5158
        %v5161 = vmul.f32 %v5149, %v5158
        %v5162 = vmul.f32 %v5150, %v5158
        %v5163 = vmul.f32 %v5151, %v5158
        %v5164 = vmul.f32 %v5152, %v5158
        %v5165 = vmul.f32 %v5153, %v5158
        %v5166 = vmul.f32 %v5154, %v5158
        %v5167 = vlaneseq
        %v5168 = vshrl.u32 %v5167, 7
        %v5169 = vsub.s32 4, %v5168
        %v5170 = vrot.slane %v3605, %v5169
        %v5171 = vadd.f32 %v5159, %v5170
        %v5172 = vadd.f32 %v5160, %v5170
        %v5173 = vadd.f32 %v5161, %v5170
        %v5174 = vadd.f32 %v5162, %v5170
        %v5175 = vadd.f32 %v5163, %v5170
        %v5176 = vadd.f32 %v5164, %v5170
        %v5177 = vadd.f32 %v5165, %v5170
        %v5178 = vadd.f32 %v5166, %v5170
        %v5179 = vadd.f32 %v3597, %v5171
        %v5180 = vadd.f32 %v3598, %v5172
        %v5181 = vadd.f32 %v3599, %v5173
        %v5182 = vadd.f32 %v3600, %v5174
        %v5183 = vadd.f32 %v3601, %v5175
        %v5184 = vadd.f32 %v3602, %v5176
        %v5185 = vadd.f32 %v3603, %v5177
        %v5186 = vadd.f32 %v3604, %v5178
        %v5187 = vpack.c.bf16 %v5180, %v5179
        %v5188 = vpack.c.bf16 %v5182, %v5181
        %v5189 = vpack.c.bf16 %v5184, %v5183
        %v5190 = vpack.c.bf16 %v5186, %v5185
        %v5191 = vld [vmem:[%s27] sm:$0xf]
        %v5192 = vld [vmem:[%s27 + $0x4] sm:$0xf]
        %v5193 = vld [vmem:[%s27 + $0x8] sm:$0xf]
        %v5194 = vld [vmem:[%s27 + $0xc] sm:$0xf]
        %v5195 = vld [vmem:[%s33] sm:$0x1]
        %v5197 = vlaneseq
        %v5198 = vshrl.u32 %v5197, 7
        %v5199 = vsub.s32 0, %v5198
        %v5200 = vrot.slane %v5195, %v5199
        %v5206 = vunpack.c.l.b16 %v5191
        %v5207 = vunpack.c.l.b16 %v5192
        %v5208 = vunpack.c.l.b16 %v5193
        %v5209 = vunpack.c.l.b16 %v5194
        %v5210 = vpack.c.b16 %v5207, %v5206
        %v5211 = vpack.c.b16 %v5209, %v5208
        %v5215 = vsel %vm1300, %v5187, 0
        %v5218 = vsel %vm1300, %v5188, 0
        %v5221 = vsel %vm1300, %v5189, 0
        %v5224 = vsel %vm1300, %v5190, 0
        %5226 = vmatprep.subr.bf16.mxu0 0
        %5227 = vmatpush1.bf16.msra.mxu0 %v5210
        %5228 = vmatprep.subr.bf16.mxu0 0
        %5229 = vmatpush1.bf16.msra.mxu0 %v5211
        %5230 = vmatprep.subr.bf16.mxu0 0
        %5231 = vmatpush1.bf16.msra.mxu0 0
        %5232 = vmatprep.subr.bf16.mxu0 0
        %5233 = vmatpush1.bf16.msra.mxu0 0
        %5234 = vmatprep.subr.bf16.mxu0 0
        %5235 = vmatpush1.bf16.msra.mxu0 0
        %5236 = vmatprep.subr.bf16.mxu0 0
        %5237 = vmatpush1.bf16.msra.mxu0 0
        %5238 = vmatprep.subr.bf16.mxu0 0
        %5239 = vmatpush1.bf16.msra.mxu0 0
        %5240 = vmatprep.subr.bf16.mxu0 0
        %5241 = vmatpush1.bf16.msra.mxu0 0
        %5242 = vmatprep.subr.bf16.mxu0 0
        %5243 = vmatpush1.bf16.msra.mxu0 0
        %5244 = vmatprep.subr.bf16.mxu0 0
        %5245 = vmatpush1.bf16.msra.mxu0 0
        %5246 = vmatprep.subr.bf16.mxu0 0
        %5247 = vmatpush1.bf16.msra.mxu0 0
        %5248 = vmatprep.subr.bf16.mxu0 0
        %5249 = vmatpush1.bf16.msra.mxu0 0
        %5250 = vmatprep.subr.bf16.mxu0 0
        %5251 = vmatpush1.bf16.msra.mxu0 0
        %5252 = vmatprep.subr.bf16.mxu0 0
        %5253 = vmatpush1.bf16.msra.mxu0 0
        %5254 = vmatprep.subr.bf16.mxu0 0
        %5255 = vmatpush1.bf16.msra.mxu0 0
        %5256 = vmatprep.subr.bf16.mxu0 0
        %5257 = vmatpush1.bf16.msra.mxu0 0
        %5258 = vmatprep.mubr.bf16.mxu0 0
        %5259 = vmatmul.mubr.bf16.gmra.mrb[0].mxu0 %v5215
        %v5260 = vpop.f32.mrb[0].mxu0
        %v5261 = vadd.f32 %v5200, %v5260
        %v5262 = vpop.f32.mrb[0].mxu0
        %v5263 = vpop.f32.mrb[0].mxu0
        %v5264 = vadd.f32 %v5200, %v5263
        %v5265 = vpop.f32.mrb[0].mxu0
        %5266 = vmatprep.mubr.bf16.mxu0 0
        %5267 = vmatmul.mubr.bf16.gmra.mrb[0].mxu0 %v5218
        %v5268 = vpop.f32.mrb[0].mxu0
        %v5269 = vadd.f32 %v5200, %v5268
        %v5270 = vpop.f32.mrb[0].mxu0
        %v5271 = vpop.f32.mrb[0].mxu0
        %v5272 = vadd.f32 %v5200, %v5271
        %v5273 = vpop.f32.mrb[0].mxu0
        %5274 = vmatprep.mubr.bf16.mxu0 0
        %5275 = vmatmul.mubr.bf16.gmra.mrb[0].mxu0 %v5221
        %v5276 = vpop.f32.mrb[0].mxu0
        %v5277 = vadd.f32 %v5200, %v5276
        %v5278 = vpop.f32.mrb[0].mxu0
        %v5279 = vpop.f32.mrb[0].mxu0
        %v5280 = vadd.f32 %v5200, %v5279
        %v5281 = vpop.f32.mrb[0].mxu0
        %5282 = vmatprep.mubr.bf16.mxu0 0
        %5283 = vmatmul.mubr.bf16.gmra.mrb[0].mxu0 %v5224
        %v5284 = vpop.f32.mrb[0].mxu0
        %v5285 = vadd.f32 %v5200, %v5284
        %v5286 = vpop.f32.mrb[0].mxu0
        %v5287 = vpop.f32.mrb[0].mxu0
        %v5288 = vadd.f32 %v5200, %v5287
        %v5289 = vpop.f32.mrb[0].mxu0
        %5290 = vdwg.mxu0
        %v5291 = vmul.f32 %v5261, 0.5
        %v5292 = vmul.f32 %v5264, 0.5
        %v5293 = vmul.f32 %v5269, 0.5
        %v5294 = vmul.f32 %v5272, 0.5
        %v5295 = vmul.f32 %v5277, 0.5
        %v5296 = vmul.f32 %v5280, 0.5
        %v5297 = vmul.f32 %v5285, 0.5
        %v5298 = vmul.f32 %v5288, 0.5
        %v5299 = vmul.f32 %v5261, 0.70710677
        %v5300 = vmul.f32 %v5264, 0.70710677
        %v5301 = vmul.f32 %v5269, 0.70710677
        %v5302 = vmul.f32 %v5272, 0.70710677
        %v5303 = vmul.f32 %v5277, 0.70710677
        %v5304 = vmul.f32 %v5280, 0.70710677
        %v5305 = vmul.f32 %v5285, 0.70710677
        %v5306 = vmul.f32 %v5288, 0.70710677
        %vm5307 = vcmp.lt.f32.partialorder %v5299, 0.0
        %vm5308 = vcmp.lt.f32.partialorder %v5300, 0.0
        %vm5309 = vcmp.lt.f32.partialorder %v5301, 0.0
        %vm5310 = vcmp.lt.f32.partialorder %v5302, 0.0
        %vm5311 = vcmp.lt.f32.partialorder %v5303, 0.0
        %vm5312 = vcmp.lt.f32.partialorder %v5304, 0.0
        %vm5313 = vcmp.lt.f32.partialorder %v5305, 0.0
        %vm5314 = vcmp.lt.f32.partialorder %v5306, 0.0
        %v5315 = vsel %vm5307, -1.0, 1.0
        %v5316 = vsel %vm5308, -1.0, 1.0
        %v5317 = vsel %vm5309, -1.0, 1.0
        %v5318 = vsel %vm5310, -1.0, 1.0
        %v5319 = vsel %vm5311, -1.0, 1.0
        %v5320 = vsel %vm5312, -1.0, 1.0
        %v5321 = vsel %vm5313, -1.0, 1.0
        %v5322 = vsel %vm5314, -1.0, 1.0
        %v5323 = vand.u32 2147483647, %v5299
        %v5324 = vand.u32 2147483647, %v5300
        %v5325 = vand.u32 2147483647, %v5301
        %v5326 = vand.u32 2147483647, %v5302
        %v5327 = vand.u32 2147483647, %v5303
        %v5328 = vand.u32 2147483647, %v5304
        %v5329 = vand.u32 2147483647, %v5305
        %v5330 = vand.u32 2147483647, %v5306
        %v5331 = vmul.f32 %v5323, 0.3275911
        %v5332 = vmul.f32 %v5324, 0.3275911
        %v5333 = vmul.f32 %v5325, 0.3275911
        %v5334 = vmul.f32 %v5326, 0.3275911
        %v5335 = vmul.f32 %v5327, 0.3275911
        %v5336 = vmul.f32 %v5328, 0.3275911
        %v5337 = vmul.f32 %v5329, 0.3275911
        %v5338 = vmul.f32 %v5330, 0.3275911
        %v5339 = vadd.f32 %v5331, 1.0
        %v5340 = vadd.f32 %v5332, 1.0
        %v5341 = vadd.f32 %v5333, 1.0
        %v5342 = vadd.f32 %v5334, 1.0
        %v5343 = vadd.f32 %v5335, 1.0
        %v5344 = vadd.f32 %v5336, 1.0
        %v5345 = vadd.f32 %v5337, 1.0
        %v5346 = vadd.f32 %v5338, 1.0
        %v5347 = vrcp.pop %v5339
        %v5348 = vmul.f32 1.0, %v5347
        %v5349 = vrcp.pop %v5340
        %v5350 = vmul.f32 1.0, %v5349
        %v5351 = vrcp.pop %v5341
        %v5352 = vmul.f32 1.0, %v5351
        %v5353 = vrcp.pop %v5342
        %v5354 = vmul.f32 1.0, %v5353
        %v5355 = vrcp.pop %v5343
        %v5356 = vmul.f32 1.0, %v5355
        %v5357 = vrcp.pop %v5344
        %v5358 = vmul.f32 1.0, %v5357
        %v5359 = vrcp.pop %v5345
        %v5360 = vmul.f32 1.0, %v5359
        %v5361 = vrcp.pop %v5346
        %v5362 = vmul.f32 1.0, %v5361
        %v5363 = vmul.f32 %v5348, 1.0614054
        %v5364 = vmul.f32 %v5350, 1.0614054
        %v5365 = vmul.f32 %v5352, 1.0614054
        %v5366 = vmul.f32 %v5354, 1.0614054
        %v5367 = vmul.f32 %v5356, 1.0614054
        %v5368 = vmul.f32 %v5358, 1.0614054
        %v5369 = vmul.f32 %v5360, 1.0614054
        %v5370 = vmul.f32 %v5362, 1.0614054
        %v5371 = vadd.f32 %v5363, -1.4531521
        %v5372 = vadd.f32 %v5364, -1.4531521
        %v5373 = vadd.f32 %v5365, -1.4531521
        %v5374 = vadd.f32 %v5366, -1.4531521
        %v5375 = vadd.f32 %v5367, -1.4531521
        %v5376 = vadd.f32 %v5368, -1.4531521
        %v5377 = vadd.f32 %v5369, -1.4531521
        %v5378 = vadd.f32 %v5370, -1.4531521
        %v5379 = vmul.f32 %v5371, %v5348
        %v5380 = vmul.f32 %v5372, %v5350
        %v5381 = vmul.f32 %v5373, %v5352
        %v5382 = vmul.f32 %v5374, %v5354
        %v5383 = vmul.f32 %v5375, %v5356
        %v5384 = vmul.f32 %v5376, %v5358
        %v5385 = vmul.f32 %v5377, %v5360
        %v5386 = vmul.f32 %v5378, %v5362
        %v5387 = vadd.f32 %v5379, 1.4214138
        %v5388 = vadd.f32 %v5380, 1.4214138
        %v5389 = vadd.f32 %v5381, 1.4214138
        %v5390 = vadd.f32 %v5382, 1.4214138
        %v5391 = vadd.f32 %v5383, 1.4214138
        %v5392 = vadd.f32 %v5384, 1.4214138
        %v5393 = vadd.f32 %v5385, 1.4214138
        %v5394 = vadd.f32 %v5386, 1.4214138
        %v5395 = vmul.f32 %v5387, %v5348
        %v5396 = vmul.f32 %v5388, %v5350
        %v5397 = vmul.f32 %v5389, %v5352
        %v5398 = vmul.f32 %v5390, %v5354
        %v5399 = vmul.f32 %v5391, %v5356
        %v5400 = vmul.f32 %v5392, %v5358
        %v5401 = vmul.f32 %v5393, %v5360
        %v5402 = vmul.f32 %v5394, %v5362
        %v5403 = vadd.f32 %v5395, -0.28449672
        %v5404 = vadd.f32 %v5396, -0.28449672
        %v5405 = vadd.f32 %v5397, -0.28449672
        %v5406 = vadd.f32 %v5398, -0.28449672
        %v5407 = vadd.f32 %v5399, -0.28449672
        %v5408 = vadd.f32 %v5400, -0.28449672
        %v5409 = vadd.f32 %v5401, -0.28449672
        %v5410 = vadd.f32 %v5402, -0.28449672
        %v5411 = vmul.f32 %v5403, %v5348
        %v5412 = vmul.f32 %v5404, %v5350
        %v5413 = vmul.f32 %v5405, %v5352
        %v5414 = vmul.f32 %v5406, %v5354
        %v5415 = vmul.f32 %v5407, %v5356
        %v5416 = vmul.f32 %v5408, %v5358
        %v5417 = vmul.f32 %v5409, %v5360
        %v5418 = vmul.f32 %v5410, %v5362
        %v5419 = vadd.f32 %v5411, 0.2548296
        %v5420 = vadd.f32 %v5412, 0.2548296
        %v5421 = vadd.f32 %v5413, 0.2548296
        %v5422 = vadd.f32 %v5414, 0.2548296
        %v5423 = vadd.f32 %v5415, 0.2548296
        %v5424 = vadd.f32 %v5416, 0.2548296
        %v5425 = vadd.f32 %v5417, 0.2548296
        %v5426 = vadd.f32 %v5418, 0.2548296
        %v5427 = vmul.f32 %v5419, %v5348
        %v5428 = vmul.f32 %v5420, %v5350
        %v5429 = vmul.f32 %v5421, %v5352
        %v5430 = vmul.f32 %v5422, %v5354
        %v5431 = vmul.f32 %v5423, %v5356
        %v5432 = vmul.f32 %v5424, %v5358
        %v5433 = vmul.f32 %v5425, %v5360
        %v5434 = vmul.f32 %v5426, %v5362
        %v5435 = vsub.f32 0.0, %v5323
        %v5436 = vsub.f32 0.0, %v5324
        %v5437 = vsub.f32 0.0, %v5325
        %v5438 = vsub.f32 0.0, %v5326
        %v5439 = vsub.f32 0.0, %v5327
        %v5440 = vsub.f32 0.0, %v5328
        %v5441 = vsub.f32 0.0, %v5329
        %v5442 = vsub.f32 0.0, %v5330
        %v5443 = vmul.f32 %v5435, %v5323
        %v5444 = vmul.f32 %v5436, %v5324
        %v5445 = vmul.f32 %v5437, %v5325
        %v5446 = vmul.f32 %v5438, %v5326
        %v5447 = vmul.f32 %v5439, %v5327
        %v5448 = vmul.f32 %v5440, %v5328
        %v5449 = vmul.f32 %v5441, %v5329
        %v5450 = vmul.f32 %v5442, %v5330
        %v5451 = vmul.f32 %v5443, 1.442695
        %v5452 = vpow.pop %v5451
        %v5453 = vmul.f32 %v5444, 1.442695
        %v5454 = vpow.pop %v5453
        %v5455 = vmul.f32 %v5445, 1.442695
        %v5456 = vpow.pop %v5455
        %v5457 = vmul.f32 %v5446, 1.442695
        %v5458 = vpow.pop %v5457
        %v5459 = vmul.f32 %v5447, 1.442695
        %v5460 = vpow.pop %v5459
        %v5461 = vmul.f32 %v5448, 1.442695
        %v5462 = vpow.pop %v5461
        %v5463 = vmul.f32 %v5449, 1.442695
        %v5464 = vpow.pop %v5463
        %v5465 = vmul.f32 %v5450, 1.442695
        %v5466 = vpow.pop %v5465
        %v5467 = vmul.f32 %v5427, %v5452
        %v5468 = vmul.f32 %v5428, %v5454
        %v5469 = vmul.f32 %v5429, %v5456
        %v5470 = vmul.f32 %v5430, %v5458
        %v5471 = vmul.f32 %v5431, %v5460
        %v5472 = vmul.f32 %v5432, %v5462
        %v5473 = vmul.f32 %v5433, %v5464
        %v5474 = vmul.f32 %v5434, %v5466
        %v5475 = vsub.f32 1.0, %v5467
        %v5476 = vsub.f32 1.0, %v5468
        %v5477 = vsub.f32 1.0, %v5469
        %v5478 = vsub.f32 1.0, %v5470
        %v5479 = vsub.f32 1.0, %v5471
        %v5480 = vsub.f32 1.0, %v5472
        %v5481 = vsub.f32 1.0, %v5473
        %v5482 = vsub.f32 1.0, %v5474
        %v5483 = vmul.f32 %v5315, %v5475
        %v5484 = vmul.f32 %v5316, %v5476
        %v5485 = vmul.f32 %v5317, %v5477
        %v5486 = vmul.f32 %v5318, %v5478
        %v5487 = vmul.f32 %v5319, %v5479
        %v5488 = vmul.f32 %v5320, %v5480
        %v5489 = vmul.f32 %v5321, %v5481
        %v5490 = vmul.f32 %v5322, %v5482
        %v5491 = vadd.f32 %v5483, 1.0
        %v5492 = vadd.f32 %v5484, 1.0
        %v5493 = vadd.f32 %v5485, 1.0
        %v5494 = vadd.f32 %v5486, 1.0
        %v5495 = vadd.f32 %v5487, 1.0
        %v5496 = vadd.f32 %v5488, 1.0
        %v5497 = vadd.f32 %v5489, 1.0
        %v5498 = vadd.f32 %v5490, 1.0
        %v5499 = vmul.f32 %v5291, %v5491
        %v5500 = vmul.f32 %v5292, %v5492
        %v5501 = vmul.f32 %v5293, %v5493
        %v5502 = vmul.f32 %v5294, %v5494
        %v5503 = vmul.f32 %v5295, %v5495
        %v5504 = vmul.f32 %v5296, %v5496
        %v5505 = vmul.f32 %v5297, %v5497
        %v5506 = vmul.f32 %v5298, %v5498
        %v5507 = vpack.c.bf16 %v5500, %v5499
        %v5508 = vpack.c.bf16 %v5502, %v5501
        %v5509 = vpack.c.bf16 %v5504, %v5503
        %v5510 = vpack.c.bf16 %v5506, %v5505
        %v5511 = vld [vmem:[%s29] sm:$0xf]
        %v5512 = vld [vmem:[%s29 + $0x4] sm:$0xf]
        %v5513 = vld [vmem:[%s29 + $0x8] sm:$0xf]
        %v5514 = vld [vmem:[%s29 + $0xc] sm:$0xf]
        %v5515 = vld [vmem:[%s29 + $0x10] sm:$0xf]
        %v5516 = vld [vmem:[%s29 + $0x14] sm:$0xf]
        %v5517 = vld [vmem:[%s29 + $0x18] sm:$0xf]
        %v5518 = vld [vmem:[%s29 + $0x1c] sm:$0xf]
        %v5519 = vld [vmem:[%s29 + $0x20] sm:$0xf]
        %v5520 = vld [vmem:[%s29 + $0x24] sm:$0xf]
        %v5521 = vld [vmem:[%s29 + $0x28] sm:$0xf]
        %v5522 = vld [vmem:[%s29 + $0x2c] sm:$0xf]
        %v5523 = vld [vmem:[%s29 + $0x30] sm:$0xf]
        %v5524 = vld [vmem:[%s29 + $0x34] sm:$0xf]
        %v5525 = vld [vmem:[%s29 + $0x38] sm:$0xf]
        %v5526 = vld [vmem:[%s29 + $0x3c] sm:$0xf]
        %v5527 = vlaneseq
        %v5528 = vshrl.u32 %v5527, 7
        %v5529 = vsub.s32 5, %v5528
        %v5530 = vrot.slane %v3605, %v5529
        %v5547 = vunpack.c.l.b16 %v5511
        %v5548 = vunpack.c.l.b16 %v5512
        %v5549 = vunpack.c.l.b16 %v5513
        %v5550 = vunpack.c.l.b16 %v5514
        %v5551 = vunpack.c.l.b16 %v5515
        %v5552 = vunpack.c.l.b16 %v5516
        %v5553 = vunpack.c.l.b16 %v5517
        %v5554 = vunpack.c.l.b16 %v5518
        %v5555 = vunpack.c.l.b16 %v5519
        %v5556 = vunpack.c.l.b16 %v5520
        %v5557 = vunpack.c.l.b16 %v5521
        %v5558 = vunpack.c.l.b16 %v5522
        %v5559 = vunpack.c.l.b16 %v5523
        %v5560 = vunpack.c.l.b16 %v5524
        %v5561 = vunpack.c.l.b16 %v5525
        %v5562 = vunpack.c.l.b16 %v5526
        %v5563 = vpack.c.b16 %v5548, %v5547
        %v5564 = vpack.c.b16 %v5550, %v5549
        %v5565 = vpack.c.b16 %v5552, %v5551
        %v5566 = vpack.c.b16 %v5554, %v5553
        %v5567 = vpack.c.b16 %v5556, %v5555
        %v5568 = vpack.c.b16 %v5558, %v5557
        %v5569 = vpack.c.b16 %v5560, %v5559
        %v5570 = vpack.c.b16 %v5562, %v5561
        %5579 = vmatprep.subr.bf16.mxu0 0
        %5580 = vmatpush1.bf16.msra.mxu0 %v5563
        %5581 = vmatprep.subr.bf16.mxu0 0
        %5582 = vmatpush1.bf16.msra.mxu0 %v5564
        %5583 = vmatprep.subr.bf16.mxu0 0
        %5584 = vmatpush1.bf16.msra.mxu0 %v5565
        %5585 = vmatprep.subr.bf16.mxu0 0
        %5586 = vmatpush1.bf16.msra.mxu0 %v5566
        %5587 = vmatprep.subr.bf16.mxu0 0
        %5588 = vmatpush1.bf16.msra.mxu0 %v5567
        %5589 = vmatprep.subr.bf16.mxu0 0
        %5590 = vmatpush1.bf16.msra.mxu0 %v5568
        %5591 = vmatprep.subr.bf16.mxu0 0
        %5592 = vmatpush1.bf16.msra.mxu0 %v5569
        %5593 = vmatprep.subr.bf16.mxu0 0
        %5594 = vmatpush1.bf16.msra.mxu0 %v5570
        %5595 = vmatprep.subr.bf16.mxu0 0
        %5596 = vmatpush1.bf16.msra.mxu0 0
        %5597 = vmatprep.subr.bf16.mxu0 0
        %5598 = vmatpush1.bf16.msra.mxu0 0
        %5599 = vmatprep.subr.bf16.mxu0 0
        %5600 = vmatpush1.bf16.msra.mxu0 0
        %5601 = vmatprep.subr.bf16.mxu0 0
        %5602 = vmatpush1.bf16.msra.mxu0 0
        %5603 = vmatprep.subr.bf16.mxu0 0
        %5604 = vmatpush1.bf16.msra.mxu0 0
        %5605 = vmatprep.subr.bf16.mxu0 0
        %5606 = vmatpush1.bf16.msra.mxu0 0
        %5607 = vmatprep.subr.bf16.mxu0 0
        %5608 = vmatpush1.bf16.msra.mxu0 0
        %5609 = vmatprep.subr.bf16.mxu0 0
        %5610 = vmatpush1.bf16.msra.mxu0 0
        %5611 = vmatprep.mubr.bf16.mxu0 0
        %5612 = vmatmul.mubr.bf16.gmra.mrb[0].mxu0 %v5507
        %v5613 = vpop.f32.mrb[0].mxu0
        %v5614 = vadd.f32 %v5530, %v5613
        %v5615 = vpop.f32.mrb[0].mxu0
        %v5616 = vpop.f32.mrb[0].mxu0
        %v5617 = vadd.f32 %v5530, %v5616
        %v5618 = vpop.f32.mrb[0].mxu0
        %5619 = vmatprep.mubr.bf16.mxu0 0
        %5620 = vmatmul.mubr.bf16.gmra.mrb[0].mxu0 %v5508
        %v5621 = vpop.f32.mrb[0].mxu0
        %v5622 = vadd.f32 %v5530, %v5621
        %v5623 = vpop.f32.mrb[0].mxu0
        %v5624 = vpop.f32.mrb[0].mxu0
        %v5625 = vadd.f32 %v5530, %v5624
        %v5626 = vpop.f32.mrb[0].mxu0
        %5627 = vmatprep.mubr.bf16.mxu0 0
        %5628 = vmatmul.mubr.bf16.gmra.mrb[0].mxu0 %v5509
        %v5629 = vpop.f32.mrb[0].mxu0
        %v5630 = vadd.f32 %v5530, %v5629
        %v5631 = vpop.f32.mrb[0].mxu0
        %v5632 = vpop.f32.mrb[0].mxu0
        %v5633 = vadd.f32 %v5530, %v5632
        %v5634 = vpop.f32.mrb[0].mxu0
        %5635 = vmatprep.mubr.bf16.mxu0 0
        %5636 = vmatmul.mubr.bf16.gmra.mrb[0].mxu0 %v5510
        %v5637 = vpop.f32.mrb[0].mxu0
        %v5638 = vadd.f32 %v5530, %v5637
        %v5639 = vpop.f32.mrb[0].mxu0
        %v5640 = vpop.f32.mrb[0].mxu0
        %v5641 = vadd.f32 %v5530, %v5640
        %v5642 = vpop.f32.mrb[0].mxu0
        %5643 = vdwg.mxu0
        %v5644 = vsel %vm1300, %v5614, 0.0
        %5645 = vadd.xlane.f32.xlu0 %v5644
        %v5646 = vpop.xlane.xlu0 %5645
        %v5647 = vsel %vm1300, %v5617, 0.0
        %5648 = vadd.xlane.f32.xlu0 %v5647
        %v5649 = vpop.xlane.xlu0 %5648
        %v5650 = vsel %vm1300, %v5622, 0.0
        %5651 = vadd.xlane.f32.xlu0 %v5650
        %v5652 = vpop.xlane.xlu0 %5651
        %v5653 = vsel %vm1300, %v5625, 0.0
        %5654 = vadd.xlane.f32.xlu0 %v5653
        %v5655 = vpop.xlane.xlu0 %5654
        %v5656 = vsel %vm1300, %v5630, 0.0
        %5657 = vadd.xlane.f32.xlu0 %v5656
        %v5658 = vpop.xlane.xlu0 %5657
        %v5659 = vsel %vm1300, %v5633, 0.0
        %5660 = vadd.xlane.f32.xlu0 %v5659
        %v5661 = vpop.xlane.xlu0 %5660
        %v5662 = vsel %vm1300, %v5638, 0.0
        %5663 = vadd.xlane.f32.xlu0 %v5662
        %v5664 = vpop.xlane.xlu0 %5663
        %v5665 = vsel %vm1300, %v5641, 0.0
        %5666 = vadd.xlane.f32.xlu0 %v5665
        %v5667 = vpop.xlane.xlu0 %5666
        %v5668 = vmul.f32 %v5646, %v1325
        %v5669 = vmul.f32 %v5649, %v1325
        %v5670 = vmul.f32 %v5652, %v1325
        %v5671 = vmul.f32 %v5655, %v1325
        %v5672 = vmul.f32 %v5658, %v1325
        %v5673 = vmul.f32 %v5661, %v1325
        %v5674 = vmul.f32 %v5664, %v1325
        %v5675 = vmul.f32 %v5667, %v1325
        %v5676 = vsub.f32 %v5614, %v5668
        %v5677 = vsub.f32 %v5617, %v5669
        %v5678 = vsub.f32 %v5622, %v5670
        %v5679 = vsub.f32 %v5625, %v5671
        %v5680 = vsub.f32 %v5630, %v5672
        %v5681 = vsub.f32 %v5633, %v5673
        %v5682 = vsub.f32 %v5638, %v5674
        %v5683 = vsub.f32 %v5641, %v5675
        %v5684 = vmul.f32 %v5676, %v5676
        %v5685 = vmul.f32 %v5677, %v5677
        %v5686 = vmul.f32 %v5678, %v5678
        %v5687 = vmul.f32 %v5679, %v5679
        %v5688 = vmul.f32 %v5680, %v5680
        %v5689 = vmul.f32 %v5681, %v5681
        %v5690 = vmul.f32 %v5682, %v5682
        %v5691 = vmul.f32 %v5683, %v5683
        %v5692 = vsel %vm1300, %v5684, 0.0
        %5693 = vadd.xlane.f32.xlu0 %v5692
        %v5694 = vpop.xlane.xlu0 %5693
        %v5695 = vsel %vm1300, %v5685, 0.0
        %5696 = vadd.xlane.f32.xlu0 %v5695
        %v5697 = vpop.xlane.xlu0 %5696
        %v5698 = vsel %vm1300, %v5686, 0.0
        %5699 = vadd.xlane.f32.xlu0 %v5698
        %v5700 = vpop.xlane.xlu0 %5699
        %v5701 = vsel %vm1300, %v5687, 0.0
        %5702 = vadd.xlane.f32.xlu0 %v5701
        %v5703 = vpop.xlane.xlu0 %5702
        %v5704 = vsel %vm1300, %v5688, 0.0
        %5705 = vadd.xlane.f32.xlu0 %v5704
        %v5706 = vpop.xlane.xlu0 %5705
        %v5707 = vsel %vm1300, %v5689, 0.0
        %5708 = vadd.xlane.f32.xlu0 %v5707
        %v5709 = vpop.xlane.xlu0 %5708
        %v5710 = vsel %vm1300, %v5690, 0.0
        %5711 = vadd.xlane.f32.xlu0 %v5710
        %v5712 = vpop.xlane.xlu0 %5711
        %v5713 = vsel %vm1300, %v5691, 0.0
        %5714 = vadd.xlane.f32.xlu0 %v5713
        %v5715 = vpop.xlane.xlu0 %5714
        %v5716 = vmul.f32 %v5694, %v1325
        %v5717 = vmul.f32 %v5697, %v1325
        %v5718 = vmul.f32 %v5700, %v1325
        %v5719 = vmul.f32 %v5703, %v1325
        %v5720 = vmul.f32 %v5706, %v1325
        %v5721 = vmul.f32 %v5709, %v1325
        %v5722 = vmul.f32 %v5712, %v1325
        %v5723 = vmul.f32 %v5715, %v1325
        %v5724 = vadd.f32 %v5716, 1e-05
        %v5725 = vadd.f32 %v5717, 1e-05
        %v5726 = vadd.f32 %v5718, 1e-05
        %v5727 = vadd.f32 %v5719, 1e-05
        %v5728 = vadd.f32 %v5720, 1e-05
        %v5729 = vadd.f32 %v5721, 1e-05
        %v5730 = vadd.f32 %v5722, 1e-05
        %v5731 = vadd.f32 %v5723, 1e-05
        %v5732 = vrsqrt.pop %v5724
        %v5733 = vrsqrt.pop %v5725
        %v5734 = vrsqrt.pop %v5726
        %v5735 = vrsqrt.pop %v5727
        %v5736 = vrsqrt.pop %v5728
        %v5737 = vrsqrt.pop %v5729
        %v5738 = vrsqrt.pop %v5730
        %v5739 = vrsqrt.pop %v5731
        %v5740 = vmul.f32 %v5676, %v5732
        %v5741 = vmul.f32 %v5677, %v5733
        %v5742 = vmul.f32 %v5678, %v5734
        %v5743 = vmul.f32 %v5679, %v5735
        %v5744 = vmul.f32 %v5680, %v5736
        %v5745 = vmul.f32 %v5681, %v5737
        %v5746 = vmul.f32 %v5682, %v5738
        %v5747 = vmul.f32 %v5683, %v5739
        %v5748 = vlaneseq
        %v5749 = vshrl.u32 %v5748, 7
        %v5750 = vsub.s32 6, %v5749
        %v5751 = vrot.slane %v3605, %v5750
        %v5752 = vmul.f32 %v5740, %v5751
        %v5753 = vmul.f32 %v5741, %v5751
        %v5754 = vmul.f32 %v5742, %v5751
        %v5755 = vmul.f32 %v5743, %v5751
        %v5756 = vmul.f32 %v5744, %v5751
        %v5757 = vmul.f32 %v5745, %v5751
        %v5758 = vmul.f32 %v5746, %v5751
        %v5759 = vmul.f32 %v5747, %v5751
        %v5760 = vlaneseq
        %v5761 = vshrl.u32 %v5760, 7
        %v5762 = vsub.s32 7, %v5761
        %v5763 = vrot.slane %v3605, %v5762
        %v5764 = vadd.f32 %v5752, %v5763
        %v5765 = vadd.f32 %v5753, %v5763
        %v5766 = vadd.f32 %v5754, %v5763
        %v5767 = vadd.f32 %v5755, %v5763
        %v5768 = vadd.f32 %v5756, %v5763
        %v5769 = vadd.f32 %v5757, %v5763
        %v5770 = vadd.f32 %v5758, %v5763
        %v5771 = vadd.f32 %v5759, %v5763
        %v5772 = vadd.f32 %v5179, %v5764
        %v5773 = vadd.f32 %v5180, %v5765
        %v5774 = vadd.f32 %v5181, %v5766
        %v5775 = vadd.f32 %v5182, %v5767
        %v5776 = vadd.f32 %v5183, %v5768
        %v5777 = vadd.f32 %v5184, %v5769
        %v5778 = vadd.f32 %v5185, %v5770
        %v5779 = vadd.f32 %v5186, %v5771
        %5780 = vst.msk [vmem:[%s1180] sm:$0xff] %vm1300, %v5772
        %5781 = vst.msk [vmem:[%s1180 + $0x8] sm:$0xff] %vm1300, %v5773
        %5782 = vst.msk [vmem:[%s1180 + $0x10] sm:$0xff] %vm1300, %v5774
        %5783 = vst.msk [vmem:[%s1180 + $0x18] sm:$0xff] %vm1300, %v5775
        %5784 = vst.msk [vmem:[%s1180 + $0x20] sm:$0xff] %vm1300, %v5776
        %5785 = vst.msk [vmem:[%s1180 + $0x28] sm:$0xff] %vm1300, %v5777
        %5786 = vst.msk [vmem:[%s1180 + $0x30] sm:$0xff] %vm1300, %v5778
        %5787 = vst.msk [vmem:[%s1180 + $0x38] sm:$0xff] %vm1300, %v5779
        %v5788 = vld [vmem:[%s39] sm:$0xff]
        %v5789 = vld [vmem:[%s39 + $0x8] sm:$0xff]
        %v5790 = vld [vmem:[%s39 + $0x10] sm:$0xff]
        %v5791 = vld [vmem:[%s39 + $0x18] sm:$0xff]
        %v5792 = vld [vmem:[%s39 + $0x20] sm:$0xff]
        %v5793 = vld [vmem:[%s39 + $0x28] sm:$0xff]
        %v5794 = vld [vmem:[%s39 + $0x30] sm:$0xff]
        %v5795 = vld [vmem:[%s39 + $0x38] sm:$0xff]
        %vm5796 = vcmask 523264
        %v5798 = vsel %vm5796, %v5788, 0
        %v5801 = vsel %vm5796, %v5789, 0
        %v5804 = vsel %vm5796, %v5790, 0
        %v5807 = vsel %vm5796, %v5791, 0
        %v5810 = vsel %vm5796, %v5792, 0
        %v5813 = vsel %vm5796, %v5793, 0
        %v5816 = vsel %vm5796, %v5794, 0
        %v5819 = vsel %vm5796, %v5795, 0
        %5821 = vmatprep.subr.mxu0 0.0
        %5822 = vmatpush1.msra.mxu0 %v5772
        %5823 = vmatprep.subr.mxu0 0.0
        %5824 = vmatpush1.msra.mxu0 %v5773
        %5825 = vmatprep.subr.mxu0 0.0
        %5826 = vmatpush1.msra.mxu0 %v5774
        %5827 = vmatprep.subr.mxu0 0.0
        %5828 = vmatpush1.msra.mxu0 %v5775
        %5829 = vmatprep.subr.mxu0 0.0
        %5830 = vmatpush1.msra.mxu0 %v5776
        %5831 = vmatprep.subr.mxu0 0.0
        %5832 = vmatpush1.msra.mxu0 %v5777
        %5833 = vmatprep.subr.mxu0 0.0
        %5834 = vmatpush1.msra.mxu0 %v5778
        %5835 = vmatprep.subr.mxu0 0.0
        %5836 = vmatpush1.msra.mxu0 %v5779
        %5837 = vmatprep.subr.mxu0 0.0
        %5838 = vmatpush1.msra.mxu0 0.0
        %5839 = vmatprep.subr.mxu0 0.0
        %5840 = vmatpush1.msra.mxu0 0.0
        %5841 = vmatprep.subr.mxu0 0.0
        %5842 = vmatpush1.msra.mxu0 0.0
        %5843 = vmatprep.subr.mxu0 0.0
        %5844 = vmatpush1.msra.mxu0 0.0
        %5845 = vmatprep.subr.mxu0 0.0
        %5846 = vmatpush1.msra.mxu0 0.0
        %5847 = vmatprep.subr.mxu0 0.0
        %5848 = vmatpush1.msra.mxu0 0.0
        %5849 = vmatprep.subr.mxu0 0.0
        %5850 = vmatpush1.msra.mxu0 0.0
        %5851 = vmatprep.subr.mxu0 0.0
        %5852 = vmatpush1.msra.mxu0 0.0
        %5853 = vmatprep.subr.mxu0 0.0
        %5854 = vmatpush1.msra.mxu0 0.0
        %5855 = vmatprep.subr.mxu0 0.0
        %5856 = vmatpush1.msra.mxu0 0.0
        %5857 = vmatprep.subr.mxu0 0.0
        %5858 = vmatpush1.msra.mxu0 0.0
        %5859 = vmatprep.subr.mxu0 0.0
        %5860 = vmatpush1.msra.mxu0 0.0
        %5861 = vmatprep.subr.mxu0 0.0
        %5862 = vmatpush1.msra.mxu0 0.0
        %5863 = vmatprep.subr.mxu0 0.0
        %5864 = vmatpush1.msra.mxu0 0.0
        %5865 = vmatprep.subr.mxu0 0.0
        %5866 = vmatpush1.msra.mxu0 0.0
        %5867 = vmatprep.subr.mxu0 0.0
        %5868 = vmatpush1.msra.mxu0 0.0
        %5869 = vmatprep.subr.mxu0 0.0
        %5870 = vmatpush1.msra.mxu0 0.0
        %5871 = vmatprep.subr.mxu0 0.0
        %5872 = vmatpush1.msra.mxu0 0.0
        %5873 = vmatprep.subr.mxu0 0.0
        %5874 = vmatpush1.msra.mxu0 0.0
        %5875 = vmatprep.subr.mxu0 0.0
        %5876 = vmatpush1.msra.mxu0 0.0
        %5877 = vmatprep.subr.mxu0 0.0
        %5878 = vmatpush1.msra.mxu0 0.0
        %5879 = vmatprep.subr.mxu0 0.0
        %5880 = vmatpush1.msra.mxu0 0.0
        %5881 = vmatprep.subr.mxu0 0.0
        %5882 = vmatpush1.msra.mxu0 0.0
        %5883 = vmatprep.subr.mxu0 0.0
        %5884 = vmatpush1.msra.mxu0 0.0
        %5885 = vmatprep.mubr.f32.mxu0 0.0
        %5886 = vmatmul.mubr.f32.gmra.mrb[0].mxu0 %v5798
        %v5887 = vpop.f32.mrb[0].mxu0
        %v5888 = vadd.f32 0.0, %v5887
        %v5889 = vpop.f32.mrb[0].mxu0
        %5890 = vmatprep.mubr.f32.mxu0 0.0
        %5891 = vmatmul.mubr.f32.gmra.mrb[0].mxu0 %v5801
        %v5892 = vpop.f32.mrb[0].mxu0
        %v5893 = vadd.f32 0.0, %v5892
        %v5894 = vpop.f32.mrb[0].mxu0
        %5895 = vmatprep.mubr.f32.mxu0 0.0
        %5896 = vmatmul.mubr.f32.gmra.mrb[0].mxu0 %v5804
        %v5897 = vpop.f32.mrb[0].mxu0
        %v5898 = vadd.f32 0.0, %v5897
        %v5899 = vpop.f32.mrb[0].mxu0
        %5900 = vmatprep.mubr.f32.mxu0 0.0
        %5901 = vmatmul.mubr.f32.gmra.mrb[0].mxu0 %v5807
        %v5902 = vpop.f32.mrb[0].mxu0
        %v5903 = vadd.f32 0.0, %v5902
        %v5904 = vpop.f32.mrb[0].mxu0
        %5905 = vmatprep.mubr.f32.mxu0 0.0
        %5906 = vmatmul.mubr.f32.gmra.mrb[0].mxu0 %v5810
        %v5907 = vpop.f32.mrb[0].mxu0
        %v5908 = vadd.f32 0.0, %v5907
        %v5909 = vpop.f32.mrb[0].mxu0
        %5910 = vmatprep.mubr.f32.mxu0 0.0
        %5911 = vmatmul.mubr.f32.gmra.mrb[0].mxu0 %v5813
        %v5912 = vpop.f32.mrb[0].mxu0
        %v5913 = vadd.f32 0.0, %v5912
        %v5914 = vpop.f32.mrb[0].mxu0
        %5915 = vmatprep.mubr.f32.mxu0 0.0
        %5916 = vmatmul.mubr.f32.gmra.mrb[0].mxu0 %v5816
        %v5917 = vpop.f32.mrb[0].mxu0
        %v5918 = vadd.f32 0.0, %v5917
        %v5919 = vpop.f32.mrb[0].mxu0
        %5920 = vmatprep.mubr.f32.mxu0 0.0
        %5921 = vmatmul.mubr.f32.gmra.mrb[0].mxu0 %v5819
        %v5922 = vpop.f32.mrb[0].mxu0
        %v5923 = vadd.f32 0.0, %v5922
        %v5924 = vpop.f32.mrb[0].mxu0
        %5925 = vdwg.mxu0
        %5928 = vrot.lane.b32.xlu0 %v5898, 32
        %v5929 = vpop.permute.xlu0 %5928
        %5930 = vrot.lane.b32.xlu0 %v5903, 32
        %v5931 = vpop.permute.xlu0 %5930
        %5936 = vrot.lane.b32.xlu0 %v5908, 64
        %v5937 = vpop.permute.xlu0 %5936
        %5938 = vrot.lane.b32.xlu0 %v5913, 64
        %v5939 = vpop.permute.xlu0 %5938
        %5944 = vrot.lane.b32.xlu0 %v5918, 96
        %v5945 = vpop.permute.xlu0 %5944
        %5946 = vrot.lane.b32.xlu0 %v5923, 96
        %v5947 = vpop.permute.xlu0 %5946
        %v5950 = vsel %vm1300, %v5888, %v5929
        %v5951 = vsel %vm1300, %v5893, %v5931
        %v5952 = vsel %vm5796, %v5950, %v5937
        %v5953 = vsel %vm5796, %v5951, %v5939
        %vm5954 = vcmask 785408
        %v5955 = vsel %vm5954, %v5952, %v5945
        %v5956 = vsel %vm5954, %v5953, %v5947
        %v5957 = vld [vmem:[%s43] sm:$0x3]
        %v5958 = vpack.c.bf16 %v5956, %v5955
        %v5959 = vld [vmem:[%s41] sm:$0xf]
        %v5960 = vld [vmem:[%s41 + $0x4] sm:$0xf]
        %v5961 = vld [vmem:[%s41 + $0x8] sm:$0xf]
        %v5962 = vld [vmem:[%s41 + $0xc] sm:$0xf]
        %v5963 = vld [vmem:[%s41 + $0x10] sm:$0xf]
        %v5964 = vld [vmem:[%s41 + $0x14] sm:$0xf]
        %v5965 = vld [vmem:[%s41 + $0x18] sm:$0xf]
        %v5966 = vld [vmem:[%s41 + $0x1c] sm:$0xf]
        %v5967 = vld [vmem:[%s41 + $0x20] sm:$0xf]
        %v5968 = vld [vmem:[%s41 + $0x24] sm:$0xf]
        %v5969 = vld [vmem:[%s41 + $0x28] sm:$0xf]
        %v5970 = vld [vmem:[%s41 + $0x2c] sm:$0xf]
        %v5971 = vld [vmem:[%s41 + $0x30] sm:$0xf]
        %v5972 = vld [vmem:[%s41 + $0x34] sm:$0xf]
        %v5973 = vld [vmem:[%s41 + $0x38] sm:$0xf]
        %v5974 = vld [vmem:[%s41 + $0x3c] sm:$0xf]
        %v5991 = vunpack.c.l.b16 %v5959
        %v5992 = vunpack.c.l.b16 %v5960
        %v5993 = vunpack.c.l.b16 %v5961
        %v5994 = vunpack.c.l.b16 %v5962
        %v5995 = vunpack.c.l.b16 %v5963
        %v5996 = vunpack.c.l.b16 %v5964
        %v5997 = vunpack.c.l.b16 %v5965
        %v5998 = vunpack.c.l.b16 %v5966
        %v5999 = vunpack.c.l.b16 %v5967
        %v6000 = vunpack.c.l.b16 %v5968
        %v6001 = vunpack.c.l.b16 %v5969
        %v6002 = vunpack.c.l.b16 %v5970
        %v6003 = vunpack.c.l.b16 %v5971
        %v6004 = vunpack.c.l.b16 %v5972
        %v6005 = vunpack.c.l.b16 %v5973
        %v6006 = vunpack.c.l.b16 %v5974
        %v6007 = vpack.c.b16 %v5992, %v5991
        %v6008 = vpack.c.b16 %v5994, %v5993
        %v6009 = vpack.c.b16 %v5996, %v5995
        %v6010 = vpack.c.b16 %v5998, %v5997
        %v6011 = vpack.c.b16 %v6000, %v5999
        %v6012 = vpack.c.b16 %v6002, %v6001
        %v6013 = vpack.c.b16 %v6004, %v6003
        %v6014 = vpack.c.b16 %v6006, %v6005
        %6023 = vmatprep.subr.bf16.mxu0 0
        %6024 = vmatpush1.bf16.msra.mxu0 %v6007
        %6025 = vmatprep.subr.bf16.mxu0 0
        %6026 = vmatpush1.bf16.msra.mxu0 %v6008
        %6027 = vmatprep.subr.bf16.mxu0 0
        %6028 = vmatpush1.bf16.msra.mxu0 %v6009
        %6029 = vmatprep.subr.bf16.mxu0 0
        %6030 = vmatpush1.bf16.msra.mxu0 %v6010
        %6031 = vmatprep.subr.bf16.mxu0 0
        %6032 = vmatpush1.bf16.msra.mxu0 %v6011
        %6033 = vmatprep.subr.bf16.mxu0 0
        %6034 = vmatpush1.bf16.msra.mxu0 %v6012
        %6035 = vmatprep.subr.bf16.mxu0 0
        %6036 = vmatpush1.bf16.msra.mxu0 %v6013
        %6037 = vmatprep.subr.bf16.mxu0 0
        %6038 = vmatpush1.bf16.msra.mxu0 %v6014
        %6039 = vmatprep.subr.bf16.mxu0 0
        %6040 = vmatpush1.bf16.msra.mxu0 0
        %6041 = vmatprep.subr.bf16.mxu0 0
        %6042 = vmatpush1.bf16.msra.mxu0 0
        %6043 = vmatprep.subr.bf16.mxu0 0
        %6044 = vmatpush1.bf16.msra.mxu0 0
        %6045 = vmatprep.subr.bf16.mxu0 0
        %6046 = vmatpush1.bf16.msra.mxu0 0
        %6047 = vmatprep.subr.bf16.mxu0 0
        %6048 = vmatpush1.bf16.msra.mxu0 0
        %6049 = vmatprep.subr.bf16.mxu0 0
        %6050 = vmatpush1.bf16.msra.mxu0 0
        %6051 = vmatprep.subr.bf16.mxu0 0
        %6052 = vmatpush1.bf16.msra.mxu0 0
        %6053 = vmatprep.subr.bf16.mxu0 0
        %6054 = vmatpush1.bf16.msra.mxu0 0
        %6055 = vmatprep.mubr.bf16.mxu0 0
        %6056 = vmatmul.mubr.bf16.gmra.mrb[0].mxu0 %v5958
        %v6057 = vpop.f32.mrb[0].mxu0
        %v6058 = vadd.f32 0.0, %v6057
        %v6059 = vpop.f32.mrb[0].mxu0
        %v6060 = vpop.f32.mrb[0].mxu0
        %v6061 = vadd.f32 0.0, %v6060
        %v6062 = vpop.f32.mrb[0].mxu0
        %6063 = vdwg.mxu0
        %v6064 = vsel %vm5796, %v6058, 0.0
        %6065 = vadd.xlane.f32.xlu0 %v6064
        %v6066 = vpop.xlane.xlu0 %6065
        %v6067 = vsel %vm5796, %v6061, 0.0
        %6068 = vadd.xlane.f32.xlu0 %v6067
        %v6069 = vpop.xlane.xlu0 %6068
        %v6070 = vrcp.pop 64.0
        %v6071 = vmul.f32 %v6066, %v6070
        %v6072 = vmul.f32 %v6069, %v6070
        %v6073 = vsub.f32 %v6058, %v6071
        %v6074 = vsub.f32 %v6061, %v6072
        %v6075 = vmul.f32 %v6073, %v6073
        %v6076 = vmul.f32 %v6074, %v6074
        %v6077 = vsel %vm5796, %v6075, 0.0
        %6078 = vadd.xlane.f32.xlu0 %v6077
        %v6079 = vpop.xlane.xlu0 %6078
        %v6080 = vsel %vm5796, %v6076, 0.0
        %6081 = vadd.xlane.f32.xlu0 %v6080
        %v6082 = vpop.xlane.xlu0 %6081
        %v6083 = vmul.f32 %v6079, %v6070
        %v6084 = vmul.f32 %v6082, %v6070
        %v6085 = vadd.f32 %v6083, 1e-05
        %v6086 = vadd.f32 %v6084, 1e-05
        %v6087 = vrsqrt.pop %v6085
        %v6088 = vrsqrt.pop %v6086
        %v6089 = vmul.f32 %v6073, %v6087
        %v6090 = vmul.f32 %v6074, %v6088
        %v6091 = vlaneseq
        %v6092 = vshrl.u32 %v6091, 7
        %v6093 = vsub.s32 0, %v6092
        %v6094 = vrot.slane %v5957, %v6093
        %v6095 = vmul.f32 %v6089, %v6094
        %v6096 = vmul.f32 %v6090, %v6094
        %v6097 = vlaneseq
        %v6098 = vshrl.u32 %v6097, 7
        %v6099 = vsub.s32 1, %v6098
        %v6100 = vrot.slane %v5957, %v6099
        %v6101 = vadd.f32 %v6095, %v6100
        %v6102 = vadd.f32 %v6096, %v6100
        %v6103 = vld [vmem:[%s53] sm:$0xff]
        %v6104 = vpack.c.bf16 %v6102, %v6101
        %v6105 = vld [vmem:[%s45] sm:$0xf]
        %v6106 = vld [vmem:[%s45 + $0x4] sm:$0xf]
        %v6107 = vld [vmem:[%s45 + $0x8] sm:$0xf]
        %v6108 = vld [vmem:[%s45 + $0xc] sm:$0xf]
        %v6109 = vld [vmem:[%s45 + $0x10] sm:$0xf]
        %v6110 = vld [vmem:[%s45 + $0x14] sm:$0xf]
        %v6111 = vld [vmem:[%s45 + $0x18] sm:$0xf]
        %v6112 = vld [vmem:[%s45 + $0x1c] sm:$0xf]
        %v6113 = vlaneseq
        %v6114 = vshrl.u32 %v6113, 7
        %v6115 = vsub.s32 0, %v6114
        %v6116 = vrot.slane %v6103, %v6115
        %v6125 = vunpack.c.l.b16 %v6105
        %v6126 = vunpack.c.l.b16 %v6106
        %v6127 = vunpack.c.l.b16 %v6107
        %v6128 = vunpack.c.l.b16 %v6108
        %v6129 = vunpack.c.l.b16 %v6109
        %v6130 = vunpack.c.l.b16 %v6110
        %v6131 = vunpack.c.l.b16 %v6111
        %v6132 = vunpack.c.l.b16 %v6112
        %v6133 = vpack.c.b16 %v6126, %v6125
        %v6134 = vpack.c.b16 %v6128, %v6127
        %v6135 = vpack.c.b16 %v6130, %v6129
        %v6136 = vpack.c.b16 %v6132, %v6131
        %v6142 = vsel %vm5796, %v6104, 0
        %6144 = vmatprep.subr.bf16.mxu0 0
        %6145 = vmatpush1.bf16.msra.mxu0 %v6133
        %6146 = vmatprep.subr.bf16.mxu0 0
        %6147 = vmatpush1.bf16.msra.mxu0 %v6134
        %6148 = vmatprep.subr.bf16.mxu0 0
        %6149 = vmatpush1.bf16.msra.mxu0 %v6135
        %6150 = vmatprep.subr.bf16.mxu0 0
        %6151 = vmatpush1.bf16.msra.mxu0 %v6136
        %6152 = vmatprep.subr.bf16.mxu0 0
        %6153 = vmatpush1.bf16.msra.mxu0 0
        %6154 = vmatprep.subr.bf16.mxu0 0
        %6155 = vmatpush1.bf16.msra.mxu0 0
        %6156 = vmatprep.subr.bf16.mxu0 0
        %6157 = vmatpush1.bf16.msra.mxu0 0
        %6158 = vmatprep.subr.bf16.mxu0 0
        %6159 = vmatpush1.bf16.msra.mxu0 0
        %6160 = vmatprep.subr.bf16.mxu0 0
        %6161 = vmatpush1.bf16.msra.mxu0 0
        %6162 = vmatprep.subr.bf16.mxu0 0
        %6163 = vmatpush1.bf16.msra.mxu0 0
        %6164 = vmatprep.subr.bf16.mxu0 0
        %6165 = vmatpush1.bf16.msra.mxu0 0
        %6166 = vmatprep.subr.bf16.mxu0 0
        %6167 = vmatpush1.bf16.msra.mxu0 0
        %6168 = vmatprep.subr.bf16.mxu0 0
        %6169 = vmatpush1.bf16.msra.mxu0 0
        %6170 = vmatprep.subr.bf16.mxu0 0
        %6171 = vmatpush1.bf16.msra.mxu0 0
        %6172 = vmatprep.subr.bf16.mxu0 0
        %6173 = vmatpush1.bf16.msra.mxu0 0
        %6174 = vmatprep.subr.bf16.mxu0 0
        %6175 = vmatpush1.bf16.msra.mxu0 0
        %6176 = vmatprep.mubr.bf16.mxu0 0
        %6177 = vmatmul.mubr.bf16.gmra.mrb[0].mxu0 %v6142
        %v6178 = vpop.f32.mrb[0].mxu0
        %v6179 = vadd.f32 %v6116, %v6178
        %v6180 = vpop.f32.mrb[0].mxu0
        %v6181 = vpop.f32.mrb[0].mxu0
        %v6182 = vadd.f32 %v6116, %v6181
        %v6183 = vpop.f32.mrb[0].mxu0
        %6184 = vdwg.mxu0
        %s6185 = scalar_lea.vmem %s45, 32
        %v6186 = vld [vmem:[%s6185] sm:$0xf]
        %v6187 = vld [vmem:[%s6185 + $0x4] sm:$0xf]
        %v6188 = vld [vmem:[%s6185 + $0x8] sm:$0xf]
        %v6189 = vld [vmem:[%s6185 + $0xc] sm:$0xf]
        %v6190 = vld [vmem:[%s6185 + $0x10] sm:$0xf]
        %v6191 = vld [vmem:[%s6185 + $0x14] sm:$0xf]
        %v6192 = vld [vmem:[%s6185 + $0x18] sm:$0xf]
        %v6193 = vld [vmem:[%s6185 + $0x1c] sm:$0xf]
        %v6202 = vunpack.c.l.b16 %v6186
        %v6203 = vunpack.c.l.b16 %v6187
        %v6204 = vunpack.c.l.b16 %v6188
        %v6205 = vunpack.c.l.b16 %v6189
        %v6206 = vunpack.c.l.b16 %v6190
        %v6207 = vunpack.c.l.b16 %v6191
        %v6208 = vunpack.c.l.b16 %v6192
        %v6209 = vunpack.c.l.b16 %v6193
        %v6210 = vpack.c.b16 %v6203, %v6202
        %v6211 = vpack.c.b16 %v6205, %v6204
        %v6212 = vpack.c.b16 %v6207, %v6206
        %v6213 = vpack.c.b16 %v6209, %v6208
        %6218 = vmatprep.subr.bf16.mxu0 0
        %6219 = vmatpush1.bf16.msra.mxu0 %v6210
        %6220 = vmatprep.subr.bf16.mxu0 0
        %6221 = vmatpush1.bf16.msra.mxu0 %v6211
        %6222 = vmatprep.subr.bf16.mxu0 0
        %6223 = vmatpush1.bf16.msra.mxu0 %v6212
        %6224 = vmatprep.subr.bf16.mxu0 0
        %6225 = vmatpush1.bf16.msra.mxu0 %v6213
        %6226 = vmatprep.subr.bf16.mxu0 0
        %6227 = vmatpush1.bf16.msra.mxu0 0
        %6228 = vmatprep.subr.bf16.mxu0 0
        %6229 = vmatpush1.bf16.msra.mxu0 0
        %6230 = vmatprep.subr.bf16.mxu0 0
        %6231 = vmatpush1.bf16.msra.mxu0 0
        %6232 = vmatprep.subr.bf16.mxu0 0
        %6233 = vmatpush1.bf16.msra.mxu0 0
        %6234 = vmatprep.subr.bf16.mxu0 0
        %6235 = vmatpush1.bf16.msra.mxu0 0
        %6236 = vmatprep.subr.bf16.mxu0 0
        %6237 = vmatpush1.bf16.msra.mxu0 0
        %6238 = vmatprep.subr.bf16.mxu0 0
        %6239 = vmatpush1.bf16.msra.mxu0 0
        %6240 = vmatprep.subr.bf16.mxu0 0
        %6241 = vmatpush1.bf16.msra.mxu0 0
        %6242 = vmatprep.subr.bf16.mxu0 0
        %6243 = vmatpush1.bf16.msra.mxu0 0
        %6244 = vmatprep.subr.bf16.mxu0 0
        %6245 = vmatpush1.bf16.msra.mxu0 0
        %6246 = vmatprep.subr.bf16.mxu0 0
        %6247 = vmatpush1.bf16.msra.mxu0 0
        %6248 = vmatprep.subr.bf16.mxu0 0
        %6249 = vmatpush1.bf16.msra.mxu0 0
        %6250 = vmatprep.mubr.bf16.mxu0 0
        %6251 = vmatmul.mubr.bf16.gmra.mrb[0].mxu0 %v6142
        %v6252 = vpop.f32.mrb[0].mxu0
        %v6253 = vadd.f32 0.0, %v6252
        %v6254 = vpop.f32.mrb[0].mxu0
        %v6255 = vpop.f32.mrb[0].mxu0
        %v6256 = vadd.f32 0.0, %v6255
        %v6257 = vpop.f32.mrb[0].mxu0
        %6258 = vdwg.mxu0
        %s6259 = scalar_lea.vmem %s45, 64
        %v6260 = vld [vmem:[%s6259] sm:$0xf]
        %v6261 = vld [vmem:[%s6259 + $0x4] sm:$0xf]
        %v6262 = vld [vmem:[%s6259 + $0x8] sm:$0xf]
        %v6263 = vld [vmem:[%s6259 + $0xc] sm:$0xf]
        %v6264 = vld [vmem:[%s6259 + $0x10] sm:$0xf]
        %v6265 = vld [vmem:[%s6259 + $0x14] sm:$0xf]
        %v6266 = vld [vmem:[%s6259 + $0x18] sm:$0xf]
        %v6267 = vld [vmem:[%s6259 + $0x1c] sm:$0xf]
        %v6268 = vlaneseq
        %v6269 = vshrl.u32 %v6268, 7
        %v6270 = vsub.s32 1, %v6269
        %v6271 = vrot.slane %v6103, %v6270
        %v6280 = vunpack.c.l.b16 %v6260
        %v6281 = vunpack.c.l.b16 %v6261
        %v6282 = vunpack.c.l.b16 %v6262
        %v6283 = vunpack.c.l.b16 %v6263
        %v6284 = vunpack.c.l.b16 %v6264
        %v6285 = vunpack.c.l.b16 %v6265
        %v6286 = vunpack.c.l.b16 %v6266
        %v6287 = vunpack.c.l.b16 %v6267
        %v6288 = vpack.c.b16 %v6281, %v6280
        %v6289 = vpack.c.b16 %v6283, %v6282
        %v6290 = vpack.c.b16 %v6285, %v6284
        %v6291 = vpack.c.b16 %v6287, %v6286
        %6296 = vmatprep.subr.bf16.mxu0 0
        %6297 = vmatpush1.bf16.msra.mxu0 %v6288
        %6298 = vmatprep.subr.bf16.mxu0 0
        %6299 = vmatpush1.bf16.msra.mxu0 %v6289
        %6300 = vmatprep.subr.bf16.mxu0 0
        %6301 = vmatpush1.bf16.msra.mxu0 %v6290
        %6302 = vmatprep.subr.bf16.mxu0 0
        %6303 = vmatpush1.bf16.msra.mxu0 %v6291
        %6304 = vmatprep.subr.bf16.mxu0 0
        %6305 = vmatpush1.bf16.msra.mxu0 0
        %6306 = vmatprep.subr.bf16.mxu0 0
        %6307 = vmatpush1.bf16.msra.mxu0 0
        %6308 = vmatprep.subr.bf16.mxu0 0
        %6309 = vmatpush1.bf16.msra.mxu0 0
        %6310 = vmatprep.subr.bf16.mxu0 0
        %6311 = vmatpush1.bf16.msra.mxu0 0
        %6312 = vmatprep.subr.bf16.mxu0 0
        %6313 = vmatpush1.bf16.msra.mxu0 0
        %6314 = vmatprep.subr.bf16.mxu0 0
        %6315 = vmatpush1.bf16.msra.mxu0 0
        %6316 = vmatprep.subr.bf16.mxu0 0
        %6317 = vmatpush1.bf16.msra.mxu0 0
        %6318 = vmatprep.subr.bf16.mxu0 0
        %6319 = vmatpush1.bf16.msra.mxu0 0
        %6320 = vmatprep.subr.bf16.mxu0 0
        %6321 = vmatpush1.bf16.msra.mxu0 0
        %6322 = vmatprep.subr.bf16.mxu0 0
        %6323 = vmatpush1.bf16.msra.mxu0 0
        %6324 = vmatprep.subr.bf16.mxu0 0
        %6325 = vmatpush1.bf16.msra.mxu0 0
        %6326 = vmatprep.subr.bf16.mxu0 0
        %6327 = vmatpush1.bf16.msra.mxu0 0
        %6328 = vmatprep.mubr.bf16.mxu0 0
        %6329 = vmatmul.mubr.bf16.gmra.mrb[0].mxu0 %v6142
        %v6330 = vpop.f32.mrb[0].mxu0
        %v6331 = vadd.f32 %v6271, %v6330
        %v6332 = vpop.f32.mrb[0].mxu0
        %v6333 = vpop.f32.mrb[0].mxu0
        %v6334 = vadd.f32 %v6271, %v6333
        %v6335 = vpop.f32.mrb[0].mxu0
        %6336 = vdwg.mxu0
        %6339 = vrot.lane.b32.xlu0 %v6179, 112
        %v6340 = vpop.permute.xlu0 %6339
        %6341 = vrot.lane.b32.xlu0 %v6182, 112
        %v6342 = vpop.permute.xlu0 %6341
        %6345 = vrot.lane.b32.xlu0 %v6179, 96
        %v6346 = vpop.permute.xlu0 %6345
        %6347 = vrot.lane.b32.xlu0 %v6182, 96
        %v6348 = vpop.permute.xlu0 %6347
        %6351 = vrot.lane.b32.xlu0 %v6179, 80
        %v6352 = vpop.permute.xlu0 %6351
        %6353 = vrot.lane.b32.xlu0 %v6182, 80
        %v6354 = vpop.permute.xlu0 %6353
        %6359 = vrot.lane.b32.xlu0 %v6253, 112
        %v6360 = vpop.permute.xlu0 %6359
        %6361 = vrot.lane.b32.xlu0 %v6256, 112
        %v6362 = vpop.permute.xlu0 %6361
        %6365 = vrot.lane.b32.xlu0 %v6253, 96
        %v6366 = vpop.permute.xlu0 %6365
        %6367 = vrot.lane.b32.xlu0 %v6256, 96
        %v6368 = vpop.permute.xlu0 %6367
        %6371 = vrot.lane.b32.xlu0 %v6253, 80
        %v6372 = vpop.permute.xlu0 %6371
        %6373 = vrot.lane.b32.xlu0 %v6256, 80
        %v6374 = vpop.permute.xlu0 %6373
        %6379 = vrot.lane.b32.xlu0 %v6331, 112
        %v6380 = vpop.permute.xlu0 %6379
        %6381 = vrot.lane.b32.xlu0 %v6334, 112
        %v6382 = vpop.permute.xlu0 %6381
        %6385 = vrot.lane.b32.xlu0 %v6331, 96
        %v6386 = vpop.permute.xlu0 %6385
        %6387 = vrot.lane.b32.xlu0 %v6334, 96
        %v6388 = vpop.permute.xlu0 %6387
        %6391 = vrot.lane.b32.xlu0 %v6331, 80
        %v6392 = vpop.permute.xlu0 %6391
        %6393 = vrot.lane.b32.xlu0 %v6334, 80
        %v6394 = vpop.permute.xlu0 %6393
        %v6397 = vmul.f32 %v6179, %v6179
        %v6398 = vmul.f32 %v6182, %v6182
        %v6399 = vmul.f32 %v6340, %v6340
        %v6400 = vmul.f32 %v6342, %v6342
        %v6401 = vmul.f32 %v6346, %v6346
        %v6402 = vmul.f32 %v6348, %v6348
        %v6403 = vmul.f32 %v6352, %v6352
        %v6404 = vmul.f32 %v6354, %v6354
        %v6405 = vsel %vm1222, %v6397, 0.0
        %6406 = vadd.xlane.f32.xlu0 %v6405
        %v6407 = vpop.xlane.xlu0 %6406
        %v6408 = vsel %vm1222, %v6398, 0.0
        %6409 = vadd.xlane.f32.xlu0 %v6408
        %v6410 = vpop.xlane.xlu0 %6409
        %v6411 = vsel %vm1222, %v6399, 0.0
        %6412 = vadd.xlane.f32.xlu0 %v6411
        %v6413 = vpop.xlane.xlu0 %6412
        %v6414 = vsel %vm1222, %v6400, 0.0
        %6415 = vadd.xlane.f32.xlu0 %v6414
        %v6416 = vpop.xlane.xlu0 %6415
        %v6417 = vsel %vm1222, %v6401, 0.0
        %6418 = vadd.xlane.f32.xlu0 %v6417
        %v6419 = vpop.xlane.xlu0 %6418
        %v6420 = vsel %vm1222, %v6402, 0.0
        %6421 = vadd.xlane.f32.xlu0 %v6420
        %v6422 = vpop.xlane.xlu0 %6421
        %v6423 = vsel %vm1222, %v6403, 0.0
        %6424 = vadd.xlane.f32.xlu0 %v6423
        %v6425 = vpop.xlane.xlu0 %6424
        %v6426 = vsel %vm1222, %v6404, 0.0
        %6427 = vadd.xlane.f32.xlu0 %v6426
        %v6428 = vpop.xlane.xlu0 %6427
        %v6429 = vmax.f32 %v6407, 1e-24
        %v6430 = vmax.f32 %v6410, 1e-24
        %v6431 = vmax.f32 %v6413, 1e-24
        %v6432 = vmax.f32 %v6416, 1e-24
        %v6433 = vmax.f32 %v6419, 1e-24
        %v6434 = vmax.f32 %v6422, 1e-24
        %v6435 = vmax.f32 %v6425, 1e-24
        %v6436 = vmax.f32 %v6428, 1e-24
        %v6437 = vrsqrt.pop %v6429
        %v6438 = vrsqrt.pop %v6430
        %v6439 = vrsqrt.pop %v6431
        %v6440 = vrsqrt.pop %v6432
        %v6441 = vrsqrt.pop %v6433
        %v6442 = vrsqrt.pop %v6434
        %v6443 = vrsqrt.pop %v6435
        %v6444 = vrsqrt.pop %v6436
        %v6445 = vmul.f32 %v6179, %v6437
        %v6446 = vmul.f32 %v6182, %v6438
        %v6447 = vmul.f32 %v6340, %v6439
        %v6448 = vmul.f32 %v6342, %v6440
        %v6449 = vmul.f32 %v6346, %v6441
        %v6450 = vmul.f32 %v6348, %v6442
        %v6451 = vmul.f32 %v6352, %v6443
        %v6452 = vmul.f32 %v6354, %v6444
        %v6453 = vld [vmem:[%s59] sm:$0xff]
        %v6454 = vld [vmem:[%s59 + $0x8] sm:$0xff]
        %v6455 = vld [vmem:[%s59 + $0x10] sm:$0xff]
        %v6456 = vld [vmem:[%s59 + $0x18] sm:$0xff]
        %v6457 = vld [vmem:[%s59 + $0x20] sm:$0xff]
        %v6458 = vld [vmem:[%s59 + $0x28] sm:$0xff]
        %v6459 = vld [vmem:[%s59 + $0x30] sm:$0xff]
        %v6460 = vld [vmem:[%s59 + $0x38] sm:$0xff]
        %6462 = vset.pattern.permute.xlu0 0
        %6463 = vperm.xlu0 %6462, %v6453
        %v6464 = vpop.permute.xlu0 %6463
        %6467 = vset.pattern.permute.xlu0 0
        %6468 = vperm.xlu0 %6467, %v6454
        %v6469 = vpop.permute.xlu0 %6468
        %6472 = vset.pattern.permute.xlu0 0
        %6473 = vperm.xlu0 %6472, %v6455
        %v6474 = vpop.permute.xlu0 %6473
        %6477 = vset.pattern.permute.xlu0 0
        %6478 = vperm.xlu0 %6477, %v6456
        %v6479 = vpop.permute.xlu0 %6478
        %6482 = vset.pattern.permute.xlu0 0
        %6483 = vperm.xlu0 %6482, %v6457
        %v6484 = vpop.permute.xlu0 %6483
        %6487 = vset.pattern.permute.xlu0 0
        %6488 = vperm.xlu0 %6487, %v6458
        %v6489 = vpop.permute.xlu0 %6488
        %6492 = vset.pattern.permute.xlu0 0
        %6493 = vperm.xlu0 %6492, %v6459
        %v6494 = vpop.permute.xlu0 %6493
        %6497 = vset.pattern.permute.xlu0 0
        %6498 = vperm.xlu0 %6497, %v6460
        %v6499 = vpop.permute.xlu0 %6498
        %v6501 = vmul.f32 %v6445, %v6464
        %v6502 = vmul.f32 %v6446, %v6469
        %v6503 = vmul.f32 %v6447, %v6474
        %v6504 = vmul.f32 %v6448, %v6479
        %v6505 = vmul.f32 %v6449, %v6484
        %v6506 = vmul.f32 %v6450, %v6489
        %v6507 = vmul.f32 %v6451, %v6494
        %v6508 = vmul.f32 %v6452, %v6499
        %v6509 = vmul.f32 %v6253, %v6253
        %v6510 = vmul.f32 %v6256, %v6256
        %v6511 = vmul.f32 %v6360, %v6360
        %v6512 = vmul.f32 %v6362, %v6362
        %v6513 = vmul.f32 %v6366, %v6366
        %v6514 = vmul.f32 %v6368, %v6368
        %v6515 = vmul.f32 %v6372, %v6372
        %v6516 = vmul.f32 %v6374, %v6374
        %v6517 = vsel %vm1222, %v6509, 0.0
        %6518 = vadd.xlane.f32.xlu0 %v6517
        %v6519 = vpop.xlane.xlu0 %6518
        %v6520 = vsel %vm1222, %v6510, 0.0
        %6521 = vadd.xlane.f32.xlu0 %v6520
        %v6522 = vpop.xlane.xlu0 %6521
        %v6523 = vsel %vm1222, %v6511, 0.0
        %6524 = vadd.xlane.f32.xlu0 %v6523
        %v6525 = vpop.xlane.xlu0 %6524
        %v6526 = vsel %vm1222, %v6512, 0.0
        %6527 = vadd.xlane.f32.xlu0 %v6526
        %v6528 = vpop.xlane.xlu0 %6527
        %v6529 = vsel %vm1222, %v6513, 0.0
        %6530 = vadd.xlane.f32.xlu0 %v6529
        %v6531 = vpop.xlane.xlu0 %6530
        %v6532 = vsel %vm1222, %v6514, 0.0
        %6533 = vadd.xlane.f32.xlu0 %v6532
        %v6534 = vpop.xlane.xlu0 %6533
        %v6535 = vsel %vm1222, %v6515, 0.0
        %6536 = vadd.xlane.f32.xlu0 %v6535
        %v6537 = vpop.xlane.xlu0 %6536
        %v6538 = vsel %vm1222, %v6516, 0.0
        %6539 = vadd.xlane.f32.xlu0 %v6538
        %v6540 = vpop.xlane.xlu0 %6539
        %v6541 = vmax.f32 %v6519, 1e-24
        %v6542 = vmax.f32 %v6522, 1e-24
        %v6543 = vmax.f32 %v6525, 1e-24
        %v6544 = vmax.f32 %v6528, 1e-24
        %v6545 = vmax.f32 %v6531, 1e-24
        %v6546 = vmax.f32 %v6534, 1e-24
        %v6547 = vmax.f32 %v6537, 1e-24
        %v6548 = vmax.f32 %v6540, 1e-24
        %v6549 = vrsqrt.pop %v6541
        %v6550 = vrsqrt.pop %v6542
        %v6551 = vrsqrt.pop %v6543
        %v6552 = vrsqrt.pop %v6544
        %v6553 = vrsqrt.pop %v6545
        %v6554 = vrsqrt.pop %v6546
        %v6555 = vrsqrt.pop %v6547
        %v6556 = vrsqrt.pop %v6548
        %v6557 = vmul.f32 %v6253, %v6549
        %v6558 = vmul.f32 %v6256, %v6550
        %v6559 = vmul.f32 %v6360, %v6551
        %v6560 = vmul.f32 %v6362, %v6552
        %v6561 = vmul.f32 %v6366, %v6553
        %v6562 = vmul.f32 %v6368, %v6554
        %v6563 = vmul.f32 %v6372, %v6555
        %v6564 = vmul.f32 %v6374, %v6556
        %v6565 = vld [vmem:[%s57] sm:$0xff]
        %v6566 = vld [vmem:[%s57 + $0x8] sm:$0xff]
        %v6567 = vld [vmem:[%s57 + $0x10] sm:$0xff]
        %v6568 = vld [vmem:[%s57 + $0x18] sm:$0xff]
        %v6569 = vld [vmem:[%s57 + $0x20] sm:$0xff]
        %v6570 = vld [vmem:[%s57 + $0x28] sm:$0xff]
        %v6571 = vld [vmem:[%s57 + $0x30] sm:$0xff]
        %v6572 = vld [vmem:[%s57 + $0x38] sm:$0xff]
        %v6574 = vsel %vm1222, %v6501, 0
        %v6577 = vsel %vm1222, %v6502, 0
        %v6580 = vsel %vm1222, %v6503, 0
        %v6583 = vsel %vm1222, %v6504, 0
        %v6586 = vsel %vm1222, %v6505, 0
        %v6589 = vsel %vm1222, %v6506, 0
        %v6592 = vsel %vm1222, %v6507, 0
        %v6595 = vsel %vm1222, %v6508, 0
        %v6598 = vsel %vm1222, %v6557, 0
        %v6601 = vsel %vm1222, %v6558, 0
        %v6604 = vsel %vm1222, %v6559, 0
        %v6607 = vsel %vm1222, %v6560, 0
        %v6610 = vsel %vm1222, %v6561, 0
        %v6613 = vsel %vm1222, %v6562, 0
        %v6616 = vsel %vm1222, %v6563, 0
        %v6619 = vsel %vm1222, %v6564, 0
        %6621 = vmatprep.subr.mxu0 0.0
        %6622 = vmatpush1.xpose.msra.mxu0 %v6598
        %6623 = vmatprep.subr.mxu0 0.0
        %6624 = vmatpush1.xpose.msra.mxu0 %v6601
        %6625 = vmatprep.subr.mxu0 0.0
        %6626 = vmatpush1.xpose.msra.mxu0 %v6604
        %6627 = vmatprep.subr.mxu0 0.0
        %6628 = vmatpush1.xpose.msra.mxu0 %v6607
        %6629 = vmatprep.subr.mxu0 0.0
        %6630 = vmatpush1.xpose.msra.mxu0 %v6610
        %6631 = vmatprep.subr.mxu0 0.0
        %6632 = vmatpush1.xpose.msra.mxu0 %v6613
        %6633 = vmatprep.subr.mxu0 0.0
        %6634 = vmatpush1.xpose.msra.mxu0 %v6616
        %6635 = vmatprep.subr.mxu0 0.0
        %6636 = vmatpush1.xpose.msra.mxu0 %v6619
        %6637 = vmatprep.subr.mxu0 0.0
        %6638 = vmatpush1.xpose.msra.mxu0 0.0
        %6639 = vmatprep.subr.mxu0 0.0
        %6640 = vmatpush1.xpose.msra.mxu0 0.0
        %6641 = vmatprep.subr.mxu0 0.0
        %6642 = vmatpush1.xpose.msra.mxu0 0.0
        %6643 = vmatprep.subr.mxu0 0.0
        %6644 = vmatpush1.xpose.msra.mxu0 0.0
        %6645 = vmatprep.subr.mxu0 0.0
        %6646 = vmatpush1.xpose.msra.mxu0 0.0
        %6647 = vmatprep.subr.mxu0 0.0
        %6648 = vmatpush1.xpose.msra.mxu0 0.0
        %6649 = vmatprep.subr.mxu0 0.0
        %6650 = vmatpush1.xpose.msra.mxu0 0.0
        %6651 = vmatprep.subr.mxu0 0.0
        %6652 = vmatpush1.xpose.msra.mxu0 0.0
        %6653 = vmatprep.subr.mxu0 0.0
        %6654 = vmatpush1.xpose.msra.mxu0 0.0
        %6655 = vmatprep.subr.mxu0 0.0
        %6656 = vmatpush1.xpose.msra.mxu0 0.0
        %6657 = vmatprep.subr.mxu0 0.0
        %6658 = vmatpush1.xpose.msra.mxu0 0.0
        %6659 = vmatprep.subr.mxu0 0.0
        %6660 = vmatpush1.xpose.msra.mxu0 0.0
        %6661 = vmatprep.subr.mxu0 0.0
        %6662 = vmatpush1.xpose.msra.mxu0 0.0
        %6663 = vmatprep.subr.mxu0 0.0
        %6664 = vmatpush1.xpose.msra.mxu0 0.0
        %6665 = vmatprep.subr.mxu0 0.0
        %6666 = vmatpush1.xpose.msra.mxu0 0.0
        %6667 = vmatprep.subr.mxu0 0.0
        %6668 = vmatpush1.xpose.msra.mxu0 0.0
        %6669 = vmatprep.subr.mxu0 0.0
        %6670 = vmatpush1.xpose.msra.mxu0 0.0
        %6671 = vmatprep.subr.mxu0 0.0
        %6672 = vmatpush1.xpose.msra.mxu0 0.0
        %6673 = vmatprep.subr.mxu0 0.0
        %6674 = vmatpush1.xpose.msra.mxu0 0.0
        %6675 = vmatprep.subr.mxu0 0.0
        %6676 = vmatpush1.xpose.msra.mxu0 0.0
        %6677 = vmatprep.subr.mxu0 0.0
        %6678 = vmatpush1.xpose.msra.mxu0 0.0
        %6679 = vmatprep.subr.mxu0 0.0
        %6680 = vmatpush1.xpose.msra.mxu0 0.0
        %6681 = vmatprep.subr.mxu0 0.0
        %6682 = vmatpush1.xpose.msra.mxu0 0.0
        %6683 = vmatprep.subr.mxu0 0.0
        %6684 = vmatpush1.xpose.msra.mxu0 0.0
        %6685 = vmatprep.mubr.f32.mxu0 0.0
        %6686 = vmatmul.mubr.f32.gmra.mrb[0].mxu0 %v6574
        %v6687 = vpop.f32.mrb[0].mxu0
        %v6688 = vadd.f32 %v6565, %v6687
        %v6689 = vpop.f32.mrb[0].mxu0
        %6690 = vmatprep.mubr.f32.mxu0 0.0
        %6691 = vmatmul.mubr.f32.gmra.mrb[0].mxu0 %v6577
        %v6692 = vpop.f32.mrb[0].mxu0
        %v6693 = vadd.f32 %v6566, %v6692
        %v6694 = vpop.f32.mrb[0].mxu0
        %6695 = vmatprep.mubr.f32.mxu0 0.0
        %6696 = vmatmul.mubr.f32.gmra.mrb[0].mxu0 %v6580
        %v6697 = vpop.f32.mrb[0].mxu0
        %v6698 = vadd.f32 %v6567, %v6697
        %v6699 = vpop.f32.mrb[0].mxu0
        %6700 = vmatprep.mubr.f32.mxu0 0.0
        %6701 = vmatmul.mubr.f32.gmra.mrb[0].mxu0 %v6583
        %v6702 = vpop.f32.mrb[0].mxu0
        %v6703 = vadd.f32 %v6568, %v6702
        %v6704 = vpop.f32.mrb[0].mxu0
        %6705 = vmatprep.mubr.f32.mxu0 0.0
        %6706 = vmatmul.mubr.f32.gmra.mrb[0].mxu0 %v6586
        %v6707 = vpop.f32.mrb[0].mxu0
        %v6708 = vadd.f32 %v6569, %v6707
        %v6709 = vpop.f32.mrb[0].mxu0
        %6710 = vmatprep.mubr.f32.mxu0 0.0
        %6711 = vmatmul.mubr.f32.gmra.mrb[0].mxu0 %v6589
        %v6712 = vpop.f32.mrb[0].mxu0
        %v6713 = vadd.f32 %v6570, %v6712
        %v6714 = vpop.f32.mrb[0].mxu0
        %6715 = vmatprep.mubr.f32.mxu0 0.0
        %6716 = vmatmul.mubr.f32.gmra.mrb[0].mxu0 %v6592
        %v6717 = vpop.f32.mrb[0].mxu0
        %v6718 = vadd.f32 %v6571, %v6717
        %v6719 = vpop.f32.mrb[0].mxu0
        %6720 = vmatprep.mubr.f32.mxu0 0.0
        %6721 = vmatmul.mubr.f32.gmra.mrb[0].mxu0 %v6595
        %v6722 = vpop.f32.mrb[0].mxu0
        %v6723 = vadd.f32 %v6572, %v6722
        %v6724 = vpop.f32.mrb[0].mxu0
        %6725 = vdwg.mxu0
        %v6726 = vsel %vm5796, %v6688, -inf
        %6727 = vmax.xlane.f32.xlu0 %v6726
        %v6728 = vpop.xlane.xlu0 %6727
        %v6729 = vsel %vm5796, %v6693, -inf
        %6730 = vmax.xlane.f32.xlu0 %v6729
        %v6731 = vpop.xlane.xlu0 %6730
        %v6732 = vsel %vm5796, %v6698, -inf
        %6733 = vmax.xlane.f32.xlu0 %v6732
        %v6734 = vpop.xlane.xlu0 %6733
        %v6735 = vsel %vm5796, %v6703, -inf
        %6736 = vmax.xlane.f32.xlu0 %v6735
        %v6737 = vpop.xlane.xlu0 %6736
        %v6738 = vsel %vm5796, %v6708, -inf
        %6739 = vmax.xlane.f32.xlu0 %v6738
        %v6740 = vpop.xlane.xlu0 %6739
        %v6741 = vsel %vm5796, %v6713, -inf
        %6742 = vmax.xlane.f32.xlu0 %v6741
        %v6743 = vpop.xlane.xlu0 %6742
        %v6744 = vsel %vm5796, %v6718, -inf
        %6745 = vmax.xlane.f32.xlu0 %v6744
        %v6746 = vpop.xlane.xlu0 %6745
        %v6747 = vsel %vm5796, %v6723, -inf
        %6748 = vmax.xlane.f32.xlu0 %v6747
        %v6749 = vpop.xlane.xlu0 %6748
        %v6750 = vsub.f32 %v6688, %v6728
        %v6751 = vsub.f32 %v6693, %v6731
        %v6752 = vsub.f32 %v6698, %v6734
        %v6753 = vsub.f32 %v6703, %v6737
        %v6754 = vsub.f32 %v6708, %v6740
        %v6755 = vsub.f32 %v6713, %v6743
        %v6756 = vsub.f32 %v6718, %v6746
        %v6757 = vsub.f32 %v6723, %v6749
        %v6758 = vmul.f32 %v6750, 1.442695
        %v6759 = vpow.pop %v6758
        %v6760 = vmul.f32 %v6751, 1.442695
        %v6761 = vpow.pop %v6760
        %v6762 = vmul.f32 %v6752, 1.442695
        %v6763 = vpow.pop %v6762
        %v6764 = vmul.f32 %v6753, 1.442695
        %v6765 = vpow.pop %v6764
        %v6766 = vmul.f32 %v6754, 1.442695
        %v6767 = vpow.pop %v6766
        %v6768 = vmul.f32 %v6755, 1.442695
        %v6769 = vpow.pop %v6768
        %v6770 = vmul.f32 %v6756, 1.442695
        %v6771 = vpow.pop %v6770
        %v6772 = vmul.f32 %v6757, 1.442695
        %v6773 = vpow.pop %v6772
        %v6774 = vsel %vm5796, %v6759, 0.0
        %6775 = vadd.xlane.f32.xlu0 %v6774
        %v6776 = vpop.xlane.xlu0 %6775
        %v6777 = vsel %vm5796, %v6761, 0.0
        %6778 = vadd.xlane.f32.xlu0 %v6777
        %v6779 = vpop.xlane.xlu0 %6778
        %v6780 = vsel %vm5796, %v6763, 0.0
        %6781 = vadd.xlane.f32.xlu0 %v6780
        %v6782 = vpop.xlane.xlu0 %6781
        %v6783 = vsel %vm5796, %v6765, 0.0
        %6784 = vadd.xlane.f32.xlu0 %v6783
        %v6785 = vpop.xlane.xlu0 %6784
        %v6786 = vsel %vm5796, %v6767, 0.0
        %6787 = vadd.xlane.f32.xlu0 %v6786
        %v6788 = vpop.xlane.xlu0 %6787
        %v6789 = vsel %vm5796, %v6769, 0.0
        %6790 = vadd.xlane.f32.xlu0 %v6789
        %v6791 = vpop.xlane.xlu0 %6790
        %v6792 = vsel %vm5796, %v6771, 0.0
        %6793 = vadd.xlane.f32.xlu0 %v6792
        %v6794 = vpop.xlane.xlu0 %6793
        %v6795 = vsel %vm5796, %v6773, 0.0
        %6796 = vadd.xlane.f32.xlu0 %v6795
        %v6797 = vpop.xlane.xlu0 %6796
        %v6798 = vrcp.pop %v6776
        %v6799 = vmul.f32 %v6759, %v6798
        %v6800 = vrcp.pop %v6779
        %v6801 = vmul.f32 %v6761, %v6800
        %v6802 = vrcp.pop %v6782
        %v6803 = vmul.f32 %v6763, %v6802
        %v6804 = vrcp.pop %v6785
        %v6805 = vmul.f32 %v6765, %v6804
        %v6806 = vrcp.pop %v6788
        %v6807 = vmul.f32 %v6767, %v6806
        %v6808 = vrcp.pop %v6791
        %v6809 = vmul.f32 %v6769, %v6808
        %v6810 = vrcp.pop %v6794
        %v6811 = vmul.f32 %v6771, %v6810
        %v6812 = vrcp.pop %v6797
        %v6813 = vmul.f32 %v6773, %v6812
        %v6815 = vsel %vm5796, %v6799, 0
        %v6818 = vsel %vm5796, %v6801, 0
        %v6821 = vsel %vm5796, %v6803, 0
        %v6824 = vsel %vm5796, %v6805, 0
        %v6827 = vsel %vm5796, %v6807, 0
        %v6830 = vsel %vm5796, %v6809, 0
        %v6833 = vsel %vm5796, %v6811, 0
        %v6836 = vsel %vm5796, %v6813, 0
        %6838 = vmatprep.subr.mxu0 0.0
        %6839 = vmatpush1.msra.mxu0 %v6331
        %6840 = vmatprep.subr.mxu0 0.0
        %6841 = vmatpush1.msra.mxu0 %v6334
        %6842 = vmatprep.subr.mxu0 0.0
        %6843 = vmatpush1.msra.mxu0 %v6380
        %6844 = vmatprep.subr.mxu0 0.0
        %6845 = vmatpush1.msra.mxu0 %v6382
        %6846 = vmatprep.subr.mxu0 0.0
        %6847 = vmatpush1.msra.mxu0 %v6386
        %6848 = vmatprep.subr.mxu0 0.0
        %6849 = vmatpush1.msra.mxu0 %v6388
        %6850 = vmatprep.subr.mxu0 0.0
        %6851 = vmatpush1.msra.mxu0 %v6392
        %6852 = vmatprep.subr.mxu0 0.0
        %6853 = vmatpush1.msra.mxu0 %v6394
        %6854 = vmatprep.subr.mxu0 0.0
        %6855 = vmatpush1.msra.mxu0 0.0
        %6856 = vmatprep.subr.mxu0 0.0
        %6857 = vmatpush1.msra.mxu0 0.0
        %6858 = vmatprep.subr.mxu0 0.0
        %6859 = vmatpush1.msra.mxu0 0.0
        %6860 = vmatprep.subr.mxu0 0.0
        %6861 = vmatpush1.msra.mxu0 0.0
        %6862 = vmatprep.subr.mxu0 0.0
        %6863 = vmatpush1.msra.mxu0 0.0
        %6864 = vmatprep.subr.mxu0 0.0
        %6865 = vmatpush1.msra.mxu0 0.0
        %6866 = vmatprep.subr.mxu0 0.0
        %6867 = vmatpush1.msra.mxu0 0.0
        %6868 = vmatprep.subr.mxu0 0.0
        %6869 = vmatpush1.msra.mxu0 0.0
        %6870 = vmatprep.subr.mxu0 0.0
        %6871 = vmatpush1.msra.mxu0 0.0
        %6872 = vmatprep.subr.mxu0 0.0
        %6873 = vmatpush1.msra.mxu0 0.0
        %6874 = vmatprep.subr.mxu0 0.0
        %6875 = vmatpush1.msra.mxu0 0.0
        %6876 = vmatprep.subr.mxu0 0.0
        %6877 = vmatpush1.msra.mxu0 0.0
        %6878 = vmatprep.subr.mxu0 0.0
        %6879 = vmatpush1.msra.mxu0 0.0
        %6880 = vmatprep.subr.mxu0 0.0
        %6881 = vmatpush1.msra.mxu0 0.0
        %6882 = vmatprep.subr.mxu0 0.0
        %6883 = vmatpush1.msra.mxu0 0.0
        %6884 = vmatprep.subr.mxu0 0.0
        %6885 = vmatpush1.msra.mxu0 0.0
        %6886 = vmatprep.subr.mxu0 0.0
        %6887 = vmatpush1.msra.mxu0 0.0
        %6888 = vmatprep.subr.mxu0 0.0
        %6889 = vmatpush1.msra.mxu0 0.0
        %6890 = vmatprep.subr.mxu0 0.0
        %6891 = vmatpush1.msra.mxu0 0.0
        %6892 = vmatprep.subr.mxu0 0.0
        %6893 = vmatpush1.msra.mxu0 0.0
        %6894 = vmatprep.subr.mxu0 0.0
        %6895 = vmatpush1.msra.mxu0 0.0
        %6896 = vmatprep.subr.mxu0 0.0
        %6897 = vmatpush1.msra.mxu0 0.0
        %6898 = vmatprep.subr.mxu0 0.0
        %6899 = vmatpush1.msra.mxu0 0.0
        %6900 = vmatprep.subr.mxu0 0.0
        %6901 = vmatpush1.msra.mxu0 0.0
        %6902 = vmatprep.mubr.f32.mxu0 0.0
        %6903 = vmatmul.mubr.f32.gmra.mrb[0].mxu0 %v6815
        %v6904 = vpop.f32.mrb[0].mxu0
        %v6905 = vadd.f32 0.0, %v6904
        %v6906 = vpop.f32.mrb[0].mxu0
        %6907 = vmatprep.mubr.f32.mxu0 0.0
        %6908 = vmatmul.mubr.f32.gmra.mrb[0].mxu0 %v6818
        %v6909 = vpop.f32.mrb[0].mxu0
        %v6910 = vadd.f32 0.0, %v6909
        %v6911 = vpop.f32.mrb[0].mxu0
        %6912 = vmatprep.mubr.f32.mxu0 0.0
        %6913 = vmatmul.mubr.f32.gmra.mrb[0].mxu0 %v6821
        %v6914 = vpop.f32.mrb[0].mxu0
        %v6915 = vadd.f32 0.0, %v6914
        %v6916 = vpop.f32.mrb[0].mxu0
        %6917 = vmatprep.mubr.f32.mxu0 0.0
        %6918 = vmatmul.mubr.f32.gmra.mrb[0].mxu0 %v6824
        %v6919 = vpop.f32.mrb[0].mxu0
        %v6920 = vadd.f32 0.0, %v6919
        %v6921 = vpop.f32.mrb[0].mxu0
        %6922 = vmatprep.mubr.f32.mxu0 0.0
        %6923 = vmatmul.mubr.f32.gmra.mrb[0].mxu0 %v6827
        %v6924 = vpop.f32.mrb[0].mxu0
        %v6925 = vadd.f32 0.0, %v6924
        %v6926 = vpop.f32.mrb[0].mxu0
        %6927 = vmatprep.mubr.f32.mxu0 0.0
        %6928 = vmatmul.mubr.f32.gmra.mrb[0].mxu0 %v6830
        %v6929 = vpop.f32.mrb[0].mxu0
        %v6930 = vadd.f32 0.0, %v6929
        %v6931 = vpop.f32.mrb[0].mxu0
        %6932 = vmatprep.mubr.f32.mxu0 0.0
        %6933 = vmatmul.mubr.f32.gmra.mrb[0].mxu0 %v6833
        %v6934 = vpop.f32.mrb[0].mxu0
        %v6935 = vadd.f32 0.0, %v6934
        %v6936 = vpop.f32.mrb[0].mxu0
        %6937 = vmatprep.mubr.f32.mxu0 0.0
        %6938 = vmatmul.mubr.f32.gmra.mrb[0].mxu0 %v6836
        %v6939 = vpop.f32.mrb[0].mxu0
        %v6940 = vadd.f32 0.0, %v6939
        %v6941 = vpop.f32.mrb[0].mxu0
        %6942 = vdwg.mxu0
        %v6943 = vpack.c.bf16 %v6910, %v6905
        %v6944 = vld [vmem:[%s47] sm:$0xf]
        %v6945 = vld [vmem:[%s47 + $0x4] sm:$0xf]
        %v6948 = vunpack.c.l.b16 %v6944
        %v6949 = vunpack.c.l.b16 %v6945
        %v6950 = vpack.c.b16 %v6949, %v6948
        %v6953 = vsel %vm1222, %v6943, 0
        %6955 = vmatprep.subr.bf16.mxu0 0
        %6956 = vmatpush1.bf16.msra.mxu0 %v6950
        %6957 = vmatprep.subr.bf16.mxu0 0
        %6958 = vmatpush1.bf16.msra.mxu0 0
        %6959 = vmatprep.subr.bf16.mxu0 0
        %6960 = vmatpush1.bf16.msra.mxu0 0
        %6961 = vmatprep.subr.bf16.mxu0 0
        %6962 = vmatpush1.bf16.msra.mxu0 0
        %6963 = vmatprep.subr.bf16.mxu0 0
        %6964 = vmatpush1.bf16.msra.mxu0 0
        %6965 = vmatprep.subr.bf16.mxu0 0
        %6966 = vmatpush1.bf16.msra.mxu0 0
        %6967 = vmatprep.subr.bf16.mxu0 0
        %6968 = vmatpush1.bf16.msra.mxu0 0
        %6969 = vmatprep.subr.bf16.mxu0 0
        %6970 = vmatpush1.bf16.msra.mxu0 0
        %6971 = vmatprep.subr.bf16.mxu0 0
        %6972 = vmatpush1.bf16.msra.mxu0 0
        %6973 = vmatprep.subr.bf16.mxu0 0
        %6974 = vmatpush1.bf16.msra.mxu0 0
        %6975 = vmatprep.subr.bf16.mxu0 0
        %6976 = vmatpush1.bf16.msra.mxu0 0
        %6977 = vmatprep.subr.bf16.mxu0 0
        %6978 = vmatpush1.bf16.msra.mxu0 0
        %6979 = vmatprep.subr.bf16.mxu0 0
        %6980 = vmatpush1.bf16.msra.mxu0 0
        %6981 = vmatprep.subr.bf16.mxu0 0
        %6982 = vmatpush1.bf16.msra.mxu0 0
        %6983 = vmatprep.subr.bf16.mxu0 0
        %6984 = vmatpush1.bf16.msra.mxu0 0
        %6985 = vmatprep.subr.bf16.mxu0 0
        %6986 = vmatpush1.bf16.msra.mxu0 0
        %6987 = vmatprep.mubr.bf16.mxu0 0
        %6988 = vmatmul.mubr.bf16.gmra.mrb[0].mxu0 %v6953
        %v6989 = vpop.f32.mrb[0].mxu0
        %v6990 = vadd.f32 0.0, %v6989
        %v6991 = vpop.f32.mrb[0].mxu0
        %v6992 = vpop.f32.mrb[0].mxu0
        %v6993 = vadd.f32 0.0, %v6992
        %v6994 = vpop.f32.mrb[0].mxu0
        %6995 = vdwg.mxu0
        %v6996 = vlaneseq
        %v6997 = vshrl.u32 %v6996, 7
        %v6998 = vsub.s32 2, %v6997
        %v6999 = vrot.slane %v6103, %v6998
        %v7000 = vadd.f32 %v6999, %v6990
        %v7001 = vadd.f32 %v6999, %v6993
        %v7002 = vpack.c.bf16 %v6920, %v6915
        %v7003 = vld [vmem:[%s47 + $0x8] sm:$0xf]
        %v7004 = vld [vmem:[%s47 + $0xc] sm:$0xf]
        %v7007 = vunpack.c.l.b16 %v7003
        %v7008 = vunpack.c.l.b16 %v7004
        %v7009 = vpack.c.b16 %v7008, %v7007
        %v7012 = vsel %vm1222, %v7002, 0
        %7014 = vmatprep.subr.bf16.mxu0 0
        %7015 = vmatpush1.bf16.msra.mxu0 %v7009
        %7016 = vmatprep.subr.bf16.mxu0 0
        %7017 = vmatpush1.bf16.msra.mxu0 0
        %7018 = vmatprep.subr.bf16.mxu0 0
        %7019 = vmatpush1.bf16.msra.mxu0 0
        %7020 = vmatprep.subr.bf16.mxu0 0
        %7021 = vmatpush1.bf16.msra.mxu0 0
        %7022 = vmatprep.subr.bf16.mxu0 0
        %7023 = vmatpush1.bf16.msra.mxu0 0
        %7024 = vmatprep.subr.bf16.mxu0 0
        %7025 = vmatpush1.bf16.msra.mxu0 0
        %7026 = vmatprep.subr.bf16.mxu0 0
        %7027 = vmatpush1.bf16.msra.mxu0 0
        %7028 = vmatprep.subr.bf16.mxu0 0
        %7029 = vmatpush1.bf16.msra.mxu0 0
        %7030 = vmatprep.subr.bf16.mxu0 0
        %7031 = vmatpush1.bf16.msra.mxu0 0
        %7032 = vmatprep.subr.bf16.mxu0 0
        %7033 = vmatpush1.bf16.msra.mxu0 0
        %7034 = vmatprep.subr.bf16.mxu0 0
        %7035 = vmatpush1.bf16.msra.mxu0 0
        %7036 = vmatprep.subr.bf16.mxu0 0
        %7037 = vmatpush1.bf16.msra.mxu0 0
        %7038 = vmatprep.subr.bf16.mxu0 0
        %7039 = vmatpush1.bf16.msra.mxu0 0
        %7040 = vmatprep.subr.bf16.mxu0 0
        %7041 = vmatpush1.bf16.msra.mxu0 0
        %7042 = vmatprep.subr.bf16.mxu0 0
        %7043 = vmatpush1.bf16.msra.mxu0 0
        %7044 = vmatprep.subr.bf16.mxu0 0
        %7045 = vmatpush1.bf16.msra.mxu0 0
        %7046 = vmatprep.mubr.bf16.mxu0 0
        %7047 = vmatmul.mubr.bf16.gmra.mrb[0].mxu0 %v7012
        %v7048 = vpop.f32.mrb[0].mxu0
        %v7049 = vadd.f32 0.0, %v7048
        %v7050 = vpop.f32.mrb[0].mxu0
        %v7051 = vpop.f32.mrb[0].mxu0
        %v7052 = vadd.f32 0.0, %v7051
        %v7053 = vpop.f32.mrb[0].mxu0
        %7054 = vdwg.mxu0
        %v7055 = vadd.f32 %v7000, %v7049
        %v7056 = vadd.f32 %v7001, %v7052
        %v7057 = vpack.c.bf16 %v6930, %v6925
        %v7058 = vld [vmem:[%s47 + $0x10] sm:$0xf]
        %v7059 = vld [vmem:[%s47 + $0x14] sm:$0xf]
        %v7062 = vunpack.c.l.b16 %v7058
        %v7063 = vunpack.c.l.b16 %v7059
        %v7064 = vpack.c.b16 %v7063, %v7062
        %v7067 = vsel %vm1222, %v7057, 0
        %7069 = vmatprep.subr.bf16.mxu0 0
        %7070 = vmatpush1.bf16.msra.mxu0 %v7064
        %7071 = vmatprep.subr.bf16.mxu0 0
        %7072 = vmatpush1.bf16.msra.mxu0 0
        %7073 = vmatprep.subr.bf16.mxu0 0
        %7074 = vmatpush1.bf16.msra.mxu0 0
        %7075 = vmatprep.subr.bf16.mxu0 0
        %7076 = vmatpush1.bf16.msra.mxu0 0
        %7077 = vmatprep.subr.bf16.mxu0 0
        %7078 = vmatpush1.bf16.msra.mxu0 0
        %7079 = vmatprep.subr.bf16.mxu0 0
        %7080 = vmatpush1.bf16.msra.mxu0 0
        %7081 = vmatprep.subr.bf16.mxu0 0
        %7082 = vmatpush1.bf16.msra.mxu0 0
        %7083 = vmatprep.subr.bf16.mxu0 0
        %7084 = vmatpush1.bf16.msra.mxu0 0
        %7085 = vmatprep.subr.bf16.mxu0 0
        %7086 = vmatpush1.bf16.msra.mxu0 0
        %7087 = vmatprep.subr.bf16.mxu0 0
        %7088 = vmatpush1.bf16.msra.mxu0 0
        %7089 = vmatprep.subr.bf16.mxu0 0
        %7090 = vmatpush1.bf16.msra.mxu0 0
        %7091 = vmatprep.subr.bf16.mxu0 0
        %7092 = vmatpush1.bf16.msra.mxu0 0
        %7093 = vmatprep.subr.bf16.mxu0 0
        %7094 = vmatpush1.bf16.msra.mxu0 0
        %7095 = vmatprep.subr.bf16.mxu0 0
        %7096 = vmatpush1.bf16.msra.mxu0 0
        %7097 = vmatprep.subr.bf16.mxu0 0
        %7098 = vmatpush1.bf16.msra.mxu0 0
        %7099 = vmatprep.subr.bf16.mxu0 0
        %7100 = vmatpush1.bf16.msra.mxu0 0
        %7101 = vmatprep.mubr.bf16.mxu0 0
        %7102 = vmatmul.mubr.bf16.gmra.mrb[0].mxu0 %v7067
        %v7103 = vpop.f32.mrb[0].mxu0
        %v7104 = vadd.f32 0.0, %v7103
        %v7105 = vpop.f32.mrb[0].mxu0
        %v7106 = vpop.f32.mrb[0].mxu0
        %v7107 = vadd.f32 0.0, %v7106
        %v7108 = vpop.f32.mrb[0].mxu0
        %7109 = vdwg.mxu0
        %v7110 = vadd.f32 %v7055, %v7104
        %v7111 = vadd.f32 %v7056, %v7107
        %v7112 = vpack.c.bf16 %v6940, %v6935
        %v7113 = vld [vmem:[%s47 + $0x18] sm:$0xf]
        %v7114 = vld [vmem:[%s47 + $0x1c] sm:$0xf]
        %v7117 = vunpack.c.l.b16 %v7113
        %v7118 = vunpack.c.l.b16 %v7114
        %v7119 = vpack.c.b16 %v7118, %v7117
        %v7122 = vsel %vm1222, %v7112, 0
        %7124 = vmatprep.subr.bf16.mxu0 0
        %7125 = vmatpush1.bf16.msra.mxu0 %v7119
        %7126 = vmatprep.subr.bf16.mxu0 0
        %7127 = vmatpush1.bf16.msra.mxu0 0
        %7128 = vmatprep.subr.bf16.mxu0 0
        %7129 = vmatpush1.bf16.msra.mxu0 0
        %7130 = vmatprep.subr.bf16.mxu0 0
        %7131 = vmatpush1.bf16.msra.mxu0 0
        %7132 = vmatprep.subr.bf16.mxu0 0
        %7133 = vmatpush1.bf16.msra.mxu0 0
        %7134 = vmatprep.subr.bf16.mxu0 0
        %7135 = vmatpush1.bf16.msra.mxu0 0
        %7136 = vmatprep.subr.bf16.mxu0 0
        %7137 = vmatpush1.bf16.msra.mxu0 0
        %7138 = vmatprep.subr.bf16.mxu0 0
        %7139 = vmatpush1.bf16.msra.mxu0 0
        %7140 = vmatprep.subr.bf16.mxu0 0
        %7141 = vmatpush1.bf16.msra.mxu0 0
        %7142 = vmatprep.subr.bf16.mxu0 0
        %7143 = vmatpush1.bf16.msra.mxu0 0
        %7144 = vmatprep.subr.bf16.mxu0 0
        %7145 = vmatpush1.bf16.msra.mxu0 0
        %7146 = vmatprep.subr.bf16.mxu0 0
        %7147 = vmatpush1.bf16.msra.mxu0 0
        %7148 = vmatprep.subr.bf16.mxu0 0
        %7149 = vmatpush1.bf16.msra.mxu0 0
        %7150 = vmatprep.subr.bf16.mxu0 0
        %7151 = vmatpush1.bf16.msra.mxu0 0
        %7152 = vmatprep.subr.bf16.mxu0 0
        %7153 = vmatpush1.bf16.msra.mxu0 0
        %7154 = vmatprep.subr.bf16.mxu0 0
        %7155 = vmatpush1.bf16.msra.mxu0 0
        %7156 = vmatprep.mubr.bf16.mxu0 0
        %7157 = vmatmul.mubr.bf16.gmra.mrb[0].mxu0 %v7122
        %v7158 = vpop.f32.mrb[0].mxu0
        %v7159 = vadd.f32 0.0, %v7158
        %v7160 = vpop.f32.mrb[0].mxu0
        %v7161 = vpop.f32.mrb[0].mxu0
        %v7162 = vadd.f32 0.0, %v7161
        %v7163 = vpop.f32.mrb[0].mxu0
        %7164 = vdwg.mxu0
        %v7165 = vadd.f32 %v7110, %v7159
        %v7166 = vadd.f32 %v7111, %v7162
        %v7167 = vsel %vm5796, %v7165, 0.0
        %7168 = vadd.xlane.f32.xlu0 %v7167
        %v7169 = vpop.xlane.xlu0 %7168
        %v7170 = vsel %vm5796, %v7166, 0.0
        %7171 = vadd.xlane.f32.xlu0 %v7170
        %v7172 = vpop.xlane.xlu0 %7171
        %v7173 = vmul.f32 %v7169, %v6070
        %v7174 = vmul.f32 %v7172, %v6070
        %v7175 = vsub.f32 %v7165, %v7173
        %v7176 = vsub.f32 %v7166, %v7174
        %v7177 = vmul.f32 %v7175, %v7175
        %v7178 = vmul.f32 %v7176, %v7176
        %v7179 = vsel %vm5796, %v7177, 0.0
        %7180 = vadd.xlane.f32.xlu0 %v7179
        %v7181 = vpop.xlane.xlu0 %7180
        %v7182 = vsel %vm5796, %v7178, 0.0
        %7183 = vadd.xlane.f32.xlu0 %v7182
        %v7184 = vpop.xlane.xlu0 %7183
        %v7185 = vmul.f32 %v7181, %v6070
        %v7186 = vmul.f32 %v7184, %v6070
        %v7187 = vadd.f32 %v7185, 1e-05
        %v7188 = vadd.f32 %v7186, 1e-05
        %v7189 = vrsqrt.pop %v7187
        %v7190 = vrsqrt.pop %v7188
        %v7191 = vmul.f32 %v7175, %v7189
        %v7192 = vmul.f32 %v7176, %v7190
        %v7193 = vlaneseq
        %v7194 = vshrl.u32 %v7193, 7
        %v7195 = vsub.s32 3, %v7194
        %v7196 = vrot.slane %v6103, %v7195
        %v7197 = vmul.f32 %v7191, %v7196
        %v7198 = vmul.f32 %v7192, %v7196
        %v7199 = vlaneseq
        %v7200 = vshrl.u32 %v7199, 7
        %v7201 = vsub.s32 4, %v7200
        %v7202 = vrot.slane %v6103, %v7201
        %v7203 = vadd.f32 %v7197, %v7202
        %v7204 = vadd.f32 %v7198, %v7202
        %v7205 = vadd.f32 %v6101, %v7203
        %v7206 = vadd.f32 %v6102, %v7204
        %v7207 = vpack.c.bf16 %v7206, %v7205
        %v7208 = vld [vmem:[%s49] sm:$0xff]
        %v7209 = vld [vmem:[%s49 + $0x8] sm:$0xff]
        %v7210 = vld [vmem:[%s49 + $0x10] sm:$0xff]
        %v7211 = vld [vmem:[%s49 + $0x18] sm:$0xff]
        %v7212 = vld [vmem:[%s49 + $0x20] sm:$0xff]
        %v7213 = vld [vmem:[%s49 + $0x28] sm:$0xff]
        %v7214 = vld [vmem:[%s49 + $0x30] sm:$0xff]
        %v7215 = vld [vmem:[%s49 + $0x38] sm:$0xff]
        %v7216 = vld [vmem:[%s55] sm:$0x3]
        %v7218 = vlaneseq
        %v7219 = vshrl.u32 %v7218, 7
        %v7220 = vsub.s32 0, %v7219
        %v7221 = vrot.slane %v7216, %v7220
        %v7222 = vlaneseq
        %v7223 = vshrl.u32 %v7222, 7
        %v7224 = vsub.s32 1, %v7223
        %v7225 = vrot.slane %v7216, %v7224
        %v7236 = vunpack.c.l.b16 %v7208
        %v7237 = vunpack.c.h.b16 %v7208
        %v7238 = vunpack.c.l.b16 %v7209
        %v7239 = vunpack.c.h.b16 %v7209
        %v7240 = vunpack.c.l.b16 %v7210
        %v7241 = vunpack.c.h.b16 %v7210
        %v7242 = vunpack.c.l.b16 %v7211
        %v7243 = vunpack.c.h.b16 %v7211
        %v7244 = vunpack.c.l.b16 %v7212
        %v7245 = vunpack.c.h.b16 %v7212
        %v7246 = vunpack.c.l.b16 %v7213
        %v7247 = vunpack.c.h.b16 %v7213
        %v7248 = vunpack.c.l.b16 %v7214
        %v7249 = vunpack.c.h.b16 %v7214
        %v7250 = vunpack.c.l.b16 %v7215
        %v7251 = vunpack.c.h.b16 %v7215
        %v7252 = vpack.c.b16 %v7238, %v7236
        %v7253 = vpack.c.b16 %v7239, %v7237
        %v7254 = vpack.c.b16 %v7242, %v7240
        %v7255 = vpack.c.b16 %v7243, %v7241
        %v7256 = vpack.c.b16 %v7246, %v7244
        %v7257 = vpack.c.b16 %v7247, %v7245
        %v7258 = vpack.c.b16 %v7250, %v7248
        %v7259 = vpack.c.b16 %v7251, %v7249
        %v7269 = vsel %vm5796, %v7207, 0
        %7271 = vmatprep.subr.bf16.mxu0 %v7253
        %7272 = vmatpush1.bf16.msra.mxu0 %v7252
        %7273 = vmatprep.subr.bf16.mxu0 %v7255
        %7274 = vmatpush1.bf16.msra.mxu0 %v7254
        %7275 = vmatprep.subr.bf16.mxu0 %v7257
        %7276 = vmatpush1.bf16.msra.mxu0 %v7256
        %7277 = vmatprep.subr.bf16.mxu0 %v7259
        %7278 = vmatpush1.bf16.msra.mxu0 %v7258
        %7279 = vmatprep.subr.bf16.mxu0 0
        %7280 = vmatpush1.bf16.msra.mxu0 0
        %7281 = vmatprep.subr.bf16.mxu0 0
        %7282 = vmatpush1.bf16.msra.mxu0 0
        %7283 = vmatprep.subr.bf16.mxu0 0
        %7284 = vmatpush1.bf16.msra.mxu0 0
        %7285 = vmatprep.subr.bf16.mxu0 0
        %7286 = vmatpush1.bf16.msra.mxu0 0
        %7287 = vmatprep.subr.bf16.mxu0 0
        %7288 = vmatpush1.bf16.msra.mxu0 0
        %7289 = vmatprep.subr.bf16.mxu0 0
        %7290 = vmatpush1.bf16.msra.mxu0 0
        %7291 = vmatprep.subr.bf16.mxu0 0
        %7292 = vmatpush1.bf16.msra.mxu0 0
        %7293 = vmatprep.subr.bf16.mxu0 0
        %7294 = vmatpush1.bf16.msra.mxu0 0
        %7295 = vmatprep.subr.bf16.mxu0 0
        %7296 = vmatpush1.bf16.msra.mxu0 0
        %7297 = vmatprep.subr.bf16.mxu0 0
        %7298 = vmatpush1.bf16.msra.mxu0 0
        %7299 = vmatprep.subr.bf16.mxu0 0
        %7300 = vmatpush1.bf16.msra.mxu0 0
        %7301 = vmatprep.subr.bf16.mxu0 0
        %7302 = vmatpush1.bf16.msra.mxu0 0
        %7303 = vmatprep.mubr.bf16.mxu0 0
        %7304 = vmatmul.mubr.bf16.gmra.mrb[0].mxu0 %v7269
        %v7305 = vpop.f32.mrb[0].mxu0
        %v7306 = vadd.f32 %v7221, %v7305
        %v7307 = vpop.f32.mrb[0].mxu0
        %v7308 = vadd.f32 %v7225, %v7307
        %v7309 = vpop.f32.mrb[0].mxu0
        %v7310 = vadd.f32 %v7221, %v7309
        %v7311 = vpop.f32.mrb[0].mxu0
        %v7312 = vadd.f32 %v7225, %v7311
        %7313 = vdwg.mxu0
        %v7314 = vmul.f32 %v7306, 0.5
        %v7315 = vmul.f32 %v7308, 0.5
        %v7316 = vmul.f32 %v7310, 0.5
        %v7317 = vmul.f32 %v7312, 0.5
        %v7318 = vmul.f32 %v7306, 0.70710677
        %v7319 = vmul.f32 %v7308, 0.70710677
        %v7320 = vmul.f32 %v7310, 0.70710677
        %v7321 = vmul.f32 %v7312, 0.70710677
        %vm7322 = vcmp.lt.f32.partialorder %v7318, 0.0
        %vm7323 = vcmp.lt.f32.partialorder %v7319, 0.0
        %vm7324 = vcmp.lt.f32.partialorder %v7320, 0.0
        %vm7325 = vcmp.lt.f32.partialorder %v7321, 0.0
        %v7326 = vsel %vm7322, -1.0, 1.0
        %v7327 = vsel %vm7323, -1.0, 1.0
        %v7328 = vsel %vm7324, -1.0, 1.0
        %v7329 = vsel %vm7325, -1.0, 1.0
        %v7330 = vand.u32 2147483647, %v7318
        %v7331 = vand.u32 2147483647, %v7319
        %v7332 = vand.u32 2147483647, %v7320
        %v7333 = vand.u32 2147483647, %v7321
        %v7334 = vmul.f32 %v7330, 0.3275911
        %v7335 = vmul.f32 %v7331, 0.3275911
        %v7336 = vmul.f32 %v7332, 0.3275911
        %v7337 = vmul.f32 %v7333, 0.3275911
        %v7338 = vadd.f32 %v7334, 1.0
        %v7339 = vadd.f32 %v7335, 1.0
        %v7340 = vadd.f32 %v7336, 1.0
        %v7341 = vadd.f32 %v7337, 1.0
        %v7342 = vrcp.pop %v7338
        %v7343 = vmul.f32 1.0, %v7342
        %v7344 = vrcp.pop %v7339
        %v7345 = vmul.f32 1.0, %v7344
        %v7346 = vrcp.pop %v7340
        %v7347 = vmul.f32 1.0, %v7346
        %v7348 = vrcp.pop %v7341
        %v7349 = vmul.f32 1.0, %v7348
        %v7350 = vmul.f32 %v7343, 1.0614054
        %v7351 = vmul.f32 %v7345, 1.0614054
        %v7352 = vmul.f32 %v7347, 1.0614054
        %v7353 = vmul.f32 %v7349, 1.0614054
        %v7354 = vadd.f32 %v7350, -1.4531521
        %v7355 = vadd.f32 %v7351, -1.4531521
        %v7356 = vadd.f32 %v7352, -1.4531521
        %v7357 = vadd.f32 %v7353, -1.4531521
        %v7358 = vmul.f32 %v7354, %v7343
        %v7359 = vmul.f32 %v7355, %v7345
        %v7360 = vmul.f32 %v7356, %v7347
        %v7361 = vmul.f32 %v7357, %v7349
        %v7362 = vadd.f32 %v7358, 1.4214138
        %v7363 = vadd.f32 %v7359, 1.4214138
        %v7364 = vadd.f32 %v7360, 1.4214138
        %v7365 = vadd.f32 %v7361, 1.4214138
        %v7366 = vmul.f32 %v7362, %v7343
        %v7367 = vmul.f32 %v7363, %v7345
        %v7368 = vmul.f32 %v7364, %v7347
        %v7369 = vmul.f32 %v7365, %v7349
        %v7370 = vadd.f32 %v7366, -0.28449672
        %v7371 = vadd.f32 %v7367, -0.28449672
        %v7372 = vadd.f32 %v7368, -0.28449672
        %v7373 = vadd.f32 %v7369, -0.28449672
        %v7374 = vmul.f32 %v7370, %v7343
        %v7375 = vmul.f32 %v7371, %v7345
        %v7376 = vmul.f32 %v7372, %v7347
        %v7377 = vmul.f32 %v7373, %v7349
        %v7378 = vadd.f32 %v7374, 0.2548296
        %v7379 = vadd.f32 %v7375, 0.2548296
        %v7380 = vadd.f32 %v7376, 0.2548296
        %v7381 = vadd.f32 %v7377, 0.2548296
        %v7382 = vmul.f32 %v7378, %v7343
        %v7383 = vmul.f32 %v7379, %v7345
        %v7384 = vmul.f32 %v7380, %v7347
        %v7385 = vmul.f32 %v7381, %v7349
        %v7386 = vsub.f32 0.0, %v7330
        %v7387 = vsub.f32 0.0, %v7331
        %v7388 = vsub.f32 0.0, %v7332
        %v7389 = vsub.f32 0.0, %v7333
        %v7390 = vmul.f32 %v7386, %v7330
        %v7391 = vmul.f32 %v7387, %v7331
        %v7392 = vmul.f32 %v7388, %v7332
        %v7393 = vmul.f32 %v7389, %v7333
        %v7394 = vmul.f32 %v7390, 1.442695
        %v7395 = vpow.pop %v7394
        %v7396 = vmul.f32 %v7391, 1.442695
        %v7397 = vpow.pop %v7396
        %v7398 = vmul.f32 %v7392, 1.442695
        %v7399 = vpow.pop %v7398
        %v7400 = vmul.f32 %v7393, 1.442695
        %v7401 = vpow.pop %v7400
        %v7402 = vmul.f32 %v7382, %v7395
        %v7403 = vmul.f32 %v7383, %v7397
        %v7404 = vmul.f32 %v7384, %v7399
        %v7405 = vmul.f32 %v7385, %v7401
        %v7406 = vsub.f32 1.0, %v7402
        %v7407 = vsub.f32 1.0, %v7403
        %v7408 = vsub.f32 1.0, %v7404
        %v7409 = vsub.f32 1.0, %v7405
        %v7410 = vmul.f32 %v7326, %v7406
        %v7411 = vmul.f32 %v7327, %v7407
        %v7412 = vmul.f32 %v7328, %v7408
        %v7413 = vmul.f32 %v7329, %v7409
        %v7414 = vadd.f32 %v7410, 1.0
        %v7415 = vadd.f32 %v7411, 1.0
        %v7416 = vadd.f32 %v7412, 1.0
        %v7417 = vadd.f32 %v7413, 1.0
        %v7418 = vmul.f32 %v7314, %v7414
        %v7419 = vmul.f32 %v7315, %v7415
        %v7420 = vmul.f32 %v7316, %v7416
        %v7421 = vmul.f32 %v7317, %v7417
        %v7422 = vpack.c.bf16 %v7420, %v7418
        %v7423 = vpack.c.bf16 %v7421, %v7419
        %v7424 = vld [vmem:[%s51] sm:$0xf]
        %v7425 = vld [vmem:[%s51 + $0x4] sm:$0xf]
        %v7426 = vld [vmem:[%s51 + $0x8] sm:$0xf]
        %v7427 = vld [vmem:[%s51 + $0xc] sm:$0xf]
        %v7428 = vld [vmem:[%s51 + $0x10] sm:$0xf]
        %v7429 = vld [vmem:[%s51 + $0x14] sm:$0xf]
        %v7430 = vld [vmem:[%s51 + $0x18] sm:$0xf]
        %v7431 = vld [vmem:[%s51 + $0x1c] sm:$0xf]
        %v7432 = vld [vmem:[%s51 + $0x20] sm:$0xf]
        %v7433 = vld [vmem:[%s51 + $0x24] sm:$0xf]
        %v7434 = vld [vmem:[%s51 + $0x28] sm:$0xf]
        %v7435 = vld [vmem:[%s51 + $0x2c] sm:$0xf]
        %v7436 = vld [vmem:[%s51 + $0x30] sm:$0xf]
        %v7437 = vld [vmem:[%s51 + $0x34] sm:$0xf]
        %v7438 = vld [vmem:[%s51 + $0x38] sm:$0xf]
        %v7439 = vld [vmem:[%s51 + $0x3c] sm:$0xf]
        %v7440 = vld [vmem:[%s51 + $0x40] sm:$0xf]
        %v7441 = vld [vmem:[%s51 + $0x44] sm:$0xf]
        %v7442 = vld [vmem:[%s51 + $0x48] sm:$0xf]
        %v7443 = vld [vmem:[%s51 + $0x4c] sm:$0xf]
        %v7444 = vld [vmem:[%s51 + $0x50] sm:$0xf]
        %v7445 = vld [vmem:[%s51 + $0x54] sm:$0xf]
        %v7446 = vld [vmem:[%s51 + $0x58] sm:$0xf]
        %v7447 = vld [vmem:[%s51 + $0x5c] sm:$0xf]
        %v7448 = vld [vmem:[%s51 + $0x60] sm:$0xf]
        %v7449 = vld [vmem:[%s51 + $0x64] sm:$0xf]
        %v7450 = vld [vmem:[%s51 + $0x68] sm:$0xf]
        %v7451 = vld [vmem:[%s51 + $0x6c] sm:$0xf]
        %v7452 = vld [vmem:[%s51 + $0x70] sm:$0xf]
        %v7453 = vld [vmem:[%s51 + $0x74] sm:$0xf]
        %v7454 = vld [vmem:[%s51 + $0x78] sm:$0xf]
        %v7455 = vld [vmem:[%s51 + $0x7c] sm:$0xf]
        %v7456 = vlaneseq
        %v7457 = vshrl.u32 %v7456, 7
        %v7458 = vsub.s32 5, %v7457
        %v7459 = vrot.slane %v6103, %v7458
        %v7492 = vunpack.c.l.b16 %v7424
        %v7493 = vunpack.c.l.b16 %v7425
        %v7494 = vunpack.c.l.b16 %v7426
        %v7495 = vunpack.c.l.b16 %v7427
        %v7496 = vunpack.c.l.b16 %v7428
        %v7497 = vunpack.c.l.b16 %v7429
        %v7498 = vunpack.c.l.b16 %v7430
        %v7499 = vunpack.c.l.b16 %v7431
        %v7500 = vunpack.c.l.b16 %v7432
        %v7501 = vunpack.c.l.b16 %v7433
        %v7502 = vunpack.c.l.b16 %v7434
        %v7503 = vunpack.c.l.b16 %v7435
        %v7504 = vunpack.c.l.b16 %v7436
        %v7505 = vunpack.c.l.b16 %v7437
        %v7506 = vunpack.c.l.b16 %v7438
        %v7507 = vunpack.c.l.b16 %v7439
        %v7508 = vunpack.c.l.b16 %v7440
        %v7509 = vunpack.c.l.b16 %v7441
        %v7510 = vunpack.c.l.b16 %v7442
        %v7511 = vunpack.c.l.b16 %v7443
        %v7512 = vunpack.c.l.b16 %v7444
        %v7513 = vunpack.c.l.b16 %v7445
        %v7514 = vunpack.c.l.b16 %v7446
        %v7515 = vunpack.c.l.b16 %v7447
        %v7516 = vunpack.c.l.b16 %v7448
        %v7517 = vunpack.c.l.b16 %v7449
        %v7518 = vunpack.c.l.b16 %v7450
        %v7519 = vunpack.c.l.b16 %v7451
        %v7520 = vunpack.c.l.b16 %v7452
        %v7521 = vunpack.c.l.b16 %v7453
        %v7522 = vunpack.c.l.b16 %v7454
        %v7523 = vunpack.c.l.b16 %v7455
        %v7524 = vpack.c.b16 %v7493, %v7492
        %v7525 = vpack.c.b16 %v7495, %v7494
        %v7526 = vpack.c.b16 %v7497, %v7496
        %v7527 = vpack.c.b16 %v7499, %v7498
        %v7528 = vpack.c.b16 %v7501, %v7500
        %v7529 = vpack.c.b16 %v7503, %v7502
        %v7530 = vpack.c.b16 %v7505, %v7504
        %v7531 = vpack.c.b16 %v7507, %v7506
        %v7532 = vpack.c.b16 %v7509, %v7508
        %v7533 = vpack.c.b16 %v7511, %v7510
        %v7534 = vpack.c.b16 %v7513, %v7512
        %v7535 = vpack.c.b16 %v7515, %v7514
        %v7536 = vpack.c.b16 %v7517, %v7516
        %v7537 = vpack.c.b16 %v7519, %v7518
        %v7538 = vpack.c.b16 %v7521, %v7520
        %v7539 = vpack.c.b16 %v7523, %v7522
        %7556 = vmatprep.subr.bf16.mxu0 0
        %7557 = vmatpush1.bf16.msra.mxu0 %v7524
        %7558 = vmatprep.subr.bf16.mxu0 0
        %7559 = vmatpush1.bf16.msra.mxu0 %v7525
        %7560 = vmatprep.subr.bf16.mxu0 0
        %7561 = vmatpush1.bf16.msra.mxu0 %v7526
        %7562 = vmatprep.subr.bf16.mxu0 0
        %7563 = vmatpush1.bf16.msra.mxu0 %v7527
        %7564 = vmatprep.subr.bf16.mxu0 0
        %7565 = vmatpush1.bf16.msra.mxu0 %v7528
        %7566 = vmatprep.subr.bf16.mxu0 0
        %7567 = vmatpush1.bf16.msra.mxu0 %v7529
        %7568 = vmatprep.subr.bf16.mxu0 0
        %7569 = vmatpush1.bf16.msra.mxu0 %v7530
        %7570 = vmatprep.subr.bf16.mxu0 0
        %7571 = vmatpush1.bf16.msra.mxu0 %v7531
        %7572 = vmatprep.subr.bf16.mxu0 0
        %7573 = vmatpush1.bf16.msra.mxu0 %v7532
        %7574 = vmatprep.subr.bf16.mxu0 0
        %7575 = vmatpush1.bf16.msra.mxu0 %v7533
        %7576 = vmatprep.subr.bf16.mxu0 0
        %7577 = vmatpush1.bf16.msra.mxu0 %v7534
        %7578 = vmatprep.subr.bf16.mxu0 0
        %7579 = vmatpush1.bf16.msra.mxu0 %v7535
        %7580 = vmatprep.subr.bf16.mxu0 0
        %7581 = vmatpush1.bf16.msra.mxu0 %v7536
        %7582 = vmatprep.subr.bf16.mxu0 0
        %7583 = vmatpush1.bf16.msra.mxu0 %v7537
        %7584 = vmatprep.subr.bf16.mxu0 0
        %7585 = vmatpush1.bf16.msra.mxu0 %v7538
        %7586 = vmatprep.subr.bf16.mxu0 0
        %7587 = vmatpush1.bf16.msra.mxu0 %v7539
        %7588 = vmatprep.mubr.bf16.mxu0 %v7423
        %7589 = vmatmul.mubr.bf16.gmra.mrb[0].mxu0 %v7422
        %v7590 = vpop.f32.mrb[0].mxu0
        %v7591 = vadd.f32 %v7459, %v7590
        %v7592 = vpop.f32.mrb[0].mxu0
        %v7593 = vpop.f32.mrb[0].mxu0
        %v7594 = vadd.f32 %v7459, %v7593
        %v7595 = vpop.f32.mrb[0].mxu0
        %7596 = vdwg.mxu0
        %v7597 = vsel %vm5796, %v7591, 0.0
        %7598 = vadd.xlane.f32.xlu0 %v7597
        %v7599 = vpop.xlane.xlu0 %7598
        %v7600 = vsel %vm5796, %v7594, 0.0
        %7601 = vadd.xlane.f32.xlu0 %v7600
        %v7602 = vpop.xlane.xlu0 %7601
        %v7603 = vmul.f32 %v7599, %v6070
        %v7604 = vmul.f32 %v7602, %v6070
        %v7605 = vsub.f32 %v7591, %v7603
        %v7606 = vsub.f32 %v7594, %v7604
        %v7607 = vmul.f32 %v7605, %v7605
        %v7608 = vmul.f32 %v7606, %v7606
        %v7609 = vsel %vm5796, %v7607, 0.0
        %7610 = vadd.xlane.f32.xlu0 %v7609
        %v7611 = vpop.xlane.xlu0 %7610
        %v7612 = vsel %vm5796, %v7608, 0.0
        %7613 = vadd.xlane.f32.xlu0 %v7612
        %v7614 = vpop.xlane.xlu0 %7613
        %v7615 = vmul.f32 %v7611, %v6070
        %v7616 = vmul.f32 %v7614, %v6070
        %v7617 = vadd.f32 %v7615, 1e-05
        %v7618 = vadd.f32 %v7616, 1e-05
        %v7619 = vrsqrt.pop %v7617
        %v7620 = vrsqrt.pop %v7618
        %v7621 = vmul.f32 %v7605, %v7619
        %v7622 = vmul.f32 %v7606, %v7620
        %v7623 = vlaneseq
        %v7624 = vshrl.u32 %v7623, 7
        %v7625 = vsub.s32 6, %v7624
        %v7626 = vrot.slane %v6103, %v7625
        %v7627 = vmul.f32 %v7621, %v7626
        %v7628 = vmul.f32 %v7622, %v7626
        %v7629 = vlaneseq
        %v7630 = vshrl.u32 %v7629, 7
        %v7631 = vsub.s32 7, %v7630
        %v7632 = vrot.slane %v6103, %v7631
        %v7633 = vadd.f32 %v7627, %v7632
        %v7634 = vadd.f32 %v7628, %v7632
        %v7635 = vadd.f32 %v7205, %v7633
        %v7636 = vadd.f32 %v7206, %v7634
        %v7637 = vld [vmem:[%s69] sm:$0xff]
        %v7638 = vpack.c.bf16 %v7636, %v7635
        %v7639 = vld [vmem:[%s61] sm:$0xf]
        %v7640 = vld [vmem:[%s61 + $0x4] sm:$0xf]
        %v7641 = vld [vmem:[%s61 + $0x8] sm:$0xf]
        %v7642 = vld [vmem:[%s61 + $0xc] sm:$0xf]
        %v7643 = vld [vmem:[%s61 + $0x10] sm:$0xf]
        %v7644 = vld [vmem:[%s61 + $0x14] sm:$0xf]
        %v7645 = vld [vmem:[%s61 + $0x18] sm:$0xf]
        %v7646 = vld [vmem:[%s61 + $0x1c] sm:$0xf]
        %v7647 = vlaneseq
        %v7648 = vshrl.u32 %v7647, 7
        %v7649 = vsub.s32 0, %v7648
        %v7650 = vrot.slane %v7637, %v7649
        %v7659 = vunpack.c.l.b16 %v7639
        %v7660 = vunpack.c.l.b16 %v7640
        %v7661 = vunpack.c.l.b16 %v7641
        %v7662 = vunpack.c.l.b16 %v7642
        %v7663 = vunpack.c.l.b16 %v7643
        %v7664 = vunpack.c.l.b16 %v7644
        %v7665 = vunpack.c.l.b16 %v7645
        %v7666 = vunpack.c.l.b16 %v7646
        %v7667 = vpack.c.b16 %v7660, %v7659
        %v7668 = vpack.c.b16 %v7662, %v7661
        %v7669 = vpack.c.b16 %v7664, %v7663
        %v7670 = vpack.c.b16 %v7666, %v7665
        %v7676 = vsel %vm5796, %v7638, 0
        %7678 = vmatprep.subr.bf16.mxu0 0
        %7679 = vmatpush1.bf16.msra.mxu0 %v7667
        %7680 = vmatprep.subr.bf16.mxu0 0
        %7681 = vmatpush1.bf16.msra.mxu0 %v7668
        %7682 = vmatprep.subr.bf16.mxu0 0
        %7683 = vmatpush1.bf16.msra.mxu0 %v7669
        %7684 = vmatprep.subr.bf16.mxu0 0
        %7685 = vmatpush1.bf16.msra.mxu0 %v7670
        %7686 = vmatprep.subr.bf16.mxu0 0
        %7687 = vmatpush1.bf16.msra.mxu0 0
        %7688 = vmatprep.subr.bf16.mxu0 0
        %7689 = vmatpush1.bf16.msra.mxu0 0
        %7690 = vmatprep.subr.bf16.mxu0 0
        %7691 = vmatpush1.bf16.msra.mxu0 0
        %7692 = vmatprep.subr.bf16.mxu0 0
        %7693 = vmatpush1.bf16.msra.mxu0 0
        %7694 = vmatprep.subr.bf16.mxu0 0
        %7695 = vmatpush1.bf16.msra.mxu0 0
        %7696 = vmatprep.subr.bf16.mxu0 0
        %7697 = vmatpush1.bf16.msra.mxu0 0
        %7698 = vmatprep.subr.bf16.mxu0 0
        %7699 = vmatpush1.bf16.msra.mxu0 0
        %7700 = vmatprep.subr.bf16.mxu0 0
        %7701 = vmatpush1.bf16.msra.mxu0 0
        %7702 = vmatprep.subr.bf16.mxu0 0
        %7703 = vmatpush1.bf16.msra.mxu0 0
        %7704 = vmatprep.subr.bf16.mxu0 0
        %7705 = vmatpush1.bf16.msra.mxu0 0
        %7706 = vmatprep.subr.bf16.mxu0 0
        %7707 = vmatpush1.bf16.msra.mxu0 0
        %7708 = vmatprep.subr.bf16.mxu0 0
        %7709 = vmatpush1.bf16.msra.mxu0 0
        %7710 = vmatprep.mubr.bf16.mxu0 0
        %7711 = vmatmul.mubr.bf16.gmra.mrb[0].mxu0 %v7676
        %v7712 = vpop.f32.mrb[0].mxu0
        %v7713 = vadd.f32 %v7650, %v7712
        %v7714 = vpop.f32.mrb[0].mxu0
        %v7715 = vpop.f32.mrb[0].mxu0
        %v7716 = vadd.f32 %v7650, %v7715
        %v7717 = vpop.f32.mrb[0].mxu0
        %7718 = vdwg.mxu0
        %s7719 = scalar_lea.vmem %s61, 32
        %v7720 = vld [vmem:[%s7719] sm:$0xf]
        %v7721 = vld [vmem:[%s7719 + $0x4] sm:$0xf]
        %v7722 = vld [vmem:[%s7719 + $0x8] sm:$0xf]
        %v7723 = vld [vmem:[%s7719 + $0xc] sm:$0xf]
        %v7724 = vld [vmem:[%s7719 + $0x10] sm:$0xf]
        %v7725 = vld [vmem:[%s7719 + $0x14] sm:$0xf]
        %v7726 = vld [vmem:[%s7719 + $0x18] sm:$0xf]
        %v7727 = vld [vmem:[%s7719 + $0x1c] sm:$0xf]
        %v7736 = vunpack.c.l.b16 %v7720
        %v7737 = vunpack.c.l.b16 %v7721
        %v7738 = vunpack.c.l.b16 %v7722
        %v7739 = vunpack.c.l.b16 %v7723
        %v7740 = vunpack.c.l.b16 %v7724
        %v7741 = vunpack.c.l.b16 %v7725
        %v7742 = vunpack.c.l.b16 %v7726
        %v7743 = vunpack.c.l.b16 %v7727
        %v7744 = vpack.c.b16 %v7737, %v7736
        %v7745 = vpack.c.b16 %v7739, %v7738
        %v7746 = vpack.c.b16 %v7741, %v7740
        %v7747 = vpack.c.b16 %v7743, %v7742
        %7752 = vmatprep.subr.bf16.mxu0 0
        %7753 = vmatpush1.bf16.msra.mxu0 %v7744
        %7754 = vmatprep.subr.bf16.mxu0 0
        %7755 = vmatpush1.bf16.msra.mxu0 %v7745
        %7756 = vmatprep.subr.bf16.mxu0 0
        %7757 = vmatpush1.bf16.msra.mxu0 %v7746
        %7758 = vmatprep.subr.bf16.mxu0 0
        %7759 = vmatpush1.bf16.msra.mxu0 %v7747
        %7760 = vmatprep.subr.bf16.mxu0 0
        %7761 = vmatpush1.bf16.msra.mxu0 0
        %7762 = vmatprep.subr.bf16.mxu0 0
        %7763 = vmatpush1.bf16.msra.mxu0 0
        %7764 = vmatprep.subr.bf16.mxu0 0
        %7765 = vmatpush1.bf16.msra.mxu0 0
        %7766 = vmatprep.subr.bf16.mxu0 0
        %7767 = vmatpush1.bf16.msra.mxu0 0
        %7768 = vmatprep.subr.bf16.mxu0 0
        %7769 = vmatpush1.bf16.msra.mxu0 0
        %7770 = vmatprep.subr.bf16.mxu0 0
        %7771 = vmatpush1.bf16.msra.mxu0 0
        %7772 = vmatprep.subr.bf16.mxu0 0
        %7773 = vmatpush1.bf16.msra.mxu0 0
        %7774 = vmatprep.subr.bf16.mxu0 0
        %7775 = vmatpush1.bf16.msra.mxu0 0
        %7776 = vmatprep.subr.bf16.mxu0 0
        %7777 = vmatpush1.bf16.msra.mxu0 0
        %7778 = vmatprep.subr.bf16.mxu0 0
        %7779 = vmatpush1.bf16.msra.mxu0 0
        %7780 = vmatprep.subr.bf16.mxu0 0
        %7781 = vmatpush1.bf16.msra.mxu0 0
        %7782 = vmatprep.subr.bf16.mxu0 0
        %7783 = vmatpush1.bf16.msra.mxu0 0
        %7784 = vmatprep.mubr.bf16.mxu0 0
        %7785 = vmatmul.mubr.bf16.gmra.mrb[0].mxu0 %v7676
        %v7786 = vpop.f32.mrb[0].mxu0
        %v7787 = vadd.f32 0.0, %v7786
        %v7788 = vpop.f32.mrb[0].mxu0
        %v7789 = vpop.f32.mrb[0].mxu0
        %v7790 = vadd.f32 0.0, %v7789
        %v7791 = vpop.f32.mrb[0].mxu0
        %7792 = vdwg.mxu0
        %s7793 = scalar_lea.vmem %s61, 64
        %v7794 = vld [vmem:[%s7793] sm:$0xf]
        %v7795 = vld [vmem:[%s7793 + $0x4] sm:$0xf]
        %v7796 = vld [vmem:[%s7793 + $0x8] sm:$0xf]
        %v7797 = vld [vmem:[%s7793 + $0xc] sm:$0xf]
        %v7798 = vld [vmem:[%s7793 + $0x10] sm:$0xf]
        %v7799 = vld [vmem:[%s7793 + $0x14] sm:$0xf]
        %v7800 = vld [vmem:[%s7793 + $0x18] sm:$0xf]
        %v7801 = vld [vmem:[%s7793 + $0x1c] sm:$0xf]
        %v7802 = vlaneseq
        %v7803 = vshrl.u32 %v7802, 7
        %v7804 = vsub.s32 1, %v7803
        %v7805 = vrot.slane %v7637, %v7804
        %v7814 = vunpack.c.l.b16 %v7794
        %v7815 = vunpack.c.l.b16 %v7795
        %v7816 = vunpack.c.l.b16 %v7796
        %v7817 = vunpack.c.l.b16 %v7797
        %v7818 = vunpack.c.l.b16 %v7798
        %v7819 = vunpack.c.l.b16 %v7799
        %v7820 = vunpack.c.l.b16 %v7800
        %v7821 = vunpack.c.l.b16 %v7801
        %v7822 = vpack.c.b16 %v7815, %v7814
        %v7823 = vpack.c.b16 %v7817, %v7816
        %v7824 = vpack.c.b16 %v7819, %v7818
        %v7825 = vpack.c.b16 %v7821, %v7820
        %7830 = vmatprep.subr.bf16.mxu0 0
        %7831 = vmatpush1.bf16.msra.mxu0 %v7822
        %7832 = vmatprep.subr.bf16.mxu0 0
        %7833 = vmatpush1.bf16.msra.mxu0 %v7823
        %7834 = vmatprep.subr.bf16.mxu0 0
        %7835 = vmatpush1.bf16.msra.mxu0 %v7824
        %7836 = vmatprep.subr.bf16.mxu0 0
        %7837 = vmatpush1.bf16.msra.mxu0 %v7825
        %7838 = vmatprep.subr.bf16.mxu0 0
        %7839 = vmatpush1.bf16.msra.mxu0 0
        %7840 = vmatprep.subr.bf16.mxu0 0
        %7841 = vmatpush1.bf16.msra.mxu0 0
        %7842 = vmatprep.subr.bf16.mxu0 0
        %7843 = vmatpush1.bf16.msra.mxu0 0
        %7844 = vmatprep.subr.bf16.mxu0 0
        %7845 = vmatpush1.bf16.msra.mxu0 0
        %7846 = vmatprep.subr.bf16.mxu0 0
        %7847 = vmatpush1.bf16.msra.mxu0 0
        %7848 = vmatprep.subr.bf16.mxu0 0
        %7849 = vmatpush1.bf16.msra.mxu0 0
        %7850 = vmatprep.subr.bf16.mxu0 0
        %7851 = vmatpush1.bf16.msra.mxu0 0
        %7852 = vmatprep.subr.bf16.mxu0 0
        %7853 = vmatpush1.bf16.msra.mxu0 0
        %7854 = vmatprep.subr.bf16.mxu0 0
        %7855 = vmatpush1.bf16.msra.mxu0 0
        %7856 = vmatprep.subr.bf16.mxu0 0
        %7857 = vmatpush1.bf16.msra.mxu0 0
        %7858 = vmatprep.subr.bf16.mxu0 0
        %7859 = vmatpush1.bf16.msra.mxu0 0
        %7860 = vmatprep.subr.bf16.mxu0 0
        %7861 = vmatpush1.bf16.msra.mxu0 0
        %7862 = vmatprep.mubr.bf16.mxu0 0
        %7863 = vmatmul.mubr.bf16.gmra.mrb[0].mxu0 %v7676
        %v7864 = vpop.f32.mrb[0].mxu0
        %v7865 = vadd.f32 %v7805, %v7864
        %v7866 = vpop.f32.mrb[0].mxu0
        %v7867 = vpop.f32.mrb[0].mxu0
        %v7868 = vadd.f32 %v7805, %v7867
        %v7869 = vpop.f32.mrb[0].mxu0
        %7870 = vdwg.mxu0
        %7873 = vrot.lane.b32.xlu0 %v7713, 112
        %v7874 = vpop.permute.xlu0 %7873
        %7875 = vrot.lane.b32.xlu0 %v7716, 112
        %v7876 = vpop.permute.xlu0 %7875
        %7879 = vrot.lane.b32.xlu0 %v7713, 96
        %v7880 = vpop.permute.xlu0 %7879
        %7881 = vrot.lane.b32.xlu0 %v7716, 96
        %v7882 = vpop.permute.xlu0 %7881
        %7885 = vrot.lane.b32.xlu0 %v7713, 80
        %v7886 = vpop.permute.xlu0 %7885
        %7887 = vrot.lane.b32.xlu0 %v7716, 80
        %v7888 = vpop.permute.xlu0 %7887
        %7893 = vrot.lane.b32.xlu0 %v7787, 112
        %v7894 = vpop.permute.xlu0 %7893
        %7895 = vrot.lane.b32.xlu0 %v7790, 112
        %v7896 = vpop.permute.xlu0 %7895
        %7899 = vrot.lane.b32.xlu0 %v7787, 96
        %v7900 = vpop.permute.xlu0 %7899
        %7901 = vrot.lane.b32.xlu0 %v7790, 96
        %v7902 = vpop.permute.xlu0 %7901
        %7905 = vrot.lane.b32.xlu0 %v7787, 80
        %v7906 = vpop.permute.xlu0 %7905
        %7907 = vrot.lane.b32.xlu0 %v7790, 80
        %v7908 = vpop.permute.xlu0 %7907
        %7913 = vrot.lane.b32.xlu0 %v7865, 112
        %v7914 = vpop.permute.xlu0 %7913
        %7915 = vrot.lane.b32.xlu0 %v7868, 112
        %v7916 = vpop.permute.xlu0 %7915
        %7919 = vrot.lane.b32.xlu0 %v7865, 96
        %v7920 = vpop.permute.xlu0 %7919
        %7921 = vrot.lane.b32.xlu0 %v7868, 96
        %v7922 = vpop.permute.xlu0 %7921
        %7925 = vrot.lane.b32.xlu0 %v7865, 80
        %v7926 = vpop.permute.xlu0 %7925
        %7927 = vrot.lane.b32.xlu0 %v7868, 80
        %v7928 = vpop.permute.xlu0 %7927
        %v7931 = vmul.f32 %v7713, %v7713
        %v7932 = vmul.f32 %v7716, %v7716
        %v7933 = vmul.f32 %v7874, %v7874
        %v7934 = vmul.f32 %v7876, %v7876
        %v7935 = vmul.f32 %v7880, %v7880
        %v7936 = vmul.f32 %v7882, %v7882
        %v7937 = vmul.f32 %v7886, %v7886
        %v7938 = vmul.f32 %v7888, %v7888
        %v7939 = vsel %vm1222, %v7931, 0.0
        %7940 = vadd.xlane.f32.xlu0 %v7939
        %v7941 = vpop.xlane.xlu0 %7940
        %v7942 = vsel %vm1222, %v7932, 0.0
        %7943 = vadd.xlane.f32.xlu0 %v7942
        %v7944 = vpop.xlane.xlu0 %7943
        %v7945 = vsel %vm1222, %v7933, 0.0
        %7946 = vadd.xlane.f32.xlu0 %v7945
        %v7947 = vpop.xlane.xlu0 %7946
        %v7948 = vsel %vm1222, %v7934, 0.0
        %7949 = vadd.xlane.f32.xlu0 %v7948
        %v7950 = vpop.xlane.xlu0 %7949
        %v7951 = vsel %vm1222, %v7935, 0.0
        %7952 = vadd.xlane.f32.xlu0 %v7951
        %v7953 = vpop.xlane.xlu0 %7952
        %v7954 = vsel %vm1222, %v7936, 0.0
        %7955 = vadd.xlane.f32.xlu0 %v7954
        %v7956 = vpop.xlane.xlu0 %7955
        %v7957 = vsel %vm1222, %v7937, 0.0
        %7958 = vadd.xlane.f32.xlu0 %v7957
        %v7959 = vpop.xlane.xlu0 %7958
        %v7960 = vsel %vm1222, %v7938, 0.0
        %7961 = vadd.xlane.f32.xlu0 %v7960
        %v7962 = vpop.xlane.xlu0 %7961
        %v7963 = vmax.f32 %v7941, 1e-24
        %v7964 = vmax.f32 %v7944, 1e-24
        %v7965 = vmax.f32 %v7947, 1e-24
        %v7966 = vmax.f32 %v7950, 1e-24
        %v7967 = vmax.f32 %v7953, 1e-24
        %v7968 = vmax.f32 %v7956, 1e-24
        %v7969 = vmax.f32 %v7959, 1e-24
        %v7970 = vmax.f32 %v7962, 1e-24
        %v7971 = vrsqrt.pop %v7963
        %v7972 = vrsqrt.pop %v7964
        %v7973 = vrsqrt.pop %v7965
        %v7974 = vrsqrt.pop %v7966
        %v7975 = vrsqrt.pop %v7967
        %v7976 = vrsqrt.pop %v7968
        %v7977 = vrsqrt.pop %v7969
        %v7978 = vrsqrt.pop %v7970
        %v7979 = vmul.f32 %v7713, %v7971
        %v7980 = vmul.f32 %v7716, %v7972
        %v7981 = vmul.f32 %v7874, %v7973
        %v7982 = vmul.f32 %v7876, %v7974
        %v7983 = vmul.f32 %v7880, %v7975
        %v7984 = vmul.f32 %v7882, %v7976
        %v7985 = vmul.f32 %v7886, %v7977
        %v7986 = vmul.f32 %v7888, %v7978
        %v7987 = vld [vmem:[%s75] sm:$0xff]
        %v7988 = vld [vmem:[%s75 + $0x8] sm:$0xff]
        %v7989 = vld [vmem:[%s75 + $0x10] sm:$0xff]
        %v7990 = vld [vmem:[%s75 + $0x18] sm:$0xff]
        %v7991 = vld [vmem:[%s75 + $0x20] sm:$0xff]
        %v7992 = vld [vmem:[%s75 + $0x28] sm:$0xff]
        %v7993 = vld [vmem:[%s75 + $0x30] sm:$0xff]
        %v7994 = vld [vmem:[%s75 + $0x38] sm:$0xff]
        %7996 = vset.pattern.permute.xlu0 0
        %7997 = vperm.xlu0 %7996, %v7987
        %v7998 = vpop.permute.xlu0 %7997
        %8001 = vset.pattern.permute.xlu0 0
        %8002 = vperm.xlu0 %8001, %v7988
        %v8003 = vpop.permute.xlu0 %8002
        %8006 = vset.pattern.permute.xlu0 0
        %8007 = vperm.xlu0 %8006, %v7989
        %v8008 = vpop.permute.xlu0 %8007
        %8011 = vset.pattern.permute.xlu0 0
        %8012 = vperm.xlu0 %8011, %v7990
        %v8013 = vpop.permute.xlu0 %8012
        %8016 = vset.pattern.permute.xlu0 0
        %8017 = vperm.xlu0 %8016, %v7991
        %v8018 = vpop.permute.xlu0 %8017
        %8021 = vset.pattern.permute.xlu0 0
        %8022 = vperm.xlu0 %8021, %v7992
        %v8023 = vpop.permute.xlu0 %8022
        %8026 = vset.pattern.permute.xlu0 0
        %8027 = vperm.xlu0 %8026, %v7993
        %v8028 = vpop.permute.xlu0 %8027
        %8031 = vset.pattern.permute.xlu0 0
        %8032 = vperm.xlu0 %8031, %v7994
        %v8033 = vpop.permute.xlu0 %8032
        %v8035 = vmul.f32 %v7979, %v7998
        %v8036 = vmul.f32 %v7980, %v8003
        %v8037 = vmul.f32 %v7981, %v8008
        %v8038 = vmul.f32 %v7982, %v8013
        %v8039 = vmul.f32 %v7983, %v8018
        %v8040 = vmul.f32 %v7984, %v8023
        %v8041 = vmul.f32 %v7985, %v8028
        %v8042 = vmul.f32 %v7986, %v8033
        %v8043 = vmul.f32 %v7787, %v7787
        %v8044 = vmul.f32 %v7790, %v7790
        %v8045 = vmul.f32 %v7894, %v7894
        %v8046 = vmul.f32 %v7896, %v7896
        %v8047 = vmul.f32 %v7900, %v7900
        %v8048 = vmul.f32 %v7902, %v7902
        %v8049 = vmul.f32 %v7906, %v7906
        %v8050 = vmul.f32 %v7908, %v7908
        %v8051 = vsel %vm1222, %v8043, 0.0
        %8052 = vadd.xlane.f32.xlu0 %v8051
        %v8053 = vpop.xlane.xlu0 %8052
        %v8054 = vsel %vm1222, %v8044, 0.0
        %8055 = vadd.xlane.f32.xlu0 %v8054
        %v8056 = vpop.xlane.xlu0 %8055
        %v8057 = vsel %vm1222, %v8045, 0.0
        %8058 = vadd.xlane.f32.xlu0 %v8057
        %v8059 = vpop.xlane.xlu0 %8058
        %v8060 = vsel %vm1222, %v8046, 0.0
        %8061 = vadd.xlane.f32.xlu0 %v8060
        %v8062 = vpop.xlane.xlu0 %8061
        %v8063 = vsel %vm1222, %v8047, 0.0
        %8064 = vadd.xlane.f32.xlu0 %v8063
        %v8065 = vpop.xlane.xlu0 %8064
        %v8066 = vsel %vm1222, %v8048, 0.0
        %8067 = vadd.xlane.f32.xlu0 %v8066
        %v8068 = vpop.xlane.xlu0 %8067
        %v8069 = vsel %vm1222, %v8049, 0.0
        %8070 = vadd.xlane.f32.xlu0 %v8069
        %v8071 = vpop.xlane.xlu0 %8070
        %v8072 = vsel %vm1222, %v8050, 0.0
        %8073 = vadd.xlane.f32.xlu0 %v8072
        %v8074 = vpop.xlane.xlu0 %8073
        %v8075 = vmax.f32 %v8053, 1e-24
        %v8076 = vmax.f32 %v8056, 1e-24
        %v8077 = vmax.f32 %v8059, 1e-24
        %v8078 = vmax.f32 %v8062, 1e-24
        %v8079 = vmax.f32 %v8065, 1e-24
        %v8080 = vmax.f32 %v8068, 1e-24
        %v8081 = vmax.f32 %v8071, 1e-24
        %v8082 = vmax.f32 %v8074, 1e-24
        %v8083 = vrsqrt.pop %v8075
        %v8084 = vrsqrt.pop %v8076
        %v8085 = vrsqrt.pop %v8077
        %v8086 = vrsqrt.pop %v8078
        %v8087 = vrsqrt.pop %v8079
        %v8088 = vrsqrt.pop %v8080
        %v8089 = vrsqrt.pop %v8081
        %v8090 = vrsqrt.pop %v8082
        %v8091 = vmul.f32 %v7787, %v8083
        %v8092 = vmul.f32 %v7790, %v8084
        %v8093 = vmul.f32 %v7894, %v8085
        %v8094 = vmul.f32 %v7896, %v8086
        %v8095 = vmul.f32 %v7900, %v8087
        %v8096 = vmul.f32 %v7902, %v8088
        %v8097 = vmul.f32 %v7906, %v8089
        %v8098 = vmul.f32 %v7908, %v8090
        %v8099 = vld [vmem:[%s73] sm:$0xff]
        %v8100 = vld [vmem:[%s73 + $0x8] sm:$0xff]
        %v8101 = vld [vmem:[%s73 + $0x10] sm:$0xff]
        %v8102 = vld [vmem:[%s73 + $0x18] sm:$0xff]
        %v8103 = vld [vmem:[%s73 + $0x20] sm:$0xff]
        %v8104 = vld [vmem:[%s73 + $0x28] sm:$0xff]
        %v8105 = vld [vmem:[%s73 + $0x30] sm:$0xff]
        %v8106 = vld [vmem:[%s73 + $0x38] sm:$0xff]
        %v8108 = vsel %vm1222, %v8035, 0
        %v8111 = vsel %vm1222, %v8036, 0
        %v8114 = vsel %vm1222, %v8037, 0
        %v8117 = vsel %vm1222, %v8038, 0
        %v8120 = vsel %vm1222, %v8039, 0
        %v8123 = vsel %vm1222, %v8040, 0
        %v8126 = vsel %vm1222, %v8041, 0
        %v8129 = vsel %vm1222, %v8042, 0
        %v8132 = vsel %vm1222, %v8091, 0
        %v8135 = vsel %vm1222, %v8092, 0
        %v8138 = vsel %vm1222, %v8093, 0
        %v8141 = vsel %vm1222, %v8094, 0
        %v8144 = vsel %vm1222, %v8095, 0
        %v8147 = vsel %vm1222, %v8096, 0
        %v8150 = vsel %vm1222, %v8097, 0
        %v8153 = vsel %vm1222, %v8098, 0
        %8155 = vmatprep.subr.mxu0 0.0
        %8156 = vmatpush1.xpose.msra.mxu0 %v8132
        %8157 = vmatprep.subr.mxu0 0.0
        %8158 = vmatpush1.xpose.msra.mxu0 %v8135
        %8159 = vmatprep.subr.mxu0 0.0
        %8160 = vmatpush1.xpose.msra.mxu0 %v8138
        %8161 = vmatprep.subr.mxu0 0.0
        %8162 = vmatpush1.xpose.msra.mxu0 %v8141
        %8163 = vmatprep.subr.mxu0 0.0
        %8164 = vmatpush1.xpose.msra.mxu0 %v8144
        %8165 = vmatprep.subr.mxu0 0.0
        %8166 = vmatpush1.xpose.msra.mxu0 %v8147
        %8167 = vmatprep.subr.mxu0 0.0
        %8168 = vmatpush1.xpose.msra.mxu0 %v8150
        %8169 = vmatprep.subr.mxu0 0.0
        %8170 = vmatpush1.xpose.msra.mxu0 %v8153
        %8171 = vmatprep.subr.mxu0 0.0
        %8172 = vmatpush1.xpose.msra.mxu0 0.0
        %8173 = vmatprep.subr.mxu0 0.0
        %8174 = vmatpush1.xpose.msra.mxu0 0.0
        %8175 = vmatprep.subr.mxu0 0.0
        %8176 = vmatpush1.xpose.msra.mxu0 0.0
        %8177 = vmatprep.subr.mxu0 0.0
        %8178 = vmatpush1.xpose.msra.mxu0 0.0
        %8179 = vmatprep.subr.mxu0 0.0
        %8180 = vmatpush1.xpose.msra.mxu0 0.0
        %8181 = vmatprep.subr.mxu0 0.0
        %8182 = vmatpush1.xpose.msra.mxu0 0.0
        %8183 = vmatprep.subr.mxu0 0.0
        %8184 = vmatpush1.xpose.msra.mxu0 0.0
        %8185 = vmatprep.subr.mxu0 0.0
        %8186 = vmatpush1.xpose.msra.mxu0 0.0
        %8187 = vmatprep.subr.mxu0 0.0
        %8188 = vmatpush1.xpose.msra.mxu0 0.0
        %8189 = vmatprep.subr.mxu0 0.0
        %8190 = vmatpush1.xpose.msra.mxu0 0.0
        %8191 = vmatprep.subr.mxu0 0.0
        %8192 = vmatpush1.xpose.msra.mxu0 0.0
        %8193 = vmatprep.subr.mxu0 0.0
        %8194 = vmatpush1.xpose.msra.mxu0 0.0
        %8195 = vmatprep.subr.mxu0 0.0
        %8196 = vmatpush1.xpose.msra.mxu0 0.0
        %8197 = vmatprep.subr.mxu0 0.0
        %8198 = vmatpush1.xpose.msra.mxu0 0.0
        %8199 = vmatprep.subr.mxu0 0.0
        %8200 = vmatpush1.xpose.msra.mxu0 0.0
        %8201 = vmatprep.subr.mxu0 0.0
        %8202 = vmatpush1.xpose.msra.mxu0 0.0
        %8203 = vmatprep.subr.mxu0 0.0
        %8204 = vmatpush1.xpose.msra.mxu0 0.0
        %8205 = vmatprep.subr.mxu0 0.0
        %8206 = vmatpush1.xpose.msra.mxu0 0.0
        %8207 = vmatprep.subr.mxu0 0.0
        %8208 = vmatpush1.xpose.msra.mxu0 0.0
        %8209 = vmatprep.subr.mxu0 0.0
        %8210 = vmatpush1.xpose.msra.mxu0 0.0
        %8211 = vmatprep.subr.mxu0 0.0
        %8212 = vmatpush1.xpose.msra.mxu0 0.0
        %8213 = vmatprep.subr.mxu0 0.0
        %8214 = vmatpush1.xpose.msra.mxu0 0.0
        %8215 = vmatprep.subr.mxu0 0.0
        %8216 = vmatpush1.xpose.msra.mxu0 0.0
        %8217 = vmatprep.subr.mxu0 0.0
        %8218 = vmatpush1.xpose.msra.mxu0 0.0
        %8219 = vmatprep.mubr.f32.mxu0 0.0
        %8220 = vmatmul.mubr.f32.gmra.mrb[0].mxu0 %v8108
        %v8221 = vpop.f32.mrb[0].mxu0
        %v8222 = vadd.f32 %v8099, %v8221
        %v8223 = vpop.f32.mrb[0].mxu0
        %8224 = vmatprep.mubr.f32.mxu0 0.0
        %8225 = vmatmul.mubr.f32.gmra.mrb[0].mxu0 %v8111
        %v8226 = vpop.f32.mrb[0].mxu0
        %v8227 = vadd.f32 %v8100, %v8226
        %v8228 = vpop.f32.mrb[0].mxu0
        %8229 = vmatprep.mubr.f32.mxu0 0.0
        %8230 = vmatmul.mubr.f32.gmra.mrb[0].mxu0 %v8114
        %v8231 = vpop.f32.mrb[0].mxu0
        %v8232 = vadd.f32 %v8101, %v8231
        %v8233 = vpop.f32.mrb[0].mxu0
        %8234 = vmatprep.mubr.f32.mxu0 0.0
        %8235 = vmatmul.mubr.f32.gmra.mrb[0].mxu0 %v8117
        %v8236 = vpop.f32.mrb[0].mxu0
        %v8237 = vadd.f32 %v8102, %v8236
        %v8238 = vpop.f32.mrb[0].mxu0
        %8239 = vmatprep.mubr.f32.mxu0 0.0
        %8240 = vmatmul.mubr.f32.gmra.mrb[0].mxu0 %v8120
        %v8241 = vpop.f32.mrb[0].mxu0
        %v8242 = vadd.f32 %v8103, %v8241
        %v8243 = vpop.f32.mrb[0].mxu0
        %8244 = vmatprep.mubr.f32.mxu0 0.0
        %8245 = vmatmul.mubr.f32.gmra.mrb[0].mxu0 %v8123
        %v8246 = vpop.f32.mrb[0].mxu0
        %v8247 = vadd.f32 %v8104, %v8246
        %v8248 = vpop.f32.mrb[0].mxu0
        %8249 = vmatprep.mubr.f32.mxu0 0.0
        %8250 = vmatmul.mubr.f32.gmra.mrb[0].mxu0 %v8126
        %v8251 = vpop.f32.mrb[0].mxu0
        %v8252 = vadd.f32 %v8105, %v8251
        %v8253 = vpop.f32.mrb[0].mxu0
        %8254 = vmatprep.mubr.f32.mxu0 0.0
        %8255 = vmatmul.mubr.f32.gmra.mrb[0].mxu0 %v8129
        %v8256 = vpop.f32.mrb[0].mxu0
        %v8257 = vadd.f32 %v8106, %v8256
        %v8258 = vpop.f32.mrb[0].mxu0
        %8259 = vdwg.mxu0
        %v8260 = vsel %vm5796, %v8222, -inf
        %8261 = vmax.xlane.f32.xlu0 %v8260
        %v8262 = vpop.xlane.xlu0 %8261
        %v8263 = vsel %vm5796, %v8227, -inf
        %8264 = vmax.xlane.f32.xlu0 %v8263
        %v8265 = vpop.xlane.xlu0 %8264
        %v8266 = vsel %vm5796, %v8232, -inf
        %8267 = vmax.xlane.f32.xlu0 %v8266
        %v8268 = vpop.xlane.xlu0 %8267
        %v8269 = vsel %vm5796, %v8237, -inf
        %8270 = vmax.xlane.f32.xlu0 %v8269
        %v8271 = vpop.xlane.xlu0 %8270
        %v8272 = vsel %vm5796, %v8242, -inf
        %8273 = vmax.xlane.f32.xlu0 %v8272
        %v8274 = vpop.xlane.xlu0 %8273
        %v8275 = vsel %vm5796, %v8247, -inf
        %8276 = vmax.xlane.f32.xlu0 %v8275
        %v8277 = vpop.xlane.xlu0 %8276
        %v8278 = vsel %vm5796, %v8252, -inf
        %8279 = vmax.xlane.f32.xlu0 %v8278
        %v8280 = vpop.xlane.xlu0 %8279
        %v8281 = vsel %vm5796, %v8257, -inf
        %8282 = vmax.xlane.f32.xlu0 %v8281
        %v8283 = vpop.xlane.xlu0 %8282
        %v8284 = vsub.f32 %v8222, %v8262
        %v8285 = vsub.f32 %v8227, %v8265
        %v8286 = vsub.f32 %v8232, %v8268
        %v8287 = vsub.f32 %v8237, %v8271
        %v8288 = vsub.f32 %v8242, %v8274
        %v8289 = vsub.f32 %v8247, %v8277
        %v8290 = vsub.f32 %v8252, %v8280
        %v8291 = vsub.f32 %v8257, %v8283
        %v8292 = vmul.f32 %v8284, 1.442695
        %v8293 = vpow.pop %v8292
        %v8294 = vmul.f32 %v8285, 1.442695
        %v8295 = vpow.pop %v8294
        %v8296 = vmul.f32 %v8286, 1.442695
        %v8297 = vpow.pop %v8296
        %v8298 = vmul.f32 %v8287, 1.442695
        %v8299 = vpow.pop %v8298
        %v8300 = vmul.f32 %v8288, 1.442695
        %v8301 = vpow.pop %v8300
        %v8302 = vmul.f32 %v8289, 1.442695
        %v8303 = vpow.pop %v8302
        %v8304 = vmul.f32 %v8290, 1.442695
        %v8305 = vpow.pop %v8304
        %v8306 = vmul.f32 %v8291, 1.442695
        %v8307 = vpow.pop %v8306
        %v8308 = vsel %vm5796, %v8293, 0.0
        %8309 = vadd.xlane.f32.xlu0 %v8308
        %v8310 = vpop.xlane.xlu0 %8309
        %v8311 = vsel %vm5796, %v8295, 0.0
        %8312 = vadd.xlane.f32.xlu0 %v8311
        %v8313 = vpop.xlane.xlu0 %8312
        %v8314 = vsel %vm5796, %v8297, 0.0
        %8315 = vadd.xlane.f32.xlu0 %v8314
        %v8316 = vpop.xlane.xlu0 %8315
        %v8317 = vsel %vm5796, %v8299, 0.0
        %8318 = vadd.xlane.f32.xlu0 %v8317
        %v8319 = vpop.xlane.xlu0 %8318
        %v8320 = vsel %vm5796, %v8301, 0.0
        %8321 = vadd.xlane.f32.xlu0 %v8320
        %v8322 = vpop.xlane.xlu0 %8321
        %v8323 = vsel %vm5796, %v8303, 0.0
        %8324 = vadd.xlane.f32.xlu0 %v8323
        %v8325 = vpop.xlane.xlu0 %8324
        %v8326 = vsel %vm5796, %v8305, 0.0
        %8327 = vadd.xlane.f32.xlu0 %v8326
        %v8328 = vpop.xlane.xlu0 %8327
        %v8329 = vsel %vm5796, %v8307, 0.0
        %8330 = vadd.xlane.f32.xlu0 %v8329
        %v8331 = vpop.xlane.xlu0 %8330
        %v8332 = vrcp.pop %v8310
        %v8333 = vmul.f32 %v8293, %v8332
        %v8334 = vrcp.pop %v8313
        %v8335 = vmul.f32 %v8295, %v8334
        %v8336 = vrcp.pop %v8316
        %v8337 = vmul.f32 %v8297, %v8336
        %v8338 = vrcp.pop %v8319
        %v8339 = vmul.f32 %v8299, %v8338
        %v8340 = vrcp.pop %v8322
        %v8341 = vmul.f32 %v8301, %v8340
        %v8342 = vrcp.pop %v8325
        %v8343 = vmul.f32 %v8303, %v8342
        %v8344 = vrcp.pop %v8328
        %v8345 = vmul.f32 %v8305, %v8344
        %v8346 = vrcp.pop %v8331
        %v8347 = vmul.f32 %v8307, %v8346
        %v8349 = vsel %vm5796, %v8333, 0
        %v8352 = vsel %vm5796, %v8335, 0
        %v8355 = vsel %vm5796, %v8337, 0
        %v8358 = vsel %vm5796, %v8339, 0
        %v8361 = vsel %vm5796, %v8341, 0
        %v8364 = vsel %vm5796, %v8343, 0
        %v8367 = vsel %vm5796, %v8345, 0
        %v8370 = vsel %vm5796, %v8347, 0
        %8372 = vmatprep.subr.mxu0 0.0
        %8373 = vmatpush1.msra.mxu0 %v7865
        %8374 = vmatprep.subr.mxu0 0.0
        %8375 = vmatpush1.msra.mxu0 %v7868
        %8376 = vmatprep.subr.mxu0 0.0
        %8377 = vmatpush1.msra.mxu0 %v7914
        %8378 = vmatprep.subr.mxu0 0.0
        %8379 = vmatpush1.msra.mxu0 %v7916
        %8380 = vmatprep.subr.mxu0 0.0
        %8381 = vmatpush1.msra.mxu0 %v7920
        %8382 = vmatprep.subr.mxu0 0.0
        %8383 = vmatpush1.msra.mxu0 %v7922
        %8384 = vmatprep.subr.mxu0 0.0
        %8385 = vmatpush1.msra.mxu0 %v7926
        %8386 = vmatprep.subr.mxu0 0.0
        %8387 = vmatpush1.msra.mxu0 %v7928
        %8388 = vmatprep.subr.mxu0 0.0
        %8389 = vmatpush1.msra.mxu0 0.0
        %8390 = vmatprep.subr.mxu0 0.0
        %8391 = vmatpush1.msra.mxu0 0.0
        %8392 = vmatprep.subr.mxu0 0.0
        %8393 = vmatpush1.msra.mxu0 0.0
        %8394 = vmatprep.subr.mxu0 0.0
        %8395 = vmatpush1.msra.mxu0 0.0
        %8396 = vmatprep.subr.mxu0 0.0
        %8397 = vmatpush1.msra.mxu0 0.0
        %8398 = vmatprep.subr.mxu0 0.0
        %8399 = vmatpush1.msra.mxu0 0.0
        %8400 = vmatprep.subr.mxu0 0.0
        %8401 = vmatpush1.msra.mxu0 0.0
        %8402 = vmatprep.subr.mxu0 0.0
        %8403 = vmatpush1.msra.mxu0 0.0
        %8404 = vmatprep.subr.mxu0 0.0
        %8405 = vmatpush1.msra.mxu0 0.0
        %8406 = vmatprep.subr.mxu0 0.0
        %8407 = vmatpush1.msra.mxu0 0.0
        %8408 = vmatprep.subr.mxu0 0.0
        %8409 = vmatpush1.msra.mxu0 0.0
        %8410 = vmatprep.subr.mxu0 0.0
        %8411 = vmatpush1.msra.mxu0 0.0
        %8412 = vmatprep.subr.mxu0 0.0
        %8413 = vmatpush1.msra.mxu0 0.0
        %8414 = vmatprep.subr.mxu0 0.0
        %8415 = vmatpush1.msra.mxu0 0.0
        %8416 = vmatprep.subr.mxu0 0.0
        %8417 = vmatpush1.msra.mxu0 0.0
        %8418 = vmatprep.subr.mxu0 0.0
        %8419 = vmatpush1.msra.mxu0 0.0
        %8420 = vmatprep.subr.mxu0 0.0
        %8421 = vmatpush1.msra.mxu0 0.0
        %8422 = vmatprep.subr.mxu0 0.0
        %8423 = vmatpush1.msra.mxu0 0.0
        %8424 = vmatprep.subr.mxu0 0.0
        %8425 = vmatpush1.msra.mxu0 0.0
        %8426 = vmatprep.subr.mxu0 0.0
        %8427 = vmatpush1.msra.mxu0 0.0
        %8428 = vmatprep.subr.mxu0 0.0
        %8429 = vmatpush1.msra.mxu0 0.0
        %8430 = vmatprep.subr.mxu0 0.0
        %8431 = vmatpush1.msra.mxu0 0.0
        %8432 = vmatprep.subr.mxu0 0.0
        %8433 = vmatpush1.msra.mxu0 0.0
        %8434 = vmatprep.subr.mxu0 0.0
        %8435 = vmatpush1.msra.mxu0 0.0
        %8436 = vmatprep.mubr.f32.mxu0 0.0
        %8437 = vmatmul.mubr.f32.gmra.mrb[0].mxu0 %v8349
        %v8438 = vpop.f32.mrb[0].mxu0
        %v8439 = vadd.f32 0.0, %v8438
        %v8440 = vpop.f32.mrb[0].mxu0
        %8441 = vmatprep.mubr.f32.mxu0 0.0
        %8442 = vmatmul.mubr.f32.gmra.mrb[0].mxu0 %v8352
        %v8443 = vpop.f32.mrb[0].mxu0
        %v8444 = vadd.f32 0.0, %v8443
        %v8445 = vpop.f32.mrb[0].mxu0
        %8446 = vmatprep.mubr.f32.mxu0 0.0
        %8447 = vmatmul.mubr.f32.gmra.mrb[0].mxu0 %v8355
        %v8448 = vpop.f32.mrb[0].mxu0
        %v8449 = vadd.f32 0.0, %v8448
        %v8450 = vpop.f32.mrb[0].mxu0
        %8451 = vmatprep.mubr.f32.mxu0 0.0
        %8452 = vmatmul.mubr.f32.gmra.mrb[0].mxu0 %v8358
        %v8453 = vpop.f32.mrb[0].mxu0
        %v8454 = vadd.f32 0.0, %v8453
        %v8455 = vpop.f32.mrb[0].mxu0
        %8456 = vmatprep.mubr.f32.mxu0 0.0
        %8457 = vmatmul.mubr.f32.gmra.mrb[0].mxu0 %v8361
        %v8458 = vpop.f32.mrb[0].mxu0
        %v8459 = vadd.f32 0.0, %v8458
        %v8460 = vpop.f32.mrb[0].mxu0
        %8461 = vmatprep.mubr.f32.mxu0 0.0
        %8462 = vmatmul.mubr.f32.gmra.mrb[0].mxu0 %v8364
        %v8463 = vpop.f32.mrb[0].mxu0
        %v8464 = vadd.f32 0.0, %v8463
        %v8465 = vpop.f32.mrb[0].mxu0
        %8466 = vmatprep.mubr.f32.mxu0 0.0
        %8467 = vmatmul.mubr.f32.gmra.mrb[0].mxu0 %v8367
        %v8468 = vpop.f32.mrb[0].mxu0
        %v8469 = vadd.f32 0.0, %v8468
        %v8470 = vpop.f32.mrb[0].mxu0
        %8471 = vmatprep.mubr.f32.mxu0 0.0
        %8472 = vmatmul.mubr.f32.gmra.mrb[0].mxu0 %v8370
        %v8473 = vpop.f32.mrb[0].mxu0
        %v8474 = vadd.f32 0.0, %v8473
        %v8475 = vpop.f32.mrb[0].mxu0
        %8476 = vdwg.mxu0
        %v8477 = vpack.c.bf16 %v8444, %v8439
        %v8478 = vld [vmem:[%s63] sm:$0xf]
        %v8479 = vld [vmem:[%s63 + $0x4] sm:$0xf]
        %v8482 = vunpack.c.l.b16 %v8478
        %v8483 = vunpack.c.l.b16 %v8479
        %v8484 = vpack.c.b16 %v8483, %v8482
        %v8487 = vsel %vm1222, %v8477, 0
        %8489 = vmatprep.subr.bf16.mxu0 0
        %8490 = vmatpush1.bf16.msra.mxu0 %v8484
        %8491 = vmatprep.subr.bf16.mxu0 0
        %8492 = vmatpush1.bf16.msra.mxu0 0
        %8493 = vmatprep.subr.bf16.mxu0 0
        %8494 = vmatpush1.bf16.msra.mxu0 0
        %8495 = vmatprep.subr.bf16.mxu0 0
        %8496 = vmatpush1.bf16.msra.mxu0 0
        %8497 = vmatprep.subr.bf16.mxu0 0
        %8498 = vmatpush1.bf16.msra.mxu0 0
        %8499 = vmatprep.subr.bf16.mxu0 0
        %8500 = vmatpush1.bf16.msra.mxu0 0
        %8501 = vmatprep.subr.bf16.mxu0 0
        %8502 = vmatpush1.bf16.msra.mxu0 0
        %8503 = vmatprep.subr.bf16.mxu0 0
        %8504 = vmatpush1.bf16.msra.mxu0 0
        %8505 = vmatprep.subr.bf16.mxu0 0
        %8506 = vmatpush1.bf16.msra.mxu0 0
        %8507 = vmatprep.subr.bf16.mxu0 0
        %8508 = vmatpush1.bf16.msra.mxu0 0
        %8509 = vmatprep.subr.bf16.mxu0 0
        %8510 = vmatpush1.bf16.msra.mxu0 0
        %8511 = vmatprep.subr.bf16.mxu0 0
        %8512 = vmatpush1.bf16.msra.mxu0 0
        %8513 = vmatprep.subr.bf16.mxu0 0
        %8514 = vmatpush1.bf16.msra.mxu0 0
        %8515 = vmatprep.subr.bf16.mxu0 0
        %8516 = vmatpush1.bf16.msra.mxu0 0
        %8517 = vmatprep.subr.bf16.mxu0 0
        %8518 = vmatpush1.bf16.msra.mxu0 0
        %8519 = vmatprep.subr.bf16.mxu0 0
        %8520 = vmatpush1.bf16.msra.mxu0 0
        %8521 = vmatprep.mubr.bf16.mxu0 0
        %8522 = vmatmul.mubr.bf16.gmra.mrb[0].mxu0 %v8487
        %v8523 = vpop.f32.mrb[0].mxu0
        %v8524 = vadd.f32 0.0, %v8523
        %v8525 = vpop.f32.mrb[0].mxu0
        %v8526 = vpop.f32.mrb[0].mxu0
        %v8527 = vadd.f32 0.0, %v8526
        %v8528 = vpop.f32.mrb[0].mxu0
        %8529 = vdwg.mxu0
        %v8530 = vlaneseq
        %v8531 = vshrl.u32 %v8530, 7
        %v8532 = vsub.s32 2, %v8531
        %v8533 = vrot.slane %v7637, %v8532
        %v8534 = vadd.f32 %v8533, %v8524
        %v8535 = vadd.f32 %v8533, %v8527
        %v8536 = vpack.c.bf16 %v8454, %v8449
        %v8537 = vld [vmem:[%s63 + $0x8] sm:$0xf]
        %v8538 = vld [vmem:[%s63 + $0xc] sm:$0xf]
        %v8541 = vunpack.c.l.b16 %v8537
        %v8542 = vunpack.c.l.b16 %v8538
        %v8543 = vpack.c.b16 %v8542, %v8541
        %v8546 = vsel %vm1222, %v8536, 0
        %8548 = vmatprep.subr.bf16.mxu0 0
        %8549 = vmatpush1.bf16.msra.mxu0 %v8543
        %8550 = vmatprep.subr.bf16.mxu0 0
        %8551 = vmatpush1.bf16.msra.mxu0 0
        %8552 = vmatprep.subr.bf16.mxu0 0
        %8553 = vmatpush1.bf16.msra.mxu0 0
        %8554 = vmatprep.subr.bf16.mxu0 0
        %8555 = vmatpush1.bf16.msra.mxu0 0
        %8556 = vmatprep.subr.bf16.mxu0 0
        %8557 = vmatpush1.bf16.msra.mxu0 0
        %8558 = vmatprep.subr.bf16.mxu0 0
        %8559 = vmatpush1.bf16.msra.mxu0 0
        %8560 = vmatprep.subr.bf16.mxu0 0
        %8561 = vmatpush1.bf16.msra.mxu0 0
        %8562 = vmatprep.subr.bf16.mxu0 0
        %8563 = vmatpush1.bf16.msra.mxu0 0
        %8564 = vmatprep.subr.bf16.mxu0 0
        %8565 = vmatpush1.bf16.msra.mxu0 0
        %8566 = vmatprep.subr.bf16.mxu0 0
        %8567 = vmatpush1.bf16.msra.mxu0 0
        %8568 = vmatprep.subr.bf16.mxu0 0
        %8569 = vmatpush1.bf16.msra.mxu0 0
        %8570 = vmatprep.subr.bf16.mxu0 0
        %8571 = vmatpush1.bf16.msra.mxu0 0
        %8572 = vmatprep.subr.bf16.mxu0 0
        %8573 = vmatpush1.bf16.msra.mxu0 0
        %8574 = vmatprep.subr.bf16.mxu0 0
        %8575 = vmatpush1.bf16.msra.mxu0 0
        %8576 = vmatprep.subr.bf16.mxu0 0
        %8577 = vmatpush1.bf16.msra.mxu0 0
        %8578 = vmatprep.subr.bf16.mxu0 0
        %8579 = vmatpush1.bf16.msra.mxu0 0
        %8580 = vmatprep.mubr.bf16.mxu0 0
        %8581 = vmatmul.mubr.bf16.gmra.mrb[0].mxu0 %v8546
        %v8582 = vpop.f32.mrb[0].mxu0
        %v8583 = vadd.f32 0.0, %v8582
        %v8584 = vpop.f32.mrb[0].mxu0
        %v8585 = vpop.f32.mrb[0].mxu0
        %v8586 = vadd.f32 0.0, %v8585
        %v8587 = vpop.f32.mrb[0].mxu0
        %8588 = vdwg.mxu0
        %v8589 = vadd.f32 %v8534, %v8583
        %v8590 = vadd.f32 %v8535, %v8586
        %v8591 = vpack.c.bf16 %v8464, %v8459
        %v8592 = vld [vmem:[%s63 + $0x10] sm:$0xf]
        %v8593 = vld [vmem:[%s63 + $0x14] sm:$0xf]
        %v8596 = vunpack.c.l.b16 %v8592
        %v8597 = vunpack.c.l.b16 %v8593
        %v8598 = vpack.c.b16 %v8597, %v8596
        %v8601 = vsel %vm1222, %v8591, 0
        %8603 = vmatprep.subr.bf16.mxu0 0
        %8604 = vmatpush1.bf16.msra.mxu0 %v8598
        %8605 = vmatprep.subr.bf16.mxu0 0
        %8606 = vmatpush1.bf16.msra.mxu0 0
        %8607 = vmatprep.subr.bf16.mxu0 0
        %8608 = vmatpush1.bf16.msra.mxu0 0
        %8609 = vmatprep.subr.bf16.mxu0 0
        %8610 = vmatpush1.bf16.msra.mxu0 0
        %8611 = vmatprep.subr.bf16.mxu0 0
        %8612 = vmatpush1.bf16.msra.mxu0 0
        %8613 = vmatprep.subr.bf16.mxu0 0
        %8614 = vmatpush1.bf16.msra.mxu0 0
        %8615 = vmatprep.subr.bf16.mxu0 0
        %8616 = vmatpush1.bf16.msra.mxu0 0
        %8617 = vmatprep.subr.bf16.mxu0 0
        %8618 = vmatpush1.bf16.msra.mxu0 0
        %8619 = vmatprep.subr.bf16.mxu0 0
        %8620 = vmatpush1.bf16.msra.mxu0 0
        %8621 = vmatprep.subr.bf16.mxu0 0
        %8622 = vmatpush1.bf16.msra.mxu0 0
        %8623 = vmatprep.subr.bf16.mxu0 0
        %8624 = vmatpush1.bf16.msra.mxu0 0
        %8625 = vmatprep.subr.bf16.mxu0 0
        %8626 = vmatpush1.bf16.msra.mxu0 0
        %8627 = vmatprep.subr.bf16.mxu0 0
        %8628 = vmatpush1.bf16.msra.mxu0 0
        %8629 = vmatprep.subr.bf16.mxu0 0
        %8630 = vmatpush1.bf16.msra.mxu0 0
        %8631 = vmatprep.subr.bf16.mxu0 0
        %8632 = vmatpush1.bf16.msra.mxu0 0
        %8633 = vmatprep.subr.bf16.mxu0 0
        %8634 = vmatpush1.bf16.msra.mxu0 0
        %8635 = vmatprep.mubr.bf16.mxu0 0
        %8636 = vmatmul.mubr.bf16.gmra.mrb[0].mxu0 %v8601
        %v8637 = vpop.f32.mrb[0].mxu0
        %v8638 = vadd.f32 0.0, %v8637
        %v8639 = vpop.f32.mrb[0].mxu0
        %v8640 = vpop.f32.mrb[0].mxu0
        %v8641 = vadd.f32 0.0, %v8640
        %v8642 = vpop.f32.mrb[0].mxu0
        %8643 = vdwg.mxu0
        %v8644 = vadd.f32 %v8589, %v8638
        %v8645 = vadd.f32 %v8590, %v8641
        %v8646 = vpack.c.bf16 %v8474, %v8469
        %v8647 = vld [vmem:[%s63 + $0x18] sm:$0xf]
        %v8648 = vld [vmem:[%s63 + $0x1c] sm:$0xf]
        %v8651 = vunpack.c.l.b16 %v8647
        %v8652 = vunpack.c.l.b16 %v8648
        %v8653 = vpack.c.b16 %v8652, %v8651
        %v8656 = vsel %vm1222, %v8646, 0
        %8658 = vmatprep.subr.bf16.mxu0 0
        %8659 = vmatpush1.bf16.msra.mxu0 %v8653
        %8660 = vmatprep.subr.bf16.mxu0 0
        %8661 = vmatpush1.bf16.msra.mxu0 0
        %8662 = vmatprep.subr.bf16.mxu0 0
        %8663 = vmatpush1.bf16.msra.mxu0 0
        %8664 = vmatprep.subr.bf16.mxu0 0
        %8665 = vmatpush1.bf16.msra.mxu0 0
        %8666 = vmatprep.subr.bf16.mxu0 0
        %8667 = vmatpush1.bf16.msra.mxu0 0
        %8668 = vmatprep.subr.bf16.mxu0 0
        %8669 = vmatpush1.bf16.msra.mxu0 0
        %8670 = vmatprep.subr.bf16.mxu0 0
        %8671 = vmatpush1.bf16.msra.mxu0 0
        %8672 = vmatprep.subr.bf16.mxu0 0
        %8673 = vmatpush1.bf16.msra.mxu0 0
        %8674 = vmatprep.subr.bf16.mxu0 0
        %8675 = vmatpush1.bf16.msra.mxu0 0
        %8676 = vmatprep.subr.bf16.mxu0 0
        %8677 = vmatpush1.bf16.msra.mxu0 0
        %8678 = vmatprep.subr.bf16.mxu0 0
        %8679 = vmatpush1.bf16.msra.mxu0 0
        %8680 = vmatprep.subr.bf16.mxu0 0
        %8681 = vmatpush1.bf16.msra.mxu0 0
        %8682 = vmatprep.subr.bf16.mxu0 0
        %8683 = vmatpush1.bf16.msra.mxu0 0
        %8684 = vmatprep.subr.bf16.mxu0 0
        %8685 = vmatpush1.bf16.msra.mxu0 0
        %8686 = vmatprep.subr.bf16.mxu0 0
        %8687 = vmatpush1.bf16.msra.mxu0 0
        %8688 = vmatprep.subr.bf16.mxu0 0
        %8689 = vmatpush1.bf16.msra.mxu0 0
        %8690 = vmatprep.mubr.bf16.mxu0 0
        %8691 = vmatmul.mubr.bf16.gmra.mrb[0].mxu0 %v8656
        %v8692 = vpop.f32.mrb[0].mxu0
        %v8693 = vadd.f32 0.0, %v8692
        %v8694 = vpop.f32.mrb[0].mxu0
        %v8695 = vpop.f32.mrb[0].mxu0
        %v8696 = vadd.f32 0.0, %v8695
        %v8697 = vpop.f32.mrb[0].mxu0
        %8698 = vdwg.mxu0
        %v8699 = vadd.f32 %v8644, %v8693
        %v8700 = vadd.f32 %v8645, %v8696
        %v8701 = vsel %vm5796, %v8699, 0.0
        %8702 = vadd.xlane.f32.xlu0 %v8701
        %v8703 = vpop.xlane.xlu0 %8702
        %v8704 = vsel %vm5796, %v8700, 0.0
        %8705 = vadd.xlane.f32.xlu0 %v8704
        %v8706 = vpop.xlane.xlu0 %8705
        %v8707 = vmul.f32 %v8703, %v6070
        %v8708 = vmul.f32 %v8706, %v6070
        %v8709 = vsub.f32 %v8699, %v8707
        %v8710 = vsub.f32 %v8700, %v8708
        %v8711 = vmul.f32 %v8709, %v8709
        %v8712 = vmul.f32 %v8710, %v8710
        %v8713 = vsel %vm5796, %v8711, 0.0
        %8714 = vadd.xlane.f32.xlu0 %v8713
        %v8715 = vpop.xlane.xlu0 %8714
        %v8716 = vsel %vm5796, %v8712, 0.0
        %8717 = vadd.xlane.f32.xlu0 %v8716
        %v8718 = vpop.xlane.xlu0 %8717
        %v8719 = vmul.f32 %v8715, %v6070
        %v8720 = vmul.f32 %v8718, %v6070
        %v8721 = vadd.f32 %v8719, 1e-05
        %v8722 = vadd.f32 %v8720, 1e-05
        %v8723 = vrsqrt.pop %v8721
        %v8724 = vrsqrt.pop %v8722
        %v8725 = vmul.f32 %v8709, %v8723
        %v8726 = vmul.f32 %v8710, %v8724
        %v8727 = vlaneseq
        %v8728 = vshrl.u32 %v8727, 7
        %v8729 = vsub.s32 3, %v8728
        %v8730 = vrot.slane %v7637, %v8729
        %v8731 = vmul.f32 %v8725, %v8730
        %v8732 = vmul.f32 %v8726, %v8730
        %v8733 = vlaneseq
        %v8734 = vshrl.u32 %v8733, 7
        %v8735 = vsub.s32 4, %v8734
        %v8736 = vrot.slane %v7637, %v8735
        %v8737 = vadd.f32 %v8731, %v8736
        %v8738 = vadd.f32 %v8732, %v8736
        %v8739 = vadd.f32 %v7635, %v8737
        %v8740 = vadd.f32 %v7636, %v8738
        %v8741 = vpack.c.bf16 %v8740, %v8739
        %v8742 = vld [vmem:[%s65] sm:$0xff]
        %v8743 = vld [vmem:[%s65 + $0x8] sm:$0xff]
        %v8744 = vld [vmem:[%s65 + $0x10] sm:$0xff]
        %v8745 = vld [vmem:[%s65 + $0x18] sm:$0xff]
        %v8746 = vld [vmem:[%s65 + $0x20] sm:$0xff]
        %v8747 = vld [vmem:[%s65 + $0x28] sm:$0xff]
        %v8748 = vld [vmem:[%s65 + $0x30] sm:$0xff]
        %v8749 = vld [vmem:[%s65 + $0x38] sm:$0xff]
        %v8750 = vld [vmem:[%s71] sm:$0x3]
        %v8752 = vlaneseq
        %v8753 = vshrl.u32 %v8752, 7
        %v8754 = vsub.s32 0, %v8753
        %v8755 = vrot.slane %v8750, %v8754
        %v8756 = vlaneseq
        %v8757 = vshrl.u32 %v8756, 7
        %v8758 = vsub.s32 1, %v8757
        %v8759 = vrot.slane %v8750, %v8758
        %v8770 = vunpack.c.l.b16 %v8742
        %v8771 = vunpack.c.h.b16 %v8742
        %v8772 = vunpack.c.l.b16 %v8743
        %v8773 = vunpack.c.h.b16 %v8743
        %v8774 = vunpack.c.l.b16 %v8744
        %v8775 = vunpack.c.h.b16 %v8744
        %v8776 = vunpack.c.l.b16 %v8745
        %v8777 = vunpack.c.h.b16 %v8745
        %v8778 = vunpack.c.l.b16 %v8746
        %v8779 = vunpack.c.h.b16 %v8746
        %v8780 = vunpack.c.l.b16 %v8747
        %v8781 = vunpack.c.h.b16 %v8747
        %v8782 = vunpack.c.l.b16 %v8748
        %v8783 = vunpack.c.h.b16 %v8748
        %v8784 = vunpack.c.l.b16 %v8749
        %v8785 = vunpack.c.h.b16 %v8749
        %v8786 = vpack.c.b16 %v8772, %v8770
        %v8787 = vpack.c.b16 %v8773, %v8771
        %v8788 = vpack.c.b16 %v8776, %v8774
        %v8789 = vpack.c.b16 %v8777, %v8775
        %v8790 = vpack.c.b16 %v8780, %v8778
        %v8791 = vpack.c.b16 %v8781, %v8779
        %v8792 = vpack.c.b16 %v8784, %v8782
        %v8793 = vpack.c.b16 %v8785, %v8783
        %v8803 = vsel %vm5796, %v8741, 0
        %8805 = vmatprep.subr.bf16.mxu0 %v8787
        %8806 = vmatpush1.bf16.msra.mxu0 %v8786
        %8807 = vmatprep.subr.bf16.mxu0 %v8789
        %8808 = vmatpush1.bf16.msra.mxu0 %v8788
        %8809 = vmatprep.subr.bf16.mxu0 %v8791
        %8810 = vmatpush1.bf16.msra.mxu0 %v8790
        %8811 = vmatprep.subr.bf16.mxu0 %v8793
        %8812 = vmatpush1.bf16.msra.mxu0 %v8792
        %8813 = vmatprep.subr.bf16.mxu0 0
        %8814 = vmatpush1.bf16.msra.mxu0 0
        %8815 = vmatprep.subr.bf16.mxu0 0
        %8816 = vmatpush1.bf16.msra.mxu0 0
        %8817 = vmatprep.subr.bf16.mxu0 0
        %8818 = vmatpush1.bf16.msra.mxu0 0
        %8819 = vmatprep.subr.bf16.mxu0 0
        %8820 = vmatpush1.bf16.msra.mxu0 0
        %8821 = vmatprep.subr.bf16.mxu0 0
        %8822 = vmatpush1.bf16.msra.mxu0 0
        %8823 = vmatprep.subr.bf16.mxu0 0
        %8824 = vmatpush1.bf16.msra.mxu0 0
        %8825 = vmatprep.subr.bf16.mxu0 0
        %8826 = vmatpush1.bf16.msra.mxu0 0
        %8827 = vmatprep.subr.bf16.mxu0 0
        %8828 = vmatpush1.bf16.msra.mxu0 0
        %8829 = vmatprep.subr.bf16.mxu0 0
        %8830 = vmatpush1.bf16.msra.mxu0 0
        %8831 = vmatprep.subr.bf16.mxu0 0
        %8832 = vmatpush1.bf16.msra.mxu0 0
        %8833 = vmatprep.subr.bf16.mxu0 0
        %8834 = vmatpush1.bf16.msra.mxu0 0
        %8835 = vmatprep.subr.bf16.mxu0 0
        %8836 = vmatpush1.bf16.msra.mxu0 0
        %8837 = vmatprep.mubr.bf16.mxu0 0
        %8838 = vmatmul.mubr.bf16.gmra.mrb[0].mxu0 %v8803
        %v8839 = vpop.f32.mrb[0].mxu0
        %v8840 = vadd.f32 %v8755, %v8839
        %v8841 = vpop.f32.mrb[0].mxu0
        %v8842 = vadd.f32 %v8759, %v8841
        %v8843 = vpop.f32.mrb[0].mxu0
        %v8844 = vadd.f32 %v8755, %v8843
        %v8845 = vpop.f32.mrb[0].mxu0
        %v8846 = vadd.f32 %v8759, %v8845
        %8847 = vdwg.mxu0
        %v8848 = vmul.f32 %v8840, 0.5
        %v8849 = vmul.f32 %v8842, 0.5
        %v8850 = vmul.f32 %v8844, 0.5
        %v8851 = vmul.f32 %v8846, 0.5
        %v8852 = vmul.f32 %v8840, 0.70710677
        %v8853 = vmul.f32 %v8842, 0.70710677
        %v8854 = vmul.f32 %v8844, 0.70710677
        %v8855 = vmul.f32 %v8846, 0.70710677
        %vm8856 = vcmp.lt.f32.partialorder %v8852, 0.0
        %vm8857 = vcmp.lt.f32.partialorder %v8853, 0.0
        %vm8858 = vcmp.lt.f32.partialorder %v8854, 0.0
        %vm8859 = vcmp.lt.f32.partialorder %v8855, 0.0
        %v8860 = vsel %vm8856, -1.0, 1.0
        %v8861 = vsel %vm8857, -1.0, 1.0
        %v8862 = vsel %vm8858, -1.0, 1.0
        %v8863 = vsel %vm8859, -1.0, 1.0
        %v8864 = vand.u32 2147483647, %v8852
        %v8865 = vand.u32 2147483647, %v8853
        %v8866 = vand.u32 2147483647, %v8854
        %v8867 = vand.u32 2147483647, %v8855
        %v8868 = vmul.f32 %v8864, 0.3275911
        %v8869 = vmul.f32 %v8865, 0.3275911
        %v8870 = vmul.f32 %v8866, 0.3275911
        %v8871 = vmul.f32 %v8867, 0.3275911
        %v8872 = vadd.f32 %v8868, 1.0
        %v8873 = vadd.f32 %v8869, 1.0
        %v8874 = vadd.f32 %v8870, 1.0
        %v8875 = vadd.f32 %v8871, 1.0
        %v8876 = vrcp.pop %v8872
        %v8877 = vmul.f32 1.0, %v8876
        %v8878 = vrcp.pop %v8873
        %v8879 = vmul.f32 1.0, %v8878
        %v8880 = vrcp.pop %v8874
        %v8881 = vmul.f32 1.0, %v8880
        %v8882 = vrcp.pop %v8875
        %v8883 = vmul.f32 1.0, %v8882
        %v8884 = vmul.f32 %v8877, 1.0614054
        %v8885 = vmul.f32 %v8879, 1.0614054
        %v8886 = vmul.f32 %v8881, 1.0614054
        %v8887 = vmul.f32 %v8883, 1.0614054
        %v8888 = vadd.f32 %v8884, -1.4531521
        %v8889 = vadd.f32 %v8885, -1.4531521
        %v8890 = vadd.f32 %v8886, -1.4531521
        %v8891 = vadd.f32 %v8887, -1.4531521
        %v8892 = vmul.f32 %v8888, %v8877
        %v8893 = vmul.f32 %v8889, %v8879
        %v8894 = vmul.f32 %v8890, %v8881
        %v8895 = vmul.f32 %v8891, %v8883
        %v8896 = vadd.f32 %v8892, 1.4214138
        %v8897 = vadd.f32 %v8893, 1.4214138
        %v8898 = vadd.f32 %v8894, 1.4214138
        %v8899 = vadd.f32 %v8895, 1.4214138
        %v8900 = vmul.f32 %v8896, %v8877
        %v8901 = vmul.f32 %v8897, %v8879
        %v8902 = vmul.f32 %v8898, %v8881
        %v8903 = vmul.f32 %v8899, %v8883
        %v8904 = vadd.f32 %v8900, -0.28449672
        %v8905 = vadd.f32 %v8901, -0.28449672
        %v8906 = vadd.f32 %v8902, -0.28449672
        %v8907 = vadd.f32 %v8903, -0.28449672
        %v8908 = vmul.f32 %v8904, %v8877
        %v8909 = vmul.f32 %v8905, %v8879
        %v8910 = vmul.f32 %v8906, %v8881
        %v8911 = vmul.f32 %v8907, %v8883
        %v8912 = vadd.f32 %v8908, 0.2548296
        %v8913 = vadd.f32 %v8909, 0.2548296
        %v8914 = vadd.f32 %v8910, 0.2548296
        %v8915 = vadd.f32 %v8911, 0.2548296
        %v8916 = vmul.f32 %v8912, %v8877
        %v8917 = vmul.f32 %v8913, %v8879
        %v8918 = vmul.f32 %v8914, %v8881
        %v8919 = vmul.f32 %v8915, %v8883
        %v8920 = vsub.f32 0.0, %v8864
        %v8921 = vsub.f32 0.0, %v8865
        %v8922 = vsub.f32 0.0, %v8866
        %v8923 = vsub.f32 0.0, %v8867
        %v8924 = vmul.f32 %v8920, %v8864
        %v8925 = vmul.f32 %v8921, %v8865
        %v8926 = vmul.f32 %v8922, %v8866
        %v8927 = vmul.f32 %v8923, %v8867
        %v8928 = vmul.f32 %v8924, 1.442695
        %v8929 = vpow.pop %v8928
        %v8930 = vmul.f32 %v8925, 1.442695
        %v8931 = vpow.pop %v8930
        %v8932 = vmul.f32 %v8926, 1.442695
        %v8933 = vpow.pop %v8932
        %v8934 = vmul.f32 %v8927, 1.442695
        %v8935 = vpow.pop %v8934
        %v8936 = vmul.f32 %v8916, %v8929
        %v8937 = vmul.f32 %v8917, %v8931
        %v8938 = vmul.f32 %v8918, %v8933
        %v8939 = vmul.f32 %v8919, %v8935
        %v8940 = vsub.f32 1.0, %v8936
        %v8941 = vsub.f32 1.0, %v8937
        %v8942 = vsub.f32 1.0, %v8938
        %v8943 = vsub.f32 1.0, %v8939
        %v8944 = vmul.f32 %v8860, %v8940
        %v8945 = vmul.f32 %v8861, %v8941
        %v8946 = vmul.f32 %v8862, %v8942
        %v8947 = vmul.f32 %v8863, %v8943
        %v8948 = vadd.f32 %v8944, 1.0
        %v8949 = vadd.f32 %v8945, 1.0
        %v8950 = vadd.f32 %v8946, 1.0
        %v8951 = vadd.f32 %v8947, 1.0
        %v8952 = vmul.f32 %v8848, %v8948
        %v8953 = vmul.f32 %v8849, %v8949
        %v8954 = vmul.f32 %v8850, %v8950
        %v8955 = vmul.f32 %v8851, %v8951
        %v8956 = vpack.c.bf16 %v8954, %v8952
        %v8957 = vpack.c.bf16 %v8955, %v8953
        %v8958 = vld [vmem:[%s67] sm:$0xf]
        %v8959 = vld [vmem:[%s67 + $0x4] sm:$0xf]
        %v8960 = vld [vmem:[%s67 + $0x8] sm:$0xf]
        %v8961 = vld [vmem:[%s67 + $0xc] sm:$0xf]
        %v8962 = vld [vmem:[%s67 + $0x10] sm:$0xf]
        %v8963 = vld [vmem:[%s67 + $0x14] sm:$0xf]
        %v8964 = vld [vmem:[%s67 + $0x18] sm:$0xf]
        %v8965 = vld [vmem:[%s67 + $0x1c] sm:$0xf]
        %v8966 = vld [vmem:[%s67 + $0x20] sm:$0xf]
        %v8967 = vld [vmem:[%s67 + $0x24] sm:$0xf]
        %v8968 = vld [vmem:[%s67 + $0x28] sm:$0xf]
        %v8969 = vld [vmem:[%s67 + $0x2c] sm:$0xf]
        %v8970 = vld [vmem:[%s67 + $0x30] sm:$0xf]
        %v8971 = vld [vmem:[%s67 + $0x34] sm:$0xf]
        %v8972 = vld [vmem:[%s67 + $0x38] sm:$0xf]
        %v8973 = vld [vmem:[%s67 + $0x3c] sm:$0xf]
        %v8974 = vld [vmem:[%s67 + $0x40] sm:$0xf]
        %v8975 = vld [vmem:[%s67 + $0x44] sm:$0xf]
        %v8976 = vld [vmem:[%s67 + $0x48] sm:$0xf]
        %v8977 = vld [vmem:[%s67 + $0x4c] sm:$0xf]
        %v8978 = vld [vmem:[%s67 + $0x50] sm:$0xf]
        %v8979 = vld [vmem:[%s67 + $0x54] sm:$0xf]
        %v8980 = vld [vmem:[%s67 + $0x58] sm:$0xf]
        %v8981 = vld [vmem:[%s67 + $0x5c] sm:$0xf]
        %v8982 = vld [vmem:[%s67 + $0x60] sm:$0xf]
        %v8983 = vld [vmem:[%s67 + $0x64] sm:$0xf]
        %v8984 = vld [vmem:[%s67 + $0x68] sm:$0xf]
        %v8985 = vld [vmem:[%s67 + $0x6c] sm:$0xf]
        %v8986 = vld [vmem:[%s67 + $0x70] sm:$0xf]
        %v8987 = vld [vmem:[%s67 + $0x74] sm:$0xf]
        %v8988 = vld [vmem:[%s67 + $0x78] sm:$0xf]
        %v8989 = vld [vmem:[%s67 + $0x7c] sm:$0xf]
        %v8990 = vlaneseq
        %v8991 = vshrl.u32 %v8990, 7
        %v8992 = vsub.s32 5, %v8991
        %v8993 = vrot.slane %v7637, %v8992
        %v9026 = vunpack.c.l.b16 %v8958
        %v9027 = vunpack.c.l.b16 %v8959
        %v9028 = vunpack.c.l.b16 %v8960
        %v9029 = vunpack.c.l.b16 %v8961
        %v9030 = vunpack.c.l.b16 %v8962
        %v9031 = vunpack.c.l.b16 %v8963
        %v9032 = vunpack.c.l.b16 %v8964
        %v9033 = vunpack.c.l.b16 %v8965
        %v9034 = vunpack.c.l.b16 %v8966
        %v9035 = vunpack.c.l.b16 %v8967
        %v9036 = vunpack.c.l.b16 %v8968
        %v9037 = vunpack.c.l.b16 %v8969
        %v9038 = vunpack.c.l.b16 %v8970
        %v9039 = vunpack.c.l.b16 %v8971
        %v9040 = vunpack.c.l.b16 %v8972
        %v9041 = vunpack.c.l.b16 %v8973
        %v9042 = vunpack.c.l.b16 %v8974
        %v9043 = vunpack.c.l.b16 %v8975
        %v9044 = vunpack.c.l.b16 %v8976
        %v9045 = vunpack.c.l.b16 %v8977
        %v9046 = vunpack.c.l.b16 %v8978
        %v9047 = vunpack.c.l.b16 %v8979
        %v9048 = vunpack.c.l.b16 %v8980
        %v9049 = vunpack.c.l.b16 %v8981
        %v9050 = vunpack.c.l.b16 %v8982
        %v9051 = vunpack.c.l.b16 %v8983
        %v9052 = vunpack.c.l.b16 %v8984
        %v9053 = vunpack.c.l.b16 %v8985
        %v9054 = vunpack.c.l.b16 %v8986
        %v9055 = vunpack.c.l.b16 %v8987
        %v9056 = vunpack.c.l.b16 %v8988
        %v9057 = vunpack.c.l.b16 %v8989
        %v9058 = vpack.c.b16 %v9027, %v9026
        %v9059 = vpack.c.b16 %v9029, %v9028
        %v9060 = vpack.c.b16 %v9031, %v9030
        %v9061 = vpack.c.b16 %v9033, %v9032
        %v9062 = vpack.c.b16 %v9035, %v9034
        %v9063 = vpack.c.b16 %v9037, %v9036
        %v9064 = vpack.c.b16 %v9039, %v9038
        %v9065 = vpack.c.b16 %v9041, %v9040
        %v9066 = vpack.c.b16 %v9043, %v9042
        %v9067 = vpack.c.b16 %v9045, %v9044
        %v9068 = vpack.c.b16 %v9047, %v9046
        %v9069 = vpack.c.b16 %v9049, %v9048
        %v9070 = vpack.c.b16 %v9051, %v9050
        %v9071 = vpack.c.b16 %v9053, %v9052
        %v9072 = vpack.c.b16 %v9055, %v9054
        %v9073 = vpack.c.b16 %v9057, %v9056
        %9090 = vmatprep.subr.bf16.mxu0 0
        %9091 = vmatpush1.bf16.msra.mxu0 %v9058
        %9092 = vmatprep.subr.bf16.mxu0 0
        %9093 = vmatpush1.bf16.msra.mxu0 %v9059
        %9094 = vmatprep.subr.bf16.mxu0 0
        %9095 = vmatpush1.bf16.msra.mxu0 %v9060
        %9096 = vmatprep.subr.bf16.mxu0 0
        %9097 = vmatpush1.bf16.msra.mxu0 %v9061
        %9098 = vmatprep.subr.bf16.mxu0 0
        %9099 = vmatpush1.bf16.msra.mxu0 %v9062
        %9100 = vmatprep.subr.bf16.mxu0 0
        %9101 = vmatpush1.bf16.msra.mxu0 %v9063
        %9102 = vmatprep.subr.bf16.mxu0 0
        %9103 = vmatpush1.bf16.msra.mxu0 %v9064
        %9104 = vmatprep.subr.bf16.mxu0 0
        %9105 = vmatpush1.bf16.msra.mxu0 %v9065
        %9106 = vmatprep.subr.bf16.mxu0 0
        %9107 = vmatpush1.bf16.msra.mxu0 %v9066
        %9108 = vmatprep.subr.bf16.mxu0 0
        %9109 = vmatpush1.bf16.msra.mxu0 %v9067
        %9110 = vmatprep.subr.bf16.mxu0 0
        %9111 = vmatpush1.bf16.msra.mxu0 %v9068
        %9112 = vmatprep.subr.bf16.mxu0 0
        %9113 = vmatpush1.bf16.msra.mxu0 %v9069
        %9114 = vmatprep.subr.bf16.mxu0 0
        %9115 = vmatpush1.bf16.msra.mxu0 %v9070
        %9116 = vmatprep.subr.bf16.mxu0 0
        %9117 = vmatpush1.bf16.msra.mxu0 %v9071
        %9118 = vmatprep.subr.bf16.mxu0 0
        %9119 = vmatpush1.bf16.msra.mxu0 %v9072
        %9120 = vmatprep.subr.bf16.mxu0 0
        %9121 = vmatpush1.bf16.msra.mxu0 %v9073
        %9122 = vmatprep.mubr.bf16.mxu0 %v8957
        %9123 = vmatmul.mubr.bf16.gmra.mrb[0].mxu0 %v8956
        %v9124 = vpop.f32.mrb[0].mxu0
        %v9125 = vadd.f32 %v8993, %v9124
        %v9126 = vpop.f32.mrb[0].mxu0
        %v9127 = vpop.f32.mrb[0].mxu0
        %v9128 = vadd.f32 %v8993, %v9127
        %v9129 = vpop.f32.mrb[0].mxu0
        %9130 = vdwg.mxu0
        %v9131 = vsel %vm5796, %v9125, 0.0
        %9132 = vadd.xlane.f32.xlu0 %v9131
        %v9133 = vpop.xlane.xlu0 %9132
        %v9134 = vsel %vm5796, %v9128, 0.0
        %9135 = vadd.xlane.f32.xlu0 %v9134
        %v9136 = vpop.xlane.xlu0 %9135
        %v9137 = vmul.f32 %v9133, %v6070
        %v9138 = vmul.f32 %v9136, %v6070
        %v9139 = vsub.f32 %v9125, %v9137
        %v9140 = vsub.f32 %v9128, %v9138
        %v9141 = vmul.f32 %v9139, %v9139
        %v9142 = vmul.f32 %v9140, %v9140
        %v9143 = vsel %vm5796, %v9141, 0.0
        %9144 = vadd.xlane.f32.xlu0 %v9143
        %v9145 = vpop.xlane.xlu0 %9144
        %v9146 = vsel %vm5796, %v9142, 0.0
        %9147 = vadd.xlane.f32.xlu0 %v9146
        %v9148 = vpop.xlane.xlu0 %9147
        %v9149 = vmul.f32 %v9145, %v6070
        %v9150 = vmul.f32 %v9148, %v6070
        %v9151 = vadd.f32 %v9149, 1e-05
        %v9152 = vadd.f32 %v9150, 1e-05
        %v9153 = vrsqrt.pop %v9151
        %v9154 = vrsqrt.pop %v9152
        %v9155 = vmul.f32 %v9139, %v9153
        %v9156 = vmul.f32 %v9140, %v9154
        %v9157 = vlaneseq
        %v9158 = vshrl.u32 %v9157, 7
        %v9159 = vsub.s32 6, %v9158
        %v9160 = vrot.slane %v7637, %v9159
        %v9161 = vmul.f32 %v9155, %v9160
        %v9162 = vmul.f32 %v9156, %v9160
        %v9163 = vlaneseq
        %v9164 = vshrl.u32 %v9163, 7
        %v9165 = vsub.s32 7, %v9164
        %v9166 = vrot.slane %v7637, %v9165
        %v9167 = vadd.f32 %v9161, %v9166
        %v9168 = vadd.f32 %v9162, %v9166
        %v9169 = vadd.f32 %v8739, %v9167
        %v9170 = vadd.f32 %v8740, %v9168
        %9171 = vst.msk [vmem:[%s1187] sm:$0xff] %vm5796, %v9169
        %9172 = vst.msk [vmem:[%s1187 + $0x8] sm:$0xff] %vm5796, %v9170
        %s9173 = sand.u32 %s908, 1
        %s9174 = scalar_lea.sflag [#allocation3], %s9173
        %s9175 = sand.u32 %s908, 1
        %s9176 = smul.addr %s9175, 64
        %s9177 = scalar_lea.vmem [#allocation2], %s9176
        %s9178 = sand.u32 %s934, 1
        %s9179 = scalar_lea.sflag [#allocation5], %s9178
        %s9180 = sand.u32 %s934, 1
        %s9181 = smul.addr %s9180, 16
        %s9182 = scalar_lea.vmem [#allocation4], %s9181
        // Predicated region
        $region173: #{swin_feature_extractor.1} parent=171 // pred_check
          %p9183 = pneg %p918
        $region174: #{swin_feature_extractor.1} parent=171 // pred_check_branch
          %9185 = sbr.rel (%p9183) target = $region176
        $region175: #{swin_feature_extractor.1} parent=171 // pred_region
          %s9186 = smul.u32 8, %s97
          %s9188 = ssub.s32 1024, 1024
          %9189 = vsyncadd %s9174, %s9188
          %s9190 = smul.addr %s9186, 128
          %s9191 = scalar_lea.hbm %s77, %s9190
          %s9192 = sshll.u32 %s9177, 4
          %s9193 = int_to_ptr.vmem [resolvable:$true] %s9192
          %9198 = dma.vmem_to_hbm [thread:$0]  %s9193, 1024, %s9191, %s9174, 128, 128, 8
        $region176: #{swin_feature_extractor.1} parent=171 // pred_fallthru
          _
        // Predicated region
        $region177: #{swin_feature_extractor.1} parent=171 // pred_check
          %p9199 = pneg %p944
        $region178: #{swin_feature_extractor.1} parent=171 // pred_check_branch
          %9201 = sbr.rel (%p9199) target = $region180
        $region179: #{swin_feature_extractor.1} parent=171 // pred_region
          %s9202 = smul.u32 2, %s97
          %s9204 = ssub.s32 256, 256
          %9205 = vsyncadd %s9179, %s9204
          %s9206 = smul.addr %s9202, 128
          %s9207 = scalar_lea.hbm %s79, %s9206
          %s9208 = sshll.u32 %s9182, 4
          %s9209 = int_to_ptr.vmem [resolvable:$true] %s9208
          %9214 = dma.vmem_to_hbm [thread:$0]  %s9209, 256, %s9207, %s9179, 128, 128, 8
        $region180: #{swin_feature_extractor.1} parent=171 // pred_fallthru
          _
      $region172: #{swin_feature_extractor.1} parent=5 // pred_fallthru
        _
      %p9215 = scmp.le.s32.totalorder 2, %s92
      // Predicated region
      $region181: #{swin_feature_extractor.1} parent=5 // pred_check
        %p9216 = pneg %p9215
      $region182: #{swin_feature_extractor.1} parent=5 // pred_check_branch
        %9218 = sbr.rel (%p9216) target = $region184
      $region183: #{swin_feature_extractor.1} parent=5 // pred_region
        %s9219 = ssub.s32 %s92, 2
        // Predicated region
        $region185: #{swin_feature_extractor.1} parent=183 // pred_check
          %p9220 = pneg %p924
        $region186: #{swin_feature_extractor.1} parent=183 // pred_check_branch
          %9222 = sbr.rel (%p9220) target = $region188
        $region187: #{swin_feature_extractor.1} parent=183 // pred_region
          %s9223 = sand.u32 %s909, 1
          %s9224 = scalar_lea.sflag [#allocation3], %s9223
          %s9225 = sand.u32 %s909, 1
          %s9226 = smul.addr %s9225, 64
          %s9227 = scalar_lea.vmem [#allocation2], %s9226
          %9228 = dma.done %s9224, 1024
        $region188: #{swin_feature_extractor.1} parent=183 // pred_fallthru
          _
        // Predicated region
        $region189: #{swin_feature_extractor.1} parent=183 // pred_check
          %p9229 = pneg %p950
        $region190: #{swin_feature_extractor.1} parent=183 // pred_check_branch
          %9231 = sbr.rel (%p9229) target = $region192
        $region191: #{swin_feature_extractor.1} parent=183 // pred_region
          %s9232 = sand.u32 %s935, 1
          %s9233 = scalar_lea.sflag [#allocation5], %s9232
          %s9234 = sand.u32 %s935, 1
          %s9235 = smul.addr %s9234, 16
          %s9236 = scalar_lea.vmem [#allocation4], %s9235
          %9237 = dma.done %s9233, 256
        $region192: #{swin_feature_extractor.1} parent=183 // pred_fallthru
          _
      $region184: #{swin_feature_extractor.1} parent=5 // pred_fallthru
        _
    $region6: #{swin_feature_extractor.1} parent=1 // loop_footer
      %s96 = sadd.s32 1, %s92
    $region7: #{swin_feature_extractor.1} parent=1 // loop_footer_branch
      %91 = sbr.rel target = $region3
    $region8: #{swin_feature_extractor.1} parent=1 // loop_exit
      _
    %9238 = vsyncpa [#allocation3], 1
    %s9239 = scalar_lea.sflag [#allocation3], 1
    %9240 = vsyncpa %s9239, 1
    %9241 = vsyncpa [#allocation5], 1
    %s9242 = scalar_lea.sflag [#allocation5], 1
    %9243 = vsyncpa %s9242, 1

</llo_original>
